<compile_context>
chip_gen: v6e
topology: v6e:2x2x1
jax: 0.10.0
libtpu: 0.0.40
codegen_flags: <defaults>
</compile_context>

<pallas_src>
import jax
import jax.numpy as jnp
import numpy as np
from jax import lax
from jax.experimental import pallas as pl
from jax.experimental.pallas import tpu as pltpu


# ----------------------------------------------------------------------------
# Tile selection: largest tile dividing `m` that still yields >= min_steps
# total grid steps (v7x has 2 TensorCores; >=4 steps keeps both busy with a
# double-buffered steady state).  Falls back to the largest divisor.
# ----------------------------------------------------------------------------
def _pick_tile(m, n_outer=1, candidates=(2048, 1024, 512, 256, 128), min_steps=4):
    best = None
    for t in candidates:
        if m % t == 0:
            if best is None:
                best = t
            if n_outer * (m // t) >= min_steps:
                return t
    return best if best is not None else m


# sub-pixel phase a -> ConvTranspose2d kernel tap index for window offset dy=0,1
_K_TAP = {0: (3, 1), 1: (2, 0)}


def _pack_deconv_weights(w_pt, scale):
    """w_pt: (Cin, Cout, 4, 4) PyTorch ConvTranspose2d weight.

    Returns (4, 4, Cin, Cout) bf16: [phase p=2a+b, tap t=2dy+dx, cin, cout]
    with the BN scale folded into the output channels.
    """
    w_scaled = w_pt * scale[None, :, None, None]
    phases = []
    for a in (0, 1):
        for b in (0, 1):
            taps = []
            for dy in (0, 1):
                for dx in (0, 1):
                    ky, kx = _K_TAP[a][dy], _K_TAP[b][dx]
                    taps.append(w_scaled[:, :, ky, kx])          # (Cin, Cout)
            phases.append(jnp.stack(taps, axis=0))               # (4, Cin, Cout)
    return jnp.stack(phases, axis=0).astype(jnp.bfloat16)        # (4, 4, Cin, Cout)


# ----------------------------------------------------------------------------
# Deconv layer kernel: in-kernel im2col (9 shifted views of the padded image),
# 16 zero-waste per-phase/per-tap matmuls, f32 accumulation, bias + ReLU.
# Output layout (1, H, 2, W, 2*Cout) reshapes contiguously to NHWC (2H, 2W, C).
# ----------------------------------------------------------------------------
def _make_deconv_kernel(H, W, Cin, Cout):
    def kernel(xp_ref, w_ref, b_ref, o_ref):
        # xp_ref: (1, H+2, W+2, Cin) bf16 padded input image (one batch elem)
        # w_ref : (4, 4, Cin, Cout)  bf16 per-phase / per-tap weights (BN folded)
        # b_ref : (1, Cout)          f32  BN bias
        # o_ref : (1, H, 2, W, 2*Cout) bf16
        views = {}
        for r in range(3):
            for c in range(3):
                views[(r, c)] = xp_ref[0, r:r + H, c:c + W, :].reshape(H * W, Cin)
        bvec = b_ref[...]  # (1, Cout) f32
        for a in (0, 1):
            for b in (0, 1):
                p = 2 * a + b
                acc = None
                for dy in (0, 1):
                    for dx in (0, 1):
                        t = 2 * dy + dx
                        d = jnp.dot(views[(a + dy, b + dx)], w_ref[p, t],
                                    preferred_element_type=jnp.float32)
                        acc = d if acc is None else acc + d
                y = jnp.maximum(acc + bvec, 0.0).astype(o_ref.dtype)   # (H*W, Cout)
                o_ref[0, :, a, :, b * Cout:(b + 1) * Cout] = y.reshape(H, W, Cout)

    return kernel


def fused_deconv_bn_relu(x_nhwc, w_pt, bn_scale, bn_bias):
    """ConvTranspose2d(k=4,s=2,p=1,bias=False) + BN(eval) + ReLU, one pallas_call."""
    Nb, H, W, Cin = x_nhwc.shape
    Cout = w_pt.shape[1]

    # Only XLA work per layer: cast + 1-px zero pad (no im2col, no pixel shuffle).
    xp = jnp.pad(x_nhwc.astype(jnp.bfloat16), ((0, 0), (1, 1), (1, 1), (0, 0)))
    w_taps = _pack_deconv_weights(w_pt, bn_scale)
    bias = bn_bias.reshape(1, Cout).astype(jnp.float32)

    out = pl.pallas_call(
        _make_deconv_kernel(H, W, Cin, Cout),
        out_shape=jax.ShapeDtypeStruct((Nb, H, 2, W, 2 * Cout), jnp.bfloat16),
        grid_spec=pltpu.PrefetchScalarGridSpec(
            num_scalar_prefetch=0,
            grid=(Nb,),
            in_specs=[
                pl.BlockSpec((1, H + 2, W + 2, Cin), lambda n: (n, 0, 0, 0)),
                # Constant operands: constant index_map -> fetched once.
                pl.BlockSpec((4, 4, Cin, Cout), lambda n: (0, 0, 0, 0)),
                pl.BlockSpec((1, Cout), lambda n: (0, 0)),
            ],
            out_specs=pl.BlockSpec((1, H, 2, W, 2 * Cout),
                                   lambda n: (n, 0, 0, 0, 0)),
        ),
        compiler_params=pltpu.CompilerParams(
            dimension_semantics=("parallel",),
            # 48 MiB: above the 32 MiB scoped default (v5e/v6e could go higher),
            # still safely below v7x's 64 MiB physical VMEM.
            vmem_limit_bytes=48 * 1024 * 1024,
        ),
    )(xp, w_taps, bias)

    # Free (contiguous) reshape: (Nb, H, 2, W, 2*Cout) -> (Nb, 2H, 2W, Cout).
    return out.reshape(Nb, 2 * H, 2 * W, Cout)


# ----------------------------------------------------------------------------
# Final 1x1 conv, computed transposed so the output is lane-dense and already
# in NCHW layout:  Y[n] = W (Cout, Cin) @ X[n]^T (Cin, tile) + b.
# ----------------------------------------------------------------------------
def _final_conv_kernel(x_ref, w_ref, b_ref, o_ref):
    # x_ref: (1, tm, Cin) bf16; w_ref: (Cout, Cin) bf16; b_ref: (Cout, 1) f32.
    y = lax.dot_general(
        w_ref[...], x_ref[0],
        dimension_numbers=(((1,), (1,)), ((), ())),
        preferred_element_type=jnp.float32,
    )  # (Cout, tm)
    o_ref[0] = y + b_ref[...]


def final_conv1x1_nchw(x_nhwc, w_pt, bias):
    """w_pt has PyTorch Conv2d layout (Cout, Cin, 1, 1). Returns NCHW f32."""
    Nb, H, W, Cin = x_nhwc.shape
    Cout = w_pt.shape[0]
    Msp = H * W

    x = x_nhwc.reshape(Nb, Msp, Cin).astype(jnp.bfloat16)   # free reshape
    w = w_pt[:, :, 0, 0].astype(jnp.bfloat16)               # (Cout, Cin)
    b = bias.reshape(Cout, 1).astype(jnp.float32)

    tm = _pick_tile(Msp, n_outer=Nb)
    out = pl.pallas_call(
        _final_conv_kernel,
        out_shape=jax.ShapeDtypeStruct((Nb, Cout, Msp), jnp.float32),
        grid_spec=pltpu.PrefetchScalarGridSpec(
            num_scalar_prefetch=0,
            grid=(Nb, Msp // tm),
            in_specs=[
                pl.BlockSpec((1, tm, Cin), lambda n, i: (n, i, 0)),
                pl.BlockSpec((Cout, Cin), lambda n, i: (0, 0)),
                pl.BlockSpec((Cout, 1), lambda n, i: (0, 0)),
            ],
            out_specs=pl.BlockSpec((1, Cout, tm), lambda n, i: (n, 0, i)),
        ),
        compiler_params=pltpu.CompilerParams(
            dimension_semantics=("parallel", "parallel"),
            vmem_limit_bytes=48 * 1024 * 1024,
        ),
    )(x, w, b)
    return out.reshape(Nb, Cout, H, W)  # already NCHW: no output transpose


# ----------------------------------------------------------------------------
# Parameter init (deterministic, synthetic) and forward pass
# ----------------------------------------------------------------------------
def init_params(key, in_channels, out_channels, num_deconv_filters=(32, 32)):
    params = {"deconv": []}
    cin = in_channels
    k = key
    for cf in num_deconv_filters:
        k, k1, k2, k3, k4, k5 = jax.random.split(k, 6)
        params["deconv"].append(
            {
                "w": 0.1 * jax.random.normal(k1, (cin, cf, 4, 4), jnp.float32),
                "gamma": 1.0 + 0.1 * jax.random.normal(k2, (cf,), jnp.float32),
                "beta": 0.1 * jax.random.normal(k3, (cf,), jnp.float32),
                "mean": 0.1 * jax.random.normal(k4, (cf,), jnp.float32),
                "var": jax.random.uniform(k5, (cf,), jnp.float32, minval=0.5, maxval=1.5),
            }
        )
        cin = cf
    k, k1, k2 = jax.random.split(k, 3)
    params["final_w"] = 0.1 * jax.random.normal(k1, (out_channels, cin, 1, 1), jnp.float32)
    params["final_b"] = 0.1 * jax.random.normal(k2, (out_channels,), jnp.float32)
    return params


@jax.jit
def topdown_head_forward(x_nchw, params, eps=1e-5):
    x = jnp.transpose(x_nchw, (0, 2, 3, 1))  # NCHW -> NHWC (channels in lanes)
    for layer in params["deconv"]:
        scale = layer["gamma"] / jnp.sqrt(layer["var"] + eps)
        bias = layer["beta"] - layer["mean"] * scale
        x = fused_deconv_bn_relu(x, layer["w"], scale, bias)
    return final_conv1x1_nchw(x, params["final_w"], params["final_b"])


# Pure-JAX f32 reference (XLA convs) for correctness checking.
def reference_forward(x_nchw, params, eps=1e-5):
    x = x_nchw
    for layer in params["deconv"]:
        w = layer["w"]  # (Cin, Cout, 4, 4)
        rhs = jnp.transpose(jnp.flip(w, axis=(2, 3)), (1, 0, 2, 3))  # (Cout, Cin, 4, 4)
        x = lax.conv_general_dilated(
            x, rhs, window_strides=(1, 1), padding=((2, 2), (2, 2)),
            lhs_dilation=(2, 2), dimension_numbers=("NCHW", "OIHW", "NCHW"))
        scale = layer["gamma"] / jnp.sqrt(layer["var"] + eps)
        bias = layer["beta"] - layer["mean"] * scale
        x = jnp.maximum(x * scale[None, :, None, None] + bias[None, :, None, None], 0.0)
    x = lax.conv_general_dilated(
        x, params["final_w"], (1, 1), ((0, 0), (0, 0)),
        dimension_numbers=("NCHW", "OIHW", "NCHW"))
    return x + params["final_b"][None, :, None, None]


if __name__ == "__main__":
    key = jax.random.PRNGKey(0)
    kx, kp = jax.random.split(key)

    # Small shapes: batch=2, in_channels=16, spatial 8x8, 8 output keypoints.
    N, Cin, H, W = 2, 16, 8, 8
    out_channels = 8
    x = jax.random.normal(kx, (N, Cin, H, W), jnp.float32)
    params = init_params(kp, Cin, out_channels, num_deconv_filters=(32, 32))

    out = jax.block_until_ready(topdown_head_forward(x, params))

    # Shape check: two stride-2 deconvs -> 4x spatial upsample, NCHW output.
    assert out.shape == (N, out_channels, 4 * H, 4 * W), out.shape

    # bf16 MXU operands vs. a pure-f32 XLA reference -> loose tolerances.
    ref = jax.block_until_ready(reference_forward(x, params))
    np.testing.assert_allclose(np.asarray(out), np.asarray(ref), rtol=5e-2, atol=5e-2)

    print("KERNEL_OK")
</pallas_src>

<mosaic_0001>
module attributes {stable_mosaic.version = 11 : i64} {
  func.func @kernel(%arg0: i32, %arg1: memref<1x10x10x16xbf16, #tpu.memory_space<vmem>>, %arg2: memref<4x4x16x32xbf16, #tpu.memory_space<vmem>>, %arg3: memref<1x32xf32, #tpu.memory_space<vmem>>, %arg4: memref<1x8x2x8x64xbf16, #tpu.memory_space<vmem>>) attributes {dimension_semantics = [#tpu.dimension_semantics<parallel>], iteration_bounds = array<i64: 2>, scalar_prefetch = 0 : i64, scratch_operands = 0 : i64, tpu.core_type = #tpu.core_type<tc>, window_params = [{transform_indices = @transform_0, window_bounds = array<i64: 1, 10, 10, 16>}, {pipeline_mode = #tpu.pipeline_mode<synchronous>, transform_indices = @transform_1, window_bounds = array<i64: 4, 4, 16, 32>}, {pipeline_mode = #tpu.pipeline_mode<synchronous>, transform_indices = @transform_2, window_bounds = array<i64: 1, 32>}, {transform_indices = @transform_3, window_bounds = array<i64: 1, 8, 2, 8, 64>}]} {
    %c0 = arith.constant 0 : index
    %c0_0 = arith.constant 0 : index
    %c0_1 = arith.constant 0 : index
    %c0_2 = arith.constant 0 : index
    %0 = vector.load %arg1[%c0, %c0_0, %c0_1, %c0_2] : memref<1x10x10x16xbf16, #tpu.memory_space<vmem>>, vector<1x8x8x16xbf16>
    %1 = vector.shape_cast %0 : vector<1x8x8x16xbf16> to vector<8x8x16xbf16>
    %2 = vector.shape_cast %1 : vector<8x8x16xbf16> to vector<64x16xbf16>
    %c0_3 = arith.constant 0 : index
    %c0_4 = arith.constant 0 : index
    %c1 = arith.constant 1 : index
    %c0_5 = arith.constant 0 : index
    %3 = vector.load %arg1[%c0_3, %c0_4, %c1, %c0_5] : memref<1x10x10x16xbf16, #tpu.memory_space<vmem>>, vector<1x8x8x16xbf16>
    %4 = vector.shape_cast %3 : vector<1x8x8x16xbf16> to vector<8x8x16xbf16>
    %5 = vector.shape_cast %4 : vector<8x8x16xbf16> to vector<64x16xbf16>
    %c0_6 = arith.constant 0 : index
    %c0_7 = arith.constant 0 : index
    %c2 = arith.constant 2 : index
    %c0_8 = arith.constant 0 : index
    %6 = vector.load %arg1[%c0_6, %c0_7, %c2, %c0_8] : memref<1x10x10x16xbf16, #tpu.memory_space<vmem>>, vector<1x8x8x16xbf16>
    %7 = vector.shape_cast %6 : vector<1x8x8x16xbf16> to vector<8x8x16xbf16>
    %8 = vector.shape_cast %7 : vector<8x8x16xbf16> to vector<64x16xbf16>
    %c0_9 = arith.constant 0 : index
    %c1_10 = arith.constant 1 : index
    %c0_11 = arith.constant 0 : index
    %c0_12 = arith.constant 0 : index
    %9 = vector.load %arg1[%c0_9, %c1_10, %c0_11, %c0_12] : memref<1x10x10x16xbf16, #tpu.memory_space<vmem>>, vector<1x8x8x16xbf16>
    %10 = vector.shape_cast %9 : vector<1x8x8x16xbf16> to vector<8x8x16xbf16>
    %11 = vector.shape_cast %10 : vector<8x8x16xbf16> to vector<64x16xbf16>
    %c0_13 = arith.constant 0 : index
    %c1_14 = arith.constant 1 : index
    %c1_15 = arith.constant 1 : index
    %c0_16 = arith.constant 0 : index
    %12 = vector.load %arg1[%c0_13, %c1_14, %c1_15, %c0_16] : memref<1x10x10x16xbf16, #tpu.memory_space<vmem>>, vector<1x8x8x16xbf16>
    %13 = vector.shape_cast %12 : vector<1x8x8x16xbf16> to vector<8x8x16xbf16>
    %14 = vector.shape_cast %13 : vector<8x8x16xbf16> to vector<64x16xbf16>
    %c0_17 = arith.constant 0 : index
    %c1_18 = arith.constant 1 : index
    %c2_19 = arith.constant 2 : index
    %c0_20 = arith.constant 0 : index
    %15 = vector.load %arg1[%c0_17, %c1_18, %c2_19, %c0_20] : memref<1x10x10x16xbf16, #tpu.memory_space<vmem>>, vector<1x8x8x16xbf16>
    %16 = vector.shape_cast %15 : vector<1x8x8x16xbf16> to vector<8x8x16xbf16>
    %17 = vector.shape_cast %16 : vector<8x8x16xbf16> to vector<64x16xbf16>
    %c0_21 = arith.constant 0 : index
    %c2_22 = arith.constant 2 : index
    %c0_23 = arith.constant 0 : index
    %c0_24 = arith.constant 0 : index
    %18 = vector.load %arg1[%c0_21, %c2_22, %c0_23, %c0_24] : memref<1x10x10x16xbf16, #tpu.memory_space<vmem>>, vector<1x8x8x16xbf16>
    %19 = vector.shape_cast %18 : vector<1x8x8x16xbf16> to vector<8x8x16xbf16>
    %20 = vector.shape_cast %19 : vector<8x8x16xbf16> to vector<64x16xbf16>
    %c0_25 = arith.constant 0 : index
    %c2_26 = arith.constant 2 : index
    %c1_27 = arith.constant 1 : index
    %c0_28 = arith.constant 0 : index
    %21 = vector.load %arg1[%c0_25, %c2_26, %c1_27, %c0_28] : memref<1x10x10x16xbf16, #tpu.memory_space<vmem>>, vector<1x8x8x16xbf16>
    %22 = vector.shape_cast %21 : vector<1x8x8x16xbf16> to vector<8x8x16xbf16>
    %23 = vector.shape_cast %22 : vector<8x8x16xbf16> to vector<64x16xbf16>
    %c0_29 = arith.constant 0 : index
    %c2_30 = arith.constant 2 : index
    %c2_31 = arith.constant 2 : index
    %c0_32 = arith.constant 0 : index
    %24 = vector.load %arg1[%c0_29, %c2_30, %c2_31, %c0_32] : memref<1x10x10x16xbf16, #tpu.memory_space<vmem>>, vector<1x8x8x16xbf16>
    %25 = vector.shape_cast %24 : vector<1x8x8x16xbf16> to vector<8x8x16xbf16>
    %26 = vector.shape_cast %25 : vector<8x8x16xbf16> to vector<64x16xbf16>
    %c0_33 = arith.constant 0 : index
    %c0_34 = arith.constant 0 : index
    %27 = vector.load %arg3[%c0_33, %c0_34] : memref<1x32xf32, #tpu.memory_space<vmem>>, vector<1x32xf32>
    %c0_35 = arith.constant 0 : index
    %c0_36 = arith.constant 0 : index
    %c0_37 = arith.constant 0 : index
    %c0_38 = arith.constant 0 : index
    %28 = vector.load %arg2[%c0_35, %c0_36, %c0_37, %c0_38] : memref<4x4x16x32xbf16, #tpu.memory_space<vmem>>, vector<1x1x16x32xbf16>
    %29 = vector.shape_cast %28 : vector<1x1x16x32xbf16> to vector<16x32xbf16>
    %cst = arith.constant dense<0.000000e+00> : vector<64x32xf32>
    %30 = tpu.matmul %2, %29, %cst {dimension_numbers = #tpu.dot_dimension_numbers<[1], [0], [0], [1], [0, 0, 1, 1], [], []>} : vector<64x16xbf16>, vector<16x32xbf16>, vector<64x32xf32> -> vector<64x32xf32>
    %c0_39 = arith.constant 0 : index
    %c1_40 = arith.constant 1 : index
    %c0_41 = arith.constant 0 : index
    %c0_42 = arith.constant 0 : index
    %31 = vector.load %arg2[%c0_39, %c1_40, %c0_41, %c0_42] : memref<4x4x16x32xbf16, #tpu.memory_space<vmem>>, vector<1x1x16x32xbf16>
    %32 = vector.shape_cast %31 : vector<1x1x16x32xbf16> to vector<16x32xbf16>
    %cst_43 = arith.constant dense<0.000000e+00> : vector<64x32xf32>
    %33 = tpu.matmul %5, %32, %cst_43 {dimension_numbers = #tpu.dot_dimension_numbers<[1], [0], [0], [1], [0, 0, 1, 1], [], []>} : vector<64x16xbf16>, vector<16x32xbf16>, vector<64x32xf32> -> vector<64x32xf32>
    %34 = arith.addf %30, %33 : vector<64x32xf32>
    %c0_44 = arith.constant 0 : index
    %c2_45 = arith.constant 2 : index
    %c0_46 = arith.constant 0 : index
    %c0_47 = arith.constant 0 : index
    %35 = vector.load %arg2[%c0_44, %c2_45, %c0_46, %c0_47] : memref<4x4x16x32xbf16, #tpu.memory_space<vmem>>, vector<1x1x16x32xbf16>
    %36 = vector.shape_cast %35 : vector<1x1x16x32xbf16> to vector<16x32xbf16>
    %cst_48 = arith.constant dense<0.000000e+00> : vector<64x32xf32>
    %37 = tpu.matmul %11, %36, %cst_48 {dimension_numbers = #tpu.dot_dimension_numbers<[1], [0], [0], [1], [0, 0, 1, 1], [], []>} : vector<64x16xbf16>, vector<16x32xbf16>, vector<64x32xf32> -> vector<64x32xf32>
    %38 = arith.addf %34, %37 : vector<64x32xf32>
    %c0_49 = arith.constant 0 : index
    %c3 = arith.constant 3 : index
    %c0_50 = arith.constant 0 : index
    %c0_51 = arith.constant 0 : index
    %39 = vector.load %arg2[%c0_49, %c3, %c0_50, %c0_51] : memref<4x4x16x32xbf16, #tpu.memory_space<vmem>>, vector<1x1x16x32xbf16>
    %40 = vector.shape_cast %39 : vector<1x1x16x32xbf16> to vector<16x32xbf16>
    %cst_52 = arith.constant dense<0.000000e+00> : vector<64x32xf32>
    %41 = tpu.matmul %14, %40, %cst_52 {dimension_numbers = #tpu.dot_dimension_numbers<[1], [0], [0], [1], [0, 0, 1, 1], [], []>} : vector<64x16xbf16>, vector<16x32xbf16>, vector<64x32xf32> -> vector<64x32xf32>
    %42 = arith.addf %38, %41 : vector<64x32xf32>
    %43 = vector.broadcast %27 : vector<1x32xf32> to vector<64x32xf32>
    %44 = arith.addf %42, %43 : vector<64x32xf32>
    %cst_53 = arith.constant 0.000000e+00 : f32
    %45 = vector.broadcast %cst_53 : f32 to vector<64x32xf32>
    %46 = arith.maximumf %44, %45 : vector<64x32xf32>
    %47 = arith.truncf %46 : vector<64x32xf32> to vector<64x32xbf16>
    %48 = vector.shape_cast %47 : vector<64x32xbf16> to vector<8x8x32xbf16>
    %c0_54 = arith.constant 0 : index
    %c0_55 = arith.constant 0 : index
    %c0_56 = arith.constant 0 : index
    %c0_57 = arith.constant 0 : index
    %c0_58 = arith.constant 0 : index
    %49 = vector.load %arg4[%c0_54, %c0_55, %c0_56, %c0_57, %c0_58] : memref<1x8x2x8x64xbf16, #tpu.memory_space<vmem>>, vector<1x8x1x8x32xbf16>
    %50 = vector.shape_cast %49 : vector<1x8x1x8x32xbf16> to vector<8x8x32xbf16>
    %51 = vector.shape_cast %48 : vector<8x8x32xbf16> to vector<1x8x1x8x32xbf16>
    tpu.vector_store %arg4[%c0_54, %c0_55, %c0_56, %c0_57, %c0_58], %51 {strides = array<i32>} : memref<1x8x2x8x64xbf16, #tpu.memory_space<vmem>>, vector<1x8x1x8x32xbf16>,
    %c1_59 = arith.constant 1 : index
    %c0_60 = arith.constant 0 : index
    %c0_61 = arith.constant 0 : index
    %c0_62 = arith.constant 0 : index
    %52 = vector.load %arg2[%c1_59, %c0_60, %c0_61, %c0_62] : memref<4x4x16x32xbf16, #tpu.memory_space<vmem>>, vector<1x1x16x32xbf16>
    %53 = vector.shape_cast %52 : vector<1x1x16x32xbf16> to vector<16x32xbf16>
    %cst_63 = arith.constant dense<0.000000e+00> : vector<64x32xf32>
    %54 = tpu.matmul %5, %53, %cst_63 {dimension_numbers = #tpu.dot_dimension_numbers<[1], [0], [0], [1], [0, 0, 1, 1], [], []>} : vector<64x16xbf16>, vector<16x32xbf16>, vector<64x32xf32> -> vector<64x32xf32>
    %c1_64 = arith.constant 1 : index
    %c1_65 = arith.constant 1 : index
    %c0_66 = arith.constant 0 : index
    %c0_67 = arith.constant 0 : index
    %55 = vector.load %arg2[%c1_64, %c1_65, %c0_66, %c0_67] : memref<4x4x16x32xbf16, #tpu.memory_space<vmem>>, vector<1x1x16x32xbf16>
    %56 = vector.shape_cast %55 : vector<1x1x16x32xbf16> to vector<16x32xbf16>
    %cst_68 = arith.constant dense<0.000000e+00> : vector<64x32xf32>
    %57 = tpu.matmul %8, %56, %cst_68 {dimension_numbers = #tpu.dot_dimension_numbers<[1], [0], [0], [1], [0, 0, 1, 1], [], []>} : vector<64x16xbf16>, vector<16x32xbf16>, vector<64x32xf32> -> vector<64x32xf32>
    %58 = arith.addf %54, %57 : vector<64x32xf32>
    %c1_69 = arith.constant 1 : index
    %c2_70 = arith.constant 2 : index
    %c0_71 = arith.constant 0 : index
    %c0_72 = arith.constant 0 : index
    %59 = vector.load %arg2[%c1_69, %c2_70, %c0_71, %c0_72] : memref<4x4x16x32xbf16, #tpu.memory_space<vmem>>, vector<1x1x16x32xbf16>
    %60 = vector.shape_cast %59 : vector<1x1x16x32xbf16> to vector<16x32xbf16>
    %cst_73 = arith.constant dense<0.000000e+00> : vector<64x32xf32>
    %61 = tpu.matmul %14, %60, %cst_73 {dimension_numbers = #tpu.dot_dimension_numbers<[1], [0], [0], [1], [0, 0, 1, 1], [], []>} : vector<64x16xbf16>, vector<16x32xbf16>, vector<64x32xf32> -> vector<64x32xf32>
    %62 = arith.addf %58, %61 : vector<64x32xf32>
    %c1_74 = arith.constant 1 : index
    %c3_75 = arith.constant 3 : index
    %c0_76 = arith.constant 0 : index
    %c0_77 = arith.constant 0 : index
    %63 = vector.load %arg2[%c1_74, %c3_75, %c0_76, %c0_77] : memref<4x4x16x32xbf16, #tpu.memory_space<vmem>>, vector<1x1x16x32xbf16>
    %64 = vector.shape_cast %63 : vector<1x1x16x32xbf16> to vector<16x32xbf16>
    %cst_78 = arith.constant dense<0.000000e+00> : vector<64x32xf32>
    %65 = tpu.matmul %17, %64, %cst_78 {dimension_numbers = #tpu.dot_dimension_numbers<[1], [0], [0], [1], [0, 0, 1, 1], [], []>} : vector<64x16xbf16>, vector<16x32xbf16>, vector<64x32xf32> -> vector<64x32xf32>
    %66 = arith.addf %62, %65 : vector<64x32xf32>
    %67 = vector.broadcast %27 : vector<1x32xf32> to vector<64x32xf32>
    %68 = arith.addf %66, %67 : vector<64x32xf32>
    %cst_79 = arith.constant 0.000000e+00 : f32
    %69 = vector.broadcast %cst_79 : f32 to vector<64x32xf32>
    %70 = arith.maximumf %68, %69 : vector<64x32xf32>
    %71 = arith.truncf %70 : vector<64x32xf32> to vector<64x32xbf16>
    %72 = vector.shape_cast %71 : vector<64x32xbf16> to vector<8x8x32xbf16>
    %c0_80 = arith.constant 0 : index
    %c0_81 = arith.constant 0 : index
    %c0_82 = arith.constant 0 : index
    %c0_83 = arith.constant 0 : index
    %c32 = arith.constant 32 : index
    %73 = vector.load %arg4[%c0_80, %c0_81, %c0_82, %c0_83, %c32] : memref<1x8x2x8x64xbf16, #tpu.memory_space<vmem>>, vector<1x8x1x8x32xbf16>
    %74 = vector.shape_cast %73 : vector<1x8x1x8x32xbf16> to vector<8x8x32xbf16>
    %75 = vector.shape_cast %72 : vector<8x8x32xbf16> to vector<1x8x1x8x32xbf16>
    tpu.vector_store %arg4[%c0_80, %c0_81, %c0_82, %c0_83, %c32], %75 {strides = array<i32>} : memref<1x8x2x8x64xbf16, #tpu.memory_space<vmem>>, vector<1x8x1x8x32xbf16>,
    %c2_84 = arith.constant 2 : index
    %c0_85 = arith.constant 0 : index
    %c0_86 = arith.constant 0 : index
    %c0_87 = arith.constant 0 : index
    %76 = vector.load %arg2[%c2_84, %c0_85, %c0_86, %c0_87] : memref<4x4x16x32xbf16, #tpu.memory_space<vmem>>, vector<1x1x16x32xbf16>
    %77 = vector.shape_cast %76 : vector<1x1x16x32xbf16> to vector<16x32xbf16>
    %cst_88 = arith.constant dense<0.000000e+00> : vector<64x32xf32>
    %78 = tpu.matmul %11, %77, %cst_88 {dimension_numbers = #tpu.dot_dimension_numbers<[1], [0], [0], [1], [0, 0, 1, 1], [], []>} : vector<64x16xbf16>, vector<16x32xbf16>, vector<64x32xf32> -> vector<64x32xf32>
    %c2_89 = arith.constant 2 : index
    %c1_90 = arith.constant 1 : index
    %c0_91 = arith.constant 0 : index
    %c0_92 = arith.constant 0 : index
    %79 = vector.load %arg2[%c2_89, %c1_90, %c0_91, %c0_92] : memref<4x4x16x32xbf16, #tpu.memory_space<vmem>>, vector<1x1x16x32xbf16>
    %80 = vector.shape_cast %79 : vector<1x1x16x32xbf16> to vector<16x32xbf16>
    %cst_93 = arith.constant dense<0.000000e+00> : vector<64x32xf32>
    %81 = tpu.matmul %14, %80, %cst_93 {dimension_numbers = #tpu.dot_dimension_numbers<[1], [0], [0], [1], [0, 0, 1, 1], [], []>} : vector<64x16xbf16>, vector<16x32xbf16>, vector<64x32xf32> -> vector<64x32xf32>
    %82 = arith.addf %78, %81 : vector<64x32xf32>
    %c2_94 = arith.constant 2 : index
    %c2_95 = arith.constant 2 : index
    %c0_96 = arith.constant 0 : index
    %c0_97 = arith.constant 0 : index
    %83 = vector.load %arg2[%c2_94, %c2_95, %c0_96, %c0_97] : memref<4x4x16x32xbf16, #tpu.memory_space<vmem>>, vector<1x1x16x32xbf16>
    %84 = vector.shape_cast %83 : vector<1x1x16x32xbf16> to vector<16x32xbf16>
    %cst_98 = arith.constant dense<0.000000e+00> : vector<64x32xf32>
    %85 = tpu.matmul %20, %84, %cst_98 {dimension_numbers = #tpu.dot_dimension_numbers<[1], [0], [0], [1], [0, 0, 1, 1], [], []>} : vector<64x16xbf16>, vector<16x32xbf16>, vector<64x32xf32> -> vector<64x32xf32>
    %86 = arith.addf %82, %85 : vector<64x32xf32>
    %c2_99 = arith.constant 2 : index
    %c3_100 = arith.constant 3 : index
    %c0_101 = arith.constant 0 : index
    %c0_102 = arith.constant 0 : index
    %87 = vector.load %arg2[%c2_99, %c3_100, %c0_101, %c0_102] : memref<4x4x16x32xbf16, #tpu.memory_space<vmem>>, vector<1x1x16x32xbf16>
    %88 = vector.shape_cast %87 : vector<1x1x16x32xbf16> to vector<16x32xbf16>
    %cst_103 = arith.constant dense<0.000000e+00> : vector<64x32xf32>
    %89 = tpu.matmul %23, %88, %cst_103 {dimension_numbers = #tpu.dot_dimension_numbers<[1], [0], [0], [1], [0, 0, 1, 1], [], []>} : vector<64x16xbf16>, vector<16x32xbf16>, vector<64x32xf32> -> vector<64x32xf32>
    %90 = arith.addf %86, %89 : vector<64x32xf32>
    %91 = vector.broadcast %27 : vector<1x32xf32> to vector<64x32xf32>
    %92 = arith.addf %90, %91 : vector<64x32xf32>
    %cst_104 = arith.constant 0.000000e+00 : f32
    %93 = vector.broadcast %cst_104 : f32 to vector<64x32xf32>
    %94 = arith.maximumf %92, %93 : vector<64x32xf32>
    %95 = arith.truncf %94 : vector<64x32xf32> to vector<64x32xbf16>
    %96 = vector.shape_cast %95 : vector<64x32xbf16> to vector<8x8x32xbf16>
    %c0_105 = arith.constant 0 : index
    %c0_106 = arith.constant 0 : index
    %c1_107 = arith.constant 1 : index
    %c0_108 = arith.constant 0 : index
    %c0_109 = arith.constant 0 : index
    %97 = vector.load %arg4[%c0_105, %c0_106, %c1_107, %c0_108, %c0_109] : memref<1x8x2x8x64xbf16, #tpu.memory_space<vmem>>, vector<1x8x1x8x32xbf16>
    %98 = vector.shape_cast %97 : vector<1x8x1x8x32xbf16> to vector<8x8x32xbf16>
    %99 = vector.shape_cast %96 : vector<8x8x32xbf16> to vector<1x8x1x8x32xbf16>
    tpu.vector_store %arg4[%c0_105, %c0_106, %c1_107, %c0_108, %c0_109], %99 {strides = array<i32>} : memref<1x8x2x8x64xbf16, #tpu.memory_space<vmem>>, vector<1x8x1x8x32xbf16>,
    %c3_110 = arith.constant 3 : index
    %c0_111 = arith.constant 0 : index
    %c0_112 = arith.constant 0 : index
    %c0_113 = arith.constant 0 : index
    %100 = vector.load %arg2[%c3_110, %c0_111, %c0_112, %c0_113] : memref<4x4x16x32xbf16, #tpu.memory_space<vmem>>, vector<1x1x16x32xbf16>
    %101 = vector.shape_cast %100 : vector<1x1x16x32xbf16> to vector<16x32xbf16>
    %cst_114 = arith.constant dense<0.000000e+00> : vector<64x32xf32>
    %102 = tpu.matmul %14, %101, %cst_114 {dimension_numbers = #tpu.dot_dimension_numbers<[1], [0], [0], [1], [0, 0, 1, 1], [], []>} : vector<64x16xbf16>, vector<16x32xbf16>, vector<64x32xf32> -> vector<64x32xf32>
    %c3_115 = arith.constant 3 : index
    %c1_116 = arith.constant 1 : index
    %c0_117 = arith.constant 0 : index
    %c0_118 = arith.constant 0 : index
    %103 = vector.load %arg2[%c3_115, %c1_116, %c0_117, %c0_118] : memref<4x4x16x32xbf16, #tpu.memory_space<vmem>>, vector<1x1x16x32xbf16>
    %104 = vector.shape_cast %103 : vector<1x1x16x32xbf16> to vector<16x32xbf16>
    %cst_119 = arith.constant dense<0.000000e+00> : vector<64x32xf32>
    %105 = tpu.matmul %17, %104, %cst_119 {dimension_numbers = #tpu.dot_dimension_numbers<[1], [0], [0], [1], [0, 0, 1, 1], [], []>} : vector<64x16xbf16>, vector<16x32xbf16>, vector<64x32xf32> -> vector<64x32xf32>
    %106 = arith.addf %102, %105 : vector<64x32xf32>
    %c3_120 = arith.constant 3 : index
    %c2_121 = arith.constant 2 : index
    %c0_122 = arith.constant 0 : index
    %c0_123 = arith.constant 0 : index
    %107 = vector.load %arg2[%c3_120, %c2_121, %c0_122, %c0_123] : memref<4x4x16x32xbf16, #tpu.memory_space<vmem>>, vector<1x1x16x32xbf16>
    %108 = vector.shape_cast %107 : vector<1x1x16x32xbf16> to vector<16x32xbf16>
    %cst_124 = arith.constant dense<0.000000e+00> : vector<64x32xf32>
    %109 = tpu.matmul %23, %108, %cst_124 {dimension_numbers = #tpu.dot_dimension_numbers<[1], [0], [0], [1], [0, 0, 1, 1], [], []>} : vector<64x16xbf16>, vector<16x32xbf16>, vector<64x32xf32> -> vector<64x32xf32>
    %110 = arith.addf %106, %109 : vector<64x32xf32>
    %c3_125 = arith.constant 3 : index
    %c3_126 = arith.constant 3 : index
    %c0_127 = arith.constant 0 : index
    %c0_128 = arith.constant 0 : index
    %111 = vector.load %arg2[%c3_125, %c3_126, %c0_127, %c0_128] : memref<4x4x16x32xbf16, #tpu.memory_space<vmem>>, vector<1x1x16x32xbf16>
    %112 = vector.shape_cast %111 : vector<1x1x16x32xbf16> to vector<16x32xbf16>
    %cst_129 = arith.constant dense<0.000000e+00> : vector<64x32xf32>
    %113 = tpu.matmul %26, %112, %cst_129 {dimension_numbers = #tpu.dot_dimension_numbers<[1], [0], [0], [1], [0, 0, 1, 1], [], []>} : vector<64x16xbf16>, vector<16x32xbf16>, vector<64x32xf32> -> vector<64x32xf32>
    %114 = arith.addf %110, %113 : vector<64x32xf32>
    %115 = vector.broadcast %27 : vector<1x32xf32> to vector<64x32xf32>
    %116 = arith.addf %114, %115 : vector<64x32xf32>
    %cst_130 = arith.constant 0.000000e+00 : f32
    %117 = vector.broadcast %cst_130 : f32 to vector<64x32xf32>
    %118 = arith.maximumf %116, %117 : vector<64x32xf32>
    %119 = arith.truncf %118 : vector<64x32xf32> to vector<64x32xbf16>
    %120 = vector.shape_cast %119 : vector<64x32xbf16> to vector<8x8x32xbf16>
    %c0_131 = arith.constant 0 : index
    %c0_132 = arith.constant 0 : index
    %c1_133 = arith.constant 1 : index
    %c0_134 = arith.constant 0 : index
    %c32_135 = arith.constant 32 : index
    %121 = vector.load %arg4[%c0_131, %c0_132, %c1_133, %c0_134, %c32_135] : memref<1x8x2x8x64xbf16, #tpu.memory_space<vmem>>, vector<1x8x1x8x32xbf16>
    %122 = vector.shape_cast %121 : vector<1x8x1x8x32xbf16> to vector<8x8x32xbf16>
    %123 = vector.shape_cast %120 : vector<8x8x32xbf16> to vector<1x8x1x8x32xbf16>
    tpu.vector_store %arg4[%c0_131, %c0_132, %c1_133, %c0_134, %c32_135], %123 {strides = array<i32>} : memref<1x8x2x8x64xbf16, #tpu.memory_space<vmem>>, vector<1x8x1x8x32xbf16>,
    return
  }
  func.func @transform_0(%arg0: i32) -> (i32, i32, i32, i32) {
    %c0_i32 = arith.constant 0 : i32
    %c0_i32_0 = arith.constant 0 : i32
    %c0_i32_1 = arith.constant 0 : i32
    %c0_i32_2 = arith.constant 0 : i32
    return %arg0, %c0_i32, %c0_i32_0, %c0_i32_1 : i32, i32, i32, i32
  }
  func.func @transform_1(%arg0: i32) -> (i32, i32, i32, i32) {
    %c0_i32 = arith.constant 0 : i32
    %c0_i32_0 = arith.constant 0 : i32
    %c0_i32_1 = arith.constant 0 : i32
    %c0_i32_2 = arith.constant 0 : i32
    %c0_i32_3 = arith.constant 0 : i32
    return %c0_i32, %c0_i32_0, %c0_i32_1, %c0_i32_2 : i32, i32, i32, i32
  }
  func.func @transform_2(%arg0: i32) -> (i32, i32) {
    %c0_i32 = arith.constant 0 : i32
    %c0_i32_0 = arith.constant 0 : i32
    %c0_i32_1 = arith.constant 0 : i32
    return %c0_i32, %c0_i32_0 : i32, i32
  }
  func.func @transform_3(%arg0: i32) -> (i32, i32, i32, i32, i32) {
    %c0_i32 = arith.constant 0 : i32
    %c0_i32_0 = arith.constant 0 : i32
    %c0_i32_1 = arith.constant 0 : i32
    %c0_i32_2 = arith.constant 0 : i32
    %c0_i32_3 = arith.constant 0 : i32
    return %arg0, %c0_i32, %c0_i32_0, %c0_i32_1, %c0_i32_2 : i32, i32, i32, i32, i32
  }
}

module attributes {stable_mosaic.version = 11 : i64} {
  func.func @kernel(%arg0: i32, %arg1: memref<1x18x18x32xbf16, #tpu.memory_space<vmem>>, %arg2: memref<4x4x32x32xbf16, #tpu.memory_space<vmem>>, %arg3: memref<1x32xf32, #tpu.memory_space<vmem>>, %arg4: memref<1x16x2x16x64xbf16, #tpu.memory_space<vmem>>) attributes {dimension_semantics = [#tpu.dimension_semantics<parallel>], iteration_bounds = array<i64: 2>, scalar_prefetch = 0 : i64, scratch_operands = 0 : i64, tpu.core_type = #tpu.core_type<tc>, window_params = [{transform_indices = @transform_0, window_bounds = array<i64: 1, 18, 18, 32>}, {pipeline_mode = #tpu.pipeline_mode<synchronous>, transform_indices = @transform_1, window_bounds = array<i64: 4, 4, 32, 32>}, {pipeline_mode = #tpu.pipeline_mode<synchronous>, transform_indices = @transform_2, window_bounds = array<i64: 1, 32>}, {transform_indices = @transform_3, window_bounds = array<i64: 1, 16, 2, 16, 64>}]} {
    %c0 = arith.constant 0 : index
    %c0_0 = arith.constant 0 : index
    %c0_1 = arith.constant 0 : index
    %c0_2 = arith.constant 0 : index
    %0 = vector.load %arg1[%c0, %c0_0, %c0_1, %c0_2] : memref<1x18x18x32xbf16, #tpu.memory_space<vmem>>, vector<1x16x16x32xbf16>
    %1 = vector.shape_cast %0 : vector<1x16x16x32xbf16> to vector<16x16x32xbf16>
    %2 = vector.shape_cast %1 : vector<16x16x32xbf16> to vector<256x32xbf16>
    %c0_3 = arith.constant 0 : index
    %c0_4 = arith.constant 0 : index
    %c1 = arith.constant 1 : index
    %c0_5 = arith.constant 0 : index
    %3 = vector.load %arg1[%c0_3, %c0_4, %c1, %c0_5] : memref<1x18x18x32xbf16, #tpu.memory_space<vmem>>, vector<1x16x16x32xbf16>
    %4 = vector.shape_cast %3 : vector<1x16x16x32xbf16> to vector<16x16x32xbf16>
    %5 = vector.shape_cast %4 : vector<16x16x32xbf16> to vector<256x32xbf16>
    %c0_6 = arith.constant 0 : index
    %c0_7 = arith.constant 0 : index
    %c2 = arith.constant 2 : index
    %c0_8 = arith.constant 0 : index
    %6 = vector.load %arg1[%c0_6, %c0_7, %c2, %c0_8] : memref<1x18x18x32xbf16, #tpu.memory_space<vmem>>, vector<1x16x16x32xbf16>
    %7 = vector.shape_cast %6 : vector<1x16x16x32xbf16> to vector<16x16x32xbf16>
    %8 = vector.shape_cast %7 : vector<16x16x32xbf16> to vector<256x32xbf16>
    %c0_9 = arith.constant 0 : index
    %c1_10 = arith.constant 1 : index
    %c0_11 = arith.constant 0 : index
    %c0_12 = arith.constant 0 : index
    %9 = vector.load %arg1[%c0_9, %c1_10, %c0_11, %c0_12] : memref<1x18x18x32xbf16, #tpu.memory_space<vmem>>, vector<1x16x16x32xbf16>
    %10 = vector.shape_cast %9 : vector<1x16x16x32xbf16> to vector<16x16x32xbf16>
    %11 = vector.shape_cast %10 : vector<16x16x32xbf16> to vector<256x32xbf16>
    %c0_13 = arith.constant 0 : index
    %c1_14 = arith.constant 1 : index
    %c1_15 = arith.constant 1 : index
    %c0_16 = arith.constant 0 : index
    %12 = vector.load %arg1[%c0_13, %c1_14, %c1_15, %c0_16] : memref<1x18x18x32xbf16, #tpu.memory_space<vmem>>, vector<1x16x16x32xbf16>
    %13 = vector.shape_cast %12 : vector<1x16x16x32xbf16> to vector<16x16x32xbf16>
    %14 = vector.shape_cast %13 : vector<16x16x32xbf16> to vector<256x32xbf16>
    %c0_17 = arith.constant 0 : index
    %c1_18 = arith.constant 1 : index
    %c2_19 = arith.constant 2 : index
    %c0_20 = arith.constant 0 : index
    %15 = vector.load %arg1[%c0_17, %c1_18, %c2_19, %c0_20] : memref<1x18x18x32xbf16, #tpu.memory_space<vmem>>, vector<1x16x16x32xbf16>
    %16 = vector.shape_cast %15 : vector<1x16x16x32xbf16> to vector<16x16x32xbf16>
    %17 = vector.shape_cast %16 : vector<16x16x32xbf16> to vector<256x32xbf16>
    %c0_21 = arith.constant 0 : index
    %c2_22 = arith.constant 2 : index
    %c0_23 = arith.constant 0 : index
    %c0_24 = arith.constant 0 : index
    %18 = vector.load %arg1[%c0_21, %c2_22, %c0_23, %c0_24] : memref<1x18x18x32xbf16, #tpu.memory_space<vmem>>, vector<1x16x16x32xbf16>
    %19 = vector.shape_cast %18 : vector<1x16x16x32xbf16> to vector<16x16x32xbf16>
    %20 = vector.shape_cast %19 : vector<16x16x32xbf16> to vector<256x32xbf16>
    %c0_25 = arith.constant 0 : index
    %c2_26 = arith.constant 2 : index
    %c1_27 = arith.constant 1 : index
    %c0_28 = arith.constant 0 : index
    %21 = vector.load %arg1[%c0_25, %c2_26, %c1_27, %c0_28] : memref<1x18x18x32xbf16, #tpu.memory_space<vmem>>, vector<1x16x16x32xbf16>
    %22 = vector.shape_cast %21 : vector<1x16x16x32xbf16> to vector<16x16x32xbf16>
    %23 = vector.shape_cast %22 : vector<16x16x32xbf16> to vector<256x32xbf16>
    %c0_29 = arith.constant 0 : index
    %c2_30 = arith.constant 2 : index
    %c2_31 = arith.constant 2 : index
    %c0_32 = arith.constant 0 : index
    %24 = vector.load %arg1[%c0_29, %c2_30, %c2_31, %c0_32] : memref<1x18x18x32xbf16, #tpu.memory_space<vmem>>, vector<1x16x16x32xbf16>
    %25 = vector.shape_cast %24 : vector<1x16x16x32xbf16> to vector<16x16x32xbf16>
    %26 = vector.shape_cast %25 : vector<16x16x32xbf16> to vector<256x32xbf16>
    %c0_33 = arith.constant 0 : index
    %c0_34 = arith.constant 0 : index
    %27 = vector.load %arg3[%c0_33, %c0_34] : memref<1x32xf32, #tpu.memory_space<vmem>>, vector<1x32xf32>
    %c0_35 = arith.constant 0 : index
    %c0_36 = arith.constant 0 : index
    %c0_37 = arith.constant 0 : index
    %c0_38 = arith.constant 0 : index
    %28 = vector.load %arg2[%c0_35, %c0_36, %c0_37, %c0_38] : memref<4x4x32x32xbf16, #tpu.memory_space<vmem>>, vector<1x1x32x32xbf16>
    %29 = vector.shape_cast %28 : vector<1x1x32x32xbf16> to vector<32x32xbf16>
    %cst = arith.constant dense<0.000000e+00> : vector<256x32xf32>
    %30 = tpu.matmul %2, %29, %cst {dimension_numbers = #tpu.dot_dimension_numbers<[1], [0], [0], [1], [0, 0, 1, 1], [], []>} : vector<256x32xbf16>, vector<32x32xbf16>, vector<256x32xf32> -> vector<256x32xf32>
    %c0_39 = arith.constant 0 : index
    %c1_40 = arith.constant 1 : index
    %c0_41 = arith.constant 0 : index
    %c0_42 = arith.constant 0 : index
    %31 = vector.load %arg2[%c0_39, %c1_40, %c0_41, %c0_42] : memref<4x4x32x32xbf16, #tpu.memory_space<vmem>>, vector<1x1x32x32xbf16>
    %32 = vector.shape_cast %31 : vector<1x1x32x32xbf16> to vector<32x32xbf16>
    %cst_43 = arith.constant dense<0.000000e+00> : vector<256x32xf32>
    %33 = tpu.matmul %5, %32, %cst_43 {dimension_numbers = #tpu.dot_dimension_numbers<[1], [0], [0], [1], [0, 0, 1, 1], [], []>} : vector<256x32xbf16>, vector<32x32xbf16>, vector<256x32xf32> -> vector<256x32xf32>
    %34 = arith.addf %30, %33 : vector<256x32xf32>
    %c0_44 = arith.constant 0 : index
    %c2_45 = arith.constant 2 : index
    %c0_46 = arith.constant 0 : index
    %c0_47 = arith.constant 0 : index
    %35 = vector.load %arg2[%c0_44, %c2_45, %c0_46, %c0_47] : memref<4x4x32x32xbf16, #tpu.memory_space<vmem>>, vector<1x1x32x32xbf16>
    %36 = vector.shape_cast %35 : vector<1x1x32x32xbf16> to vector<32x32xbf16>
    %cst_48 = arith.constant dense<0.000000e+00> : vector<256x32xf32>
    %37 = tpu.matmul %11, %36, %cst_48 {dimension_numbers = #tpu.dot_dimension_numbers<[1], [0], [0], [1], [0, 0, 1, 1], [], []>} : vector<256x32xbf16>, vector<32x32xbf16>, vector<256x32xf32> -> vector<256x32xf32>
    %38 = arith.addf %34, %37 : vector<256x32xf32>
    %c0_49 = arith.constant 0 : index
    %c3 = arith.constant 3 : index
    %c0_50 = arith.constant 0 : index
    %c0_51 = arith.constant 0 : index
    %39 = vector.load %arg2[%c0_49, %c3, %c0_50, %c0_51] : memref<4x4x32x32xbf16, #tpu.memory_space<vmem>>, vector<1x1x32x32xbf16>
    %40 = vector.shape_cast %39 : vector<1x1x32x32xbf16> to vector<32x32xbf16>
    %cst_52 = arith.constant dense<0.000000e+00> : vector<256x32xf32>
    %41 = tpu.matmul %14, %40, %cst_52 {dimension_numbers = #tpu.dot_dimension_numbers<[1], [0], [0], [1], [0, 0, 1, 1], [], []>} : vector<256x32xbf16>, vector<32x32xbf16>, vector<256x32xf32> -> vector<256x32xf32>
    %42 = arith.addf %38, %41 : vector<256x32xf32>
    %43 = vector.broadcast %27 : vector<1x32xf32> to vector<256x32xf32>
    %44 = arith.addf %42, %43 : vector<256x32xf32>
    %cst_53 = arith.constant 0.000000e+00 : f32
    %45 = vector.broadcast %cst_53 : f32 to vector<256x32xf32>
    %46 = arith.maximumf %44, %45 : vector<256x32xf32>
    %47 = arith.truncf %46 : vector<256x32xf32> to vector<256x32xbf16>
    %48 = vector.shape_cast %47 : vector<256x32xbf16> to vector<16x16x32xbf16>
    %c0_54 = arith.constant 0 : index
    %c0_55 = arith.constant 0 : index
    %c0_56 = arith.constant 0 : index
    %c0_57 = arith.constant 0 : index
    %c0_58 = arith.constant 0 : index
    %49 = vector.load %arg4[%c0_54, %c0_55, %c0_56, %c0_57, %c0_58] : memref<1x16x2x16x64xbf16, #tpu.memory_space<vmem>>, vector<1x16x1x16x32xbf16>
    %50 = vector.shape_cast %49 : vector<1x16x1x16x32xbf16> to vector<16x16x32xbf16>
    %51 = vector.shape_cast %48 : vector<16x16x32xbf16> to vector<1x16x1x16x32xbf16>
    tpu.vector_store %arg4[%c0_54, %c0_55, %c0_56, %c0_57, %c0_58], %51 {strides = array<i32>} : memref<1x16x2x16x64xbf16, #tpu.memory_space<vmem>>, vector<1x16x1x16x32xbf16>,
    %c1_59 = arith.constant 1 : index
    %c0_60 = arith.constant 0 : index
    %c0_61 = arith.constant 0 : index
    %c0_62 = arith.constant 0 : index
    %52 = vector.load %arg2[%c1_59, %c0_60, %c0_61, %c0_62] : memref<4x4x32x32xbf16, #tpu.memory_space<vmem>>, vector<1x1x32x32xbf16>
    %53 = vector.shape_cast %52 : vector<1x1x32x32xbf16> to vector<32x32xbf16>
    %cst_63 = arith.constant dense<0.000000e+00> : vector<256x32xf32>
    %54 = tpu.matmul %5, %53, %cst_63 {dimension_numbers = #tpu.dot_dimension_numbers<[1], [0], [0], [1], [0, 0, 1, 1], [], []>} : vector<256x32xbf16>, vector<32x32xbf16>, vector<256x32xf32> -> vector<256x32xf32>
    %c1_64 = arith.constant 1 : index
    %c1_65 = arith.constant 1 : index
    %c0_66 = arith.constant 0 : index
    %c0_67 = arith.constant 0 : index
    %55 = vector.load %arg2[%c1_64, %c1_65, %c0_66, %c0_67] : memref<4x4x32x32xbf16, #tpu.memory_space<vmem>>, vector<1x1x32x32xbf16>
    %56 = vector.shape_cast %55 : vector<1x1x32x32xbf16> to vector<32x32xbf16>
    %cst_68 = arith.constant dense<0.000000e+00> : vector<256x32xf32>
    %57 = tpu.matmul %8, %56, %cst_68 {dimension_numbers = #tpu.dot_dimension_numbers<[1], [0], [0], [1], [0, 0, 1, 1], [], []>} : vector<256x32xbf16>, vector<32x32xbf16>, vector<256x32xf32> -> vector<256x32xf32>
    %58 = arith.addf %54, %57 : vector<256x32xf32>
    %c1_69 = arith.constant 1 : index
    %c2_70 = arith.constant 2 : index
    %c0_71 = arith.constant 0 : index
    %c0_72 = arith.constant 0 : index
    %59 = vector.load %arg2[%c1_69, %c2_70, %c0_71, %c0_72] : memref<4x4x32x32xbf16, #tpu.memory_space<vmem>>, vector<1x1x32x32xbf16>
    %60 = vector.shape_cast %59 : vector<1x1x32x32xbf16> to vector<32x32xbf16>
    %cst_73 = arith.constant dense<0.000000e+00> : vector<256x32xf32>
    %61 = tpu.matmul %14, %60, %cst_73 {dimension_numbers = #tpu.dot_dimension_numbers<[1], [0], [0], [1], [0, 0, 1, 1], [], []>} : vector<256x32xbf16>, vector<32x32xbf16>, vector<256x32xf32> -> vector<256x32xf32>
    %62 = arith.addf %58, %61 : vector<256x32xf32>
    %c1_74 = arith.constant 1 : index
    %c3_75 = arith.constant 3 : index
    %c0_76 = arith.constant 0 : index
    %c0_77 = arith.constant 0 : index
    %63 = vector.load %arg2[%c1_74, %c3_75, %c0_76, %c0_77] : memref<4x4x32x32xbf16, #tpu.memory_space<vmem>>, vector<1x1x32x32xbf16>
    %64 = vector.shape_cast %63 : vector<1x1x32x32xbf16> to vector<32x32xbf16>
    %cst_78 = arith.constant dense<0.000000e+00> : vector<256x32xf32>
    %65 = tpu.matmul %17, %64, %cst_78 {dimension_numbers = #tpu.dot_dimension_numbers<[1], [0], [0], [1], [0, 0, 1, 1], [], []>} : vector<256x32xbf16>, vector<32x32xbf16>, vector<256x32xf32> -> vector<256x32xf32>
    %66 = arith.addf %62, %65 : vector<256x32xf32>
    %67 = vector.broadcast %27 : vector<1x32xf32> to vector<256x32xf32>
    %68 = arith.addf %66, %67 : vector<256x32xf32>
    %cst_79 = arith.constant 0.000000e+00 : f32
    %69 = vector.broadcast %cst_79 : f32 to vector<256x32xf32>
    %70 = arith.maximumf %68, %69 : vector<256x32xf32>
    %71 = arith.truncf %70 : vector<256x32xf32> to vector<256x32xbf16>
    %72 = vector.shape_cast %71 : vector<256x32xbf16> to vector<16x16x32xbf16>
    %c0_80 = arith.constant 0 : index
    %c0_81 = arith.constant 0 : index
    %c0_82 = arith.constant 0 : index
    %c0_83 = arith.constant 0 : index
    %c32 = arith.constant 32 : index
    %73 = vector.load %arg4[%c0_80, %c0_81, %c0_82, %c0_83, %c32] : memref<1x16x2x16x64xbf16, #tpu.memory_space<vmem>>, vector<1x16x1x16x32xbf16>
    %74 = vector.shape_cast %73 : vector<1x16x1x16x32xbf16> to vector<16x16x32xbf16>
    %75 = vector.shape_cast %72 : vector<16x16x32xbf16> to vector<1x16x1x16x32xbf16>
    tpu.vector_store %arg4[%c0_80, %c0_81, %c0_82, %c0_83, %c32], %75 {strides = array<i32>} : memref<1x16x2x16x64xbf16, #tpu.memory_space<vmem>>, vector<1x16x1x16x32xbf16>,
    %c2_84 = arith.constant 2 : index
    %c0_85 = arith.constant 0 : index
    %c0_86 = arith.constant 0 : index
    %c0_87 = arith.constant 0 : index
    %76 = vector.load %arg2[%c2_84, %c0_85, %c0_86, %c0_87] : memref<4x4x32x32xbf16, #tpu.memory_space<vmem>>, vector<1x1x32x32xbf16>
    %77 = vector.shape_cast %76 : vector<1x1x32x32xbf16> to vector<32x32xbf16>
    %cst_88 = arith.constant dense<0.000000e+00> : vector<256x32xf32>
    %78 = tpu.matmul %11, %77, %cst_88 {dimension_numbers = #tpu.dot_dimension_numbers<[1], [0], [0], [1], [0, 0, 1, 1], [], []>} : vector<256x32xbf16>, vector<32x32xbf16>, vector<256x32xf32> -> vector<256x32xf32>
    %c2_89 = arith.constant 2 : index
    %c1_90 = arith.constant 1 : index
    %c0_91 = arith.constant 0 : index
    %c0_92 = arith.constant 0 : index
    %79 = vector.load %arg2[%c2_89, %c1_90, %c0_91, %c0_92] : memref<4x4x32x32xbf16, #tpu.memory_space<vmem>>, vector<1x1x32x32xbf16>
    %80 = vector.shape_cast %79 : vector<1x1x32x32xbf16> to vector<32x32xbf16>
    %cst_93 = arith.constant dense<0.000000e+00> : vector<256x32xf32>
    %81 = tpu.matmul %14, %80, %cst_93 {dimension_numbers = #tpu.dot_dimension_numbers<[1], [0], [0], [1], [0, 0, 1, 1], [], []>} : vector<256x32xbf16>, vector<32x32xbf16>, vector<256x32xf32> -> vector<256x32xf32>
    %82 = arith.addf %78, %81 : vector<256x32xf32>
    %c2_94 = arith.constant 2 : index
    %c2_95 = arith.constant 2 : index
    %c0_96 = arith.constant 0 : index
    %c0_97 = arith.constant 0 : index
    %83 = vector.load %arg2[%c2_94, %c2_95, %c0_96, %c0_97] : memref<4x4x32x32xbf16, #tpu.memory_space<vmem>>, vector<1x1x32x32xbf16>
    %84 = vector.shape_cast %83 : vector<1x1x32x32xbf16> to vector<32x32xbf16>
    %cst_98 = arith.constant dense<0.000000e+00> : vector<256x32xf32>
    %85 = tpu.matmul %20, %84, %cst_98 {dimension_numbers = #tpu.dot_dimension_numbers<[1], [0], [0], [1], [0, 0, 1, 1], [], []>} : vector<256x32xbf16>, vector<32x32xbf16>, vector<256x32xf32> -> vector<256x32xf32>
    %86 = arith.addf %82, %85 : vector<256x32xf32>
    %c2_99 = arith.constant 2 : index
    %c3_100 = arith.constant 3 : index
    %c0_101 = arith.constant 0 : index
    %c0_102 = arith.constant 0 : index
    %87 = vector.load %arg2[%c2_99, %c3_100, %c0_101, %c0_102] : memref<4x4x32x32xbf16, #tpu.memory_space<vmem>>, vector<1x1x32x32xbf16>
    %88 = vector.shape_cast %87 : vector<1x1x32x32xbf16> to vector<32x32xbf16>
    %cst_103 = arith.constant dense<0.000000e+00> : vector<256x32xf32>
    %89 = tpu.matmul %23, %88, %cst_103 {dimension_numbers = #tpu.dot_dimension_numbers<[1], [0], [0], [1], [0, 0, 1, 1], [], []>} : vector<256x32xbf16>, vector<32x32xbf16>, vector<256x32xf32> -> vector<256x32xf32>
    %90 = arith.addf %86, %89 : vector<256x32xf32>
    %91 = vector.broadcast %27 : vector<1x32xf32> to vector<256x32xf32>
    %92 = arith.addf %90, %91 : vector<256x32xf32>
    %cst_104 = arith.constant 0.000000e+00 : f32
    %93 = vector.broadcast %cst_104 : f32 to vector<256x32xf32>
    %94 = arith.maximumf %92, %93 : vector<256x32xf32>
    %95 = arith.truncf %94 : vector<256x32xf32> to vector<256x32xbf16>
    %96 = vector.shape_cast %95 : vector<256x32xbf16> to vector<16x16x32xbf16>
    %c0_105 = arith.constant 0 : index
    %c0_106 = arith.constant 0 : index
    %c1_107 = arith.constant 1 : index
    %c0_108 = arith.constant 0 : index
    %c0_109 = arith.constant 0 : index
    %97 = vector.load %arg4[%c0_105, %c0_106, %c1_107, %c0_108, %c0_109] : memref<1x16x2x16x64xbf16, #tpu.memory_space<vmem>>, vector<1x16x1x16x32xbf16>
    %98 = vector.shape_cast %97 : vector<1x16x1x16x32xbf16> to vector<16x16x32xbf16>
    %99 = vector.shape_cast %96 : vector<16x16x32xbf16> to vector<1x16x1x16x32xbf16>
    tpu.vector_store %arg4[%c0_105, %c0_106, %c1_107, %c0_108, %c0_109], %99 {strides = array<i32>} : memref<1x16x2x16x64xbf16, #tpu.memory_space<vmem>>, vector<1x16x1x16x32xbf16>,
    %c3_110 = arith.constant 3 : index
    %c0_111 = arith.constant 0 : index
    %c0_112 = arith.constant 0 : index
    %c0_113 = arith.constant 0 : index
    %100 = vector.load %arg2[%c3_110, %c0_111, %c0_112, %c0_113] : memref<4x4x32x32xbf16, #tpu.memory_space<vmem>>, vector<1x1x32x32xbf16>
    %101 = vector.shape_cast %100 : vector<1x1x32x32xbf16> to vector<32x32xbf16>
    %cst_114 = arith.constant dense<0.000000e+00> : vector<256x32xf32>
    %102 = tpu.matmul %14, %101, %cst_114 {dimension_numbers = #tpu.dot_dimension_numbers<[1], [0], [0], [1], [0, 0, 1, 1], [], []>} : vector<256x32xbf16>, vector<32x32xbf16>, vector<256x32xf32> -> vector<256x32xf32>
    %c3_115 = arith.constant 3 : index
    %c1_116 = arith.constant 1 : index
    %c0_117 = arith.constant 0 : index
    %c0_118 = arith.constant 0 : index
    %103 = vector.load %arg2[%c3_115, %c1_116, %c0_117, %c0_118] : memref<4x4x32x32xbf16, #tpu.memory_space<vmem>>, vector<1x1x32x32xbf16>
    %104 = vector.shape_cast %103 : vector<1x1x32x32xbf16> to vector<32x32xbf16>
    %cst_119 = arith.constant dense<0.000000e+00> : vector<256x32xf32>
    %105 = tpu.matmul %17, %104, %cst_119 {dimension_numbers = #tpu.dot_dimension_numbers<[1], [0], [0], [1], [0, 0, 1, 1], [], []>} : vector<256x32xbf16>, vector<32x32xbf16>, vector<256x32xf32> -> vector<256x32xf32>
    %106 = arith.addf %102, %105 : vector<256x32xf32>
    %c3_120 = arith.constant 3 : index
    %c2_121 = arith.constant 2 : index
    %c0_122 = arith.constant 0 : index
    %c0_123 = arith.constant 0 : index
    %107 = vector.load %arg2[%c3_120, %c2_121, %c0_122, %c0_123] : memref<4x4x32x32xbf16, #tpu.memory_space<vmem>>, vector<1x1x32x32xbf16>
    %108 = vector.shape_cast %107 : vector<1x1x32x32xbf16> to vector<32x32xbf16>
    %cst_124 = arith.constant dense<0.000000e+00> : vector<256x32xf32>
    %109 = tpu.matmul %23, %108, %cst_124 {dimension_numbers = #tpu.dot_dimension_numbers<[1], [0], [0], [1], [0, 0, 1, 1], [], []>} : vector<256x32xbf16>, vector<32x32xbf16>, vector<256x32xf32> -> vector<256x32xf32>
    %110 = arith.addf %106, %109 : vector<256x32xf32>
    %c3_125 = arith.constant 3 : index
    %c3_126 = arith.constant 3 : index
    %c0_127 = arith.constant 0 : index
    %c0_128 = arith.constant 0 : index
    %111 = vector.load %arg2[%c3_125, %c3_126, %c0_127, %c0_128] : memref<4x4x32x32xbf16, #tpu.memory_space<vmem>>, vector<1x1x32x32xbf16>
    %112 = vector.shape_cast %111 : vector<1x1x32x32xbf16> to vector<32x32xbf16>
    %cst_129 = arith.constant dense<0.000000e+00> : vector<256x32xf32>
    %113 = tpu.matmul %26, %112, %cst_129 {dimension_numbers = #tpu.dot_dimension_numbers<[1], [0], [0], [1], [0, 0, 1, 1], [], []>} : vector<256x32xbf16>, vector<32x32xbf16>, vector<256x32xf32> -> vector<256x32xf32>
    %114 = arith.addf %110, %113 : vector<256x32xf32>
    %115 = vector.broadcast %27 : vector<1x32xf32> to vector<256x32xf32>
    %116 = arith.addf %114, %115 : vector<256x32xf32>
    %cst_130 = arith.constant 0.000000e+00 : f32
    %117 = vector.broadcast %cst_130 : f32 to vector<256x32xf32>
    %118 = arith.maximumf %116, %117 : vector<256x32xf32>
    %119 = arith.truncf %118 : vector<256x32xf32> to vector<256x32xbf16>
    %120 = vector.shape_cast %119 : vector<256x32xbf16> to vector<16x16x32xbf16>
    %c0_131 = arith.constant 0 : index
    %c0_132 = arith.constant 0 : index
    %c1_133 = arith.constant 1 : index
    %c0_134 = arith.constant 0 : index
    %c32_135 = arith.constant 32 : index
    %121 = vector.load %arg4[%c0_131, %c0_132, %c1_133, %c0_134, %c32_135] : memref<1x16x2x16x64xbf16, #tpu.memory_space<vmem>>, vector<1x16x1x16x32xbf16>
    %122 = vector.shape_cast %121 : vector<1x16x1x16x32xbf16> to vector<16x16x32xbf16>
    %123 = vector.shape_cast %120 : vector<16x16x32xbf16> to vector<1x16x1x16x32xbf16>
    tpu.vector_store %arg4[%c0_131, %c0_132, %c1_133, %c0_134, %c32_135], %123 {strides = array<i32>} : memref<1x16x2x16x64xbf16, #tpu.memory_space<vmem>>, vector<1x16x1x16x32xbf16>,
    return
  }
  func.func @transform_0(%arg0: i32) -> (i32, i32, i32, i32) {
    %c0_i32 = arith.constant 0 : i32
    %c0_i32_0 = arith.constant 0 : i32
    %c0_i32_1 = arith.constant 0 : i32
    %c0_i32_2 = arith.constant 0 : i32
    return %arg0, %c0_i32, %c0_i32_0, %c0_i32_1 : i32, i32, i32, i32
  }
  func.func @transform_1(%arg0: i32) -> (i32, i32, i32, i32) {
    %c0_i32 = arith.constant 0 : i32
    %c0_i32_0 = arith.constant 0 : i32
    %c0_i32_1 = arith.constant 0 : i32
    %c0_i32_2 = arith.constant 0 : i32
    %c0_i32_3 = arith.constant 0 : i32
    return %c0_i32, %c0_i32_0, %c0_i32_1, %c0_i32_2 : i32, i32, i32, i32
  }
  func.func @transform_2(%arg0: i32) -> (i32, i32) {
    %c0_i32 = arith.constant 0 : i32
    %c0_i32_0 = arith.constant 0 : i32
    %c0_i32_1 = arith.constant 0 : i32
    return %c0_i32, %c0_i32_0 : i32, i32
  }
  func.func @transform_3(%arg0: i32) -> (i32, i32, i32, i32, i32) {
    %c0_i32 = arith.constant 0 : i32
    %c0_i32_0 = arith.constant 0 : i32
    %c0_i32_1 = arith.constant 0 : i32
    %c0_i32_2 = arith.constant 0 : i32
    %c0_i32_3 = arith.constant 0 : i32
    return %arg0, %c0_i32, %c0_i32_0, %c0_i32_1, %c0_i32_2 : i32, i32, i32, i32, i32
  }
}

module attributes {stable_mosaic.version = 11 : i64} {
  func.func @_final_conv_kernel(%arg0: i32, %arg1: i32, %arg2: memref<1x512x32xbf16, #tpu.memory_space<vmem>>, %arg3: memref<8x32xbf16, #tpu.memory_space<vmem>>, %arg4: memref<8x1xf32, #tpu.memory_space<vmem>>, %arg5: memref<1x8x512xf32, #tpu.memory_space<vmem>>) attributes {dimension_semantics = [#tpu.dimension_semantics<parallel>, #tpu.dimension_semantics<parallel>], iteration_bounds = array<i64: 2, 2>, scalar_prefetch = 0 : i64, scratch_operands = 0 : i64, tpu.core_type = #tpu.core_type<tc>, window_params = [{transform_indices = @transform_0, window_bounds = array<i64: 1, 512, 32>}, {pipeline_mode = #tpu.pipeline_mode<synchronous>, transform_indices = @transform_1, window_bounds = array<i64: 8, 32>}, {pipeline_mode = #tpu.pipeline_mode<synchronous>, transform_indices = @transform_2, window_bounds = array<i64: 8, 1>}, {transform_indices = @transform_3, window_bounds = array<i64: 1, 8, 512>}]} {
    %c0 = arith.constant 0 : index
    %c0_0 = arith.constant 0 : index
    %0 = vector.load %arg3[%c0, %c0_0] : memref<8x32xbf16, #tpu.memory_space<vmem>>, vector<8x32xbf16>
    %c0_1 = arith.constant 0 : index
    %c0_2 = arith.constant 0 : index
    %c0_3 = arith.constant 0 : index
    %1 = vector.load %arg2[%c0_1, %c0_2, %c0_3] : memref<1x512x32xbf16, #tpu.memory_space<vmem>>, vector<1x512x32xbf16>
    %2 = vector.shape_cast %1 : vector<1x512x32xbf16> to vector<512x32xbf16>
    %cst = arith.constant dense<0.000000e+00> : vector<8x512xf32>
    %3 = tpu.matmul %0, %2, %cst {dimension_numbers = #tpu.dot_dimension_numbers<[1], [1], [0], [0], [0, 0, 1, 0], [], []>} : vector<8x32xbf16>, vector<512x32xbf16>, vector<8x512xf32> -> vector<8x512xf32>
    %c0_4 = arith.constant 0 : index
    %c0_5 = arith.constant 0 : index
    %4 = vector.load %arg4[%c0_4, %c0_5] : memref<8x1xf32, #tpu.memory_space<vmem>>, vector<8x1xf32>
    %5 = vector.broadcast %4 : vector<8x1xf32> to vector<8x512xf32>
    %6 = arith.addf %3, %5 : vector<8x512xf32>
    %c0_6 = arith.constant 0 : index
    %c0_7 = arith.constant 0 : index
    %c0_8 = arith.constant 0 : index
    %7 = vector.load %arg5[%c0_6, %c0_7, %c0_8] : memref<1x8x512xf32, #tpu.memory_space<vmem>>, vector<1x8x512xf32>
    %8 = vector.shape_cast %7 : vector<1x8x512xf32> to vector<8x512xf32>
    %9 = vector.shape_cast %6 : vector<8x512xf32> to vector<1x8x512xf32>
    tpu.vector_store %arg5[%c0_6, %c0_7, %c0_8], %9 {strides = array<i32>} : memref<1x8x512xf32, #tpu.memory_space<vmem>>, vector<1x8x512xf32>,
    return
  }
  func.func @transform_0(%arg0: i32, %arg1: i32) -> (i32, i32, i32) {
    %c0_i32 = arith.constant 0 : i32
    %c0_i32_0 = arith.constant 0 : i32
    return %arg0, %arg1, %c0_i32 : i32, i32, i32
  }
  func.func @transform_1(%arg0: i32, %arg1: i32) -> (i32, i32) {
    %c0_i32 = arith.constant 0 : i32
    %c0_i32_0 = arith.constant 0 : i32
    %c0_i32_1 = arith.constant 0 : i32
    return %c0_i32, %c0_i32_0 : i32, i32
  }
  func.func @transform_2(%arg0: i32, %arg1: i32) -> (i32, i32) {
    %c0_i32 = arith.constant 0 : i32
    %c0_i32_0 = arith.constant 0 : i32
    %c0_i32_1 = arith.constant 0 : i32
    return %c0_i32, %c0_i32_0 : i32, i32
  }
  func.func @transform_3(%arg0: i32, %arg1: i32) -> (i32, i32, i32) {
    %c0_i32 = arith.constant 0 : i32
    %c0_i32_0 = arith.constant 0 : i32
    return %arg0, %c0_i32, %arg1 : i32, i32, i32
  }
}

</mosaic_0001>

<llo_original>
// kernel: topdown_head_forward.5
$region0: #{topdown_head_forward.5}
  #allocation0 [shape = 'u32[]', space=smem, size = 0x4, offset = 0x4, fixed_abs, tag = 'smem constant byte address 0x4 - core index']
  #allocation1 [shape = 'u32[144,128]{1,0:T(1,128)}', space=vmem, size = 0x12000, scoped, tag = 'internal scratch']
  %s0 = inlined_call_operand.vmem [shape: bf16[2,1024,32], index: 0, kind: input, shape index: {}]
  %s1 = inlined_call_operand.vmem [shape: bf16[8,32], index: 1, kind: input, shape index: {}]
  %s2 = inlined_call_operand.vmem [shape: f32[8,1], index: 2, kind: input, shape index: {}]
  %s3 = inlined_call_operand.vmem [shape: f32[2,8,1024], index: 3, kind: output, shape index: {}]
  %s4 = sld [smem:[#allocation0]]
  $region45: #{topdown_head_forward.5} parent=0
    _
  %s6 = ssub.s32 1, %s4
  %s7 = scalar_select 0, %s6, %s4
  loop: start=0, step=1, limit=6
  $region2: #{topdown_head_forward.5} parent=0 // loop_pre_header
    _
  $region3: #{topdown_head_forward.5} parent=0 // loop_header
    %s9 = sphi 0, %s13
    %p10 = scmp.ge.s32.totalorder %s9, 6
    %s16 = sphi 0, %s28
    %s17 = sphi 0, %s24
    %s18 = sphi 0, %s16
    %s19 = sphi 0, %s17
    %s20 = sphi 0, %s18
    %s21 = sphi 0, %s19
    %s33 = sphi 0, %s35
    %s36 = sphi 0, %s33
    %s37 = sphi 0, %s36
    %s53 = sphi 0, %s37
    %s57 = sphi 0, %s57
    %s59 = sphi 0, %s57
    %s60 = sphi 0, %s59
    %s74 = sphi 0, %s60
    %s78 = sphi 0, %s78
    %s80 = sphi 0, %s78
    %s81 = sphi 0, %s80
    %s95 = sphi 0, %s81
    %s103 = sphi 0, %s105
    %s106 = sphi 0, %s103
    %s107 = sphi 0, %s106
    %s123 = sphi 0, %s107
  $region4: #{topdown_head_forward.5} parent=0 // loop_header_branch
    %12 = sbr.rel (%p10) target = $region8
  $region5: #{topdown_head_forward.5} parent=0 // loop_body
    %s14 = ssub.s32 %s9, 1
    %s15 = ssub.s32 %s9, 2
    %s22 = sadd.s32 1, %s17
    %p23 = scmp.ge.s32.totalorder %s22, 2
    %s24 = scalar_select %p23, 0, %s22
    %s25 = sadd.s32 1, %s16
    %s26 = scalar_select %p23, %s25, %s16
    %p27 = scmp.ge.s32.totalorder %s26, 2
    %s28 = scalar_select %p27, 0, %s26
    %s29 = ssub.s32 %s16, %s28
    %s30 = ssub.s32 %s17, %s24
    %s31 = sor.u32 %s29, %s30
    %p32 = scmp.eq.s32.totalorder %s31, 0
    %s34 = sadd.s32 %s33, 1
    %s35 = scalar_select %p32, %s33, %s34
    %p38 = pneg %p32
    %p39 = scmp.eq.s32.totalorder %s9, 3
    %p40 = por %p38, %p39
    %p41 = scmp.ne.s32.totalorder %s33, %s36
    %p42 = scmp.eq.s32.totalorder %s9, 0
    %p43 = por %p41, %p42
    %p44 = scmp.ne.s32.totalorder %s33, %s36
    %p45 = scmp.eq.s32.totalorder %s14, 3
    %p46 = por %p44, %p45
    %p47 = scmp.ne.s32.totalorder %s36, %s37
    %p48 = scmp.eq.s32.totalorder %s14, 0
    %p49 = por %p47, %p48
    %p50 = scmp.ne.s32.totalorder %s36, %s37
    %p51 = scmp.eq.s32.totalorder %s15, 3
    %p52 = por %p50, %p51
    %p54 = scmp.ne.s32.totalorder %s37, %s53
    %p55 = scmp.eq.s32.totalorder %s15, 0
    %p56 = por %p54, %p55
    %s58 = sadd.s32 %s57, 1
    %p61 = scmp.eq.s32.totalorder %s9, 3
    %p62 = scmp.ne.s32.totalorder %s57, %s59
    %p63 = scmp.eq.s32.totalorder %s9, 0
    %p64 = por %p62, %p63
    %p65 = scmp.ne.s32.totalorder %s57, %s59
    %p66 = scmp.eq.s32.totalorder %s14, 3
    %p67 = por %p65, %p66
    %p68 = scmp.ne.s32.totalorder %s59, %s60
    %p69 = scmp.eq.s32.totalorder %s14, 0
    %p70 = por %p68, %p69
    %p71 = scmp.ne.s32.totalorder %s59, %s60
    %p72 = scmp.eq.s32.totalorder %s15, 3
    %p73 = por %p71, %p72
    %p75 = scmp.ne.s32.totalorder %s60, %s74
    %p76 = scmp.eq.s32.totalorder %s15, 0
    %p77 = por %p75, %p76
    %s79 = sadd.s32 %s78, 1
    %p82 = scmp.eq.s32.totalorder %s9, 3
    %p83 = scmp.ne.s32.totalorder %s78, %s80
    %p84 = scmp.eq.s32.totalorder %s9, 0
    %p85 = por %p83, %p84
    %p86 = scmp.ne.s32.totalorder %s78, %s80
    %p87 = scmp.eq.s32.totalorder %s14, 3
    %p88 = por %p86, %p87
    %p89 = scmp.ne.s32.totalorder %s80, %s81
    %p90 = scmp.eq.s32.totalorder %s14, 0
    %p91 = por %p89, %p90
    %p92 = scmp.ne.s32.totalorder %s80, %s81
    %p93 = scmp.eq.s32.totalorder %s15, 3
    %p94 = por %p92, %p93
    %p96 = scmp.ne.s32.totalorder %s81, %s95
    %p97 = scmp.eq.s32.totalorder %s15, 0
    %p98 = por %p96, %p97
    %s99 = ssub.s32 %s16, %s28
    %s100 = ssub.s32 %s17, %s24
    %s101 = sor.u32 %s99, %s100
    %p102 = scmp.eq.s32.totalorder %s101, 0
    %s104 = sadd.s32 %s103, 1
    %s105 = scalar_select %p102, %s103, %s104
    %p108 = pneg %p102
    %p109 = scmp.eq.s32.totalorder %s9, 3
    %p110 = por %p108, %p109
    %p111 = scmp.ne.s32.totalorder %s103, %s106
    %p112 = scmp.eq.s32.totalorder %s9, 0
    %p113 = por %p111, %p112
    %p114 = scmp.ne.s32.totalorder %s103, %s106
    %p115 = scmp.eq.s32.totalorder %s14, 3
    %p116 = por %p114, %p115
    %p117 = scmp.ne.s32.totalorder %s106, %s107
    %p118 = scmp.eq.s32.totalorder %s14, 0
    %p119 = por %p117, %p118
    %p120 = scmp.ne.s32.totalorder %s106, %s107
    %p121 = scmp.eq.s32.totalorder %s15, 3
    %p122 = por %p120, %p121
    %p124 = scmp.ne.s32.totalorder %s107, %s123
    %p125 = scmp.eq.s32.totalorder %s15, 0
    %p126 = por %p124, %p125
    %p127 = scmp.le.s32.totalorder 1, %s9
    %p128 = scmp.lt.s32.totalorder %s9, 5
    %p129 = pnand %p127, %p128
    %p130 = pneg %p129
    // Predicated region
    $region9: #{topdown_head_forward.5} parent=5 // pred_check
      _
    $region10: #{topdown_head_forward.5} parent=5 // pred_check_branch
      %132 = sbr.rel (%p129) target = $region12
    $region11: #{topdown_head_forward.5} parent=5 // pred_region
      %s133 = ssub.s32 %s9, 1
      // Predicated region
      $region13: #{topdown_head_forward.5} parent=11 // pred_check
        %p134 = pneg %p70
      $region14: #{topdown_head_forward.5} parent=11 // pred_check_branch
        %136 = sbr.rel (%p134) target = $region16
      $region15: #{topdown_head_forward.5} parent=11 // pred_region
        _
      $region16: #{topdown_head_forward.5} parent=11 // pred_fallthru
        _
      // Predicated region
      $region17: #{topdown_head_forward.5} parent=11 // pred_check
        %p137 = pneg %p91
      $region18: #{topdown_head_forward.5} parent=11 // pred_check_branch
        %139 = sbr.rel (%p137) target = $region20
      $region19: #{topdown_head_forward.5} parent=11 // pred_region
        _
      $region20: #{topdown_head_forward.5} parent=11 // pred_fallthru
        _
    $region12: #{topdown_head_forward.5} parent=5 // pred_fallthru
      _
    %p140 = scmp.lt.s32.totalorder %s9, 4
    // Predicated region
    $region21: #{topdown_head_forward.5} parent=5 // pred_check
      %p141 = pneg %p140
    $region22: #{topdown_head_forward.5} parent=5 // pred_check_branch
      %143 = sbr.rel (%p141) target = $region24
    $region23: #{topdown_head_forward.5} parent=5 // pred_region
      // Predicated region
      $region25: #{topdown_head_forward.5} parent=23 // pred_check
        %p144 = pneg %p43
      $region26: #{topdown_head_forward.5} parent=23 // pred_check_branch
        %146 = sbr.rel (%p144) target = $region28
      $region27: #{topdown_head_forward.5} parent=23 // pred_region
        %s147 = smul.u32 64, %s17
        %p148 = scmp.lt.s32.totalorder %s16, 1
        %s149 = scalar_select %p148, %s16, 1
        %p150 = scmp.lt.s32.totalorder %s147, 127
        %s151 = scalar_select %p150, %s147, 127
        %s152 = smul.addr %s149, 128
        %s153 = sadd.s32 %s151, %s152
        %s154 = smul.addr %s153, 4
        %s155 = scalar_lea.vmem %s0, %s154
        %s156 = smul.u32 64, %s17
      $region28: #{topdown_head_forward.5} parent=23 // pred_fallthru
        _
    $region24: #{topdown_head_forward.5} parent=5 // pred_fallthru
      _
    %p157 = scmp.le.s32.totalorder 1, %s9
    %p158 = scmp.lt.s32.totalorder %s9, 5
    %p159 = pnand %p157, %p158
    %p160 = pneg %p159
    // Predicated region
    $region29: #{topdown_head_forward.5} parent=5 // pred_check
      _
    $region30: #{topdown_head_forward.5} parent=5 // pred_check_branch
      %162 = sbr.rel (%p159) target = $region32
    $region31: #{topdown_head_forward.5} parent=5 // pred_region
      %s163 = ssub.s32 %s9, 1
      %s164 = smul.u32 64, %s19
      %p165 = scmp.lt.s32.totalorder %s18, 1
      %s166 = scalar_select %p165, %s18, 1
      %p167 = scmp.lt.s32.totalorder %s164, 127
      %s168 = scalar_select %p167, %s164, 127
      %s169 = smul.addr %s166, 128
      %s170 = sadd.s32 %s168, %s169
      %s171 = smul.addr %s170, 4
      %s172 = scalar_lea.vmem %s0, %s171
      %p173 = pneg %p49
      %p174 = pneg %p46
      %p175 = pneg %p70
      %p176 = pneg %p67
      %p177 = pneg %p91
      %p178 = pneg %p88
      %p179 = pneg %p119
      %p180 = pneg %p116
      %s181 = smul.u32 4, %s19
      %p182 = scmp.lt.s32.totalorder %s18, 1
      %s183 = scalar_select %p182, %s18, 1
      %p184 = scmp.lt.s32.totalorder %s181, 7
      %s185 = scalar_select %p184, %s181, 7
      %s186 = smul.addr %s183, 8
      %s187 = sadd.s32 %s185, %s186
      %s188 = smul.addr %s187, 8
      %s189 = scalar_lea.vmem %s3, %s188
      %s190 = smul.u32 64, %s19
      %p191 = scmp.lt.s32.totalorder %s18, 1
      %s192 = scalar_select %p191, %s18, 1
      %p193 = scmp.lt.s32.totalorder %s190, 127
      %s194 = scalar_select %p193, %s190, 127
      %s195 = smul.addr %s192, 128
      %s196 = sadd.s32 %s194, %s195
      %s197 = smul.addr %s196, 4
      %s198 = scalar_lea.vmem %s0, %s197
      %s199 = smul.u32 64, %s19
      %s200 = smul.u32 4, %s19
      %p201 = scmp.lt.s32.totalorder %s18, 1
      %s202 = scalar_select %p201, %s18, 1
      %p203 = scmp.lt.s32.totalorder %s200, 7
      %s204 = scalar_select %p203, %s200, 7
      %s205 = smul.addr %s202, 8
      %s206 = sadd.s32 %s204, %s205
      %s207 = smul.addr %s206, 8
      %s208 = scalar_lea.vmem %s3, %s207
      %s209 = smul.u32 4, %s19
      %v211 = vld [vmem:[%s1] sm:$0xf]
      %v212 = vld [vmem:[%s198] sm:$0xf]
      %v213 = vld [vmem:[%s198 + $0x4] sm:$0xf]
      %v214 = vld [vmem:[%s198 + $0x8] sm:$0xf]
      %v215 = vld [vmem:[%s198 + $0xc] sm:$0xf]
      %v216 = vld [vmem:[%s198 + $0x10] sm:$0xf]
      %v217 = vld [vmem:[%s198 + $0x14] sm:$0xf]
      %v218 = vld [vmem:[%s198 + $0x18] sm:$0xf]
      %v219 = vld [vmem:[%s198 + $0x1c] sm:$0xf]
      %v220 = vld [vmem:[%s198 + $0x20] sm:$0xf]
      %v221 = vld [vmem:[%s198 + $0x24] sm:$0xf]
      %v222 = vld [vmem:[%s198 + $0x28] sm:$0xf]
      %v223 = vld [vmem:[%s198 + $0x2c] sm:$0xf]
      %v224 = vld [vmem:[%s198 + $0x30] sm:$0xf]
      %v225 = vld [vmem:[%s198 + $0x34] sm:$0xf]
      %v226 = vld [vmem:[%s198 + $0x38] sm:$0xf]
      %v227 = vld [vmem:[%s198 + $0x3c] sm:$0xf]
      %v228 = vld [vmem:[%s198 + $0x40] sm:$0xf]
      %v229 = vld [vmem:[%s198 + $0x44] sm:$0xf]
      %v230 = vld [vmem:[%s198 + $0x48] sm:$0xf]
      %v231 = vld [vmem:[%s198 + $0x4c] sm:$0xf]
      %v232 = vld [vmem:[%s198 + $0x50] sm:$0xf]
      %v233 = vld [vmem:[%s198 + $0x54] sm:$0xf]
      %v234 = vld [vmem:[%s198 + $0x58] sm:$0xf]
      %v235 = vld [vmem:[%s198 + $0x5c] sm:$0xf]
      %v236 = vld [vmem:[%s198 + $0x60] sm:$0xf]
      %v237 = vld [vmem:[%s198 + $0x64] sm:$0xf]
      %v238 = vld [vmem:[%s198 + $0x68] sm:$0xf]
      %v239 = vld [vmem:[%s198 + $0x6c] sm:$0xf]
      %v240 = vld [vmem:[%s198 + $0x70] sm:$0xf]
      %v241 = vld [vmem:[%s198 + $0x74] sm:$0xf]
      %v242 = vld [vmem:[%s198 + $0x78] sm:$0xf]
      %v243 = vld [vmem:[%s198 + $0x7c] sm:$0xf]
      %v244 = vld [vmem:[%s198 + $0x80] sm:$0xf]
      %v245 = vld [vmem:[%s198 + $0x84] sm:$0xf]
      %v246 = vld [vmem:[%s198 + $0x88] sm:$0xf]
      %v247 = vld [vmem:[%s198 + $0x8c] sm:$0xf]
      %v248 = vld [vmem:[%s198 + $0x90] sm:$0xf]
      %v249 = vld [vmem:[%s198 + $0x94] sm:$0xf]
      %v250 = vld [vmem:[%s198 + $0x98] sm:$0xf]
      %v251 = vld [vmem:[%s198 + $0x9c] sm:$0xf]
      %v252 = vld [vmem:[%s198 + $0xa0] sm:$0xf]
      %v253 = vld [vmem:[%s198 + $0xa4] sm:$0xf]
      %v254 = vld [vmem:[%s198 + $0xa8] sm:$0xf]
      %v255 = vld [vmem:[%s198 + $0xac] sm:$0xf]
      %v256 = vld [vmem:[%s198 + $0xb0] sm:$0xf]
      %v257 = vld [vmem:[%s198 + $0xb4] sm:$0xf]
      %v258 = vld [vmem:[%s198 + $0xb8] sm:$0xf]
      %v259 = vld [vmem:[%s198 + $0xbc] sm:$0xf]
      %v260 = vld [vmem:[%s198 + $0xc0] sm:$0xf]
      %v261 = vld [vmem:[%s198 + $0xc4] sm:$0xf]
      %v262 = vld [vmem:[%s198 + $0xc8] sm:$0xf]
      %v263 = vld [vmem:[%s198 + $0xcc] sm:$0xf]
      %v264 = vld [vmem:[%s198 + $0xd0] sm:$0xf]
      %v265 = vld [vmem:[%s198 + $0xd4] sm:$0xf]
      %v266 = vld [vmem:[%s198 + $0xd8] sm:$0xf]
      %v267 = vld [vmem:[%s198 + $0xdc] sm:$0xf]
      %v268 = vld [vmem:[%s198 + $0xe0] sm:$0xf]
      %v269 = vld [vmem:[%s198 + $0xe4] sm:$0xf]
      %v270 = vld [vmem:[%s198 + $0xe8] sm:$0xf]
      %v271 = vld [vmem:[%s198 + $0xec] sm:$0xf]
      %v272 = vld [vmem:[%s198 + $0xf0] sm:$0xf]
      %v273 = vld [vmem:[%s198 + $0xf4] sm:$0xf]
      %v274 = vld [vmem:[%s198 + $0xf8] sm:$0xf]
      %v275 = vld [vmem:[%s198 + $0xfc] sm:$0xf]
      %v276 = vld [vmem:[%s2] sm:$0xff]
      %278 = vset.pattern.permute.xlu0 0
      %279 = vperm.xlu0 %278, %v276
      %v280 = vpop.permute.xlu0 %279
      %v346 = vunpack.c.l.b16 %v212
      %v347 = vunpack.c.l.b16 %v213
      %v348 = vunpack.c.l.b16 %v214
      %v349 = vunpack.c.l.b16 %v215
      %v350 = vunpack.c.l.b16 %v216
      %v351 = vunpack.c.l.b16 %v217
      %v352 = vunpack.c.l.b16 %v218
      %v353 = vunpack.c.l.b16 %v219
      %v354 = vunpack.c.l.b16 %v220
      %v355 = vunpack.c.l.b16 %v221
      %v356 = vunpack.c.l.b16 %v222
      %v357 = vunpack.c.l.b16 %v223
      %v358 = vunpack.c.l.b16 %v224
      %v359 = vunpack.c.l.b16 %v225
      %v360 = vunpack.c.l.b16 %v226
      %v361 = vunpack.c.l.b16 %v227
      %v362 = vunpack.c.l.b16 %v228
      %v363 = vunpack.c.l.b16 %v229
      %v364 = vunpack.c.l.b16 %v230
      %v365 = vunpack.c.l.b16 %v231
      %v366 = vunpack.c.l.b16 %v232
      %v367 = vunpack.c.l.b16 %v233
      %v368 = vunpack.c.l.b16 %v234
      %v369 = vunpack.c.l.b16 %v235
      %v370 = vunpack.c.l.b16 %v236
      %v371 = vunpack.c.l.b16 %v237
      %v372 = vunpack.c.l.b16 %v238
      %v373 = vunpack.c.l.b16 %v239
      %v374 = vunpack.c.l.b16 %v240
      %v375 = vunpack.c.l.b16 %v241
      %v376 = vunpack.c.l.b16 %v242
      %v377 = vunpack.c.l.b16 %v243
      %v378 = vunpack.c.l.b16 %v244
      %v379 = vunpack.c.l.b16 %v245
      %v380 = vunpack.c.l.b16 %v246
      %v381 = vunpack.c.l.b16 %v247
      %v382 = vunpack.c.l.b16 %v248
      %v383 = vunpack.c.l.b16 %v249
      %v384 = vunpack.c.l.b16 %v250
      %v385 = vunpack.c.l.b16 %v251
      %v386 = vunpack.c.l.b16 %v252
      %v387 = vunpack.c.l.b16 %v253
      %v388 = vunpack.c.l.b16 %v254
      %v389 = vunpack.c.l.b16 %v255
      %v390 = vunpack.c.l.b16 %v256
      %v391 = vunpack.c.l.b16 %v257
      %v392 = vunpack.c.l.b16 %v258
      %v393 = vunpack.c.l.b16 %v259
      %v394 = vunpack.c.l.b16 %v260
      %v395 = vunpack.c.l.b16 %v261
      %v396 = vunpack.c.l.b16 %v262
      %v397 = vunpack.c.l.b16 %v263
      %v398 = vunpack.c.l.b16 %v264
      %v399 = vunpack.c.l.b16 %v265
      %v400 = vunpack.c.l.b16 %v266
      %v401 = vunpack.c.l.b16 %v267
      %v402 = vunpack.c.l.b16 %v268
      %v403 = vunpack.c.l.b16 %v269
      %v404 = vunpack.c.l.b16 %v270
      %v405 = vunpack.c.l.b16 %v271
      %v406 = vunpack.c.l.b16 %v272
      %v407 = vunpack.c.l.b16 %v273
      %v408 = vunpack.c.l.b16 %v274
      %v409 = vunpack.c.l.b16 %v275
      %v410 = vpack.c.b16 %v347, %v346
      %v411 = vpack.c.b16 %v349, %v348
      %v412 = vpack.c.b16 %v351, %v350
      %v413 = vpack.c.b16 %v353, %v352
      %v414 = vpack.c.b16 %v355, %v354
      %v415 = vpack.c.b16 %v357, %v356
      %v416 = vpack.c.b16 %v359, %v358
      %v417 = vpack.c.b16 %v361, %v360
      %v418 = vpack.c.b16 %v363, %v362
      %v419 = vpack.c.b16 %v365, %v364
      %v420 = vpack.c.b16 %v367, %v366
      %v421 = vpack.c.b16 %v369, %v368
      %v422 = vpack.c.b16 %v371, %v370
      %v423 = vpack.c.b16 %v373, %v372
      %v424 = vpack.c.b16 %v375, %v374
      %v425 = vpack.c.b16 %v377, %v376
      %v426 = vpack.c.b16 %v379, %v378
      %v427 = vpack.c.b16 %v381, %v380
      %v428 = vpack.c.b16 %v383, %v382
      %v429 = vpack.c.b16 %v385, %v384
      %v430 = vpack.c.b16 %v387, %v386
      %v431 = vpack.c.b16 %v389, %v388
      %v432 = vpack.c.b16 %v391, %v390
      %v433 = vpack.c.b16 %v393, %v392
      %v434 = vpack.c.b16 %v395, %v394
      %v435 = vpack.c.b16 %v397, %v396
      %v436 = vpack.c.b16 %v399, %v398
      %v437 = vpack.c.b16 %v401, %v400
      %v438 = vpack.c.b16 %v403, %v402
      %v439 = vpack.c.b16 %v405, %v404
      %v440 = vpack.c.b16 %v407, %v406
      %v441 = vpack.c.b16 %v409, %v408
      %vm442 = vcmask 261120
      %v444 = vsel %vm442, %v211, 0
      %v447 = vsel %vm442, %v410, 0
      %v450 = vsel %vm442, %v411, 0
      %v453 = vsel %vm442, %v412, 0
      %v456 = vsel %vm442, %v413, 0
      %v459 = vsel %vm442, %v414, 0
      %v462 = vsel %vm442, %v415, 0
      %v465 = vsel %vm442, %v416, 0
      %v468 = vsel %vm442, %v417, 0
      %v471 = vsel %vm442, %v418, 0
      %v474 = vsel %vm442, %v419, 0
      %v477 = vsel %vm442, %v420, 0
      %v480 = vsel %vm442, %v421, 0
      %v483 = vsel %vm442, %v422, 0
      %v486 = vsel %vm442, %v423, 0
      %v489 = vsel %vm442, %v424, 0
      %v492 = vsel %vm442, %v425, 0
      %v495 = vsel %vm442, %v426, 0
      %v498 = vsel %vm442, %v427, 0
      %v501 = vsel %vm442, %v428, 0
      %v504 = vsel %vm442, %v429, 0
      %v507 = vsel %vm442, %v430, 0
      %v510 = vsel %vm442, %v431, 0
      %v513 = vsel %vm442, %v432, 0
      %v516 = vsel %vm442, %v433, 0
      %v519 = vsel %vm442, %v434, 0
      %v522 = vsel %vm442, %v435, 0
      %v525 = vsel %vm442, %v436, 0
      %v528 = vsel %vm442, %v437, 0
      %v531 = vsel %vm442, %v438, 0
      %v534 = vsel %vm442, %v439, 0
      %v537 = vsel %vm442, %v440, 0
      %v540 = vsel %vm442, %v441, 0
      %542 = vmatprep.subr.bf16.mxu0 0
      %543 = vmatpush1.bf16.xpose.msra.mxu0 %v468
      %544 = vmatprep.subr.bf16.mxu0 0
      %545 = vmatpush1.bf16.xpose.msra.mxu0 %v465
      %546 = vmatprep.subr.bf16.mxu0 0
      %547 = vmatpush1.bf16.xpose.msra.mxu0 %v462
      %548 = vmatprep.subr.bf16.mxu0 0
      %549 = vmatpush1.bf16.xpose.msra.mxu0 %v459
      %550 = vmatprep.subr.bf16.mxu0 0
      %551 = vmatpush1.bf16.xpose.msra.mxu0 %v456
      %552 = vmatprep.subr.bf16.mxu0 0
      %553 = vmatpush1.bf16.xpose.msra.mxu0 %v453
      %554 = vmatprep.subr.bf16.mxu0 0
      %555 = vmatpush1.bf16.xpose.msra.mxu0 %v450
      %556 = vmatprep.subr.bf16.mxu0 0
      %557 = vmatpush1.bf16.xpose.msra.mxu0 %v447
      %558 = vmatprep.subr.bf16.mxu0 0
      %559 = vmatpush2.bf16.xpose.msra.mxu0 %v492
      %560 = vmatprep.subr.bf16.mxu0 0
      %561 = vmatpush2.bf16.xpose.msra.mxu0 %v489
      %562 = vmatprep.subr.bf16.mxu0 0
      %563 = vmatpush2.bf16.xpose.msra.mxu0 %v486
      %564 = vmatprep.subr.bf16.mxu0 0
      %565 = vmatpush2.bf16.xpose.msra.mxu0 %v483
      %566 = vmatprep.subr.bf16.mxu0 0
      %567 = vmatpush2.bf16.xpose.msra.mxu0 %v480
      %568 = vmatprep.subr.bf16.mxu0 0
      %569 = vmatpush2.bf16.xpose.msra.mxu0 %v477
      %570 = vmatprep.subr.bf16.mxu0 0
      %571 = vmatpush2.bf16.xpose.msra.mxu0 %v474
      %572 = vmatprep.subr.bf16.mxu0 0
      %573 = vmatpush2.bf16.xpose.msra.mxu0 %v471
      %574 = vmatprep.mubr.bf16.mxu0 0
      %575 = vmatmul.mubr.bf16.gmra.mxu0 %v444
      %v576 = vpop.f32.mrf.mxu0
      %v577 = vadd.f32 %v280, %v576
      %v578 = vpop.f32.mrf.mxu0
      %v579 = vadd.f32 %v280, %v578
      %v580 = vpop.f32.mrf.mxu0
      %v581 = vpop.f32.mrf.mxu0
      %582 = vdwg.mxu0
      %583 = vmatprep.subr.bf16.mxu0 0
      %584 = vmatpush1.bf16.xpose.msra.mxu0 %v516
      %585 = vmatprep.subr.bf16.mxu0 0
      %586 = vmatpush1.bf16.xpose.msra.mxu0 %v513
      %587 = vmatprep.subr.bf16.mxu0 0
      %588 = vmatpush1.bf16.xpose.msra.mxu0 %v510
      %589 = vmatprep.subr.bf16.mxu0 0
      %590 = vmatpush1.bf16.xpose.msra.mxu0 %v507
      %591 = vmatprep.subr.bf16.mxu0 0
      %592 = vmatpush1.bf16.xpose.msra.mxu0 %v504
      %593 = vmatprep.subr.bf16.mxu0 0
      %594 = vmatpush1.bf16.xpose.msra.mxu0 %v501
      %595 = vmatprep.subr.bf16.mxu0 0
      %596 = vmatpush1.bf16.xpose.msra.mxu0 %v498
      %597 = vmatprep.subr.bf16.mxu0 0
      %598 = vmatpush1.bf16.xpose.msra.mxu0 %v495
      %599 = vmatprep.subr.bf16.mxu0 0
      %600 = vmatpush2.bf16.xpose.msra.mxu0 %v540
      %601 = vmatprep.subr.bf16.mxu0 0
      %602 = vmatpush2.bf16.xpose.msra.mxu0 %v537
      %603 = vmatprep.subr.bf16.mxu0 0
      %604 = vmatpush2.bf16.xpose.msra.mxu0 %v534
      %605 = vmatprep.subr.bf16.mxu0 0
      %606 = vmatpush2.bf16.xpose.msra.mxu0 %v531
      %607 = vmatprep.subr.bf16.mxu0 0
      %608 = vmatpush2.bf16.xpose.msra.mxu0 %v528
      %609 = vmatprep.subr.bf16.mxu0 0
      %610 = vmatpush2.bf16.xpose.msra.mxu0 %v525
      %611 = vmatprep.subr.bf16.mxu0 0
      %612 = vmatpush2.bf16.xpose.msra.mxu0 %v522
      %613 = vmatprep.subr.bf16.mxu0 0
      %614 = vmatpush2.bf16.xpose.msra.mxu0 %v519
      %615 = vmatprep.mubr.bf16.mxu0 0
      %616 = vmatmul.mubr.bf16.gmra.mxu0 %v444
      %v617 = vpop.f32.mrf.mxu0
      %v618 = vadd.f32 %v280, %v617
      %v619 = vpop.f32.mrf.mxu0
      %v620 = vadd.f32 %v280, %v619
      %v621 = vpop.f32.mrf.mxu0
      %v622 = vpop.f32.mrf.mxu0
      %623 = vdwg.mxu0
      %624 = vst [vmem:[%s208] sm:$0xff] %v577
      %625 = vst [vmem:[%s208 + $0x8] sm:$0xff] %v579
      %626 = vst [vmem:[%s208 + $0x10] sm:$0xff] %v618
      %627 = vst [vmem:[%s208 + $0x18] sm:$0xff] %v620
      %s628 = smul.u32 4, %s19
      %p629 = scmp.lt.s32.totalorder %s18, 1
      %s630 = scalar_select %p629, %s18, 1
      %p631 = scmp.lt.s32.totalorder %s628, 7
      %s632 = scalar_select %p631, %s628, 7
      %s633 = smul.addr %s630, 8
      %s634 = sadd.s32 %s632, %s633
      %s635 = smul.addr %s634, 8
      %s636 = scalar_lea.vmem %s3, %s635
      // Predicated region
      $region33: #{topdown_head_forward.5} parent=31 // pred_check
        %p637 = pneg %p116
      $region34: #{topdown_head_forward.5} parent=31 // pred_check_branch
        %639 = sbr.rel (%p637) target = $region36
      $region35: #{topdown_head_forward.5} parent=31 // pred_region
        %s640 = smul.u32 4, %s19
      $region36: #{topdown_head_forward.5} parent=31 // pred_fallthru
        _
    $region32: #{topdown_head_forward.5} parent=5 // pred_fallthru
      _
    %p641 = scmp.le.s32.totalorder 2, %s9
    // Predicated region
    $region37: #{topdown_head_forward.5} parent=5 // pred_check
      %p642 = pneg %p641
    $region38: #{topdown_head_forward.5} parent=5 // pred_check_branch
      %644 = sbr.rel (%p642) target = $region40
    $region39: #{topdown_head_forward.5} parent=5 // pred_region
      %s645 = ssub.s32 %s9, 2
      // Predicated region
      $region41: #{topdown_head_forward.5} parent=39 // pred_check
        %p646 = pneg %p122
      $region42: #{topdown_head_forward.5} parent=39 // pred_check_branch
        %648 = sbr.rel (%p646) target = $region44
      $region43: #{topdown_head_forward.5} parent=39 // pred_region
        %s649 = smul.u32 4, %s21
        %p650 = scmp.lt.s32.totalorder %s20, 1
        %s651 = scalar_select %p650, %s20, 1
        %p652 = scmp.lt.s32.totalorder %s649, 7
        %s653 = scalar_select %p652, %s649, 7
        %s654 = smul.addr %s651, 8
        %s655 = sadd.s32 %s653, %s654
        %s656 = smul.addr %s655, 8
        %s657 = scalar_lea.vmem %s3, %s656
      $region44: #{topdown_head_forward.5} parent=39 // pred_fallthru
        _
    $region40: #{topdown_head_forward.5} parent=5 // pred_fallthru
      _
  $region6: #{topdown_head_forward.5} parent=0 // loop_footer
    %s13 = sadd.s32 1, %s9
  $region7: #{topdown_head_forward.5} parent=0 // loop_footer_branch
    %8 = sbr.rel target = $region3
  $region8: #{topdown_head_forward.5} parent=0 // loop_exit
    _

// kernel: topdown_head_forward.3
$region0: #{topdown_head_forward.3}
  #allocation0 [shape = 'u32[]', space=smem, size = 0x4, offset = 0x4, fixed_abs, tag = 'smem constant byte address 0x4 - core index']
  #allocation1 [shape = 'u32[144,128]{1,0:T(1,128)}', space=vmem, size = 0x12000, scoped, tag = 'internal scratch']
  %s0 = inlined_call_operand.vmem [shape: bf16[2,10,10,16], index: 0, kind: input, shape index: {}]
  %s1 = inlined_call_operand.vmem [shape: bf16[4,4,16,32], index: 1, kind: input, shape index: {}]
  %s2 = inlined_call_operand.vmem [shape: f32[1,32], index: 2, kind: input, shape index: {}]
  %s3 = inlined_call_operand.vmem [shape: bf16[2,8,2,8,64], index: 3, kind: output, shape index: {}]
  %s4 = sld [smem:[#allocation0]]
  $region45: #{topdown_head_forward.3} parent=0
    _
  %s6 = ssub.s32 1, %s4
  %s7 = scalar_select 0, %s6, %s4
  loop: start=0, step=1, limit=4
  $region2: #{topdown_head_forward.3} parent=0 // loop_pre_header
    _
  $region3: #{topdown_head_forward.3} parent=0 // loop_header
    %s9 = sphi 0, %s13
    %p10 = scmp.ge.s32.totalorder %s9, 4
    %s19 = sphi 0, %s21
    %s22 = sphi 0, %s19
    %s23 = sphi 0, %s22
    %s39 = sphi 0, %s23
    %s43 = sphi 0, %s43
    %s45 = sphi 0, %s43
    %s46 = sphi 0, %s45
    %s60 = sphi 0, %s46
    %s64 = sphi 0, %s64
    %s66 = sphi 0, %s64
    %s67 = sphi 0, %s66
    %s81 = sphi 0, %s67
    %s87 = sphi 0, %s89
    %s90 = sphi 0, %s87
    %s91 = sphi 0, %s90
    %s107 = sphi 0, %s91
  $region4: #{topdown_head_forward.3} parent=0 // loop_header_branch
    %12 = sbr.rel (%p10) target = $region8
  $region5: #{topdown_head_forward.3} parent=0 // loop_body
    %s14 = ssub.s32 %s9, 1
    %s15 = ssub.s32 %s9, 2
    %s16 = sadd.s32 %s9, 1
    %s17 = ssub.s32 %s9, %s16
    %p18 = scmp.eq.s32.totalorder %s17, 0
    %s20 = sadd.s32 %s19, 1
    %s21 = scalar_select %p18, %s19, %s20
    %p24 = pneg %p18
    %p25 = scmp.eq.s32.totalorder %s9, 1
    %p26 = por %p24, %p25
    %p27 = scmp.ne.s32.totalorder %s19, %s22
    %p28 = scmp.eq.s32.totalorder %s9, 0
    %p29 = por %p27, %p28
    %p30 = scmp.ne.s32.totalorder %s19, %s22
    %p31 = scmp.eq.s32.totalorder %s14, 1
    %p32 = por %p30, %p31
    %p33 = scmp.ne.s32.totalorder %s22, %s23
    %p34 = scmp.eq.s32.totalorder %s14, 0
    %p35 = por %p33, %p34
    %p36 = scmp.ne.s32.totalorder %s22, %s23
    %p37 = scmp.eq.s32.totalorder %s15, 1
    %p38 = por %p36, %p37
    %p40 = scmp.ne.s32.totalorder %s23, %s39
    %p41 = scmp.eq.s32.totalorder %s15, 0
    %p42 = por %p40, %p41
    %s44 = sadd.s32 %s43, 1
    %p47 = scmp.eq.s32.totalorder %s9, 1
    %p48 = scmp.ne.s32.totalorder %s43, %s45
    %p49 = scmp.eq.s32.totalorder %s9, 0
    %p50 = por %p48, %p49
    %p51 = scmp.ne.s32.totalorder %s43, %s45
    %p52 = scmp.eq.s32.totalorder %s14, 1
    %p53 = por %p51, %p52
    %p54 = scmp.ne.s32.totalorder %s45, %s46
    %p55 = scmp.eq.s32.totalorder %s14, 0
    %p56 = por %p54, %p55
    %p57 = scmp.ne.s32.totalorder %s45, %s46
    %p58 = scmp.eq.s32.totalorder %s15, 1
    %p59 = por %p57, %p58
    %p61 = scmp.ne.s32.totalorder %s46, %s60
    %p62 = scmp.eq.s32.totalorder %s15, 0
    %p63 = por %p61, %p62
    %s65 = sadd.s32 %s64, 1
    %p68 = scmp.eq.s32.totalorder %s9, 1
    %p69 = scmp.ne.s32.totalorder %s64, %s66
    %p70 = scmp.eq.s32.totalorder %s9, 0
    %p71 = por %p69, %p70
    %p72 = scmp.ne.s32.totalorder %s64, %s66
    %p73 = scmp.eq.s32.totalorder %s14, 1
    %p74 = por %p72, %p73
    %p75 = scmp.ne.s32.totalorder %s66, %s67
    %p76 = scmp.eq.s32.totalorder %s14, 0
    %p77 = por %p75, %p76
    %p78 = scmp.ne.s32.totalorder %s66, %s67
    %p79 = scmp.eq.s32.totalorder %s15, 1
    %p80 = por %p78, %p79
    %p82 = scmp.ne.s32.totalorder %s67, %s81
    %p83 = scmp.eq.s32.totalorder %s15, 0
    %p84 = por %p82, %p83
    %s85 = ssub.s32 %s9, %s16
    %p86 = scmp.eq.s32.totalorder %s85, 0
    %s88 = sadd.s32 %s87, 1
    %s89 = scalar_select %p86, %s87, %s88
    %p92 = pneg %p86
    %p93 = scmp.eq.s32.totalorder %s9, 1
    %p94 = por %p92, %p93
    %p95 = scmp.ne.s32.totalorder %s87, %s90
    %p96 = scmp.eq.s32.totalorder %s9, 0
    %p97 = por %p95, %p96
    %p98 = scmp.ne.s32.totalorder %s87, %s90
    %p99 = scmp.eq.s32.totalorder %s14, 1
    %p100 = por %p98, %p99
    %p101 = scmp.ne.s32.totalorder %s90, %s91
    %p102 = scmp.eq.s32.totalorder %s14, 0
    %p103 = por %p101, %p102
    %p104 = scmp.ne.s32.totalorder %s90, %s91
    %p105 = scmp.eq.s32.totalorder %s15, 1
    %p106 = por %p104, %p105
    %p108 = scmp.ne.s32.totalorder %s91, %s107
    %p109 = scmp.eq.s32.totalorder %s15, 0
    %p110 = por %p108, %p109
    %p111 = scmp.le.s32.totalorder 1, %s9
    %p112 = scmp.lt.s32.totalorder %s9, 3
    %p113 = pnand %p111, %p112
    %p114 = pneg %p113
    // Predicated region
    $region9: #{topdown_head_forward.3} parent=5 // pred_check
      _
    $region10: #{topdown_head_forward.3} parent=5 // pred_check_branch
      %116 = sbr.rel (%p113) target = $region12
    $region11: #{topdown_head_forward.3} parent=5 // pred_region
      %s117 = ssub.s32 %s9, 1
      // Predicated region
      $region13: #{topdown_head_forward.3} parent=11 // pred_check
        %p118 = pneg %p56
      $region14: #{topdown_head_forward.3} parent=11 // pred_check_branch
        %120 = sbr.rel (%p118) target = $region16
      $region15: #{topdown_head_forward.3} parent=11 // pred_region
        _
      $region16: #{topdown_head_forward.3} parent=11 // pred_fallthru
        _
      // Predicated region
      $region17: #{topdown_head_forward.3} parent=11 // pred_check
        %p121 = pneg %p77
      $region18: #{topdown_head_forward.3} parent=11 // pred_check_branch
        %123 = sbr.rel (%p121) target = $region20
      $region19: #{topdown_head_forward.3} parent=11 // pred_region
        _
      $region20: #{topdown_head_forward.3} parent=11 // pred_fallthru
        _
    $region12: #{topdown_head_forward.3} parent=5 // pred_fallthru
      _
    %p124 = scmp.lt.s32.totalorder %s9, 2
    // Predicated region
    $region21: #{topdown_head_forward.3} parent=5 // pred_check
      %p125 = pneg %p124
    $region22: #{topdown_head_forward.3} parent=5 // pred_check_branch
      %127 = sbr.rel (%p125) target = $region24
    $region23: #{topdown_head_forward.3} parent=5 // pred_region
      // Predicated region
      $region25: #{topdown_head_forward.3} parent=23 // pred_check
        %p128 = pneg %p29
      $region26: #{topdown_head_forward.3} parent=23 // pred_check_branch
        %130 = sbr.rel (%p128) target = $region28
      $region27: #{topdown_head_forward.3} parent=23 // pred_region
        %p131 = scmp.lt.s32.totalorder %s9, 1
        %s132 = scalar_select %p131, %s9, 1
        %s133 = smul.addr %s132, 20
        %s134 = smul.addr %s133, 4
        %s135 = scalar_lea.vmem %s0, %s134
      $region28: #{topdown_head_forward.3} parent=23 // pred_fallthru
        _
    $region24: #{topdown_head_forward.3} parent=5 // pred_fallthru
      _
    %p136 = scmp.le.s32.totalorder 1, %s9
    %p137 = scmp.lt.s32.totalorder %s9, 3
    %p138 = pnand %p136, %p137
    %p139 = pneg %p138
    // Predicated region
    $region29: #{topdown_head_forward.3} parent=5 // pred_check
      _
    $region30: #{topdown_head_forward.3} parent=5 // pred_check_branch
      %141 = sbr.rel (%p138) target = $region32
    $region31: #{topdown_head_forward.3} parent=5 // pred_region
      %s142 = ssub.s32 %s9, 1
      %p143 = scmp.lt.s32.totalorder %s14, 1
      %s144 = scalar_select %p143, %s14, 1
      %s145 = smul.addr %s144, 20
      %s146 = smul.addr %s145, 4
      %s147 = scalar_lea.vmem %s0, %s146
      %p148 = pneg %p35
      %p149 = pneg %p32
      %p150 = pneg %p56
      %p151 = pneg %p53
      %p152 = pneg %p77
      %p153 = pneg %p74
      %p154 = pneg %p103
      %p155 = pneg %p100
      %p156 = scmp.lt.s32.totalorder %s14, 1
      %s157 = scalar_select %p156, %s14, 1
      %s158 = smul.addr %s157, 16
      %s159 = smul.addr %s158, 4
      %s160 = scalar_lea.vmem %s3, %s159
      %p161 = scmp.lt.s32.totalorder %s14, 1
      %s162 = scalar_select %p161, %s14, 1
      %s163 = smul.addr %s162, 20
      %s164 = smul.addr %s163, 4
      %s165 = scalar_lea.vmem %s0, %s164
      %p166 = scmp.lt.s32.totalorder %s14, 1
      %s167 = scalar_select %p166, %s14, 1
      %s168 = smul.addr %s167, 16
      %s169 = smul.addr %s168, 4
      %s170 = scalar_lea.vmem %s3, %s169
      %v172 = vld [vmem:[%s165] sm:$0xf]
      %v173 = vld [vmem:[%s165 + $0x8] sm:$0xf]
      %v174 = vld [vmem:[%s165 + $0x10] sm:$0xf]
      %v175 = vld [vmem:[%s165 + $0x18] sm:$0xf]
      %v176 = vld [vmem:[%s165 + $0x20] sm:$0xf]
      %v177 = vld [vmem:[%s165 + $0x28] sm:$0xf]
      %v178 = vld [vmem:[%s165 + $0x30] sm:$0xf]
      %v179 = vld [vmem:[%s165 + $0x38] sm:$0xf]
      %v180 = vld [vmem:[%s165 + $0x4] sm:$0x1]
      %v181 = vld [vmem:[%s165 + $0xc] sm:$0x1]
      %v182 = vld [vmem:[%s165 + $0x14] sm:$0x1]
      %v183 = vld [vmem:[%s165 + $0x1c] sm:$0x1]
      %v184 = vld [vmem:[%s165 + $0x24] sm:$0x1]
      %v185 = vld [vmem:[%s165 + $0x2c] sm:$0x1]
      %v186 = vld [vmem:[%s165 + $0x34] sm:$0x1]
      %v187 = vld [vmem:[%s165 + $0x3c] sm:$0x1]
      %vm188 = vsmask.f32 3328
      %vm189 = vsmask.f32 7440
      %vm190 = vmor %vm188, %vm189
      %v192 = vshrl.u32 %v172, 16
      %v194 = vrot.slane %v192, 4
      %v195 = vshll.u32 %v172, 16
      %v197 = vrot.slane %v195, 5
      %v198 = vor.u32 %v194, %v197
      %v199 = vrot.slane %v198, 4
      %v201 = vshll.u32 %v180, 16
      %v203 = vrot.slane %v201, 5
      %v204 = vsel %vm190, %v199, %v203
      %v206 = vshrl.u32 %v173, 16
      %v208 = vrot.slane %v206, 4
      %v209 = vshll.u32 %v173, 16
      %v211 = vrot.slane %v209, 5
      %v212 = vor.u32 %v208, %v211
      %v213 = vrot.slane %v212, 4
      %v215 = vshll.u32 %v181, 16
      %v217 = vrot.slane %v215, 5
      %v218 = vsel %vm190, %v213, %v217
      %v220 = vshrl.u32 %v174, 16
      %v222 = vrot.slane %v220, 4
      %v223 = vshll.u32 %v174, 16
      %v225 = vrot.slane %v223, 5
      %v226 = vor.u32 %v222, %v225
      %v227 = vrot.slane %v226, 4
      %v229 = vshll.u32 %v182, 16
      %v231 = vrot.slane %v229, 5
      %v232 = vsel %vm190, %v227, %v231
      %v234 = vshrl.u32 %v175, 16
      %v236 = vrot.slane %v234, 4
      %v237 = vshll.u32 %v175, 16
      %v239 = vrot.slane %v237, 5
      %v240 = vor.u32 %v236, %v239
      %v241 = vrot.slane %v240, 4
      %v243 = vshll.u32 %v183, 16
      %v245 = vrot.slane %v243, 5
      %v246 = vsel %vm190, %v241, %v245
      %v248 = vshrl.u32 %v176, 16
      %v250 = vrot.slane %v248, 4
      %v251 = vshll.u32 %v176, 16
      %v253 = vrot.slane %v251, 5
      %v254 = vor.u32 %v250, %v253
      %v255 = vrot.slane %v254, 4
      %v257 = vshll.u32 %v184, 16
      %v259 = vrot.slane %v257, 5
      %v260 = vsel %vm190, %v255, %v259
      %v262 = vshrl.u32 %v177, 16
      %v264 = vrot.slane %v262, 4
      %v265 = vshll.u32 %v177, 16
      %v267 = vrot.slane %v265, 5
      %v268 = vor.u32 %v264, %v267
      %v269 = vrot.slane %v268, 4
      %v271 = vshll.u32 %v185, 16
      %v273 = vrot.slane %v271, 5
      %v274 = vsel %vm190, %v269, %v273
      %v276 = vshrl.u32 %v178, 16
      %v278 = vrot.slane %v276, 4
      %v279 = vshll.u32 %v178, 16
      %v281 = vrot.slane %v279, 5
      %v282 = vor.u32 %v278, %v281
      %v283 = vrot.slane %v282, 4
      %v285 = vshll.u32 %v186, 16
      %v287 = vrot.slane %v285, 5
      %v288 = vsel %vm190, %v283, %v287
      %v290 = vshrl.u32 %v179, 16
      %v292 = vrot.slane %v290, 4
      %v293 = vshll.u32 %v179, 16
      %v295 = vrot.slane %v293, 5
      %v296 = vor.u32 %v292, %v295
      %v297 = vrot.slane %v296, 4
      %v299 = vshll.u32 %v187, 16
      %v301 = vrot.slane %v299, 5
      %v302 = vsel %vm190, %v297, %v301
      %v303 = vld [vmem:[%s165] sm:$0xe]
      %v304 = vld [vmem:[%s165 + $0x8] sm:$0xe]
      %v305 = vld [vmem:[%s165 + $0x10] sm:$0xe]
      %v306 = vld [vmem:[%s165 + $0x18] sm:$0xe]
      %v307 = vld [vmem:[%s165 + $0x20] sm:$0xe]
      %v308 = vld [vmem:[%s165 + $0x28] sm:$0xe]
      %v309 = vld [vmem:[%s165 + $0x30] sm:$0xe]
      %v310 = vld [vmem:[%s165 + $0x38] sm:$0xe]
      %vm327 = vcmask 1042432
      %vm328 = vcmask 1046532
      %vm329 = vmor %vm327, %vm328
      %v330 = vrot.slane %v303, 5
      %v331 = vrot.slane %v330, 4
      %v332 = vrot.slane %v180, 5
      %v333 = vsel %vm329, %v331, %v332
      %v334 = vrot.slane %v304, 5
      %v335 = vrot.slane %v334, 4
      %v336 = vrot.slane %v181, 5
      %v337 = vsel %vm329, %v335, %v336
      %v338 = vrot.slane %v305, 5
      %v339 = vrot.slane %v338, 4
      %v340 = vrot.slane %v182, 5
      %v341 = vsel %vm329, %v339, %v340
      %v342 = vrot.slane %v306, 5
      %v343 = vrot.slane %v342, 4
      %v344 = vrot.slane %v183, 5
      %v345 = vsel %vm329, %v343, %v344
      %v346 = vrot.slane %v307, 5
      %v347 = vrot.slane %v346, 4
      %v348 = vrot.slane %v184, 5
      %v349 = vsel %vm329, %v347, %v348
      %v350 = vrot.slane %v308, 5
      %v351 = vrot.slane %v350, 4
      %v352 = vrot.slane %v185, 5
      %v353 = vsel %vm329, %v351, %v352
      %v354 = vrot.slane %v309, 5
      %v355 = vrot.slane %v354, 4
      %v356 = vrot.slane %v186, 5
      %v357 = vsel %vm329, %v355, %v356
      %v358 = vrot.slane %v310, 5
      %v359 = vrot.slane %v358, 4
      %v360 = vrot.slane %v187, 5
      %v361 = vsel %vm329, %v359, %v360
      %s362 = scalar_lea.vmem %s165, 8
      %v363 = vld [vmem:[%s362] sm:$0xf]
      %v364 = vld [vmem:[%s362 + $0x8] sm:$0xf]
      %v365 = vld [vmem:[%s362 + $0x10] sm:$0xf]
      %v366 = vld [vmem:[%s362 + $0x18] sm:$0xf]
      %v367 = vld [vmem:[%s362 + $0x20] sm:$0xf]
      %v368 = vld [vmem:[%s362 + $0x28] sm:$0xf]
      %v369 = vld [vmem:[%s362 + $0x30] sm:$0xf]
      %v370 = vld [vmem:[%s362 + $0x38] sm:$0xf]
      %v371 = vld [vmem:[%s362 + $0x4] sm:$0x1]
      %v372 = vld [vmem:[%s362 + $0xc] sm:$0x1]
      %v373 = vld [vmem:[%s362 + $0x14] sm:$0x1]
      %v374 = vld [vmem:[%s362 + $0x1c] sm:$0x1]
      %v375 = vld [vmem:[%s362 + $0x24] sm:$0x1]
      %v376 = vld [vmem:[%s362 + $0x2c] sm:$0x1]
      %v377 = vld [vmem:[%s362 + $0x34] sm:$0x1]
      %v378 = vld [vmem:[%s362 + $0x3c] sm:$0x1]
      %v380 = vshrl.u32 %v363, 16
      %v382 = vrot.slane %v380, 4
      %v383 = vshll.u32 %v363, 16
      %v385 = vrot.slane %v383, 5
      %v386 = vor.u32 %v382, %v385
      %v387 = vrot.slane %v386, 4
      %v389 = vshll.u32 %v371, 16
      %v391 = vrot.slane %v389, 5
      %v392 = vsel %vm190, %v387, %v391
      %v394 = vshrl.u32 %v364, 16
      %v396 = vrot.slane %v394, 4
      %v397 = vshll.u32 %v364, 16
      %v399 = vrot.slane %v397, 5
      %v400 = vor.u32 %v396, %v399
      %v401 = vrot.slane %v400, 4
      %v403 = vshll.u32 %v372, 16
      %v405 = vrot.slane %v403, 5
      %v406 = vsel %vm190, %v401, %v405
      %v408 = vshrl.u32 %v365, 16
      %v410 = vrot.slane %v408, 4
      %v411 = vshll.u32 %v365, 16
      %v413 = vrot.slane %v411, 5
      %v414 = vor.u32 %v410, %v413
      %v415 = vrot.slane %v414, 4
      %v417 = vshll.u32 %v373, 16
      %v419 = vrot.slane %v417, 5
      %v420 = vsel %vm190, %v415, %v419
      %v422 = vshrl.u32 %v366, 16
      %v424 = vrot.slane %v422, 4
      %v425 = vshll.u32 %v366, 16
      %v427 = vrot.slane %v425, 5
      %v428 = vor.u32 %v424, %v427
      %v429 = vrot.slane %v428, 4
      %v431 = vshll.u32 %v374, 16
      %v433 = vrot.slane %v431, 5
      %v434 = vsel %vm190, %v429, %v433
      %v436 = vshrl.u32 %v367, 16
      %v438 = vrot.slane %v436, 4
      %v439 = vshll.u32 %v367, 16
      %v441 = vrot.slane %v439, 5
      %v442 = vor.u32 %v438, %v441
      %v443 = vrot.slane %v442, 4
      %v445 = vshll.u32 %v375, 16
      %v447 = vrot.slane %v445, 5
      %v448 = vsel %vm190, %v443, %v447
      %v450 = vshrl.u32 %v368, 16
      %v452 = vrot.slane %v450, 4
      %v453 = vshll.u32 %v368, 16
      %v455 = vrot.slane %v453, 5
      %v456 = vor.u32 %v452, %v455
      %v457 = vrot.slane %v456, 4
      %v459 = vshll.u32 %v376, 16
      %v461 = vrot.slane %v459, 5
      %v462 = vsel %vm190, %v457, %v461
      %v464 = vshrl.u32 %v369, 16
      %v466 = vrot.slane %v464, 4
      %v467 = vshll.u32 %v369, 16
      %v469 = vrot.slane %v467, 5
      %v470 = vor.u32 %v466, %v469
      %v471 = vrot.slane %v470, 4
      %v473 = vshll.u32 %v377, 16
      %v475 = vrot.slane %v473, 5
      %v476 = vsel %vm190, %v471, %v475
      %v478 = vshrl.u32 %v370, 16
      %v480 = vrot.slane %v478, 4
      %v481 = vshll.u32 %v370, 16
      %v483 = vrot.slane %v481, 5
      %v484 = vor.u32 %v480, %v483
      %v485 = vrot.slane %v484, 4
      %v487 = vshll.u32 %v378, 16
      %v489 = vrot.slane %v487, 5
      %v490 = vsel %vm190, %v485, %v489
      %v491 = vld [vmem:[%s362] sm:$0xe]
      %v492 = vld [vmem:[%s362 + $0x8] sm:$0xe]
      %v493 = vld [vmem:[%s362 + $0x10] sm:$0xe]
      %v494 = vld [vmem:[%s362 + $0x18] sm:$0xe]
      %v495 = vld [vmem:[%s362 + $0x20] sm:$0xe]
      %v496 = vld [vmem:[%s362 + $0x28] sm:$0xe]
      %v497 = vld [vmem:[%s362 + $0x30] sm:$0xe]
      %v498 = vld [vmem:[%s362 + $0x38] sm:$0xe]
      %v515 = vrot.slane %v491, 5
      %v516 = vrot.slane %v515, 4
      %v517 = vrot.slane %v371, 5
      %v518 = vsel %vm329, %v516, %v517
      %v519 = vrot.slane %v492, 5
      %v520 = vrot.slane %v519, 4
      %v521 = vrot.slane %v372, 5
      %v522 = vsel %vm329, %v520, %v521
      %v523 = vrot.slane %v493, 5
      %v524 = vrot.slane %v523, 4
      %v525 = vrot.slane %v373, 5
      %v526 = vsel %vm329, %v524, %v525
      %v527 = vrot.slane %v494, 5
      %v528 = vrot.slane %v527, 4
      %v529 = vrot.slane %v374, 5
      %v530 = vsel %vm329, %v528, %v529
      %v531 = vrot.slane %v495, 5
      %v532 = vrot.slane %v531, 4
      %v533 = vrot.slane %v375, 5
      %v534 = vsel %vm329, %v532, %v533
      %v535 = vrot.slane %v496, 5
      %v536 = vrot.slane %v535, 4
      %v537 = vrot.slane %v376, 5
      %v538 = vsel %vm329, %v536, %v537
      %v539 = vrot.slane %v497, 5
      %v540 = vrot.slane %v539, 4
      %v541 = vrot.slane %v377, 5
      %v542 = vsel %vm329, %v540, %v541
      %v543 = vrot.slane %v498, 5
      %v544 = vrot.slane %v543, 4
      %v545 = vrot.slane %v378, 5
      %v546 = vsel %vm329, %v544, %v545
      %s547 = scalar_lea.vmem %s165, 16
      %v548 = vld [vmem:[%s547] sm:$0xf]
      %v549 = vld [vmem:[%s547 + $0x8] sm:$0xf]
      %v550 = vld [vmem:[%s547 + $0x10] sm:$0xf]
      %v551 = vld [vmem:[%s547 + $0x18] sm:$0xf]
      %v552 = vld [vmem:[%s547 + $0x20] sm:$0xf]
      %v553 = vld [vmem:[%s547 + $0x28] sm:$0xf]
      %v554 = vld [vmem:[%s547 + $0x30] sm:$0xf]
      %v555 = vld [vmem:[%s547 + $0x38] sm:$0xf]
      %v556 = vld [vmem:[%s547 + $0x4] sm:$0x1]
      %v557 = vld [vmem:[%s547 + $0xc] sm:$0x1]
      %v558 = vld [vmem:[%s547 + $0x14] sm:$0x1]
      %v559 = vld [vmem:[%s547 + $0x1c] sm:$0x1]
      %v560 = vld [vmem:[%s547 + $0x24] sm:$0x1]
      %v561 = vld [vmem:[%s547 + $0x2c] sm:$0x1]
      %v562 = vld [vmem:[%s547 + $0x34] sm:$0x1]
      %v563 = vld [vmem:[%s547 + $0x3c] sm:$0x1]
      %v565 = vshrl.u32 %v548, 16
      %v567 = vrot.slane %v565, 4
      %v568 = vshll.u32 %v548, 16
      %v570 = vrot.slane %v568, 5
      %v571 = vor.u32 %v567, %v570
      %v572 = vrot.slane %v571, 4
      %v574 = vshll.u32 %v556, 16
      %v576 = vrot.slane %v574, 5
      %v577 = vsel %vm190, %v572, %v576
      %v579 = vshrl.u32 %v549, 16
      %v581 = vrot.slane %v579, 4
      %v582 = vshll.u32 %v549, 16
      %v584 = vrot.slane %v582, 5
      %v585 = vor.u32 %v581, %v584
      %v586 = vrot.slane %v585, 4
      %v588 = vshll.u32 %v557, 16
      %v590 = vrot.slane %v588, 5
      %v591 = vsel %vm190, %v586, %v590
      %v593 = vshrl.u32 %v550, 16
      %v595 = vrot.slane %v593, 4
      %v596 = vshll.u32 %v550, 16
      %v598 = vrot.slane %v596, 5
      %v599 = vor.u32 %v595, %v598
      %v600 = vrot.slane %v599, 4
      %v602 = vshll.u32 %v558, 16
      %v604 = vrot.slane %v602, 5
      %v605 = vsel %vm190, %v600, %v604
      %v607 = vshrl.u32 %v551, 16
      %v609 = vrot.slane %v607, 4
      %v610 = vshll.u32 %v551, 16
      %v612 = vrot.slane %v610, 5
      %v613 = vor.u32 %v609, %v612
      %v614 = vrot.slane %v613, 4
      %v616 = vshll.u32 %v559, 16
      %v618 = vrot.slane %v616, 5
      %v619 = vsel %vm190, %v614, %v618
      %v621 = vshrl.u32 %v552, 16
      %v623 = vrot.slane %v621, 4
      %v624 = vshll.u32 %v552, 16
      %v626 = vrot.slane %v624, 5
      %v627 = vor.u32 %v623, %v626
      %v628 = vrot.slane %v627, 4
      %v630 = vshll.u32 %v560, 16
      %v632 = vrot.slane %v630, 5
      %v633 = vsel %vm190, %v628, %v632
      %v635 = vshrl.u32 %v553, 16
      %v637 = vrot.slane %v635, 4
      %v638 = vshll.u32 %v553, 16
      %v640 = vrot.slane %v638, 5
      %v641 = vor.u32 %v637, %v640
      %v642 = vrot.slane %v641, 4
      %v644 = vshll.u32 %v561, 16
      %v646 = vrot.slane %v644, 5
      %v647 = vsel %vm190, %v642, %v646
      %v649 = vshrl.u32 %v554, 16
      %v651 = vrot.slane %v649, 4
      %v652 = vshll.u32 %v554, 16
      %v654 = vrot.slane %v652, 5
      %v655 = vor.u32 %v651, %v654
      %v656 = vrot.slane %v655, 4
      %v658 = vshll.u32 %v562, 16
      %v660 = vrot.slane %v658, 5
      %v661 = vsel %vm190, %v656, %v660
      %v663 = vshrl.u32 %v555, 16
      %v665 = vrot.slane %v663, 4
      %v666 = vshll.u32 %v555, 16
      %v668 = vrot.slane %v666, 5
      %v669 = vor.u32 %v665, %v668
      %v670 = vrot.slane %v669, 4
      %v672 = vshll.u32 %v563, 16
      %v674 = vrot.slane %v672, 5
      %v675 = vsel %vm190, %v670, %v674
      %v676 = vld [vmem:[%s547] sm:$0xe]
      %v677 = vld [vmem:[%s547 + $0x8] sm:$0xe]
      %v678 = vld [vmem:[%s547 + $0x10] sm:$0xe]
      %v679 = vld [vmem:[%s547 + $0x18] sm:$0xe]
      %v680 = vld [vmem:[%s547 + $0x20] sm:$0xe]
      %v681 = vld [vmem:[%s547 + $0x28] sm:$0xe]
      %v682 = vld [vmem:[%s547 + $0x30] sm:$0xe]
      %v683 = vld [vmem:[%s547 + $0x38] sm:$0xe]
      %v700 = vrot.slane %v676, 5
      %v701 = vrot.slane %v700, 4
      %v702 = vrot.slane %v556, 5
      %v703 = vsel %vm329, %v701, %v702
      %v704 = vrot.slane %v677, 5
      %v705 = vrot.slane %v704, 4
      %v706 = vrot.slane %v557, 5
      %v707 = vsel %vm329, %v705, %v706
      %v708 = vrot.slane %v678, 5
      %v709 = vrot.slane %v708, 4
      %v710 = vrot.slane %v558, 5
      %v711 = vsel %vm329, %v709, %v710
      %v712 = vrot.slane %v679, 5
      %v713 = vrot.slane %v712, 4
      %v714 = vrot.slane %v559, 5
      %v715 = vsel %vm329, %v713, %v714
      %v716 = vrot.slane %v680, 5
      %v717 = vrot.slane %v716, 4
      %v718 = vrot.slane %v560, 5
      %v719 = vsel %vm329, %v717, %v718
      %v720 = vrot.slane %v681, 5
      %v721 = vrot.slane %v720, 4
      %v722 = vrot.slane %v561, 5
      %v723 = vsel %vm329, %v721, %v722
      %v724 = vrot.slane %v682, 5
      %v725 = vrot.slane %v724, 4
      %v726 = vrot.slane %v562, 5
      %v727 = vsel %vm329, %v725, %v726
      %v728 = vrot.slane %v683, 5
      %v729 = vrot.slane %v728, 4
      %v730 = vrot.slane %v563, 5
      %v731 = vsel %vm329, %v729, %v730
      %v732 = vld [vmem:[%s2] sm:$0x1]
      %v733 = vld [vmem:[%s1] sm:$0xf]
      %v734 = vld [vmem:[%s1 + $0x4] sm:$0xf]
      %s735 = scalar_lea.vmem %s1, 8
      %v736 = vld [vmem:[%s735] sm:$0xf]
      %v737 = vld [vmem:[%s735 + $0x4] sm:$0xf]
      %v738 = vunpack.c.l.b16 %v204
      %v739 = vunpack.c.l.b16 %v218
      %v740 = vunpack.c.l.b16 %v232
      %v741 = vunpack.c.l.b16 %v246
      %v742 = vunpack.c.l.b16 %v260
      %v743 = vunpack.c.l.b16 %v274
      %v744 = vunpack.c.l.b16 %v288
      %v745 = vunpack.c.l.b16 %v302
      %v746 = vpack.c.b16 %v739, %v738
      %v747 = vpack.c.b16 %v741, %v740
      %v748 = vpack.c.b16 %v743, %v742
      %v749 = vpack.c.b16 %v745, %v744
      %v752 = vunpack.c.l.b16 %v736
      %v753 = vunpack.c.l.b16 %v737
      %v754 = vpack.c.b16 %v753, %v752
      %vm756 = vcmask 130048
      %v758 = vsel %vm756, %v746, 0
      %v761 = vsel %vm756, %v747, 0
      %v764 = vsel %vm756, %v748, 0
      %v767 = vsel %vm756, %v749, 0
      %769 = vmatprep.subr.bf16.mxu0 0
      %770 = vmatpush1.bf16.msra.mxu0 0
      %771 = vmatprep.subr.bf16.mxu0 0
      %772 = vmatpush1.bf16.msra.mxu0 0
      %773 = vmatprep.subr.bf16.mxu0 0
      %774 = vmatpush1.bf16.msra.mxu0 0
      %775 = vmatprep.subr.bf16.mxu0 0
      %776 = vmatpush1.bf16.msra.mxu0 0
      %777 = vmatprep.subr.bf16.mxu0 0
      %778 = vmatpush1.bf16.msra.mxu0 0
      %779 = vmatprep.subr.bf16.mxu0 0
      %780 = vmatpush1.bf16.msra.mxu0 0
      %781 = vmatprep.subr.bf16.mxu0 0
      %782 = vmatpush1.bf16.msra.mxu0 0
      %783 = vmatprep.subr.bf16.mxu0 0
      %784 = vmatpush1.bf16.msra.mxu0 %v754
      %785 = vmatprep.subr.bf16.mxu0 0
      %786 = vmatpush2.bf16.msra.mxu0 0
      %787 = vmatprep.subr.bf16.mxu0 0
      %788 = vmatpush2.bf16.msra.mxu0 0
      %789 = vmatprep.subr.bf16.mxu0 0
      %790 = vmatpush2.bf16.msra.mxu0 0
      %791 = vmatprep.subr.bf16.mxu0 0
      %792 = vmatpush2.bf16.msra.mxu0 0
      %793 = vmatprep.subr.bf16.mxu0 0
      %794 = vmatpush2.bf16.msra.mxu0 0
      %795 = vmatprep.subr.bf16.mxu0 0
      %796 = vmatpush2.bf16.msra.mxu0 0
      %797 = vmatprep.subr.bf16.mxu0 0
      %798 = vmatpush2.bf16.msra.mxu0 0
      %799 = vmatprep.subr.bf16.mxu0 0
      %800 = vmatpush2.bf16.msra.mxu0 0
      %801 = vmatprep.mubr.bf16.mxu0 0
      %802 = vmatmul.mubr.bf16.gmra.mxu0 %v758
      %v803 = vpop.f32.mrf.mxu0
      %v804 = vadd.f32 0.0, %v803
      %v805 = vpop.f32.mrf.mxu0
      %v806 = vpop.f32.mrf.mxu0
      %v807 = vadd.f32 0.0, %v806
      %v808 = vpop.f32.mrf.mxu0
      %809 = vmatprep.mubr.bf16.mxu0 0
      %810 = vmatmul.mubr.bf16.gmra.mxu0 %v761
      %v811 = vpop.f32.mrf.mxu0
      %v812 = vadd.f32 0.0, %v811
      %v813 = vpop.f32.mrf.mxu0
      %v814 = vpop.f32.mrf.mxu0
      %v815 = vadd.f32 0.0, %v814
      %v816 = vpop.f32.mrf.mxu0
      %817 = vmatprep.mubr.bf16.mxu0 0
      %818 = vmatmul.mubr.bf16.gmra.mxu0 %v764
      %v819 = vpop.f32.mrf.mxu0
      %v820 = vadd.f32 0.0, %v819
      %v821 = vpop.f32.mrf.mxu0
      %v822 = vpop.f32.mrf.mxu0
      %v823 = vadd.f32 0.0, %v822
      %v824 = vpop.f32.mrf.mxu0
      %825 = vmatprep.mubr.bf16.mxu0 0
      %826 = vmatmul.mubr.bf16.gmra.mxu0 %v767
      %v827 = vpop.f32.mrf.mxu0
      %v828 = vadd.f32 0.0, %v827
      %v829 = vpop.f32.mrf.mxu0
      %v830 = vpop.f32.mrf.mxu0
      %v831 = vadd.f32 0.0, %v830
      %v832 = vpop.f32.mrf.mxu0
      %833 = vdwg.mxu0
      %v842 = vunpack.c.l.b16 %v172
      %v843 = vunpack.c.l.b16 %v173
      %v844 = vunpack.c.l.b16 %v174
      %v845 = vunpack.c.l.b16 %v175
      %v846 = vunpack.c.l.b16 %v176
      %v847 = vunpack.c.l.b16 %v177
      %v848 = vunpack.c.l.b16 %v178
      %v849 = vunpack.c.l.b16 %v179
      %v850 = vpack.c.b16 %v843, %v842
      %v851 = vpack.c.b16 %v845, %v844
      %v852 = vpack.c.b16 %v847, %v846
      %v853 = vpack.c.b16 %v849, %v848
      %v856 = vunpack.c.l.b16 %v733
      %v857 = vunpack.c.l.b16 %v734
      %v858 = vpack.c.b16 %v857, %v856
      %v861 = vsel %vm756, %v850, 0
      %v864 = vsel %vm756, %v851, 0
      %v867 = vsel %vm756, %v852, 0
      %v870 = vsel %vm756, %v853, 0
      %872 = vmatprep.subr.bf16.mxu0 0
      %873 = vmatpush1.bf16.msra.mxu0 0
      %874 = vmatprep.subr.bf16.mxu0 0
      %875 = vmatpush1.bf16.msra.mxu0 0
      %876 = vmatprep.subr.bf16.mxu0 0
      %877 = vmatpush1.bf16.msra.mxu0 0
      %878 = vmatprep.subr.bf16.mxu0 0
      %879 = vmatpush1.bf16.msra.mxu0 0
      %880 = vmatprep.subr.bf16.mxu0 0
      %881 = vmatpush1.bf16.msra.mxu0 0
      %882 = vmatprep.subr.bf16.mxu0 0
      %883 = vmatpush1.bf16.msra.mxu0 0
      %884 = vmatprep.subr.bf16.mxu0 0
      %885 = vmatpush1.bf16.msra.mxu0 0
      %886 = vmatprep.subr.bf16.mxu0 0
      %887 = vmatpush1.bf16.msra.mxu0 %v858
      %888 = vmatprep.subr.bf16.mxu0 0
      %889 = vmatpush2.bf16.msra.mxu0 0
      %890 = vmatprep.subr.bf16.mxu0 0
      %891 = vmatpush2.bf16.msra.mxu0 0
      %892 = vmatprep.subr.bf16.mxu0 0
      %893 = vmatpush2.bf16.msra.mxu0 0
      %894 = vmatprep.subr.bf16.mxu0 0
      %895 = vmatpush2.bf16.msra.mxu0 0
      %896 = vmatprep.subr.bf16.mxu0 0
      %897 = vmatpush2.bf16.msra.mxu0 0
      %898 = vmatprep.subr.bf16.mxu0 0
      %899 = vmatpush2.bf16.msra.mxu0 0
      %900 = vmatprep.subr.bf16.mxu0 0
      %901 = vmatpush2.bf16.msra.mxu0 0
      %902 = vmatprep.subr.bf16.mxu0 0
      %903 = vmatpush2.bf16.msra.mxu0 0
      %904 = vmatprep.mubr.bf16.mxu0 0
      %905 = vmatmul.mubr.bf16.gmra.mxu0 %v861
      %v906 = vpop.f32.mrf.mxu0
      %v907 = vadd.f32 %v804, %v906
      %v908 = vpop.f32.mrf.mxu0
      %v909 = vpop.f32.mrf.mxu0
      %v910 = vadd.f32 %v807, %v909
      %v911 = vpop.f32.mrf.mxu0
      %912 = vmatprep.mubr.bf16.mxu0 0
      %913 = vmatmul.mubr.bf16.gmra.mxu0 %v864
      %v914 = vpop.f32.mrf.mxu0
      %v915 = vadd.f32 %v812, %v914
      %v916 = vpop.f32.mrf.mxu0
      %v917 = vpop.f32.mrf.mxu0
      %v918 = vadd.f32 %v815, %v917
      %v919 = vpop.f32.mrf.mxu0
      %920 = vmatprep.mubr.bf16.mxu0 0
      %921 = vmatmul.mubr.bf16.gmra.mxu0 %v867
      %v922 = vpop.f32.mrf.mxu0
      %v923 = vadd.f32 %v820, %v922
      %v924 = vpop.f32.mrf.mxu0
      %v925 = vpop.f32.mrf.mxu0
      %v926 = vadd.f32 %v823, %v925
      %v927 = vpop.f32.mrf.mxu0
      %928 = vmatprep.mubr.bf16.mxu0 0
      %929 = vmatmul.mubr.bf16.gmra.mxu0 %v870
      %v930 = vpop.f32.mrf.mxu0
      %v931 = vadd.f32 %v828, %v930
      %v932 = vpop.f32.mrf.mxu0
      %v933 = vpop.f32.mrf.mxu0
      %v934 = vadd.f32 %v831, %v933
      %v935 = vpop.f32.mrf.mxu0
      %936 = vdwg.mxu0
      %s937 = scalar_lea.vmem %s1, 16
      %v938 = vld [vmem:[%s937] sm:$0xf]
      %v939 = vld [vmem:[%s937 + $0x4] sm:$0xf]
      %v948 = vunpack.c.l.b16 %v363
      %v949 = vunpack.c.l.b16 %v364
      %v950 = vunpack.c.l.b16 %v365
      %v951 = vunpack.c.l.b16 %v366
      %v952 = vunpack.c.l.b16 %v367
      %v953 = vunpack.c.l.b16 %v368
      %v954 = vunpack.c.l.b16 %v369
      %v955 = vunpack.c.l.b16 %v370
      %v956 = vpack.c.b16 %v949, %v948
      %v957 = vpack.c.b16 %v951, %v950
      %v958 = vpack.c.b16 %v953, %v952
      %v959 = vpack.c.b16 %v955, %v954
      %v962 = vunpack.c.l.b16 %v938
      %v963 = vunpack.c.l.b16 %v939
      %v964 = vpack.c.b16 %v963, %v962
      %v967 = vsel %vm756, %v956, 0
      %v970 = vsel %vm756, %v957, 0
      %v973 = vsel %vm756, %v958, 0
      %v976 = vsel %vm756, %v959, 0
      %978 = vmatprep.subr.bf16.mxu0 0
      %979 = vmatpush1.bf16.msra.mxu0 0
      %980 = vmatprep.subr.bf16.mxu0 0
      %981 = vmatpush1.bf16.msra.mxu0 0
      %982 = vmatprep.subr.bf16.mxu0 0
      %983 = vmatpush1.bf16.msra.mxu0 0
      %984 = vmatprep.subr.bf16.mxu0 0
      %985 = vmatpush1.bf16.msra.mxu0 0
      %986 = vmatprep.subr.bf16.mxu0 0
      %987 = vmatpush1.bf16.msra.mxu0 0
      %988 = vmatprep.subr.bf16.mxu0 0
      %989 = vmatpush1.bf16.msra.mxu0 0
      %990 = vmatprep.subr.bf16.mxu0 0
      %991 = vmatpush1.bf16.msra.mxu0 0
      %992 = vmatprep.subr.bf16.mxu0 0
      %993 = vmatpush1.bf16.msra.mxu0 %v964
      %994 = vmatprep.subr.bf16.mxu0 0
      %995 = vmatpush2.bf16.msra.mxu0 0
      %996 = vmatprep.subr.bf16.mxu0 0
      %997 = vmatpush2.bf16.msra.mxu0 0
      %998 = vmatprep.subr.bf16.mxu0 0
      %999 = vmatpush2.bf16.msra.mxu0 0
      %1000 = vmatprep.subr.bf16.mxu0 0
      %1001 = vmatpush2.bf16.msra.mxu0 0
      %1002 = vmatprep.subr.bf16.mxu0 0
      %1003 = vmatpush2.bf16.msra.mxu0 0
      %1004 = vmatprep.subr.bf16.mxu0 0
      %1005 = vmatpush2.bf16.msra.mxu0 0
      %1006 = vmatprep.subr.bf16.mxu0 0
      %1007 = vmatpush2.bf16.msra.mxu0 0
      %1008 = vmatprep.subr.bf16.mxu0 0
      %1009 = vmatpush2.bf16.msra.mxu0 0
      %1010 = vmatprep.mubr.bf16.mxu0 0
      %1011 = vmatmul.mubr.bf16.gmra.mxu0 %v967
      %v1012 = vpop.f32.mrf.mxu0
      %v1013 = vadd.f32 0.0, %v1012
      %v1014 = vpop.f32.mrf.mxu0
      %v1015 = vpop.f32.mrf.mxu0
      %v1016 = vadd.f32 0.0, %v1015
      %v1017 = vpop.f32.mrf.mxu0
      %1018 = vmatprep.mubr.bf16.mxu0 0
      %1019 = vmatmul.mubr.bf16.gmra.mxu0 %v970
      %v1020 = vpop.f32.mrf.mxu0
      %v1021 = vadd.f32 0.0, %v1020
      %v1022 = vpop.f32.mrf.mxu0
      %v1023 = vpop.f32.mrf.mxu0
      %v1024 = vadd.f32 0.0, %v1023
      %v1025 = vpop.f32.mrf.mxu0
      %1026 = vmatprep.mubr.bf16.mxu0 0
      %1027 = vmatmul.mubr.bf16.gmra.mxu0 %v973
      %v1028 = vpop.f32.mrf.mxu0
      %v1029 = vadd.f32 0.0, %v1028
      %v1030 = vpop.f32.mrf.mxu0
      %v1031 = vpop.f32.mrf.mxu0
      %v1032 = vadd.f32 0.0, %v1031
      %v1033 = vpop.f32.mrf.mxu0
      %1034 = vmatprep.mubr.bf16.mxu0 0
      %1035 = vmatmul.mubr.bf16.gmra.mxu0 %v976
      %v1036 = vpop.f32.mrf.mxu0
      %v1037 = vadd.f32 0.0, %v1036
      %v1038 = vpop.f32.mrf.mxu0
      %v1039 = vpop.f32.mrf.mxu0
      %v1040 = vadd.f32 0.0, %v1039
      %v1041 = vpop.f32.mrf.mxu0
      %1042 = vdwg.mxu0
      %v1043 = vadd.f32 %v907, %v1013
      %v1044 = vadd.f32 %v910, %v1016
      %v1045 = vadd.f32 %v915, %v1021
      %v1046 = vadd.f32 %v918, %v1024
      %v1047 = vadd.f32 %v923, %v1029
      %v1048 = vadd.f32 %v926, %v1032
      %v1049 = vadd.f32 %v931, %v1037
      %v1050 = vadd.f32 %v934, %v1040
      %s1051 = scalar_lea.vmem %s1, 24
      %v1052 = vld [vmem:[%s1051] sm:$0xf]
      %v1053 = vld [vmem:[%s1051 + $0x4] sm:$0xf]
      %v1054 = vunpack.c.l.b16 %v392
      %v1055 = vunpack.c.l.b16 %v406
      %v1056 = vunpack.c.l.b16 %v420
      %v1057 = vunpack.c.l.b16 %v434
      %v1058 = vunpack.c.l.b16 %v448
      %v1059 = vunpack.c.l.b16 %v462
      %v1060 = vunpack.c.l.b16 %v476
      %v1061 = vunpack.c.l.b16 %v490
      %v1062 = vpack.c.b16 %v1055, %v1054
      %v1063 = vpack.c.b16 %v1057, %v1056
      %v1064 = vpack.c.b16 %v1059, %v1058
      %v1065 = vpack.c.b16 %v1061, %v1060
      %v1068 = vunpack.c.l.b16 %v1052
      %v1069 = vunpack.c.l.b16 %v1053
      %v1070 = vpack.c.b16 %v1069, %v1068
      %v1073 = vsel %vm756, %v1062, 0
      %v1076 = vsel %vm756, %v1063, 0
      %v1079 = vsel %vm756, %v1064, 0
      %v1082 = vsel %vm756, %v1065, 0
      %1084 = vmatprep.subr.bf16.mxu0 0
      %1085 = vmatpush1.bf16.msra.mxu0 0
      %1086 = vmatprep.subr.bf16.mxu0 0
      %1087 = vmatpush1.bf16.msra.mxu0 0
      %1088 = vmatprep.subr.bf16.mxu0 0
      %1089 = vmatpush1.bf16.msra.mxu0 0
      %1090 = vmatprep.subr.bf16.mxu0 0
      %1091 = vmatpush1.bf16.msra.mxu0 0
      %1092 = vmatprep.subr.bf16.mxu0 0
      %1093 = vmatpush1.bf16.msra.mxu0 0
      %1094 = vmatprep.subr.bf16.mxu0 0
      %1095 = vmatpush1.bf16.msra.mxu0 0
      %1096 = vmatprep.subr.bf16.mxu0 0
      %1097 = vmatpush1.bf16.msra.mxu0 0
      %1098 = vmatprep.subr.bf16.mxu0 0
      %1099 = vmatpush1.bf16.msra.mxu0 %v1070
      %1100 = vmatprep.subr.bf16.mxu0 0
      %1101 = vmatpush2.bf16.msra.mxu0 0
      %1102 = vmatprep.subr.bf16.mxu0 0
      %1103 = vmatpush2.bf16.msra.mxu0 0
      %1104 = vmatprep.subr.bf16.mxu0 0
      %1105 = vmatpush2.bf16.msra.mxu0 0
      %1106 = vmatprep.subr.bf16.mxu0 0
      %1107 = vmatpush2.bf16.msra.mxu0 0
      %1108 = vmatprep.subr.bf16.mxu0 0
      %1109 = vmatpush2.bf16.msra.mxu0 0
      %1110 = vmatprep.subr.bf16.mxu0 0
      %1111 = vmatpush2.bf16.msra.mxu0 0
      %1112 = vmatprep.subr.bf16.mxu0 0
      %1113 = vmatpush2.bf16.msra.mxu0 0
      %1114 = vmatprep.subr.bf16.mxu0 0
      %1115 = vmatpush2.bf16.msra.mxu0 0
      %1116 = vmatprep.mubr.bf16.mxu0 0
      %1117 = vmatmul.mubr.bf16.gmra.mxu0 %v1073
      %v1118 = vpop.f32.mrf.mxu0
      %v1119 = vadd.f32 0.0, %v1118
      %v1120 = vpop.f32.mrf.mxu0
      %v1121 = vpop.f32.mrf.mxu0
      %v1122 = vadd.f32 0.0, %v1121
      %v1123 = vpop.f32.mrf.mxu0
      %1124 = vmatprep.mubr.bf16.mxu0 0
      %1125 = vmatmul.mubr.bf16.gmra.mxu0 %v1076
      %v1126 = vpop.f32.mrf.mxu0
      %v1127 = vadd.f32 0.0, %v1126
      %v1128 = vpop.f32.mrf.mxu0
      %v1129 = vpop.f32.mrf.mxu0
      %v1130 = vadd.f32 0.0, %v1129
      %v1131 = vpop.f32.mrf.mxu0
      %1132 = vmatprep.mubr.bf16.mxu0 0
      %1133 = vmatmul.mubr.bf16.gmra.mxu0 %v1079
      %v1134 = vpop.f32.mrf.mxu0
      %v1135 = vadd.f32 0.0, %v1134
      %v1136 = vpop.f32.mrf.mxu0
      %v1137 = vpop.f32.mrf.mxu0
      %v1138 = vadd.f32 0.0, %v1137
      %v1139 = vpop.f32.mrf.mxu0
      %1140 = vmatprep.mubr.bf16.mxu0 0
      %1141 = vmatmul.mubr.bf16.gmra.mxu0 %v1082
      %v1142 = vpop.f32.mrf.mxu0
      %v1143 = vadd.f32 0.0, %v1142
      %v1144 = vpop.f32.mrf.mxu0
      %v1145 = vpop.f32.mrf.mxu0
      %v1146 = vadd.f32 0.0, %v1145
      %v1147 = vpop.f32.mrf.mxu0
      %1148 = vdwg.mxu0
      %v1149 = vadd.f32 %v1043, %v1119
      %v1150 = vadd.f32 %v1044, %v1122
      %v1151 = vadd.f32 %v1045, %v1127
      %v1152 = vadd.f32 %v1046, %v1130
      %v1153 = vadd.f32 %v1047, %v1135
      %v1154 = vadd.f32 %v1048, %v1138
      %v1155 = vadd.f32 %v1049, %v1143
      %v1156 = vadd.f32 %v1050, %v1146
      %v1158 = vlaneseq
      %v1159 = vshrl.u32 %v1158, 7
      %v1160 = vsub.s32 0, %v1159
      %v1161 = vrot.slane %v732, %v1160
      %v1163 = vadd.f32 %v1149, %v1161
      %v1164 = vadd.f32 %v1150, %v1161
      %v1165 = vadd.f32 %v1151, %v1161
      %v1166 = vadd.f32 %v1152, %v1161
      %v1167 = vadd.f32 %v1153, %v1161
      %v1168 = vadd.f32 %v1154, %v1161
      %v1169 = vadd.f32 %v1155, %v1161
      %v1170 = vadd.f32 %v1156, %v1161
      %v1171 = vmax.f32 %v1163, 0.0
      %v1172 = vmax.f32 %v1164, 0.0
      %v1173 = vmax.f32 %v1165, 0.0
      %v1174 = vmax.f32 %v1166, 0.0
      %v1175 = vmax.f32 %v1167, 0.0
      %v1176 = vmax.f32 %v1168, 0.0
      %v1177 = vmax.f32 %v1169, 0.0
      %v1178 = vmax.f32 %v1170, 0.0
      %v1179 = vpack.c.bf16 %v1172, %v1171
      %v1180 = vpack.c.bf16 %v1174, %v1173
      %v1181 = vpack.c.bf16 %v1176, %v1175
      %v1182 = vpack.c.bf16 %v1178, %v1177
      %v1187 = vunpack.c.l.b16 %v1179
      %v1188 = vunpack.c.h.b16 %v1179
      %v1189 = vunpack.c.l.b16 %v1180
      %v1190 = vunpack.c.h.b16 %v1180
      %v1191 = vunpack.c.l.b16 %v1181
      %v1192 = vunpack.c.h.b16 %v1181
      %v1193 = vunpack.c.l.b16 %v1182
      %v1194 = vunpack.c.h.b16 %v1182
      %v1195 = vpack.c.b16 %v1187, %v1187
      %v1196 = vpack.c.b16 %v1188, %v1188
      %v1197 = vpack.c.b16 %v1189, %v1189
      %v1198 = vpack.c.b16 %v1190, %v1190
      %v1199 = vpack.c.b16 %v1191, %v1191
      %v1200 = vpack.c.b16 %v1192, %v1192
      %v1201 = vpack.c.b16 %v1193, %v1193
      %v1202 = vpack.c.b16 %v1194, %v1194
      %vm1211 = vcmask 257024
      %1212 = vst.msk [vmem:[%s170] sm:$0xf] %vm1211, %v1195
      %1213 = vst.msk [vmem:[%s170 + $0x8] sm:$0xf] %vm1211, %v1196
      %1214 = vst.msk [vmem:[%s170 + $0x10] sm:$0xf] %vm1211, %v1197
      %1215 = vst.msk [vmem:[%s170 + $0x18] sm:$0xf] %vm1211, %v1198
      %1216 = vst.msk [vmem:[%s170 + $0x20] sm:$0xf] %vm1211, %v1199
      %1217 = vst.msk [vmem:[%s170 + $0x28] sm:$0xf] %vm1211, %v1200
      %1218 = vst.msk [vmem:[%s170 + $0x30] sm:$0xf] %vm1211, %v1201
      %1219 = vst.msk [vmem:[%s170 + $0x38] sm:$0xf] %vm1211, %v1202
      %s1220 = scalar_lea.vmem %s1, 32
      %v1221 = vld [vmem:[%s1220] sm:$0xf]
      %v1222 = vld [vmem:[%s1220 + $0x4] sm:$0xf]
      %s1223 = scalar_lea.vmem %s1, 40
      %v1224 = vld [vmem:[%s1223] sm:$0xf]
      %v1225 = vld [vmem:[%s1223 + $0x4] sm:$0xf]
      %v1226 = vunpack.c.l.b16 %v333
      %v1227 = vunpack.c.l.b16 %v337
      %v1228 = vunpack.c.l.b16 %v341
      %v1229 = vunpack.c.l.b16 %v345
      %v1230 = vunpack.c.l.b16 %v349
      %v1231 = vunpack.c.l.b16 %v353
      %v1232 = vunpack.c.l.b16 %v357
      %v1233 = vunpack.c.l.b16 %v361
      %v1234 = vpack.c.b16 %v1227, %v1226
      %v1235 = vpack.c.b16 %v1229, %v1228
      %v1236 = vpack.c.b16 %v1231, %v1230
      %v1237 = vpack.c.b16 %v1233, %v1232
      %v1240 = vunpack.c.l.b16 %v1224
      %v1241 = vunpack.c.l.b16 %v1225
      %v1242 = vpack.c.b16 %v1241, %v1240
      %v1245 = vsel %vm756, %v1234, 0
      %v1248 = vsel %vm756, %v1235, 0
      %v1251 = vsel %vm756, %v1236, 0
      %v1254 = vsel %vm756, %v1237, 0
      %1256 = vmatprep.subr.bf16.mxu0 0
      %1257 = vmatpush1.bf16.msra.mxu0 0
      %1258 = vmatprep.subr.bf16.mxu0 0
      %1259 = vmatpush1.bf16.msra.mxu0 0
      %1260 = vmatprep.subr.bf16.mxu0 0
      %1261 = vmatpush1.bf16.msra.mxu0 0
      %1262 = vmatprep.subr.bf16.mxu0 0
      %1263 = vmatpush1.bf16.msra.mxu0 0
      %1264 = vmatprep.subr.bf16.mxu0 0
      %1265 = vmatpush1.bf16.msra.mxu0 0
      %1266 = vmatprep.subr.bf16.mxu0 0
      %1267 = vmatpush1.bf16.msra.mxu0 0
      %1268 = vmatprep.subr.bf16.mxu0 0
      %1269 = vmatpush1.bf16.msra.mxu0 0
      %1270 = vmatprep.subr.bf16.mxu0 0
      %1271 = vmatpush1.bf16.msra.mxu0 %v1242
      %1272 = vmatprep.subr.bf16.mxu0 0
      %1273 = vmatpush2.bf16.msra.mxu0 0
      %1274 = vmatprep.subr.bf16.mxu0 0
      %1275 = vmatpush2.bf16.msra.mxu0 0
      %1276 = vmatprep.subr.bf16.mxu0 0
      %1277 = vmatpush2.bf16.msra.mxu0 0
      %1278 = vmatprep.subr.bf16.mxu0 0
      %1279 = vmatpush2.bf16.msra.mxu0 0
      %1280 = vmatprep.subr.bf16.mxu0 0
      %1281 = vmatpush2.bf16.msra.mxu0 0
      %1282 = vmatprep.subr.bf16.mxu0 0
      %1283 = vmatpush2.bf16.msra.mxu0 0
      %1284 = vmatprep.subr.bf16.mxu0 0
      %1285 = vmatpush2.bf16.msra.mxu0 0
      %1286 = vmatprep.subr.bf16.mxu0 0
      %1287 = vmatpush2.bf16.msra.mxu0 0
      %1288 = vmatprep.mubr.bf16.mxu0 0
      %1289 = vmatmul.mubr.bf16.gmra.mxu0 %v1245
      %v1290 = vpop.f32.mrf.mxu0
      %v1291 = vadd.f32 0.0, %v1290
      %v1292 = vpop.f32.mrf.mxu0
      %v1293 = vpop.f32.mrf.mxu0
      %v1294 = vadd.f32 0.0, %v1293
      %v1295 = vpop.f32.mrf.mxu0
      %1296 = vmatprep.mubr.bf16.mxu0 0
      %1297 = vmatmul.mubr.bf16.gmra.mxu0 %v1248
      %v1298 = vpop.f32.mrf.mxu0
      %v1299 = vadd.f32 0.0, %v1298
      %v1300 = vpop.f32.mrf.mxu0
      %v1301 = vpop.f32.mrf.mxu0
      %v1302 = vadd.f32 0.0, %v1301
      %v1303 = vpop.f32.mrf.mxu0
      %1304 = vmatprep.mubr.bf16.mxu0 0
      %1305 = vmatmul.mubr.bf16.gmra.mxu0 %v1251
      %v1306 = vpop.f32.mrf.mxu0
      %v1307 = vadd.f32 0.0, %v1306
      %v1308 = vpop.f32.mrf.mxu0
      %v1309 = vpop.f32.mrf.mxu0
      %v1310 = vadd.f32 0.0, %v1309
      %v1311 = vpop.f32.mrf.mxu0
      %1312 = vmatprep.mubr.bf16.mxu0 0
      %1313 = vmatmul.mubr.bf16.gmra.mxu0 %v1254
      %v1314 = vpop.f32.mrf.mxu0
      %v1315 = vadd.f32 0.0, %v1314
      %v1316 = vpop.f32.mrf.mxu0
      %v1317 = vpop.f32.mrf.mxu0
      %v1318 = vadd.f32 0.0, %v1317
      %v1319 = vpop.f32.mrf.mxu0
      %1320 = vdwg.mxu0
      %v1323 = vunpack.c.l.b16 %v1221
      %v1324 = vunpack.c.l.b16 %v1222
      %v1325 = vpack.c.b16 %v1324, %v1323
      %1327 = vmatprep.subr.bf16.mxu0 0
      %1328 = vmatpush1.bf16.msra.mxu0 0
      %1329 = vmatprep.subr.bf16.mxu0 0
      %1330 = vmatpush1.bf16.msra.mxu0 0
      %1331 = vmatprep.subr.bf16.mxu0 0
      %1332 = vmatpush1.bf16.msra.mxu0 0
      %1333 = vmatprep.subr.bf16.mxu0 0
      %1334 = vmatpush1.bf16.msra.mxu0 0
      %1335 = vmatprep.subr.bf16.mxu0 0
      %1336 = vmatpush1.bf16.msra.mxu0 0
      %1337 = vmatprep.subr.bf16.mxu0 0
      %1338 = vmatpush1.bf16.msra.mxu0 0
      %1339 = vmatprep.subr.bf16.mxu0 0
      %1340 = vmatpush1.bf16.msra.mxu0 0
      %1341 = vmatprep.subr.bf16.mxu0 0
      %1342 = vmatpush1.bf16.msra.mxu0 %v1325
      %1343 = vmatprep.subr.bf16.mxu0 0
      %1344 = vmatpush2.bf16.msra.mxu0 0
      %1345 = vmatprep.subr.bf16.mxu0 0
      %1346 = vmatpush2.bf16.msra.mxu0 0
      %1347 = vmatprep.subr.bf16.mxu0 0
      %1348 = vmatpush2.bf16.msra.mxu0 0
      %1349 = vmatprep.subr.bf16.mxu0 0
      %1350 = vmatpush2.bf16.msra.mxu0 0
      %1351 = vmatprep.subr.bf16.mxu0 0
      %1352 = vmatpush2.bf16.msra.mxu0 0
      %1353 = vmatprep.subr.bf16.mxu0 0
      %1354 = vmatpush2.bf16.msra.mxu0 0
      %1355 = vmatprep.subr.bf16.mxu0 0
      %1356 = vmatpush2.bf16.msra.mxu0 0
      %1357 = vmatprep.subr.bf16.mxu0 0
      %1358 = vmatpush2.bf16.msra.mxu0 0
      %1359 = vmatprep.mubr.bf16.mxu0 0
      %1360 = vmatmul.mubr.bf16.gmra.mxu0 %v758
      %v1361 = vpop.f32.mrf.mxu0
      %v1362 = vadd.f32 %v1291, %v1361
      %v1363 = vpop.f32.mrf.mxu0
      %v1364 = vpop.f32.mrf.mxu0
      %v1365 = vadd.f32 %v1294, %v1364
      %v1366 = vpop.f32.mrf.mxu0
      %1367 = vmatprep.mubr.bf16.mxu0 0
      %1368 = vmatmul.mubr.bf16.gmra.mxu0 %v761
      %v1369 = vpop.f32.mrf.mxu0
      %v1370 = vadd.f32 %v1299, %v1369
      %v1371 = vpop.f32.mrf.mxu0
      %v1372 = vpop.f32.mrf.mxu0
      %v1373 = vadd.f32 %v1302, %v1372
      %v1374 = vpop.f32.mrf.mxu0
      %1375 = vmatprep.mubr.bf16.mxu0 0
      %1376 = vmatmul.mubr.bf16.gmra.mxu0 %v764
      %v1377 = vpop.f32.mrf.mxu0
      %v1378 = vadd.f32 %v1307, %v1377
      %v1379 = vpop.f32.mrf.mxu0
      %v1380 = vpop.f32.mrf.mxu0
      %v1381 = vadd.f32 %v1310, %v1380
      %v1382 = vpop.f32.mrf.mxu0
      %1383 = vmatprep.mubr.bf16.mxu0 0
      %1384 = vmatmul.mubr.bf16.gmra.mxu0 %v767
      %v1385 = vpop.f32.mrf.mxu0
      %v1386 = vadd.f32 %v1315, %v1385
      %v1387 = vpop.f32.mrf.mxu0
      %v1388 = vpop.f32.mrf.mxu0
      %v1389 = vadd.f32 %v1318, %v1388
      %v1390 = vpop.f32.mrf.mxu0
      %1391 = vdwg.mxu0
      %s1392 = scalar_lea.vmem %s1, 48
      %v1393 = vld [vmem:[%s1392] sm:$0xf]
      %v1394 = vld [vmem:[%s1392 + $0x4] sm:$0xf]
      %v1397 = vunpack.c.l.b16 %v1393
      %v1398 = vunpack.c.l.b16 %v1394
      %v1399 = vpack.c.b16 %v1398, %v1397
      %1401 = vmatprep.subr.bf16.mxu0 0
      %1402 = vmatpush1.bf16.msra.mxu0 0
      %1403 = vmatprep.subr.bf16.mxu0 0
      %1404 = vmatpush1.bf16.msra.mxu0 0
      %1405 = vmatprep.subr.bf16.mxu0 0
      %1406 = vmatpush1.bf16.msra.mxu0 0
      %1407 = vmatprep.subr.bf16.mxu0 0
      %1408 = vmatpush1.bf16.msra.mxu0 0
      %1409 = vmatprep.subr.bf16.mxu0 0
      %1410 = vmatpush1.bf16.msra.mxu0 0
      %1411 = vmatprep.subr.bf16.mxu0 0
      %1412 = vmatpush1.bf16.msra.mxu0 0
      %1413 = vmatprep.subr.bf16.mxu0 0
      %1414 = vmatpush1.bf16.msra.mxu0 0
      %1415 = vmatprep.subr.bf16.mxu0 0
      %1416 = vmatpush1.bf16.msra.mxu0 %v1399
      %1417 = vmatprep.subr.bf16.mxu0 0
      %1418 = vmatpush2.bf16.msra.mxu0 0
      %1419 = vmatprep.subr.bf16.mxu0 0
      %1420 = vmatpush2.bf16.msra.mxu0 0
      %1421 = vmatprep.subr.bf16.mxu0 0
      %1422 = vmatpush2.bf16.msra.mxu0 0
      %1423 = vmatprep.subr.bf16.mxu0 0
      %1424 = vmatpush2.bf16.msra.mxu0 0
      %1425 = vmatprep.subr.bf16.mxu0 0
      %1426 = vmatpush2.bf16.msra.mxu0 0
      %1427 = vmatprep.subr.bf16.mxu0 0
      %1428 = vmatpush2.bf16.msra.mxu0 0
      %1429 = vmatprep.subr.bf16.mxu0 0
      %1430 = vmatpush2.bf16.msra.mxu0 0
      %1431 = vmatprep.subr.bf16.mxu0 0
      %1432 = vmatpush2.bf16.msra.mxu0 0
      %1433 = vmatprep.mubr.bf16.mxu0 0
      %1434 = vmatmul.mubr.bf16.gmra.mxu0 %v1073
      %v1435 = vpop.f32.mrf.mxu0
      %v1436 = vadd.f32 0.0, %v1435
      %v1437 = vpop.f32.mrf.mxu0
      %v1438 = vpop.f32.mrf.mxu0
      %v1439 = vadd.f32 0.0, %v1438
      %v1440 = vpop.f32.mrf.mxu0
      %1441 = vmatprep.mubr.bf16.mxu0 0
      %1442 = vmatmul.mubr.bf16.gmra.mxu0 %v1076
      %v1443 = vpop.f32.mrf.mxu0
      %v1444 = vadd.f32 0.0, %v1443
      %v1445 = vpop.f32.mrf.mxu0
      %v1446 = vpop.f32.mrf.mxu0
      %v1447 = vadd.f32 0.0, %v1446
      %v1448 = vpop.f32.mrf.mxu0
      %1449 = vmatprep.mubr.bf16.mxu0 0
      %1450 = vmatmul.mubr.bf16.gmra.mxu0 %v1079
      %v1451 = vpop.f32.mrf.mxu0
      %v1452 = vadd.f32 0.0, %v1451
      %v1453 = vpop.f32.mrf.mxu0
      %v1454 = vpop.f32.mrf.mxu0
      %v1455 = vadd.f32 0.0, %v1454
      %v1456 = vpop.f32.mrf.mxu0
      %1457 = vmatprep.mubr.bf16.mxu0 0
      %1458 = vmatmul.mubr.bf16.gmra.mxu0 %v1082
      %v1459 = vpop.f32.mrf.mxu0
      %v1460 = vadd.f32 0.0, %v1459
      %v1461 = vpop.f32.mrf.mxu0
      %v1462 = vpop.f32.mrf.mxu0
      %v1463 = vadd.f32 0.0, %v1462
      %v1464 = vpop.f32.mrf.mxu0
      %1465 = vdwg.mxu0
      %v1466 = vadd.f32 %v1362, %v1436
      %v1467 = vadd.f32 %v1365, %v1439
      %v1468 = vadd.f32 %v1370, %v1444
      %v1469 = vadd.f32 %v1373, %v1447
      %v1470 = vadd.f32 %v1378, %v1452
      %v1471 = vadd.f32 %v1381, %v1455
      %v1472 = vadd.f32 %v1386, %v1460
      %v1473 = vadd.f32 %v1389, %v1463
      %s1474 = scalar_lea.vmem %s1, 56
      %v1475 = vld [vmem:[%s1474] sm:$0xf]
      %v1476 = vld [vmem:[%s1474 + $0x4] sm:$0xf]
      %v1477 = vunpack.c.l.b16 %v518
      %v1478 = vunpack.c.l.b16 %v522
      %v1479 = vunpack.c.l.b16 %v526
      %v1480 = vunpack.c.l.b16 %v530
      %v1481 = vunpack.c.l.b16 %v534
      %v1482 = vunpack.c.l.b16 %v538
      %v1483 = vunpack.c.l.b16 %v542
      %v1484 = vunpack.c.l.b16 %v546
      %v1485 = vpack.c.b16 %v1478, %v1477
      %v1486 = vpack.c.b16 %v1480, %v1479
      %v1487 = vpack.c.b16 %v1482, %v1481
      %v1488 = vpack.c.b16 %v1484, %v1483
      %v1491 = vunpack.c.l.b16 %v1475
      %v1492 = vunpack.c.l.b16 %v1476
      %v1493 = vpack.c.b16 %v1492, %v1491
      %v1496 = vsel %vm756, %v1485, 0
      %v1499 = vsel %vm756, %v1486, 0
      %v1502 = vsel %vm756, %v1487, 0
      %v1505 = vsel %vm756, %v1488, 0
      %1507 = vmatprep.subr.bf16.mxu0 0
      %1508 = vmatpush1.bf16.msra.mxu0 0
      %1509 = vmatprep.subr.bf16.mxu0 0
      %1510 = vmatpush1.bf16.msra.mxu0 0
      %1511 = vmatprep.subr.bf16.mxu0 0
      %1512 = vmatpush1.bf16.msra.mxu0 0
      %1513 = vmatprep.subr.bf16.mxu0 0
      %1514 = vmatpush1.bf16.msra.mxu0 0
      %1515 = vmatprep.subr.bf16.mxu0 0
      %1516 = vmatpush1.bf16.msra.mxu0 0
      %1517 = vmatprep.subr.bf16.mxu0 0
      %1518 = vmatpush1.bf16.msra.mxu0 0
      %1519 = vmatprep.subr.bf16.mxu0 0
      %1520 = vmatpush1.bf16.msra.mxu0 0
      %1521 = vmatprep.subr.bf16.mxu0 0
      %1522 = vmatpush1.bf16.msra.mxu0 %v1493
      %1523 = vmatprep.subr.bf16.mxu0 0
      %1524 = vmatpush2.bf16.msra.mxu0 0
      %1525 = vmatprep.subr.bf16.mxu0 0
      %1526 = vmatpush2.bf16.msra.mxu0 0
      %1527 = vmatprep.subr.bf16.mxu0 0
      %1528 = vmatpush2.bf16.msra.mxu0 0
      %1529 = vmatprep.subr.bf16.mxu0 0
      %1530 = vmatpush2.bf16.msra.mxu0 0
      %1531 = vmatprep.subr.bf16.mxu0 0
      %1532 = vmatpush2.bf16.msra.mxu0 0
      %1533 = vmatprep.subr.bf16.mxu0 0
      %1534 = vmatpush2.bf16.msra.mxu0 0
      %1535 = vmatprep.subr.bf16.mxu0 0
      %1536 = vmatpush2.bf16.msra.mxu0 0
      %1537 = vmatprep.subr.bf16.mxu0 0
      %1538 = vmatpush2.bf16.msra.mxu0 0
      %1539 = vmatprep.mubr.bf16.mxu0 0
      %1540 = vmatmul.mubr.bf16.gmra.mxu0 %v1496
      %v1541 = vpop.f32.mrf.mxu0
      %v1542 = vadd.f32 0.0, %v1541
      %v1543 = vpop.f32.mrf.mxu0
      %v1544 = vpop.f32.mrf.mxu0
      %v1545 = vadd.f32 0.0, %v1544
      %v1546 = vpop.f32.mrf.mxu0
      %1547 = vmatprep.mubr.bf16.mxu0 0
      %1548 = vmatmul.mubr.bf16.gmra.mxu0 %v1499
      %v1549 = vpop.f32.mrf.mxu0
      %v1550 = vadd.f32 0.0, %v1549
      %v1551 = vpop.f32.mrf.mxu0
      %v1552 = vpop.f32.mrf.mxu0
      %v1553 = vadd.f32 0.0, %v1552
      %v1554 = vpop.f32.mrf.mxu0
      %1555 = vmatprep.mubr.bf16.mxu0 0
      %1556 = vmatmul.mubr.bf16.gmra.mxu0 %v1502
      %v1557 = vpop.f32.mrf.mxu0
      %v1558 = vadd.f32 0.0, %v1557
      %v1559 = vpop.f32.mrf.mxu0
      %v1560 = vpop.f32.mrf.mxu0
      %v1561 = vadd.f32 0.0, %v1560
      %v1562 = vpop.f32.mrf.mxu0
      %1563 = vmatprep.mubr.bf16.mxu0 0
      %1564 = vmatmul.mubr.bf16.gmra.mxu0 %v1505
      %v1565 = vpop.f32.mrf.mxu0
      %v1566 = vadd.f32 0.0, %v1565
      %v1567 = vpop.f32.mrf.mxu0
      %v1568 = vpop.f32.mrf.mxu0
      %v1569 = vadd.f32 0.0, %v1568
      %v1570 = vpop.f32.mrf.mxu0
      %1571 = vdwg.mxu0
      %v1572 = vadd.f32 %v1466, %v1542
      %v1573 = vadd.f32 %v1467, %v1545
      %v1574 = vadd.f32 %v1468, %v1550
      %v1575 = vadd.f32 %v1469, %v1553
      %v1576 = vadd.f32 %v1470, %v1558
      %v1577 = vadd.f32 %v1471, %v1561
      %v1578 = vadd.f32 %v1472, %v1566
      %v1579 = vadd.f32 %v1473, %v1569
      %v1580 = vadd.f32 %v1572, %v1161
      %v1581 = vadd.f32 %v1573, %v1161
      %v1582 = vadd.f32 %v1574, %v1161
      %v1583 = vadd.f32 %v1575, %v1161
      %v1584 = vadd.f32 %v1576, %v1161
      %v1585 = vadd.f32 %v1577, %v1161
      %v1586 = vadd.f32 %v1578, %v1161
      %v1587 = vadd.f32 %v1579, %v1161
      %v1588 = vmax.f32 %v1580, 0.0
      %v1589 = vmax.f32 %v1581, 0.0
      %v1590 = vmax.f32 %v1582, 0.0
      %v1591 = vmax.f32 %v1583, 0.0
      %v1592 = vmax.f32 %v1584, 0.0
      %v1593 = vmax.f32 %v1585, 0.0
      %v1594 = vmax.f32 %v1586, 0.0
      %v1595 = vmax.f32 %v1587, 0.0
      %v1596 = vpack.c.bf16 %v1589, %v1588
      %v1597 = vpack.c.bf16 %v1591, %v1590
      %v1598 = vpack.c.bf16 %v1593, %v1592
      %v1599 = vpack.c.bf16 %v1595, %v1594
      %v1604 = vunpack.c.l.b16 %v1596
      %v1605 = vunpack.c.h.b16 %v1596
      %v1606 = vunpack.c.l.b16 %v1597
      %v1607 = vunpack.c.h.b16 %v1597
      %v1608 = vunpack.c.l.b16 %v1598
      %v1609 = vunpack.c.h.b16 %v1598
      %v1610 = vunpack.c.l.b16 %v1599
      %v1611 = vunpack.c.h.b16 %v1599
      %v1612 = vpack.c.b16 %v1604, %v1604
      %v1613 = vpack.c.b16 %v1605, %v1605
      %v1614 = vpack.c.b16 %v1606, %v1606
      %v1615 = vpack.c.b16 %v1607, %v1607
      %v1616 = vpack.c.b16 %v1608, %v1608
      %v1617 = vpack.c.b16 %v1609, %v1609
      %v1618 = vpack.c.b16 %v1610, %v1610
      %v1619 = vpack.c.b16 %v1611, %v1611
      %1620 = vrot.lane.b32.xlu0 %v1612, 32
      %v1621 = vpop.permute.xlu0 %1620
      %1622 = vrot.lane.b32.xlu0 %v1613, 32
      %v1623 = vpop.permute.xlu0 %1622
      %1624 = vrot.lane.b32.xlu0 %v1614, 32
      %v1625 = vpop.permute.xlu0 %1624
      %1626 = vrot.lane.b32.xlu0 %v1615, 32
      %v1627 = vpop.permute.xlu0 %1626
      %1628 = vrot.lane.b32.xlu0 %v1616, 32
      %v1629 = vpop.permute.xlu0 %1628
      %1630 = vrot.lane.b32.xlu0 %v1617, 32
      %v1631 = vpop.permute.xlu0 %1630
      %1632 = vrot.lane.b32.xlu0 %v1618, 32
      %v1633 = vpop.permute.xlu0 %1632
      %1634 = vrot.lane.b32.xlu0 %v1619, 32
      %v1635 = vpop.permute.xlu0 %1634
      %vm1644 = vcmask 519424
      %1645 = vst.msk [vmem:[%s170] sm:$0xf] %vm1644, %v1621
      %1646 = vst.msk [vmem:[%s170 + $0x8] sm:$0xf] %vm1644, %v1623
      %1647 = vst.msk [vmem:[%s170 + $0x10] sm:$0xf] %vm1644, %v1625
      %1648 = vst.msk [vmem:[%s170 + $0x18] sm:$0xf] %vm1644, %v1627
      %1649 = vst.msk [vmem:[%s170 + $0x20] sm:$0xf] %vm1644, %v1629
      %1650 = vst.msk [vmem:[%s170 + $0x28] sm:$0xf] %vm1644, %v1631
      %1651 = vst.msk [vmem:[%s170 + $0x30] sm:$0xf] %vm1644, %v1633
      %1652 = vst.msk [vmem:[%s170 + $0x38] sm:$0xf] %vm1644, %v1635
      %s1653 = scalar_lea.vmem %s1, 64
      %v1654 = vld [vmem:[%s1653] sm:$0xf]
      %v1655 = vld [vmem:[%s1653 + $0x4] sm:$0xf]
      %s1656 = scalar_lea.vmem %s1, 72
      %v1657 = vld [vmem:[%s1656] sm:$0xf]
      %v1658 = vld [vmem:[%s1656 + $0x4] sm:$0xf]
      %v1661 = vunpack.c.l.b16 %v1657
      %v1662 = vunpack.c.l.b16 %v1658
      %v1663 = vpack.c.b16 %v1662, %v1661
      %1665 = vmatprep.subr.bf16.mxu0 0
      %1666 = vmatpush1.bf16.msra.mxu0 0
      %1667 = vmatprep.subr.bf16.mxu0 0
      %1668 = vmatpush1.bf16.msra.mxu0 0
      %1669 = vmatprep.subr.bf16.mxu0 0
      %1670 = vmatpush1.bf16.msra.mxu0 0
      %1671 = vmatprep.subr.bf16.mxu0 0
      %1672 = vmatpush1.bf16.msra.mxu0 0
      %1673 = vmatprep.subr.bf16.mxu0 0
      %1674 = vmatpush1.bf16.msra.mxu0 0
      %1675 = vmatprep.subr.bf16.mxu0 0
      %1676 = vmatpush1.bf16.msra.mxu0 0
      %1677 = vmatprep.subr.bf16.mxu0 0
      %1678 = vmatpush1.bf16.msra.mxu0 0
      %1679 = vmatprep.subr.bf16.mxu0 0
      %1680 = vmatpush1.bf16.msra.mxu0 %v1663
      %1681 = vmatprep.subr.bf16.mxu0 0
      %1682 = vmatpush2.bf16.msra.mxu0 0
      %1683 = vmatprep.subr.bf16.mxu0 0
      %1684 = vmatpush2.bf16.msra.mxu0 0
      %1685 = vmatprep.subr.bf16.mxu0 0
      %1686 = vmatpush2.bf16.msra.mxu0 0
      %1687 = vmatprep.subr.bf16.mxu0 0
      %1688 = vmatpush2.bf16.msra.mxu0 0
      %1689 = vmatprep.subr.bf16.mxu0 0
      %1690 = vmatpush2.bf16.msra.mxu0 0
      %1691 = vmatprep.subr.bf16.mxu0 0
      %1692 = vmatpush2.bf16.msra.mxu0 0
      %1693 = vmatprep.subr.bf16.mxu0 0
      %1694 = vmatpush2.bf16.msra.mxu0 0
      %1695 = vmatprep.subr.bf16.mxu0 0
      %1696 = vmatpush2.bf16.msra.mxu0 0
      %1697 = vmatprep.mubr.bf16.mxu0 0
      %1698 = vmatmul.mubr.bf16.gmra.mxu0 %v1073
      %v1699 = vpop.f32.mrf.mxu0
      %v1700 = vadd.f32 0.0, %v1699
      %v1701 = vpop.f32.mrf.mxu0
      %v1702 = vpop.f32.mrf.mxu0
      %v1703 = vadd.f32 0.0, %v1702
      %v1704 = vpop.f32.mrf.mxu0
      %1705 = vmatprep.mubr.bf16.mxu0 0
      %1706 = vmatmul.mubr.bf16.gmra.mxu0 %v1076
      %v1707 = vpop.f32.mrf.mxu0
      %v1708 = vadd.f32 0.0, %v1707
      %v1709 = vpop.f32.mrf.mxu0
      %v1710 = vpop.f32.mrf.mxu0
      %v1711 = vadd.f32 0.0, %v1710
      %v1712 = vpop.f32.mrf.mxu0
      %1713 = vmatprep.mubr.bf16.mxu0 0
      %1714 = vmatmul.mubr.bf16.gmra.mxu0 %v1079
      %v1715 = vpop.f32.mrf.mxu0
      %v1716 = vadd.f32 0.0, %v1715
      %v1717 = vpop.f32.mrf.mxu0
      %v1718 = vpop.f32.mrf.mxu0
      %v1719 = vadd.f32 0.0, %v1718
      %v1720 = vpop.f32.mrf.mxu0
      %1721 = vmatprep.mubr.bf16.mxu0 0
      %1722 = vmatmul.mubr.bf16.gmra.mxu0 %v1082
      %v1723 = vpop.f32.mrf.mxu0
      %v1724 = vadd.f32 0.0, %v1723
      %v1725 = vpop.f32.mrf.mxu0
      %v1726 = vpop.f32.mrf.mxu0
      %v1727 = vadd.f32 0.0, %v1726
      %v1728 = vpop.f32.mrf.mxu0
      %1729 = vdwg.mxu0
      %v1732 = vunpack.c.l.b16 %v1654
      %v1733 = vunpack.c.l.b16 %v1655
      %v1734 = vpack.c.b16 %v1733, %v1732
      %1736 = vmatprep.subr.bf16.mxu0 0
      %1737 = vmatpush1.bf16.msra.mxu0 0
      %1738 = vmatprep.subr.bf16.mxu0 0
      %1739 = vmatpush1.bf16.msra.mxu0 0
      %1740 = vmatprep.subr.bf16.mxu0 0
      %1741 = vmatpush1.bf16.msra.mxu0 0
      %1742 = vmatprep.subr.bf16.mxu0 0
      %1743 = vmatpush1.bf16.msra.mxu0 0
      %1744 = vmatprep.subr.bf16.mxu0 0
      %1745 = vmatpush1.bf16.msra.mxu0 0
      %1746 = vmatprep.subr.bf16.mxu0 0
      %1747 = vmatpush1.bf16.msra.mxu0 0
      %1748 = vmatprep.subr.bf16.mxu0 0
      %1749 = vmatpush1.bf16.msra.mxu0 0
      %1750 = vmatprep.subr.bf16.mxu0 0
      %1751 = vmatpush1.bf16.msra.mxu0 %v1734
      %1752 = vmatprep.subr.bf16.mxu0 0
      %1753 = vmatpush2.bf16.msra.mxu0 0
      %1754 = vmatprep.subr.bf16.mxu0 0
      %1755 = vmatpush2.bf16.msra.mxu0 0
      %1756 = vmatprep.subr.bf16.mxu0 0
      %1757 = vmatpush2.bf16.msra.mxu0 0
      %1758 = vmatprep.subr.bf16.mxu0 0
      %1759 = vmatpush2.bf16.msra.mxu0 0
      %1760 = vmatprep.subr.bf16.mxu0 0
      %1761 = vmatpush2.bf16.msra.mxu0 0
      %1762 = vmatprep.subr.bf16.mxu0 0
      %1763 = vmatpush2.bf16.msra.mxu0 0
      %1764 = vmatprep.subr.bf16.mxu0 0
      %1765 = vmatpush2.bf16.msra.mxu0 0
      %1766 = vmatprep.subr.bf16.mxu0 0
      %1767 = vmatpush2.bf16.msra.mxu0 0
      %1768 = vmatprep.mubr.bf16.mxu0 0
      %1769 = vmatmul.mubr.bf16.gmra.mxu0 %v967
      %v1770 = vpop.f32.mrf.mxu0
      %v1771 = vadd.f32 %v1700, %v1770
      %v1772 = vpop.f32.mrf.mxu0
      %v1773 = vpop.f32.mrf.mxu0
      %v1774 = vadd.f32 %v1703, %v1773
      %v1775 = vpop.f32.mrf.mxu0
      %1776 = vmatprep.mubr.bf16.mxu0 0
      %1777 = vmatmul.mubr.bf16.gmra.mxu0 %v970
      %v1778 = vpop.f32.mrf.mxu0
      %v1779 = vadd.f32 %v1708, %v1778
      %v1780 = vpop.f32.mrf.mxu0
      %v1781 = vpop.f32.mrf.mxu0
      %v1782 = vadd.f32 %v1711, %v1781
      %v1783 = vpop.f32.mrf.mxu0
      %1784 = vmatprep.mubr.bf16.mxu0 0
      %1785 = vmatmul.mubr.bf16.gmra.mxu0 %v973
      %v1786 = vpop.f32.mrf.mxu0
      %v1787 = vadd.f32 %v1716, %v1786
      %v1788 = vpop.f32.mrf.mxu0
      %v1789 = vpop.f32.mrf.mxu0
      %v1790 = vadd.f32 %v1719, %v1789
      %v1791 = vpop.f32.mrf.mxu0
      %1792 = vmatprep.mubr.bf16.mxu0 0
      %1793 = vmatmul.mubr.bf16.gmra.mxu0 %v976
      %v1794 = vpop.f32.mrf.mxu0
      %v1795 = vadd.f32 %v1724, %v1794
      %v1796 = vpop.f32.mrf.mxu0
      %v1797 = vpop.f32.mrf.mxu0
      %v1798 = vadd.f32 %v1727, %v1797
      %v1799 = vpop.f32.mrf.mxu0
      %1800 = vdwg.mxu0
      %s1801 = scalar_lea.vmem %s1, 80
      %v1802 = vld [vmem:[%s1801] sm:$0xf]
      %v1803 = vld [vmem:[%s1801 + $0x4] sm:$0xf]
      %v1812 = vunpack.c.l.b16 %v548
      %v1813 = vunpack.c.l.b16 %v549
      %v1814 = vunpack.c.l.b16 %v550
      %v1815 = vunpack.c.l.b16 %v551
      %v1816 = vunpack.c.l.b16 %v552
      %v1817 = vunpack.c.l.b16 %v553
      %v1818 = vunpack.c.l.b16 %v554
      %v1819 = vunpack.c.l.b16 %v555
      %v1820 = vpack.c.b16 %v1813, %v1812
      %v1821 = vpack.c.b16 %v1815, %v1814
      %v1822 = vpack.c.b16 %v1817, %v1816
      %v1823 = vpack.c.b16 %v1819, %v1818
      %v1826 = vunpack.c.l.b16 %v1802
      %v1827 = vunpack.c.l.b16 %v1803
      %v1828 = vpack.c.b16 %v1827, %v1826
      %v1831 = vsel %vm756, %v1820, 0
      %v1834 = vsel %vm756, %v1821, 0
      %v1837 = vsel %vm756, %v1822, 0
      %v1840 = vsel %vm756, %v1823, 0
      %1842 = vmatprep.subr.bf16.mxu0 0
      %1843 = vmatpush1.bf16.msra.mxu0 0
      %1844 = vmatprep.subr.bf16.mxu0 0
      %1845 = vmatpush1.bf16.msra.mxu0 0
      %1846 = vmatprep.subr.bf16.mxu0 0
      %1847 = vmatpush1.bf16.msra.mxu0 0
      %1848 = vmatprep.subr.bf16.mxu0 0
      %1849 = vmatpush1.bf16.msra.mxu0 0
      %1850 = vmatprep.subr.bf16.mxu0 0
      %1851 = vmatpush1.bf16.msra.mxu0 0
      %1852 = vmatprep.subr.bf16.mxu0 0
      %1853 = vmatpush1.bf16.msra.mxu0 0
      %1854 = vmatprep.subr.bf16.mxu0 0
      %1855 = vmatpush1.bf16.msra.mxu0 0
      %1856 = vmatprep.subr.bf16.mxu0 0
      %1857 = vmatpush1.bf16.msra.mxu0 %v1828
      %1858 = vmatprep.subr.bf16.mxu0 0
      %1859 = vmatpush2.bf16.msra.mxu0 0
      %1860 = vmatprep.subr.bf16.mxu0 0
      %1861 = vmatpush2.bf16.msra.mxu0 0
      %1862 = vmatprep.subr.bf16.mxu0 0
      %1863 = vmatpush2.bf16.msra.mxu0 0
      %1864 = vmatprep.subr.bf16.mxu0 0
      %1865 = vmatpush2.bf16.msra.mxu0 0
      %1866 = vmatprep.subr.bf16.mxu0 0
      %1867 = vmatpush2.bf16.msra.mxu0 0
      %1868 = vmatprep.subr.bf16.mxu0 0
      %1869 = vmatpush2.bf16.msra.mxu0 0
      %1870 = vmatprep.subr.bf16.mxu0 0
      %1871 = vmatpush2.bf16.msra.mxu0 0
      %1872 = vmatprep.subr.bf16.mxu0 0
      %1873 = vmatpush2.bf16.msra.mxu0 0
      %1874 = vmatprep.mubr.bf16.mxu0 0
      %1875 = vmatmul.mubr.bf16.gmra.mxu0 %v1831
      %v1876 = vpop.f32.mrf.mxu0
      %v1877 = vadd.f32 0.0, %v1876
      %v1878 = vpop.f32.mrf.mxu0
      %v1879 = vpop.f32.mrf.mxu0
      %v1880 = vadd.f32 0.0, %v1879
      %v1881 = vpop.f32.mrf.mxu0
      %1882 = vmatprep.mubr.bf16.mxu0 0
      %1883 = vmatmul.mubr.bf16.gmra.mxu0 %v1834
      %v1884 = vpop.f32.mrf.mxu0
      %v1885 = vadd.f32 0.0, %v1884
      %v1886 = vpop.f32.mrf.mxu0
      %v1887 = vpop.f32.mrf.mxu0
      %v1888 = vadd.f32 0.0, %v1887
      %v1889 = vpop.f32.mrf.mxu0
      %1890 = vmatprep.mubr.bf16.mxu0 0
      %1891 = vmatmul.mubr.bf16.gmra.mxu0 %v1837
      %v1892 = vpop.f32.mrf.mxu0
      %v1893 = vadd.f32 0.0, %v1892
      %v1894 = vpop.f32.mrf.mxu0
      %v1895 = vpop.f32.mrf.mxu0
      %v1896 = vadd.f32 0.0, %v1895
      %v1897 = vpop.f32.mrf.mxu0
      %1898 = vmatprep.mubr.bf16.mxu0 0
      %1899 = vmatmul.mubr.bf16.gmra.mxu0 %v1840
      %v1900 = vpop.f32.mrf.mxu0
      %v1901 = vadd.f32 0.0, %v1900
      %v1902 = vpop.f32.mrf.mxu0
      %v1903 = vpop.f32.mrf.mxu0
      %v1904 = vadd.f32 0.0, %v1903
      %v1905 = vpop.f32.mrf.mxu0
      %1906 = vdwg.mxu0
      %v1907 = vadd.f32 %v1771, %v1877
      %v1908 = vadd.f32 %v1774, %v1880
      %v1909 = vadd.f32 %v1779, %v1885
      %v1910 = vadd.f32 %v1782, %v1888
      %v1911 = vadd.f32 %v1787, %v1893
      %v1912 = vadd.f32 %v1790, %v1896
      %v1913 = vadd.f32 %v1795, %v1901
      %v1914 = vadd.f32 %v1798, %v1904
      %s1915 = scalar_lea.vmem %s1, 88
      %v1916 = vld [vmem:[%s1915] sm:$0xf]
      %v1917 = vld [vmem:[%s1915 + $0x4] sm:$0xf]
      %v1918 = vunpack.c.l.b16 %v577
      %v1919 = vunpack.c.l.b16 %v591
      %v1920 = vunpack.c.l.b16 %v605
      %v1921 = vunpack.c.l.b16 %v619
      %v1922 = vunpack.c.l.b16 %v633
      %v1923 = vunpack.c.l.b16 %v647
      %v1924 = vunpack.c.l.b16 %v661
      %v1925 = vunpack.c.l.b16 %v675
      %v1926 = vpack.c.b16 %v1919, %v1918
      %v1927 = vpack.c.b16 %v1921, %v1920
      %v1928 = vpack.c.b16 %v1923, %v1922
      %v1929 = vpack.c.b16 %v1925, %v1924
      %v1932 = vunpack.c.l.b16 %v1916
      %v1933 = vunpack.c.l.b16 %v1917
      %v1934 = vpack.c.b16 %v1933, %v1932
      %v1937 = vsel %vm756, %v1926, 0
      %v1940 = vsel %vm756, %v1927, 0
      %v1943 = vsel %vm756, %v1928, 0
      %v1946 = vsel %vm756, %v1929, 0
      %1948 = vmatprep.subr.bf16.mxu0 0
      %1949 = vmatpush1.bf16.msra.mxu0 0
      %1950 = vmatprep.subr.bf16.mxu0 0
      %1951 = vmatpush1.bf16.msra.mxu0 0
      %1952 = vmatprep.subr.bf16.mxu0 0
      %1953 = vmatpush1.bf16.msra.mxu0 0
      %1954 = vmatprep.subr.bf16.mxu0 0
      %1955 = vmatpush1.bf16.msra.mxu0 0
      %1956 = vmatprep.subr.bf16.mxu0 0
      %1957 = vmatpush1.bf16.msra.mxu0 0
      %1958 = vmatprep.subr.bf16.mxu0 0
      %1959 = vmatpush1.bf16.msra.mxu0 0
      %1960 = vmatprep.subr.bf16.mxu0 0
      %1961 = vmatpush1.bf16.msra.mxu0 0
      %1962 = vmatprep.subr.bf16.mxu0 0
      %1963 = vmatpush1.bf16.msra.mxu0 %v1934
      %1964 = vmatprep.subr.bf16.mxu0 0
      %1965 = vmatpush2.bf16.msra.mxu0 0
      %1966 = vmatprep.subr.bf16.mxu0 0
      %1967 = vmatpush2.bf16.msra.mxu0 0
      %1968 = vmatprep.subr.bf16.mxu0 0
      %1969 = vmatpush2.bf16.msra.mxu0 0
      %1970 = vmatprep.subr.bf16.mxu0 0
      %1971 = vmatpush2.bf16.msra.mxu0 0
      %1972 = vmatprep.subr.bf16.mxu0 0
      %1973 = vmatpush2.bf16.msra.mxu0 0
      %1974 = vmatprep.subr.bf16.mxu0 0
      %1975 = vmatpush2.bf16.msra.mxu0 0
      %1976 = vmatprep.subr.bf16.mxu0 0
      %1977 = vmatpush2.bf16.msra.mxu0 0
      %1978 = vmatprep.subr.bf16.mxu0 0
      %1979 = vmatpush2.bf16.msra.mxu0 0
      %1980 = vmatprep.mubr.bf16.mxu0 0
      %1981 = vmatmul.mubr.bf16.gmra.mxu0 %v1937
      %v1982 = vpop.f32.mrf.mxu0
      %v1983 = vadd.f32 0.0, %v1982
      %v1984 = vpop.f32.mrf.mxu0
      %v1985 = vpop.f32.mrf.mxu0
      %v1986 = vadd.f32 0.0, %v1985
      %v1987 = vpop.f32.mrf.mxu0
      %1988 = vmatprep.mubr.bf16.mxu0 0
      %1989 = vmatmul.mubr.bf16.gmra.mxu0 %v1940
      %v1990 = vpop.f32.mrf.mxu0
      %v1991 = vadd.f32 0.0, %v1990
      %v1992 = vpop.f32.mrf.mxu0
      %v1993 = vpop.f32.mrf.mxu0
      %v1994 = vadd.f32 0.0, %v1993
      %v1995 = vpop.f32.mrf.mxu0
      %1996 = vmatprep.mubr.bf16.mxu0 0
      %1997 = vmatmul.mubr.bf16.gmra.mxu0 %v1943
      %v1998 = vpop.f32.mrf.mxu0
      %v1999 = vadd.f32 0.0, %v1998
      %v2000 = vpop.f32.mrf.mxu0
      %v2001 = vpop.f32.mrf.mxu0
      %v2002 = vadd.f32 0.0, %v2001
      %v2003 = vpop.f32.mrf.mxu0
      %2004 = vmatprep.mubr.bf16.mxu0 0
      %2005 = vmatmul.mubr.bf16.gmra.mxu0 %v1946
      %v2006 = vpop.f32.mrf.mxu0
      %v2007 = vadd.f32 0.0, %v2006
      %v2008 = vpop.f32.mrf.mxu0
      %v2009 = vpop.f32.mrf.mxu0
      %v2010 = vadd.f32 0.0, %v2009
      %v2011 = vpop.f32.mrf.mxu0
      %2012 = vdwg.mxu0
      %v2013 = vadd.f32 %v1907, %v1983
      %v2014 = vadd.f32 %v1908, %v1986
      %v2015 = vadd.f32 %v1909, %v1991
      %v2016 = vadd.f32 %v1910, %v1994
      %v2017 = vadd.f32 %v1911, %v1999
      %v2018 = vadd.f32 %v1912, %v2002
      %v2019 = vadd.f32 %v1913, %v2007
      %v2020 = vadd.f32 %v1914, %v2010
      %v2021 = vadd.f32 %v2013, %v1161
      %v2022 = vadd.f32 %v2014, %v1161
      %v2023 = vadd.f32 %v2015, %v1161
      %v2024 = vadd.f32 %v2016, %v1161
      %v2025 = vadd.f32 %v2017, %v1161
      %v2026 = vadd.f32 %v2018, %v1161
      %v2027 = vadd.f32 %v2019, %v1161
      %v2028 = vadd.f32 %v2020, %v1161
      %v2029 = vmax.f32 %v2021, 0.0
      %v2030 = vmax.f32 %v2022, 0.0
      %v2031 = vmax.f32 %v2023, 0.0
      %v2032 = vmax.f32 %v2024, 0.0
      %v2033 = vmax.f32 %v2025, 0.0
      %v2034 = vmax.f32 %v2026, 0.0
      %v2035 = vmax.f32 %v2027, 0.0
      %v2036 = vmax.f32 %v2028, 0.0
      %v2037 = vpack.c.bf16 %v2030, %v2029
      %v2038 = vpack.c.bf16 %v2032, %v2031
      %v2039 = vpack.c.bf16 %v2034, %v2033
      %v2040 = vpack.c.bf16 %v2036, %v2035
      %v2045 = vunpack.c.l.b16 %v2037
      %v2046 = vunpack.c.h.b16 %v2037
      %v2047 = vunpack.c.l.b16 %v2038
      %v2048 = vunpack.c.h.b16 %v2038
      %v2049 = vunpack.c.l.b16 %v2039
      %v2050 = vunpack.c.h.b16 %v2039
      %v2051 = vunpack.c.l.b16 %v2040
      %v2052 = vunpack.c.h.b16 %v2040
      %v2053 = vpack.c.b16 %v2045, %v2045
      %v2054 = vpack.c.b16 %v2046, %v2046
      %v2055 = vpack.c.b16 %v2047, %v2047
      %v2056 = vpack.c.b16 %v2048, %v2048
      %v2057 = vpack.c.b16 %v2049, %v2049
      %v2058 = vpack.c.b16 %v2050, %v2050
      %v2059 = vpack.c.b16 %v2051, %v2051
      %v2060 = vpack.c.b16 %v2052, %v2052
      %s2069 = scalar_lea.vmem %s170, 4
      %2070 = vst.msk [vmem:[%s2069] sm:$0xf] %vm1211, %v2053
      %2071 = vst.msk [vmem:[%s2069 + $0x8] sm:$0xf] %vm1211, %v2054
      %2072 = vst.msk [vmem:[%s2069 + $0x10] sm:$0xf] %vm1211, %v2055
      %2073 = vst.msk [vmem:[%s2069 + $0x18] sm:$0xf] %vm1211, %v2056
      %2074 = vst.msk [vmem:[%s2069 + $0x20] sm:$0xf] %vm1211, %v2057
      %2075 = vst.msk [vmem:[%s2069 + $0x28] sm:$0xf] %vm1211, %v2058
      %2076 = vst.msk [vmem:[%s2069 + $0x30] sm:$0xf] %vm1211, %v2059
      %2077 = vst.msk [vmem:[%s2069 + $0x38] sm:$0xf] %vm1211, %v2060
      %s2078 = scalar_lea.vmem %s1, 96
      %v2079 = vld [vmem:[%s2078] sm:$0xf]
      %v2080 = vld [vmem:[%s2078 + $0x4] sm:$0xf]
      %s2081 = scalar_lea.vmem %s1, 104
      %v2082 = vld [vmem:[%s2081] sm:$0xf]
      %v2083 = vld [vmem:[%s2081 + $0x4] sm:$0xf]
      %v2086 = vunpack.c.l.b16 %v2082
      %v2087 = vunpack.c.l.b16 %v2083
      %v2088 = vpack.c.b16 %v2087, %v2086
      %2090 = vmatprep.subr.bf16.mxu0 0
      %2091 = vmatpush1.bf16.msra.mxu0 0
      %2092 = vmatprep.subr.bf16.mxu0 0
      %2093 = vmatpush1.bf16.msra.mxu0 0
      %2094 = vmatprep.subr.bf16.mxu0 0
      %2095 = vmatpush1.bf16.msra.mxu0 0
      %2096 = vmatprep.subr.bf16.mxu0 0
      %2097 = vmatpush1.bf16.msra.mxu0 0
      %2098 = vmatprep.subr.bf16.mxu0 0
      %2099 = vmatpush1.bf16.msra.mxu0 0
      %2100 = vmatprep.subr.bf16.mxu0 0
      %2101 = vmatpush1.bf16.msra.mxu0 0
      %2102 = vmatprep.subr.bf16.mxu0 0
      %2103 = vmatpush1.bf16.msra.mxu0 0
      %2104 = vmatprep.subr.bf16.mxu0 0
      %2105 = vmatpush1.bf16.msra.mxu0 %v2088
      %2106 = vmatprep.subr.bf16.mxu0 0
      %2107 = vmatpush2.bf16.msra.mxu0 0
      %2108 = vmatprep.subr.bf16.mxu0 0
      %2109 = vmatpush2.bf16.msra.mxu0 0
      %2110 = vmatprep.subr.bf16.mxu0 0
      %2111 = vmatpush2.bf16.msra.mxu0 0
      %2112 = vmatprep.subr.bf16.mxu0 0
      %2113 = vmatpush2.bf16.msra.mxu0 0
      %2114 = vmatprep.subr.bf16.mxu0 0
      %2115 = vmatpush2.bf16.msra.mxu0 0
      %2116 = vmatprep.subr.bf16.mxu0 0
      %2117 = vmatpush2.bf16.msra.mxu0 0
      %2118 = vmatprep.subr.bf16.mxu0 0
      %2119 = vmatpush2.bf16.msra.mxu0 0
      %2120 = vmatprep.subr.bf16.mxu0 0
      %2121 = vmatpush2.bf16.msra.mxu0 0
      %2122 = vmatprep.mubr.bf16.mxu0 0
      %2123 = vmatmul.mubr.bf16.gmra.mxu0 %v1496
      %v2124 = vpop.f32.mrf.mxu0
      %v2125 = vadd.f32 0.0, %v2124
      %v2126 = vpop.f32.mrf.mxu0
      %v2127 = vpop.f32.mrf.mxu0
      %v2128 = vadd.f32 0.0, %v2127
      %v2129 = vpop.f32.mrf.mxu0
      %2130 = vmatprep.mubr.bf16.mxu0 0
      %2131 = vmatmul.mubr.bf16.gmra.mxu0 %v1499
      %v2132 = vpop.f32.mrf.mxu0
      %v2133 = vadd.f32 0.0, %v2132
      %v2134 = vpop.f32.mrf.mxu0
      %v2135 = vpop.f32.mrf.mxu0
      %v2136 = vadd.f32 0.0, %v2135
      %v2137 = vpop.f32.mrf.mxu0
      %2138 = vmatprep.mubr.bf16.mxu0 0
      %2139 = vmatmul.mubr.bf16.gmra.mxu0 %v1502
      %v2140 = vpop.f32.mrf.mxu0
      %v2141 = vadd.f32 0.0, %v2140
      %v2142 = vpop.f32.mrf.mxu0
      %v2143 = vpop.f32.mrf.mxu0
      %v2144 = vadd.f32 0.0, %v2143
      %v2145 = vpop.f32.mrf.mxu0
      %2146 = vmatprep.mubr.bf16.mxu0 0
      %2147 = vmatmul.mubr.bf16.gmra.mxu0 %v1505
      %v2148 = vpop.f32.mrf.mxu0
      %v2149 = vadd.f32 0.0, %v2148
      %v2150 = vpop.f32.mrf.mxu0
      %v2151 = vpop.f32.mrf.mxu0
      %v2152 = vadd.f32 0.0, %v2151
      %v2153 = vpop.f32.mrf.mxu0
      %2154 = vdwg.mxu0
      %v2157 = vunpack.c.l.b16 %v2079
      %v2158 = vunpack.c.l.b16 %v2080
      %v2159 = vpack.c.b16 %v2158, %v2157
      %2161 = vmatprep.subr.bf16.mxu0 0
      %2162 = vmatpush1.bf16.msra.mxu0 0
      %2163 = vmatprep.subr.bf16.mxu0 0
      %2164 = vmatpush1.bf16.msra.mxu0 0
      %2165 = vmatprep.subr.bf16.mxu0 0
      %2166 = vmatpush1.bf16.msra.mxu0 0
      %2167 = vmatprep.subr.bf16.mxu0 0
      %2168 = vmatpush1.bf16.msra.mxu0 0
      %2169 = vmatprep.subr.bf16.mxu0 0
      %2170 = vmatpush1.bf16.msra.mxu0 0
      %2171 = vmatprep.subr.bf16.mxu0 0
      %2172 = vmatpush1.bf16.msra.mxu0 0
      %2173 = vmatprep.subr.bf16.mxu0 0
      %2174 = vmatpush1.bf16.msra.mxu0 0
      %2175 = vmatprep.subr.bf16.mxu0 0
      %2176 = vmatpush1.bf16.msra.mxu0 %v2159
      %2177 = vmatprep.subr.bf16.mxu0 0
      %2178 = vmatpush2.bf16.msra.mxu0 0
      %2179 = vmatprep.subr.bf16.mxu0 0
      %2180 = vmatpush2.bf16.msra.mxu0 0
      %2181 = vmatprep.subr.bf16.mxu0 0
      %2182 = vmatpush2.bf16.msra.mxu0 0
      %2183 = vmatprep.subr.bf16.mxu0 0
      %2184 = vmatpush2.bf16.msra.mxu0 0
      %2185 = vmatprep.subr.bf16.mxu0 0
      %2186 = vmatpush2.bf16.msra.mxu0 0
      %2187 = vmatprep.subr.bf16.mxu0 0
      %2188 = vmatpush2.bf16.msra.mxu0 0
      %2189 = vmatprep.subr.bf16.mxu0 0
      %2190 = vmatpush2.bf16.msra.mxu0 0
      %2191 = vmatprep.subr.bf16.mxu0 0
      %2192 = vmatpush2.bf16.msra.mxu0 0
      %2193 = vmatprep.mubr.bf16.mxu0 0
      %2194 = vmatmul.mubr.bf16.gmra.mxu0 %v1073
      %v2195 = vpop.f32.mrf.mxu0
      %v2196 = vadd.f32 %v2125, %v2195
      %v2197 = vpop.f32.mrf.mxu0
      %v2198 = vpop.f32.mrf.mxu0
      %v2199 = vadd.f32 %v2128, %v2198
      %v2200 = vpop.f32.mrf.mxu0
      %2201 = vmatprep.mubr.bf16.mxu0 0
      %2202 = vmatmul.mubr.bf16.gmra.mxu0 %v1076
      %v2203 = vpop.f32.mrf.mxu0
      %v2204 = vadd.f32 %v2133, %v2203
      %v2205 = vpop.f32.mrf.mxu0
      %v2206 = vpop.f32.mrf.mxu0
      %v2207 = vadd.f32 %v2136, %v2206
      %v2208 = vpop.f32.mrf.mxu0
      %2209 = vmatprep.mubr.bf16.mxu0 0
      %2210 = vmatmul.mubr.bf16.gmra.mxu0 %v1079
      %v2211 = vpop.f32.mrf.mxu0
      %v2212 = vadd.f32 %v2141, %v2211
      %v2213 = vpop.f32.mrf.mxu0
      %v2214 = vpop.f32.mrf.mxu0
      %v2215 = vadd.f32 %v2144, %v2214
      %v2216 = vpop.f32.mrf.mxu0
      %2217 = vmatprep.mubr.bf16.mxu0 0
      %2218 = vmatmul.mubr.bf16.gmra.mxu0 %v1082
      %v2219 = vpop.f32.mrf.mxu0
      %v2220 = vadd.f32 %v2149, %v2219
      %v2221 = vpop.f32.mrf.mxu0
      %v2222 = vpop.f32.mrf.mxu0
      %v2223 = vadd.f32 %v2152, %v2222
      %v2224 = vpop.f32.mrf.mxu0
      %2225 = vdwg.mxu0
      %s2226 = scalar_lea.vmem %s1, 112
      %v2227 = vld [vmem:[%s2226] sm:$0xf]
      %v2228 = vld [vmem:[%s2226 + $0x4] sm:$0xf]
      %v2231 = vunpack.c.l.b16 %v2227
      %v2232 = vunpack.c.l.b16 %v2228
      %v2233 = vpack.c.b16 %v2232, %v2231
      %2235 = vmatprep.subr.bf16.mxu0 0
      %2236 = vmatpush1.bf16.msra.mxu0 0
      %2237 = vmatprep.subr.bf16.mxu0 0
      %2238 = vmatpush1.bf16.msra.mxu0 0
      %2239 = vmatprep.subr.bf16.mxu0 0
      %2240 = vmatpush1.bf16.msra.mxu0 0
      %2241 = vmatprep.subr.bf16.mxu0 0
      %2242 = vmatpush1.bf16.msra.mxu0 0
      %2243 = vmatprep.subr.bf16.mxu0 0
      %2244 = vmatpush1.bf16.msra.mxu0 0
      %2245 = vmatprep.subr.bf16.mxu0 0
      %2246 = vmatpush1.bf16.msra.mxu0 0
      %2247 = vmatprep.subr.bf16.mxu0 0
      %2248 = vmatpush1.bf16.msra.mxu0 0
      %2249 = vmatprep.subr.bf16.mxu0 0
      %2250 = vmatpush1.bf16.msra.mxu0 %v2233
      %2251 = vmatprep.subr.bf16.mxu0 0
      %2252 = vmatpush2.bf16.msra.mxu0 0
      %2253 = vmatprep.subr.bf16.mxu0 0
      %2254 = vmatpush2.bf16.msra.mxu0 0
      %2255 = vmatprep.subr.bf16.mxu0 0
      %2256 = vmatpush2.bf16.msra.mxu0 0
      %2257 = vmatprep.subr.bf16.mxu0 0
      %2258 = vmatpush2.bf16.msra.mxu0 0
      %2259 = vmatprep.subr.bf16.mxu0 0
      %2260 = vmatpush2.bf16.msra.mxu0 0
      %2261 = vmatprep.subr.bf16.mxu0 0
      %2262 = vmatpush2.bf16.msra.mxu0 0
      %2263 = vmatprep.subr.bf16.mxu0 0
      %2264 = vmatpush2.bf16.msra.mxu0 0
      %2265 = vmatprep.subr.bf16.mxu0 0
      %2266 = vmatpush2.bf16.msra.mxu0 0
      %2267 = vmatprep.mubr.bf16.mxu0 0
      %2268 = vmatmul.mubr.bf16.gmra.mxu0 %v1937
      %v2269 = vpop.f32.mrf.mxu0
      %v2270 = vadd.f32 0.0, %v2269
      %v2271 = vpop.f32.mrf.mxu0
      %v2272 = vpop.f32.mrf.mxu0
      %v2273 = vadd.f32 0.0, %v2272
      %v2274 = vpop.f32.mrf.mxu0
      %2275 = vmatprep.mubr.bf16.mxu0 0
      %2276 = vmatmul.mubr.bf16.gmra.mxu0 %v1940
      %v2277 = vpop.f32.mrf.mxu0
      %v2278 = vadd.f32 0.0, %v2277
      %v2279 = vpop.f32.mrf.mxu0
      %v2280 = vpop.f32.mrf.mxu0
      %v2281 = vadd.f32 0.0, %v2280
      %v2282 = vpop.f32.mrf.mxu0
      %2283 = vmatprep.mubr.bf16.mxu0 0
      %2284 = vmatmul.mubr.bf16.gmra.mxu0 %v1943
      %v2285 = vpop.f32.mrf.mxu0
      %v2286 = vadd.f32 0.0, %v2285
      %v2287 = vpop.f32.mrf.mxu0
      %v2288 = vpop.f32.mrf.mxu0
      %v2289 = vadd.f32 0.0, %v2288
      %v2290 = vpop.f32.mrf.mxu0
      %2291 = vmatprep.mubr.bf16.mxu0 0
      %2292 = vmatmul.mubr.bf16.gmra.mxu0 %v1946
      %v2293 = vpop.f32.mrf.mxu0
      %v2294 = vadd.f32 0.0, %v2293
      %v2295 = vpop.f32.mrf.mxu0
      %v2296 = vpop.f32.mrf.mxu0
      %v2297 = vadd.f32 0.0, %v2296
      %v2298 = vpop.f32.mrf.mxu0
      %2299 = vdwg.mxu0
      %v2300 = vadd.f32 %v2196, %v2270
      %v2301 = vadd.f32 %v2199, %v2273
      %v2302 = vadd.f32 %v2204, %v2278
      %v2303 = vadd.f32 %v2207, %v2281
      %v2304 = vadd.f32 %v2212, %v2286
      %v2305 = vadd.f32 %v2215, %v2289
      %v2306 = vadd.f32 %v2220, %v2294
      %v2307 = vadd.f32 %v2223, %v2297
      %s2308 = scalar_lea.vmem %s1, 120
      %v2309 = vld [vmem:[%s2308] sm:$0xf]
      %v2310 = vld [vmem:[%s2308 + $0x4] sm:$0xf]
      %v2311 = vunpack.c.l.b16 %v703
      %v2312 = vunpack.c.l.b16 %v707
      %v2313 = vunpack.c.l.b16 %v711
      %v2314 = vunpack.c.l.b16 %v715
      %v2315 = vunpack.c.l.b16 %v719
      %v2316 = vunpack.c.l.b16 %v723
      %v2317 = vunpack.c.l.b16 %v727
      %v2318 = vunpack.c.l.b16 %v731
      %v2319 = vpack.c.b16 %v2312, %v2311
      %v2320 = vpack.c.b16 %v2314, %v2313
      %v2321 = vpack.c.b16 %v2316, %v2315
      %v2322 = vpack.c.b16 %v2318, %v2317
      %v2325 = vunpack.c.l.b16 %v2309
      %v2326 = vunpack.c.l.b16 %v2310
      %v2327 = vpack.c.b16 %v2326, %v2325
      %v2330 = vsel %vm756, %v2319, 0
      %v2333 = vsel %vm756, %v2320, 0
      %v2336 = vsel %vm756, %v2321, 0
      %v2339 = vsel %vm756, %v2322, 0
      %2341 = vmatprep.subr.bf16.mxu0 0
      %2342 = vmatpush1.bf16.msra.mxu0 0
      %2343 = vmatprep.subr.bf16.mxu0 0
      %2344 = vmatpush1.bf16.msra.mxu0 0
      %2345 = vmatprep.subr.bf16.mxu0 0
      %2346 = vmatpush1.bf16.msra.mxu0 0
      %2347 = vmatprep.subr.bf16.mxu0 0
      %2348 = vmatpush1.bf16.msra.mxu0 0
      %2349 = vmatprep.subr.bf16.mxu0 0
      %2350 = vmatpush1.bf16.msra.mxu0 0
      %2351 = vmatprep.subr.bf16.mxu0 0
      %2352 = vmatpush1.bf16.msra.mxu0 0
      %2353 = vmatprep.subr.bf16.mxu0 0
      %2354 = vmatpush1.bf16.msra.mxu0 0
      %2355 = vmatprep.subr.bf16.mxu0 0
      %2356 = vmatpush1.bf16.msra.mxu0 %v2327
      %2357 = vmatprep.subr.bf16.mxu0 0
      %2358 = vmatpush2.bf16.msra.mxu0 0
      %2359 = vmatprep.subr.bf16.mxu0 0
      %2360 = vmatpush2.bf16.msra.mxu0 0
      %2361 = vmatprep.subr.bf16.mxu0 0
      %2362 = vmatpush2.bf16.msra.mxu0 0
      %2363 = vmatprep.subr.bf16.mxu0 0
      %2364 = vmatpush2.bf16.msra.mxu0 0
      %2365 = vmatprep.subr.bf16.mxu0 0
      %2366 = vmatpush2.bf16.msra.mxu0 0
      %2367 = vmatprep.subr.bf16.mxu0 0
      %2368 = vmatpush2.bf16.msra.mxu0 0
      %2369 = vmatprep.subr.bf16.mxu0 0
      %2370 = vmatpush2.bf16.msra.mxu0 0
      %2371 = vmatprep.subr.bf16.mxu0 0
      %2372 = vmatpush2.bf16.msra.mxu0 0
      %2373 = vmatprep.mubr.bf16.mxu0 0
      %2374 = vmatmul.mubr.bf16.gmra.mxu0 %v2330
      %v2375 = vpop.f32.mrf.mxu0
      %v2376 = vadd.f32 0.0, %v2375
      %v2377 = vpop.f32.mrf.mxu0
      %v2378 = vpop.f32.mrf.mxu0
      %v2379 = vadd.f32 0.0, %v2378
      %v2380 = vpop.f32.mrf.mxu0
      %2381 = vmatprep.mubr.bf16.mxu0 0
      %2382 = vmatmul.mubr.bf16.gmra.mxu0 %v2333
      %v2383 = vpop.f32.mrf.mxu0
      %v2384 = vadd.f32 0.0, %v2383
      %v2385 = vpop.f32.mrf.mxu0
      %v2386 = vpop.f32.mrf.mxu0
      %v2387 = vadd.f32 0.0, %v2386
      %v2388 = vpop.f32.mrf.mxu0
      %2389 = vmatprep.mubr.bf16.mxu0 0
      %2390 = vmatmul.mubr.bf16.gmra.mxu0 %v2336
      %v2391 = vpop.f32.mrf.mxu0
      %v2392 = vadd.f32 0.0, %v2391
      %v2393 = vpop.f32.mrf.mxu0
      %v2394 = vpop.f32.mrf.mxu0
      %v2395 = vadd.f32 0.0, %v2394
      %v2396 = vpop.f32.mrf.mxu0
      %2397 = vmatprep.mubr.bf16.mxu0 0
      %2398 = vmatmul.mubr.bf16.gmra.mxu0 %v2339
      %v2399 = vpop.f32.mrf.mxu0
      %v2400 = vadd.f32 0.0, %v2399
      %v2401 = vpop.f32.mrf.mxu0
      %v2402 = vpop.f32.mrf.mxu0
      %v2403 = vadd.f32 0.0, %v2402
      %v2404 = vpop.f32.mrf.mxu0
      %2405 = vdwg.mxu0
      %v2406 = vadd.f32 %v2300, %v2376
      %v2407 = vadd.f32 %v2301, %v2379
      %v2408 = vadd.f32 %v2302, %v2384
      %v2409 = vadd.f32 %v2303, %v2387
      %v2410 = vadd.f32 %v2304, %v2392
      %v2411 = vadd.f32 %v2305, %v2395
      %v2412 = vadd.f32 %v2306, %v2400
      %v2413 = vadd.f32 %v2307, %v2403
      %v2414 = vadd.f32 %v2406, %v1161
      %v2415 = vadd.f32 %v2407, %v1161
      %v2416 = vadd.f32 %v2408, %v1161
      %v2417 = vadd.f32 %v2409, %v1161
      %v2418 = vadd.f32 %v2410, %v1161
      %v2419 = vadd.f32 %v2411, %v1161
      %v2420 = vadd.f32 %v2412, %v1161
      %v2421 = vadd.f32 %v2413, %v1161
      %v2422 = vmax.f32 %v2414, 0.0
      %v2423 = vmax.f32 %v2415, 0.0
      %v2424 = vmax.f32 %v2416, 0.0
      %v2425 = vmax.f32 %v2417, 0.0
      %v2426 = vmax.f32 %v2418, 0.0
      %v2427 = vmax.f32 %v2419, 0.0
      %v2428 = vmax.f32 %v2420, 0.0
      %v2429 = vmax.f32 %v2421, 0.0
      %v2430 = vpack.c.bf16 %v2423, %v2422
      %v2431 = vpack.c.bf16 %v2425, %v2424
      %v2432 = vpack.c.bf16 %v2427, %v2426
      %v2433 = vpack.c.bf16 %v2429, %v2428
      %v2438 = vunpack.c.l.b16 %v2430
      %v2439 = vunpack.c.h.b16 %v2430
      %v2440 = vunpack.c.l.b16 %v2431
      %v2441 = vunpack.c.h.b16 %v2431
      %v2442 = vunpack.c.l.b16 %v2432
      %v2443 = vunpack.c.h.b16 %v2432
      %v2444 = vunpack.c.l.b16 %v2433
      %v2445 = vunpack.c.h.b16 %v2433
      %v2446 = vpack.c.b16 %v2438, %v2438
      %v2447 = vpack.c.b16 %v2439, %v2439
      %v2448 = vpack.c.b16 %v2440, %v2440
      %v2449 = vpack.c.b16 %v2441, %v2441
      %v2450 = vpack.c.b16 %v2442, %v2442
      %v2451 = vpack.c.b16 %v2443, %v2443
      %v2452 = vpack.c.b16 %v2444, %v2444
      %v2453 = vpack.c.b16 %v2445, %v2445
      %2454 = vrot.lane.b32.xlu0 %v2446, 32
      %v2455 = vpop.permute.xlu0 %2454
      %2456 = vrot.lane.b32.xlu0 %v2447, 32
      %v2457 = vpop.permute.xlu0 %2456
      %2458 = vrot.lane.b32.xlu0 %v2448, 32
      %v2459 = vpop.permute.xlu0 %2458
      %2460 = vrot.lane.b32.xlu0 %v2449, 32
      %v2461 = vpop.permute.xlu0 %2460
      %2462 = vrot.lane.b32.xlu0 %v2450, 32
      %v2463 = vpop.permute.xlu0 %2462
      %2464 = vrot.lane.b32.xlu0 %v2451, 32
      %v2465 = vpop.permute.xlu0 %2464
      %2466 = vrot.lane.b32.xlu0 %v2452, 32
      %v2467 = vpop.permute.xlu0 %2466
      %2468 = vrot.lane.b32.xlu0 %v2453, 32
      %v2469 = vpop.permute.xlu0 %2468
      %2478 = vst.msk [vmem:[%s2069] sm:$0xf] %vm1644, %v2455
      %2479 = vst.msk [vmem:[%s2069 + $0x8] sm:$0xf] %vm1644, %v2457
      %2480 = vst.msk [vmem:[%s2069 + $0x10] sm:$0xf] %vm1644, %v2459
      %2481 = vst.msk [vmem:[%s2069 + $0x18] sm:$0xf] %vm1644, %v2461
      %2482 = vst.msk [vmem:[%s2069 + $0x20] sm:$0xf] %vm1644, %v2463
      %2483 = vst.msk [vmem:[%s2069 + $0x28] sm:$0xf] %vm1644, %v2465
      %2484 = vst.msk [vmem:[%s2069 + $0x30] sm:$0xf] %vm1644, %v2467
      %2485 = vst.msk [vmem:[%s2069 + $0x38] sm:$0xf] %vm1644, %v2469
      %p2486 = scmp.lt.s32.totalorder %s14, 1
      %s2487 = scalar_select %p2486, %s14, 1
      %s2488 = smul.addr %s2487, 16
      %s2489 = smul.addr %s2488, 4
      %s2490 = scalar_lea.vmem %s3, %s2489
      // Predicated region
      $region33: #{topdown_head_forward.3} parent=31 // pred_check
        %p2491 = pneg %p100
      $region34: #{topdown_head_forward.3} parent=31 // pred_check_branch
        %2493 = sbr.rel (%p2491) target = $region36
      $region35: #{topdown_head_forward.3} parent=31 // pred_region
        _
      $region36: #{topdown_head_forward.3} parent=31 // pred_fallthru
        _
    $region32: #{topdown_head_forward.3} parent=5 // pred_fallthru
      _
    %p2494 = scmp.le.s32.totalorder 2, %s9
    // Predicated region
    $region37: #{topdown_head_forward.3} parent=5 // pred_check
      %p2495 = pneg %p2494
    $region38: #{topdown_head_forward.3} parent=5 // pred_check_branch
      %2497 = sbr.rel (%p2495) target = $region40
    $region39: #{topdown_head_forward.3} parent=5 // pred_region
      %s2498 = ssub.s32 %s9, 2
      // Predicated region
      $region41: #{topdown_head_forward.3} parent=39 // pred_check
        %p2499 = pneg %p106
      $region42: #{topdown_head_forward.3} parent=39 // pred_check_branch
        %2501 = sbr.rel (%p2499) target = $region44
      $region43: #{topdown_head_forward.3} parent=39 // pred_region
        %p2502 = scmp.lt.s32.totalorder %s15, 1
        %s2503 = scalar_select %p2502, %s15, 1
        %s2504 = smul.addr %s2503, 16
        %s2505 = smul.addr %s2504, 4
        %s2506 = scalar_lea.vmem %s3, %s2505
      $region44: #{topdown_head_forward.3} parent=39 // pred_fallthru
        _
    $region40: #{topdown_head_forward.3} parent=5 // pred_fallthru
      _
  $region6: #{topdown_head_forward.3} parent=0 // loop_footer
    %s13 = sadd.s32 1, %s9
  $region7: #{topdown_head_forward.3} parent=0 // loop_footer_branch
    %8 = sbr.rel target = $region3
  $region8: #{topdown_head_forward.3} parent=0 // loop_exit
    _

// kernel: topdown_head_forward.4
$region0: #{topdown_head_forward.4}
  #allocation0 [shape = 'u32[]', space=smem, size = 0x4, offset = 0x4, fixed_abs, tag = 'smem constant byte address 0x4 - core index']
  #allocation1 [shape = 'u32[144,128]{1,0:T(1,128)}', space=vmem, size = 0x12000, scoped, tag = 'internal scratch']
  %s0 = inlined_call_operand.vmem [shape: bf16[2,18,18,32], index: 0, kind: input, shape index: {}]
  %s1 = inlined_call_operand.vmem [shape: bf16[4,4,32,32], index: 1, kind: input, shape index: {}]
  %s2 = inlined_call_operand.vmem [shape: f32[1,32], index: 2, kind: input, shape index: {}]
  %s3 = inlined_call_operand.vmem [shape: bf16[2,16,2,16,64], index: 3, kind: output, shape index: {}]
  %s4 = sld [smem:[#allocation0]]
  $region45: #{topdown_head_forward.4} parent=0
    _
  %s6 = ssub.s32 1, %s4
  %s7 = scalar_select 0, %s6, %s4
  loop: start=0, step=1, limit=4
  $region2: #{topdown_head_forward.4} parent=0 // loop_pre_header
    _
  $region3: #{topdown_head_forward.4} parent=0 // loop_header
    %s9 = sphi 0, %s13
    %p10 = scmp.ge.s32.totalorder %s9, 4
    %s19 = sphi 0, %s21
    %s22 = sphi 0, %s19
    %s23 = sphi 0, %s22
    %s39 = sphi 0, %s23
    %s43 = sphi 0, %s43
    %s45 = sphi 0, %s43
    %s46 = sphi 0, %s45
    %s60 = sphi 0, %s46
    %s64 = sphi 0, %s64
    %s66 = sphi 0, %s64
    %s67 = sphi 0, %s66
    %s81 = sphi 0, %s67
    %s87 = sphi 0, %s89
    %s90 = sphi 0, %s87
    %s91 = sphi 0, %s90
    %s107 = sphi 0, %s91
  $region4: #{topdown_head_forward.4} parent=0 // loop_header_branch
    %12 = sbr.rel (%p10) target = $region8
  $region5: #{topdown_head_forward.4} parent=0 // loop_body
    %s14 = ssub.s32 %s9, 1
    %s15 = ssub.s32 %s9, 2
    %s16 = sadd.s32 %s9, 1
    %s17 = ssub.s32 %s9, %s16
    %p18 = scmp.eq.s32.totalorder %s17, 0
    %s20 = sadd.s32 %s19, 1
    %s21 = scalar_select %p18, %s19, %s20
    %p24 = pneg %p18
    %p25 = scmp.eq.s32.totalorder %s9, 1
    %p26 = por %p24, %p25
    %p27 = scmp.ne.s32.totalorder %s19, %s22
    %p28 = scmp.eq.s32.totalorder %s9, 0
    %p29 = por %p27, %p28
    %p30 = scmp.ne.s32.totalorder %s19, %s22
    %p31 = scmp.eq.s32.totalorder %s14, 1
    %p32 = por %p30, %p31
    %p33 = scmp.ne.s32.totalorder %s22, %s23
    %p34 = scmp.eq.s32.totalorder %s14, 0
    %p35 = por %p33, %p34
    %p36 = scmp.ne.s32.totalorder %s22, %s23
    %p37 = scmp.eq.s32.totalorder %s15, 1
    %p38 = por %p36, %p37
    %p40 = scmp.ne.s32.totalorder %s23, %s39
    %p41 = scmp.eq.s32.totalorder %s15, 0
    %p42 = por %p40, %p41
    %s44 = sadd.s32 %s43, 1
    %p47 = scmp.eq.s32.totalorder %s9, 1
    %p48 = scmp.ne.s32.totalorder %s43, %s45
    %p49 = scmp.eq.s32.totalorder %s9, 0
    %p50 = por %p48, %p49
    %p51 = scmp.ne.s32.totalorder %s43, %s45
    %p52 = scmp.eq.s32.totalorder %s14, 1
    %p53 = por %p51, %p52
    %p54 = scmp.ne.s32.totalorder %s45, %s46
    %p55 = scmp.eq.s32.totalorder %s14, 0
    %p56 = por %p54, %p55
    %p57 = scmp.ne.s32.totalorder %s45, %s46
    %p58 = scmp.eq.s32.totalorder %s15, 1
    %p59 = por %p57, %p58
    %p61 = scmp.ne.s32.totalorder %s46, %s60
    %p62 = scmp.eq.s32.totalorder %s15, 0
    %p63 = por %p61, %p62
    %s65 = sadd.s32 %s64, 1
    %p68 = scmp.eq.s32.totalorder %s9, 1
    %p69 = scmp.ne.s32.totalorder %s64, %s66
    %p70 = scmp.eq.s32.totalorder %s9, 0
    %p71 = por %p69, %p70
    %p72 = scmp.ne.s32.totalorder %s64, %s66
    %p73 = scmp.eq.s32.totalorder %s14, 1
    %p74 = por %p72, %p73
    %p75 = scmp.ne.s32.totalorder %s66, %s67
    %p76 = scmp.eq.s32.totalorder %s14, 0
    %p77 = por %p75, %p76
    %p78 = scmp.ne.s32.totalorder %s66, %s67
    %p79 = scmp.eq.s32.totalorder %s15, 1
    %p80 = por %p78, %p79
    %p82 = scmp.ne.s32.totalorder %s67, %s81
    %p83 = scmp.eq.s32.totalorder %s15, 0
    %p84 = por %p82, %p83
    %s85 = ssub.s32 %s9, %s16
    %p86 = scmp.eq.s32.totalorder %s85, 0
    %s88 = sadd.s32 %s87, 1
    %s89 = scalar_select %p86, %s87, %s88
    %p92 = pneg %p86
    %p93 = scmp.eq.s32.totalorder %s9, 1
    %p94 = por %p92, %p93
    %p95 = scmp.ne.s32.totalorder %s87, %s90
    %p96 = scmp.eq.s32.totalorder %s9, 0
    %p97 = por %p95, %p96
    %p98 = scmp.ne.s32.totalorder %s87, %s90
    %p99 = scmp.eq.s32.totalorder %s14, 1
    %p100 = por %p98, %p99
    %p101 = scmp.ne.s32.totalorder %s90, %s91
    %p102 = scmp.eq.s32.totalorder %s14, 0
    %p103 = por %p101, %p102
    %p104 = scmp.ne.s32.totalorder %s90, %s91
    %p105 = scmp.eq.s32.totalorder %s15, 1
    %p106 = por %p104, %p105
    %p108 = scmp.ne.s32.totalorder %s91, %s107
    %p109 = scmp.eq.s32.totalorder %s15, 0
    %p110 = por %p108, %p109
    %p111 = scmp.le.s32.totalorder 1, %s9
    %p112 = scmp.lt.s32.totalorder %s9, 3
    %p113 = pnand %p111, %p112
    %p114 = pneg %p113
    // Predicated region
    $region9: #{topdown_head_forward.4} parent=5 // pred_check
      _
    $region10: #{topdown_head_forward.4} parent=5 // pred_check_branch
      %116 = sbr.rel (%p113) target = $region12
    $region11: #{topdown_head_forward.4} parent=5 // pred_region
      %s117 = ssub.s32 %s9, 1
      // Predicated region
      $region13: #{topdown_head_forward.4} parent=11 // pred_check
        %p118 = pneg %p56
      $region14: #{topdown_head_forward.4} parent=11 // pred_check_branch
        %120 = sbr.rel (%p118) target = $region16
      $region15: #{topdown_head_forward.4} parent=11 // pred_region
        _
      $region16: #{topdown_head_forward.4} parent=11 // pred_fallthru
        _
      // Predicated region
      $region17: #{topdown_head_forward.4} parent=11 // pred_check
        %p121 = pneg %p77
      $region18: #{topdown_head_forward.4} parent=11 // pred_check_branch
        %123 = sbr.rel (%p121) target = $region20
      $region19: #{topdown_head_forward.4} parent=11 // pred_region
        _
      $region20: #{topdown_head_forward.4} parent=11 // pred_fallthru
        _
    $region12: #{topdown_head_forward.4} parent=5 // pred_fallthru
      _
    %p124 = scmp.lt.s32.totalorder %s9, 2
    // Predicated region
    $region21: #{topdown_head_forward.4} parent=5 // pred_check
      %p125 = pneg %p124
    $region22: #{topdown_head_forward.4} parent=5 // pred_check_branch
      %127 = sbr.rel (%p125) target = $region24
    $region23: #{topdown_head_forward.4} parent=5 // pred_region
      // Predicated region
      $region25: #{topdown_head_forward.4} parent=23 // pred_check
        %p128 = pneg %p29
      $region26: #{topdown_head_forward.4} parent=23 // pred_check_branch
        %130 = sbr.rel (%p128) target = $region28
      $region27: #{topdown_head_forward.4} parent=23 // pred_region
        %p131 = scmp.lt.s32.totalorder %s9, 1
        %s132 = scalar_select %p131, %s9, 1
        %s133 = smul.addr %s132, 54
        %s134 = smul.addr %s133, 4
        %s135 = scalar_lea.vmem %s0, %s134
      $region28: #{topdown_head_forward.4} parent=23 // pred_fallthru
        _
    $region24: #{topdown_head_forward.4} parent=5 // pred_fallthru
      _
    %p136 = scmp.le.s32.totalorder 1, %s9
    %p137 = scmp.lt.s32.totalorder %s9, 3
    %p138 = pnand %p136, %p137
    %p139 = pneg %p138
    // Predicated region
    $region29: #{topdown_head_forward.4} parent=5 // pred_check
      _
    $region30: #{topdown_head_forward.4} parent=5 // pred_check_branch
      %141 = sbr.rel (%p138) target = $region32
    $region31: #{topdown_head_forward.4} parent=5 // pred_region
      %s142 = ssub.s32 %s9, 1
      %p143 = scmp.lt.s32.totalorder %s14, 1
      %s144 = scalar_select %p143, %s14, 1
      %s145 = smul.addr %s144, 54
      %s146 = smul.addr %s145, 4
      %s147 = scalar_lea.vmem %s0, %s146
      %p148 = pneg %p35
      %p149 = pneg %p32
      %p150 = pneg %p56
      %p151 = pneg %p53
      %p152 = pneg %p77
      %p153 = pneg %p74
      %p154 = pneg %p103
      %p155 = pneg %p100
      %p156 = scmp.lt.s32.totalorder %s14, 1
      %s157 = scalar_select %p156, %s14, 1
      %s158 = smul.addr %s157, 64
      %s159 = smul.addr %s158, 4
      %s160 = scalar_lea.vmem %s3, %s159
      %p161 = scmp.lt.s32.totalorder %s14, 1
      %s162 = scalar_select %p161, %s14, 1
      %s163 = smul.addr %s162, 54
      %s164 = smul.addr %s163, 4
      %s165 = scalar_lea.vmem %s0, %s164
      %p166 = scmp.lt.s32.totalorder %s14, 1
      %s167 = scalar_select %p166, %s14, 1
      %s168 = smul.addr %s167, 64
      %s169 = smul.addr %s168, 4
      %s170 = scalar_lea.vmem %s3, %s169
      %v172 = vld [vmem:[%s165] sm:$0xf]
      %v173 = vld [vmem:[%s165 + $0x4] sm:$0xf]
      %v174 = vld [vmem:[%s165 + $0xc] sm:$0xf]
      %v175 = vld [vmem:[%s165 + $0x10] sm:$0xf]
      %v176 = vld [vmem:[%s165 + $0x18] sm:$0xf]
      %v177 = vld [vmem:[%s165 + $0x1c] sm:$0xf]
      %v178 = vld [vmem:[%s165 + $0x24] sm:$0xf]
      %v179 = vld [vmem:[%s165 + $0x28] sm:$0xf]
      %v180 = vld [vmem:[%s165 + $0x30] sm:$0xf]
      %v181 = vld [vmem:[%s165 + $0x34] sm:$0xf]
      %v182 = vld [vmem:[%s165 + $0x3c] sm:$0xf]
      %v183 = vld [vmem:[%s165 + $0x40] sm:$0xf]
      %v184 = vld [vmem:[%s165 + $0x48] sm:$0xf]
      %v185 = vld [vmem:[%s165 + $0x4c] sm:$0xf]
      %v186 = vld [vmem:[%s165 + $0x54] sm:$0xf]
      %v187 = vld [vmem:[%s165 + $0x58] sm:$0xf]
      %v188 = vld [vmem:[%s165 + $0x60] sm:$0xf]
      %v189 = vld [vmem:[%s165 + $0x64] sm:$0xf]
      %v190 = vld [vmem:[%s165 + $0x6c] sm:$0xf]
      %v191 = vld [vmem:[%s165 + $0x70] sm:$0xf]
      %v192 = vld [vmem:[%s165 + $0x78] sm:$0xf]
      %v193 = vld [vmem:[%s165 + $0x7c] sm:$0xf]
      %v194 = vld [vmem:[%s165 + $0x84] sm:$0xf]
      %v195 = vld [vmem:[%s165 + $0x88] sm:$0xf]
      %v196 = vld [vmem:[%s165 + $0x90] sm:$0xf]
      %v197 = vld [vmem:[%s165 + $0x94] sm:$0xf]
      %v198 = vld [vmem:[%s165 + $0x9c] sm:$0xf]
      %v199 = vld [vmem:[%s165 + $0xa0] sm:$0xf]
      %v200 = vld [vmem:[%s165 + $0xa8] sm:$0xf]
      %v201 = vld [vmem:[%s165 + $0xac] sm:$0xf]
      %v202 = vld [vmem:[%s165 + $0xb4] sm:$0xf]
      %v203 = vld [vmem:[%s165 + $0xb8] sm:$0xf]
      %v204 = vld [vmem:[%s165 + $0x8] sm:$0x1]
      %v205 = vld [vmem:[%s165 + $0x14] sm:$0x1]
      %v206 = vld [vmem:[%s165 + $0x20] sm:$0x1]
      %v207 = vld [vmem:[%s165 + $0x2c] sm:$0x1]
      %v208 = vld [vmem:[%s165 + $0x38] sm:$0x1]
      %v209 = vld [vmem:[%s165 + $0x44] sm:$0x1]
      %v210 = vld [vmem:[%s165 + $0x50] sm:$0x1]
      %v211 = vld [vmem:[%s165 + $0x5c] sm:$0x1]
      %v212 = vld [vmem:[%s165 + $0x68] sm:$0x1]
      %v213 = vld [vmem:[%s165 + $0x74] sm:$0x1]
      %v214 = vld [vmem:[%s165 + $0x80] sm:$0x1]
      %v215 = vld [vmem:[%s165 + $0x8c] sm:$0x1]
      %v216 = vld [vmem:[%s165 + $0x98] sm:$0x1]
      %v217 = vld [vmem:[%s165 + $0xa4] sm:$0x1]
      %v218 = vld [vmem:[%s165 + $0xb0] sm:$0x1]
      %v219 = vld [vmem:[%s165 + $0xbc] sm:$0x1]
      %vm220 = vsmask.f32 3328
      %vm221 = vsmask.f32 7440
      %vm222 = vmor %vm220, %vm221
      %v224 = vshrl.u32 %v172, 16
      %v226 = vrot.slane %v224, 4
      %v227 = vshll.u32 %v172, 16
      %v229 = vrot.slane %v227, 5
      %v230 = vor.u32 %v226, %v229
      %v231 = vrot.slane %v230, 4
      %v233 = vshll.u32 %v173, 16
      %v235 = vrot.slane %v233, 5
      %v236 = vsel %vm222, %v231, %v235
      %v237 = vshrl.u32 %v173, 16
      %v239 = vrot.slane %v237, 4
      %v240 = vor.u32 %v239, %v235
      %v241 = vrot.slane %v240, 4
      %v243 = vshll.u32 %v204, 16
      %v245 = vrot.slane %v243, 5
      %v246 = vsel %vm222, %v241, %v245
      %v248 = vshrl.u32 %v174, 16
      %v250 = vrot.slane %v248, 4
      %v251 = vshll.u32 %v174, 16
      %v253 = vrot.slane %v251, 5
      %v254 = vor.u32 %v250, %v253
      %v255 = vrot.slane %v254, 4
      %v257 = vshll.u32 %v175, 16
      %v259 = vrot.slane %v257, 5
      %v260 = vsel %vm222, %v255, %v259
      %v261 = vshrl.u32 %v175, 16
      %v263 = vrot.slane %v261, 4
      %v264 = vor.u32 %v263, %v259
      %v265 = vrot.slane %v264, 4
      %v267 = vshll.u32 %v205, 16
      %v269 = vrot.slane %v267, 5
      %v270 = vsel %vm222, %v265, %v269
      %v272 = vshrl.u32 %v176, 16
      %v274 = vrot.slane %v272, 4
      %v275 = vshll.u32 %v176, 16
      %v277 = vrot.slane %v275, 5
      %v278 = vor.u32 %v274, %v277
      %v279 = vrot.slane %v278, 4
      %v281 = vshll.u32 %v177, 16
      %v283 = vrot.slane %v281, 5
      %v284 = vsel %vm222, %v279, %v283
      %v285 = vshrl.u32 %v177, 16
      %v287 = vrot.slane %v285, 4
      %v288 = vor.u32 %v287, %v283
      %v289 = vrot.slane %v288, 4
      %v291 = vshll.u32 %v206, 16
      %v293 = vrot.slane %v291, 5
      %v294 = vsel %vm222, %v289, %v293
      %v296 = vshrl.u32 %v178, 16
      %v298 = vrot.slane %v296, 4
      %v299 = vshll.u32 %v178, 16
      %v301 = vrot.slane %v299, 5
      %v302 = vor.u32 %v298, %v301
      %v303 = vrot.slane %v302, 4
      %v305 = vshll.u32 %v179, 16
      %v307 = vrot.slane %v305, 5
      %v308 = vsel %vm222, %v303, %v307
      %v309 = vshrl.u32 %v179, 16
      %v311 = vrot.slane %v309, 4
      %v312 = vor.u32 %v311, %v307
      %v313 = vrot.slane %v312, 4
      %v315 = vshll.u32 %v207, 16
      %v317 = vrot.slane %v315, 5
      %v318 = vsel %vm222, %v313, %v317
      %v320 = vshrl.u32 %v180, 16
      %v322 = vrot.slane %v320, 4
      %v323 = vshll.u32 %v180, 16
      %v325 = vrot.slane %v323, 5
      %v326 = vor.u32 %v322, %v325
      %v327 = vrot.slane %v326, 4
      %v329 = vshll.u32 %v181, 16
      %v331 = vrot.slane %v329, 5
      %v332 = vsel %vm222, %v327, %v331
      %v333 = vshrl.u32 %v181, 16
      %v335 = vrot.slane %v333, 4
      %v336 = vor.u32 %v335, %v331
      %v337 = vrot.slane %v336, 4
      %v339 = vshll.u32 %v208, 16
      %v341 = vrot.slane %v339, 5
      %v342 = vsel %vm222, %v337, %v341
      %v344 = vshrl.u32 %v182, 16
      %v346 = vrot.slane %v344, 4
      %v347 = vshll.u32 %v182, 16
      %v349 = vrot.slane %v347, 5
      %v350 = vor.u32 %v346, %v349
      %v351 = vrot.slane %v350, 4
      %v353 = vshll.u32 %v183, 16
      %v355 = vrot.slane %v353, 5
      %v356 = vsel %vm222, %v351, %v355
      %v357 = vshrl.u32 %v183, 16
      %v359 = vrot.slane %v357, 4
      %v360 = vor.u32 %v359, %v355
      %v361 = vrot.slane %v360, 4
      %v363 = vshll.u32 %v209, 16
      %v365 = vrot.slane %v363, 5
      %v366 = vsel %vm222, %v361, %v365
      %v368 = vshrl.u32 %v184, 16
      %v370 = vrot.slane %v368, 4
      %v371 = vshll.u32 %v184, 16
      %v373 = vrot.slane %v371, 5
      %v374 = vor.u32 %v370, %v373
      %v375 = vrot.slane %v374, 4
      %v377 = vshll.u32 %v185, 16
      %v379 = vrot.slane %v377, 5
      %v380 = vsel %vm222, %v375, %v379
      %v381 = vshrl.u32 %v185, 16
      %v383 = vrot.slane %v381, 4
      %v384 = vor.u32 %v383, %v379
      %v385 = vrot.slane %v384, 4
      %v387 = vshll.u32 %v210, 16
      %v389 = vrot.slane %v387, 5
      %v390 = vsel %vm222, %v385, %v389
      %v392 = vshrl.u32 %v186, 16
      %v394 = vrot.slane %v392, 4
      %v395 = vshll.u32 %v186, 16
      %v397 = vrot.slane %v395, 5
      %v398 = vor.u32 %v394, %v397
      %v399 = vrot.slane %v398, 4
      %v401 = vshll.u32 %v187, 16
      %v403 = vrot.slane %v401, 5
      %v404 = vsel %vm222, %v399, %v403
      %v405 = vshrl.u32 %v187, 16
      %v407 = vrot.slane %v405, 4
      %v408 = vor.u32 %v407, %v403
      %v409 = vrot.slane %v408, 4
      %v411 = vshll.u32 %v211, 16
      %v413 = vrot.slane %v411, 5
      %v414 = vsel %vm222, %v409, %v413
      %v416 = vshrl.u32 %v188, 16
      %v418 = vrot.slane %v416, 4
      %v419 = vshll.u32 %v188, 16
      %v421 = vrot.slane %v419, 5
      %v422 = vor.u32 %v418, %v421
      %v423 = vrot.slane %v422, 4
      %v425 = vshll.u32 %v189, 16
      %v427 = vrot.slane %v425, 5
      %v428 = vsel %vm222, %v423, %v427
      %v429 = vshrl.u32 %v189, 16
      %v431 = vrot.slane %v429, 4
      %v432 = vor.u32 %v431, %v427
      %v433 = vrot.slane %v432, 4
      %v435 = vshll.u32 %v212, 16
      %v437 = vrot.slane %v435, 5
      %v438 = vsel %vm222, %v433, %v437
      %v440 = vshrl.u32 %v190, 16
      %v442 = vrot.slane %v440, 4
      %v443 = vshll.u32 %v190, 16
      %v445 = vrot.slane %v443, 5
      %v446 = vor.u32 %v442, %v445
      %v447 = vrot.slane %v446, 4
      %v449 = vshll.u32 %v191, 16
      %v451 = vrot.slane %v449, 5
      %v452 = vsel %vm222, %v447, %v451
      %v453 = vshrl.u32 %v191, 16
      %v455 = vrot.slane %v453, 4
      %v456 = vor.u32 %v455, %v451
      %v457 = vrot.slane %v456, 4
      %v459 = vshll.u32 %v213, 16
      %v461 = vrot.slane %v459, 5
      %v462 = vsel %vm222, %v457, %v461
      %v464 = vshrl.u32 %v192, 16
      %v466 = vrot.slane %v464, 4
      %v467 = vshll.u32 %v192, 16
      %v469 = vrot.slane %v467, 5
      %v470 = vor.u32 %v466, %v469
      %v471 = vrot.slane %v470, 4
      %v473 = vshll.u32 %v193, 16
      %v475 = vrot.slane %v473, 5
      %v476 = vsel %vm222, %v471, %v475
      %v477 = vshrl.u32 %v193, 16
      %v479 = vrot.slane %v477, 4
      %v480 = vor.u32 %v479, %v475
      %v481 = vrot.slane %v480, 4
      %v483 = vshll.u32 %v214, 16
      %v485 = vrot.slane %v483, 5
      %v486 = vsel %vm222, %v481, %v485
      %v488 = vshrl.u32 %v194, 16
      %v490 = vrot.slane %v488, 4
      %v491 = vshll.u32 %v194, 16
      %v493 = vrot.slane %v491, 5
      %v494 = vor.u32 %v490, %v493
      %v495 = vrot.slane %v494, 4
      %v497 = vshll.u32 %v195, 16
      %v499 = vrot.slane %v497, 5
      %v500 = vsel %vm222, %v495, %v499
      %v501 = vshrl.u32 %v195, 16
      %v503 = vrot.slane %v501, 4
      %v504 = vor.u32 %v503, %v499
      %v505 = vrot.slane %v504, 4
      %v507 = vshll.u32 %v215, 16
      %v509 = vrot.slane %v507, 5
      %v510 = vsel %vm222, %v505, %v509
      %v512 = vshrl.u32 %v196, 16
      %v514 = vrot.slane %v512, 4
      %v515 = vshll.u32 %v196, 16
      %v517 = vrot.slane %v515, 5
      %v518 = vor.u32 %v514, %v517
      %v519 = vrot.slane %v518, 4
      %v521 = vshll.u32 %v197, 16
      %v523 = vrot.slane %v521, 5
      %v524 = vsel %vm222, %v519, %v523
      %v525 = vshrl.u32 %v197, 16
      %v527 = vrot.slane %v525, 4
      %v528 = vor.u32 %v527, %v523
      %v529 = vrot.slane %v528, 4
      %v531 = vshll.u32 %v216, 16
      %v533 = vrot.slane %v531, 5
      %v534 = vsel %vm222, %v529, %v533
      %v536 = vshrl.u32 %v198, 16
      %v538 = vrot.slane %v536, 4
      %v539 = vshll.u32 %v198, 16
      %v541 = vrot.slane %v539, 5
      %v542 = vor.u32 %v538, %v541
      %v543 = vrot.slane %v542, 4
      %v545 = vshll.u32 %v199, 16
      %v547 = vrot.slane %v545, 5
      %v548 = vsel %vm222, %v543, %v547
      %v549 = vshrl.u32 %v199, 16
      %v551 = vrot.slane %v549, 4
      %v552 = vor.u32 %v551, %v547
      %v553 = vrot.slane %v552, 4
      %v555 = vshll.u32 %v217, 16
      %v557 = vrot.slane %v555, 5
      %v558 = vsel %vm222, %v553, %v557
      %v560 = vshrl.u32 %v200, 16
      %v562 = vrot.slane %v560, 4
      %v563 = vshll.u32 %v200, 16
      %v565 = vrot.slane %v563, 5
      %v566 = vor.u32 %v562, %v565
      %v567 = vrot.slane %v566, 4
      %v569 = vshll.u32 %v201, 16
      %v571 = vrot.slane %v569, 5
      %v572 = vsel %vm222, %v567, %v571
      %v573 = vshrl.u32 %v201, 16
      %v575 = vrot.slane %v573, 4
      %v576 = vor.u32 %v575, %v571
      %v577 = vrot.slane %v576, 4
      %v579 = vshll.u32 %v218, 16
      %v581 = vrot.slane %v579, 5
      %v582 = vsel %vm222, %v577, %v581
      %v584 = vshrl.u32 %v202, 16
      %v586 = vrot.slane %v584, 4
      %v587 = vshll.u32 %v202, 16
      %v589 = vrot.slane %v587, 5
      %v590 = vor.u32 %v586, %v589
      %v591 = vrot.slane %v590, 4
      %v593 = vshll.u32 %v203, 16
      %v595 = vrot.slane %v593, 5
      %v596 = vsel %vm222, %v591, %v595
      %v597 = vshrl.u32 %v203, 16
      %v599 = vrot.slane %v597, 4
      %v600 = vor.u32 %v599, %v595
      %v601 = vrot.slane %v600, 4
      %v603 = vshll.u32 %v219, 16
      %v605 = vrot.slane %v603, 5
      %v606 = vsel %vm222, %v601, %v605
      %v607 = vld [vmem:[%s165] sm:$0xe]
      %v608 = vld [vmem:[%s165 + $0xc] sm:$0xe]
      %v609 = vld [vmem:[%s165 + $0x18] sm:$0xe]
      %v610 = vld [vmem:[%s165 + $0x24] sm:$0xe]
      %v611 = vld [vmem:[%s165 + $0x30] sm:$0xe]
      %v612 = vld [vmem:[%s165 + $0x3c] sm:$0xe]
      %v613 = vld [vmem:[%s165 + $0x48] sm:$0xe]
      %v614 = vld [vmem:[%s165 + $0x54] sm:$0xe]
      %v615 = vld [vmem:[%s165 + $0x60] sm:$0xe]
      %v616 = vld [vmem:[%s165 + $0x6c] sm:$0xe]
      %v617 = vld [vmem:[%s165 + $0x78] sm:$0xe]
      %v618 = vld [vmem:[%s165 + $0x84] sm:$0xe]
      %v619 = vld [vmem:[%s165 + $0x90] sm:$0xe]
      %v620 = vld [vmem:[%s165 + $0x9c] sm:$0xe]
      %v621 = vld [vmem:[%s165 + $0xa8] sm:$0xe]
      %v622 = vld [vmem:[%s165 + $0xb4] sm:$0xe]
      %vm671 = vcmask 1042432
      %vm672 = vcmask 1046532
      %vm673 = vmor %vm671, %vm672
      %v674 = vrot.slane %v607, 5
      %v675 = vrot.slane %v674, 4
      %v676 = vrot.slane %v173, 5
      %v677 = vsel %vm673, %v675, %v676
      %v678 = vrot.slane %v676, 4
      %v679 = vrot.slane %v204, 5
      %v680 = vsel %vm673, %v678, %v679
      %v681 = vrot.slane %v608, 5
      %v682 = vrot.slane %v681, 4
      %v683 = vrot.slane %v175, 5
      %v684 = vsel %vm673, %v682, %v683
      %v685 = vrot.slane %v683, 4
      %v686 = vrot.slane %v205, 5
      %v687 = vsel %vm673, %v685, %v686
      %v688 = vrot.slane %v609, 5
      %v689 = vrot.slane %v688, 4
      %v690 = vrot.slane %v177, 5
      %v691 = vsel %vm673, %v689, %v690
      %v692 = vrot.slane %v690, 4
      %v693 = vrot.slane %v206, 5
      %v694 = vsel %vm673, %v692, %v693
      %v695 = vrot.slane %v610, 5
      %v696 = vrot.slane %v695, 4
      %v697 = vrot.slane %v179, 5
      %v698 = vsel %vm673, %v696, %v697
      %v699 = vrot.slane %v697, 4
      %v700 = vrot.slane %v207, 5
      %v701 = vsel %vm673, %v699, %v700
      %v702 = vrot.slane %v611, 5
      %v703 = vrot.slane %v702, 4
      %v704 = vrot.slane %v181, 5
      %v705 = vsel %vm673, %v703, %v704
      %v706 = vrot.slane %v704, 4
      %v707 = vrot.slane %v208, 5
      %v708 = vsel %vm673, %v706, %v707
      %v709 = vrot.slane %v612, 5
      %v710 = vrot.slane %v709, 4
      %v711 = vrot.slane %v183, 5
      %v712 = vsel %vm673, %v710, %v711
      %v713 = vrot.slane %v711, 4
      %v714 = vrot.slane %v209, 5
      %v715 = vsel %vm673, %v713, %v714
      %v716 = vrot.slane %v613, 5
      %v717 = vrot.slane %v716, 4
      %v718 = vrot.slane %v185, 5
      %v719 = vsel %vm673, %v717, %v718
      %v720 = vrot.slane %v718, 4
      %v721 = vrot.slane %v210, 5
      %v722 = vsel %vm673, %v720, %v721
      %v723 = vrot.slane %v614, 5
      %v724 = vrot.slane %v723, 4
      %v725 = vrot.slane %v187, 5
      %v726 = vsel %vm673, %v724, %v725
      %v727 = vrot.slane %v725, 4
      %v728 = vrot.slane %v211, 5
      %v729 = vsel %vm673, %v727, %v728
      %v730 = vrot.slane %v615, 5
      %v731 = vrot.slane %v730, 4
      %v732 = vrot.slane %v189, 5
      %v733 = vsel %vm673, %v731, %v732
      %v734 = vrot.slane %v732, 4
      %v735 = vrot.slane %v212, 5
      %v736 = vsel %vm673, %v734, %v735
      %v737 = vrot.slane %v616, 5
      %v738 = vrot.slane %v737, 4
      %v739 = vrot.slane %v191, 5
      %v740 = vsel %vm673, %v738, %v739
      %v741 = vrot.slane %v739, 4
      %v742 = vrot.slane %v213, 5
      %v743 = vsel %vm673, %v741, %v742
      %v744 = vrot.slane %v617, 5
      %v745 = vrot.slane %v744, 4
      %v746 = vrot.slane %v193, 5
      %v747 = vsel %vm673, %v745, %v746
      %v748 = vrot.slane %v746, 4
      %v749 = vrot.slane %v214, 5
      %v750 = vsel %vm673, %v748, %v749
      %v751 = vrot.slane %v618, 5
      %v752 = vrot.slane %v751, 4
      %v753 = vrot.slane %v195, 5
      %v754 = vsel %vm673, %v752, %v753
      %v755 = vrot.slane %v753, 4
      %v756 = vrot.slane %v215, 5
      %v757 = vsel %vm673, %v755, %v756
      %v758 = vrot.slane %v619, 5
      %v759 = vrot.slane %v758, 4
      %v760 = vrot.slane %v197, 5
      %v761 = vsel %vm673, %v759, %v760
      %v762 = vrot.slane %v760, 4
      %v763 = vrot.slane %v216, 5
      %v764 = vsel %vm673, %v762, %v763
      %v765 = vrot.slane %v620, 5
      %v766 = vrot.slane %v765, 4
      %v767 = vrot.slane %v199, 5
      %v768 = vsel %vm673, %v766, %v767
      %v769 = vrot.slane %v767, 4
      %v770 = vrot.slane %v217, 5
      %v771 = vsel %vm673, %v769, %v770
      %v772 = vrot.slane %v621, 5
      %v773 = vrot.slane %v772, 4
      %v774 = vrot.slane %v201, 5
      %v775 = vsel %vm673, %v773, %v774
      %v776 = vrot.slane %v774, 4
      %v777 = vrot.slane %v218, 5
      %v778 = vsel %vm673, %v776, %v777
      %v779 = vrot.slane %v622, 5
      %v780 = vrot.slane %v779, 4
      %v781 = vrot.slane %v203, 5
      %v782 = vsel %vm673, %v780, %v781
      %v783 = vrot.slane %v781, 4
      %v784 = vrot.slane %v219, 5
      %v785 = vsel %vm673, %v783, %v784
      %s786 = scalar_lea.vmem %s165, 12
      %v787 = vld [vmem:[%s786] sm:$0xf]
      %v788 = vld [vmem:[%s786 + $0x4] sm:$0xf]
      %v789 = vld [vmem:[%s786 + $0xc] sm:$0xf]
      %v790 = vld [vmem:[%s786 + $0x10] sm:$0xf]
      %v791 = vld [vmem:[%s786 + $0x18] sm:$0xf]
      %v792 = vld [vmem:[%s786 + $0x1c] sm:$0xf]
      %v793 = vld [vmem:[%s786 + $0x24] sm:$0xf]
      %v794 = vld [vmem:[%s786 + $0x28] sm:$0xf]
      %v795 = vld [vmem:[%s786 + $0x30] sm:$0xf]
      %v796 = vld [vmem:[%s786 + $0x34] sm:$0xf]
      %v797 = vld [vmem:[%s786 + $0x3c] sm:$0xf]
      %v798 = vld [vmem:[%s786 + $0x40] sm:$0xf]
      %v799 = vld [vmem:[%s786 + $0x48] sm:$0xf]
      %v800 = vld [vmem:[%s786 + $0x4c] sm:$0xf]
      %v801 = vld [vmem:[%s786 + $0x54] sm:$0xf]
      %v802 = vld [vmem:[%s786 + $0x58] sm:$0xf]
      %v803 = vld [vmem:[%s786 + $0x60] sm:$0xf]
      %v804 = vld [vmem:[%s786 + $0x64] sm:$0xf]
      %v805 = vld [vmem:[%s786 + $0x6c] sm:$0xf]
      %v806 = vld [vmem:[%s786 + $0x70] sm:$0xf]
      %v807 = vld [vmem:[%s786 + $0x78] sm:$0xf]
      %v808 = vld [vmem:[%s786 + $0x7c] sm:$0xf]
      %v809 = vld [vmem:[%s786 + $0x84] sm:$0xf]
      %v810 = vld [vmem:[%s786 + $0x88] sm:$0xf]
      %v811 = vld [vmem:[%s786 + $0x90] sm:$0xf]
      %v812 = vld [vmem:[%s786 + $0x94] sm:$0xf]
      %v813 = vld [vmem:[%s786 + $0x9c] sm:$0xf]
      %v814 = vld [vmem:[%s786 + $0xa0] sm:$0xf]
      %v815 = vld [vmem:[%s786 + $0xa8] sm:$0xf]
      %v816 = vld [vmem:[%s786 + $0xac] sm:$0xf]
      %v817 = vld [vmem:[%s786 + $0xb4] sm:$0xf]
      %v818 = vld [vmem:[%s786 + $0xb8] sm:$0xf]
      %v819 = vld [vmem:[%s786 + $0x8] sm:$0x1]
      %v820 = vld [vmem:[%s786 + $0x14] sm:$0x1]
      %v821 = vld [vmem:[%s786 + $0x20] sm:$0x1]
      %v822 = vld [vmem:[%s786 + $0x2c] sm:$0x1]
      %v823 = vld [vmem:[%s786 + $0x38] sm:$0x1]
      %v824 = vld [vmem:[%s786 + $0x44] sm:$0x1]
      %v825 = vld [vmem:[%s786 + $0x50] sm:$0x1]
      %v826 = vld [vmem:[%s786 + $0x5c] sm:$0x1]
      %v827 = vld [vmem:[%s786 + $0x68] sm:$0x1]
      %v828 = vld [vmem:[%s786 + $0x74] sm:$0x1]
      %v829 = vld [vmem:[%s786 + $0x80] sm:$0x1]
      %v830 = vld [vmem:[%s786 + $0x8c] sm:$0x1]
      %v831 = vld [vmem:[%s786 + $0x98] sm:$0x1]
      %v832 = vld [vmem:[%s786 + $0xa4] sm:$0x1]
      %v833 = vld [vmem:[%s786 + $0xb0] sm:$0x1]
      %v834 = vld [vmem:[%s786 + $0xbc] sm:$0x1]
      %v836 = vshrl.u32 %v787, 16
      %v838 = vrot.slane %v836, 4
      %v839 = vshll.u32 %v787, 16
      %v841 = vrot.slane %v839, 5
      %v842 = vor.u32 %v838, %v841
      %v843 = vrot.slane %v842, 4
      %v845 = vshll.u32 %v788, 16
      %v847 = vrot.slane %v845, 5
      %v848 = vsel %vm222, %v843, %v847
      %v849 = vshrl.u32 %v788, 16
      %v851 = vrot.slane %v849, 4
      %v852 = vor.u32 %v851, %v847
      %v853 = vrot.slane %v852, 4
      %v855 = vshll.u32 %v819, 16
      %v857 = vrot.slane %v855, 5
      %v858 = vsel %vm222, %v853, %v857
      %v860 = vshrl.u32 %v789, 16
      %v862 = vrot.slane %v860, 4
      %v863 = vshll.u32 %v789, 16
      %v865 = vrot.slane %v863, 5
      %v866 = vor.u32 %v862, %v865
      %v867 = vrot.slane %v866, 4
      %v869 = vshll.u32 %v790, 16
      %v871 = vrot.slane %v869, 5
      %v872 = vsel %vm222, %v867, %v871
      %v873 = vshrl.u32 %v790, 16
      %v875 = vrot.slane %v873, 4
      %v876 = vor.u32 %v875, %v871
      %v877 = vrot.slane %v876, 4
      %v879 = vshll.u32 %v820, 16
      %v881 = vrot.slane %v879, 5
      %v882 = vsel %vm222, %v877, %v881
      %v884 = vshrl.u32 %v791, 16
      %v886 = vrot.slane %v884, 4
      %v887 = vshll.u32 %v791, 16
      %v889 = vrot.slane %v887, 5
      %v890 = vor.u32 %v886, %v889
      %v891 = vrot.slane %v890, 4
      %v893 = vshll.u32 %v792, 16
      %v895 = vrot.slane %v893, 5
      %v896 = vsel %vm222, %v891, %v895
      %v897 = vshrl.u32 %v792, 16
      %v899 = vrot.slane %v897, 4
      %v900 = vor.u32 %v899, %v895
      %v901 = vrot.slane %v900, 4
      %v903 = vshll.u32 %v821, 16
      %v905 = vrot.slane %v903, 5
      %v906 = vsel %vm222, %v901, %v905
      %v908 = vshrl.u32 %v793, 16
      %v910 = vrot.slane %v908, 4
      %v911 = vshll.u32 %v793, 16
      %v913 = vrot.slane %v911, 5
      %v914 = vor.u32 %v910, %v913
      %v915 = vrot.slane %v914, 4
      %v917 = vshll.u32 %v794, 16
      %v919 = vrot.slane %v917, 5
      %v920 = vsel %vm222, %v915, %v919
      %v921 = vshrl.u32 %v794, 16
      %v923 = vrot.slane %v921, 4
      %v924 = vor.u32 %v923, %v919
      %v925 = vrot.slane %v924, 4
      %v927 = vshll.u32 %v822, 16
      %v929 = vrot.slane %v927, 5
      %v930 = vsel %vm222, %v925, %v929
      %v932 = vshrl.u32 %v795, 16
      %v934 = vrot.slane %v932, 4
      %v935 = vshll.u32 %v795, 16
      %v937 = vrot.slane %v935, 5
      %v938 = vor.u32 %v934, %v937
      %v939 = vrot.slane %v938, 4
      %v941 = vshll.u32 %v796, 16
      %v943 = vrot.slane %v941, 5
      %v944 = vsel %vm222, %v939, %v943
      %v945 = vshrl.u32 %v796, 16
      %v947 = vrot.slane %v945, 4
      %v948 = vor.u32 %v947, %v943
      %v949 = vrot.slane %v948, 4
      %v951 = vshll.u32 %v823, 16
      %v953 = vrot.slane %v951, 5
      %v954 = vsel %vm222, %v949, %v953
      %v956 = vshrl.u32 %v797, 16
      %v958 = vrot.slane %v956, 4
      %v959 = vshll.u32 %v797, 16
      %v961 = vrot.slane %v959, 5
      %v962 = vor.u32 %v958, %v961
      %v963 = vrot.slane %v962, 4
      %v965 = vshll.u32 %v798, 16
      %v967 = vrot.slane %v965, 5
      %v968 = vsel %vm222, %v963, %v967
      %v969 = vshrl.u32 %v798, 16
      %v971 = vrot.slane %v969, 4
      %v972 = vor.u32 %v971, %v967
      %v973 = vrot.slane %v972, 4
      %v975 = vshll.u32 %v824, 16
      %v977 = vrot.slane %v975, 5
      %v978 = vsel %vm222, %v973, %v977
      %v980 = vshrl.u32 %v799, 16
      %v982 = vrot.slane %v980, 4
      %v983 = vshll.u32 %v799, 16
      %v985 = vrot.slane %v983, 5
      %v986 = vor.u32 %v982, %v985
      %v987 = vrot.slane %v986, 4
      %v989 = vshll.u32 %v800, 16
      %v991 = vrot.slane %v989, 5
      %v992 = vsel %vm222, %v987, %v991
      %v993 = vshrl.u32 %v800, 16
      %v995 = vrot.slane %v993, 4
      %v996 = vor.u32 %v995, %v991
      %v997 = vrot.slane %v996, 4
      %v999 = vshll.u32 %v825, 16
      %v1001 = vrot.slane %v999, 5
      %v1002 = vsel %vm222, %v997, %v1001
      %v1004 = vshrl.u32 %v801, 16
      %v1006 = vrot.slane %v1004, 4
      %v1007 = vshll.u32 %v801, 16
      %v1009 = vrot.slane %v1007, 5
      %v1010 = vor.u32 %v1006, %v1009
      %v1011 = vrot.slane %v1010, 4
      %v1013 = vshll.u32 %v802, 16
      %v1015 = vrot.slane %v1013, 5
      %v1016 = vsel %vm222, %v1011, %v1015
      %v1017 = vshrl.u32 %v802, 16
      %v1019 = vrot.slane %v1017, 4
      %v1020 = vor.u32 %v1019, %v1015
      %v1021 = vrot.slane %v1020, 4
      %v1023 = vshll.u32 %v826, 16
      %v1025 = vrot.slane %v1023, 5
      %v1026 = vsel %vm222, %v1021, %v1025
      %v1028 = vshrl.u32 %v803, 16
      %v1030 = vrot.slane %v1028, 4
      %v1031 = vshll.u32 %v803, 16
      %v1033 = vrot.slane %v1031, 5
      %v1034 = vor.u32 %v1030, %v1033
      %v1035 = vrot.slane %v1034, 4
      %v1037 = vshll.u32 %v804, 16
      %v1039 = vrot.slane %v1037, 5
      %v1040 = vsel %vm222, %v1035, %v1039
      %v1041 = vshrl.u32 %v804, 16
      %v1043 = vrot.slane %v1041, 4
      %v1044 = vor.u32 %v1043, %v1039
      %v1045 = vrot.slane %v1044, 4
      %v1047 = vshll.u32 %v827, 16
      %v1049 = vrot.slane %v1047, 5
      %v1050 = vsel %vm222, %v1045, %v1049
      %v1052 = vshrl.u32 %v805, 16
      %v1054 = vrot.slane %v1052, 4
      %v1055 = vshll.u32 %v805, 16
      %v1057 = vrot.slane %v1055, 5
      %v1058 = vor.u32 %v1054, %v1057
      %v1059 = vrot.slane %v1058, 4
      %v1061 = vshll.u32 %v806, 16
      %v1063 = vrot.slane %v1061, 5
      %v1064 = vsel %vm222, %v1059, %v1063
      %v1065 = vshrl.u32 %v806, 16
      %v1067 = vrot.slane %v1065, 4
      %v1068 = vor.u32 %v1067, %v1063
      %v1069 = vrot.slane %v1068, 4
      %v1071 = vshll.u32 %v828, 16
      %v1073 = vrot.slane %v1071, 5
      %v1074 = vsel %vm222, %v1069, %v1073
      %v1076 = vshrl.u32 %v807, 16
      %v1078 = vrot.slane %v1076, 4
      %v1079 = vshll.u32 %v807, 16
      %v1081 = vrot.slane %v1079, 5
      %v1082 = vor.u32 %v1078, %v1081
      %v1083 = vrot.slane %v1082, 4
      %v1085 = vshll.u32 %v808, 16
      %v1087 = vrot.slane %v1085, 5
      %v1088 = vsel %vm222, %v1083, %v1087
      %v1089 = vshrl.u32 %v808, 16
      %v1091 = vrot.slane %v1089, 4
      %v1092 = vor.u32 %v1091, %v1087
      %v1093 = vrot.slane %v1092, 4
      %v1095 = vshll.u32 %v829, 16
      %v1097 = vrot.slane %v1095, 5
      %v1098 = vsel %vm222, %v1093, %v1097
      %v1100 = vshrl.u32 %v809, 16
      %v1102 = vrot.slane %v1100, 4
      %v1103 = vshll.u32 %v809, 16
      %v1105 = vrot.slane %v1103, 5
      %v1106 = vor.u32 %v1102, %v1105
      %v1107 = vrot.slane %v1106, 4
      %v1109 = vshll.u32 %v810, 16
      %v1111 = vrot.slane %v1109, 5
      %v1112 = vsel %vm222, %v1107, %v1111
      %v1113 = vshrl.u32 %v810, 16
      %v1115 = vrot.slane %v1113, 4
      %v1116 = vor.u32 %v1115, %v1111
      %v1117 = vrot.slane %v1116, 4
      %v1119 = vshll.u32 %v830, 16
      %v1121 = vrot.slane %v1119, 5
      %v1122 = vsel %vm222, %v1117, %v1121
      %v1124 = vshrl.u32 %v811, 16
      %v1126 = vrot.slane %v1124, 4
      %v1127 = vshll.u32 %v811, 16
      %v1129 = vrot.slane %v1127, 5
      %v1130 = vor.u32 %v1126, %v1129
      %v1131 = vrot.slane %v1130, 4
      %v1133 = vshll.u32 %v812, 16
      %v1135 = vrot.slane %v1133, 5
      %v1136 = vsel %vm222, %v1131, %v1135
      %v1137 = vshrl.u32 %v812, 16
      %v1139 = vrot.slane %v1137, 4
      %v1140 = vor.u32 %v1139, %v1135
      %v1141 = vrot.slane %v1140, 4
      %v1143 = vshll.u32 %v831, 16
      %v1145 = vrot.slane %v1143, 5
      %v1146 = vsel %vm222, %v1141, %v1145
      %v1148 = vshrl.u32 %v813, 16
      %v1150 = vrot.slane %v1148, 4
      %v1151 = vshll.u32 %v813, 16
      %v1153 = vrot.slane %v1151, 5
      %v1154 = vor.u32 %v1150, %v1153
      %v1155 = vrot.slane %v1154, 4
      %v1157 = vshll.u32 %v814, 16
      %v1159 = vrot.slane %v1157, 5
      %v1160 = vsel %vm222, %v1155, %v1159
      %v1161 = vshrl.u32 %v814, 16
      %v1163 = vrot.slane %v1161, 4
      %v1164 = vor.u32 %v1163, %v1159
      %v1165 = vrot.slane %v1164, 4
      %v1167 = vshll.u32 %v832, 16
      %v1169 = vrot.slane %v1167, 5
      %v1170 = vsel %vm222, %v1165, %v1169
      %v1172 = vshrl.u32 %v815, 16
      %v1174 = vrot.slane %v1172, 4
      %v1175 = vshll.u32 %v815, 16
      %v1177 = vrot.slane %v1175, 5
      %v1178 = vor.u32 %v1174, %v1177
      %v1179 = vrot.slane %v1178, 4
      %v1181 = vshll.u32 %v816, 16
      %v1183 = vrot.slane %v1181, 5
      %v1184 = vsel %vm222, %v1179, %v1183
      %v1185 = vshrl.u32 %v816, 16
      %v1187 = vrot.slane %v1185, 4
      %v1188 = vor.u32 %v1187, %v1183
      %v1189 = vrot.slane %v1188, 4
      %v1191 = vshll.u32 %v833, 16
      %v1193 = vrot.slane %v1191, 5
      %v1194 = vsel %vm222, %v1189, %v1193
      %v1196 = vshrl.u32 %v817, 16
      %v1198 = vrot.slane %v1196, 4
      %v1199 = vshll.u32 %v817, 16
      %v1201 = vrot.slane %v1199, 5
      %v1202 = vor.u32 %v1198, %v1201
      %v1203 = vrot.slane %v1202, 4
      %v1205 = vshll.u32 %v818, 16
      %v1207 = vrot.slane %v1205, 5
      %v1208 = vsel %vm222, %v1203, %v1207
      %v1209 = vshrl.u32 %v818, 16
      %v1211 = vrot.slane %v1209, 4
      %v1212 = vor.u32 %v1211, %v1207
      %v1213 = vrot.slane %v1212, 4
      %v1215 = vshll.u32 %v834, 16
      %v1217 = vrot.slane %v1215, 5
      %v1218 = vsel %vm222, %v1213, %v1217
      %v1219 = vld [vmem:[%s786] sm:$0xe]
      %v1220 = vld [vmem:[%s786 + $0xc] sm:$0xe]
      %v1221 = vld [vmem:[%s786 + $0x18] sm:$0xe]
      %v1222 = vld [vmem:[%s786 + $0x24] sm:$0xe]
      %v1223 = vld [vmem:[%s786 + $0x30] sm:$0xe]
      %v1224 = vld [vmem:[%s786 + $0x3c] sm:$0xe]
      %v1225 = vld [vmem:[%s786 + $0x48] sm:$0xe]
      %v1226 = vld [vmem:[%s786 + $0x54] sm:$0xe]
      %v1227 = vld [vmem:[%s786 + $0x60] sm:$0xe]
      %v1228 = vld [vmem:[%s786 + $0x6c] sm:$0xe]
      %v1229 = vld [vmem:[%s786 + $0x78] sm:$0xe]
      %v1230 = vld [vmem:[%s786 + $0x84] sm:$0xe]
      %v1231 = vld [vmem:[%s786 + $0x90] sm:$0xe]
      %v1232 = vld [vmem:[%s786 + $0x9c] sm:$0xe]
      %v1233 = vld [vmem:[%s786 + $0xa8] sm:$0xe]
      %v1234 = vld [vmem:[%s786 + $0xb4] sm:$0xe]
      %v1283 = vrot.slane %v1219, 5
      %v1284 = vrot.slane %v1283, 4
      %v1285 = vrot.slane %v788, 5
      %v1286 = vsel %vm673, %v1284, %v1285
      %v1287 = vrot.slane %v1285, 4
      %v1288 = vrot.slane %v819, 5
      %v1289 = vsel %vm673, %v1287, %v1288
      %v1290 = vrot.slane %v1220, 5
      %v1291 = vrot.slane %v1290, 4
      %v1292 = vrot.slane %v790, 5
      %v1293 = vsel %vm673, %v1291, %v1292
      %v1294 = vrot.slane %v1292, 4
      %v1295 = vrot.slane %v820, 5
      %v1296 = vsel %vm673, %v1294, %v1295
      %v1297 = vrot.slane %v1221, 5
      %v1298 = vrot.slane %v1297, 4
      %v1299 = vrot.slane %v792, 5
      %v1300 = vsel %vm673, %v1298, %v1299
      %v1301 = vrot.slane %v1299, 4
      %v1302 = vrot.slane %v821, 5
      %v1303 = vsel %vm673, %v1301, %v1302
      %v1304 = vrot.slane %v1222, 5
      %v1305 = vrot.slane %v1304, 4
      %v1306 = vrot.slane %v794, 5
      %v1307 = vsel %vm673, %v1305, %v1306
      %v1308 = vrot.slane %v1306, 4
      %v1309 = vrot.slane %v822, 5
      %v1310 = vsel %vm673, %v1308, %v1309
      %v1311 = vrot.slane %v1223, 5
      %v1312 = vrot.slane %v1311, 4
      %v1313 = vrot.slane %v796, 5
      %v1314 = vsel %vm673, %v1312, %v1313
      %v1315 = vrot.slane %v1313, 4
      %v1316 = vrot.slane %v823, 5
      %v1317 = vsel %vm673, %v1315, %v1316
      %v1318 = vrot.slane %v1224, 5
      %v1319 = vrot.slane %v1318, 4
      %v1320 = vrot.slane %v798, 5
      %v1321 = vsel %vm673, %v1319, %v1320
      %v1322 = vrot.slane %v1320, 4
      %v1323 = vrot.slane %v824, 5
      %v1324 = vsel %vm673, %v1322, %v1323
      %v1325 = vrot.slane %v1225, 5
      %v1326 = vrot.slane %v1325, 4
      %v1327 = vrot.slane %v800, 5
      %v1328 = vsel %vm673, %v1326, %v1327
      %v1329 = vrot.slane %v1327, 4
      %v1330 = vrot.slane %v825, 5
      %v1331 = vsel %vm673, %v1329, %v1330
      %v1332 = vrot.slane %v1226, 5
      %v1333 = vrot.slane %v1332, 4
      %v1334 = vrot.slane %v802, 5
      %v1335 = vsel %vm673, %v1333, %v1334
      %v1336 = vrot.slane %v1334, 4
      %v1337 = vrot.slane %v826, 5
      %v1338 = vsel %vm673, %v1336, %v1337
      %v1339 = vrot.slane %v1227, 5
      %v1340 = vrot.slane %v1339, 4
      %v1341 = vrot.slane %v804, 5
      %v1342 = vsel %vm673, %v1340, %v1341
      %v1343 = vrot.slane %v1341, 4
      %v1344 = vrot.slane %v827, 5
      %v1345 = vsel %vm673, %v1343, %v1344
      %v1346 = vrot.slane %v1228, 5
      %v1347 = vrot.slane %v1346, 4
      %v1348 = vrot.slane %v806, 5
      %v1349 = vsel %vm673, %v1347, %v1348
      %v1350 = vrot.slane %v1348, 4
      %v1351 = vrot.slane %v828, 5
      %v1352 = vsel %vm673, %v1350, %v1351
      %v1353 = vrot.slane %v1229, 5
      %v1354 = vrot.slane %v1353, 4
      %v1355 = vrot.slane %v808, 5
      %v1356 = vsel %vm673, %v1354, %v1355
      %v1357 = vrot.slane %v1355, 4
      %v1358 = vrot.slane %v829, 5
      %v1359 = vsel %vm673, %v1357, %v1358
      %v1360 = vrot.slane %v1230, 5
      %v1361 = vrot.slane %v1360, 4
      %v1362 = vrot.slane %v810, 5
      %v1363 = vsel %vm673, %v1361, %v1362
      %v1364 = vrot.slane %v1362, 4
      %v1365 = vrot.slane %v830, 5
      %v1366 = vsel %vm673, %v1364, %v1365
      %v1367 = vrot.slane %v1231, 5
      %v1368 = vrot.slane %v1367, 4
      %v1369 = vrot.slane %v812, 5
      %v1370 = vsel %vm673, %v1368, %v1369
      %v1371 = vrot.slane %v1369, 4
      %v1372 = vrot.slane %v831, 5
      %v1373 = vsel %vm673, %v1371, %v1372
      %v1374 = vrot.slane %v1232, 5
      %v1375 = vrot.slane %v1374, 4
      %v1376 = vrot.slane %v814, 5
      %v1377 = vsel %vm673, %v1375, %v1376
      %v1378 = vrot.slane %v1376, 4
      %v1379 = vrot.slane %v832, 5
      %v1380 = vsel %vm673, %v1378, %v1379
      %v1381 = vrot.slane %v1233, 5
      %v1382 = vrot.slane %v1381, 4
      %v1383 = vrot.slane %v816, 5
      %v1384 = vsel %vm673, %v1382, %v1383
      %v1385 = vrot.slane %v1383, 4
      %v1386 = vrot.slane %v833, 5
      %v1387 = vsel %vm673, %v1385, %v1386
      %v1388 = vrot.slane %v1234, 5
      %v1389 = vrot.slane %v1388, 4
      %v1390 = vrot.slane %v818, 5
      %v1391 = vsel %vm673, %v1389, %v1390
      %v1392 = vrot.slane %v1390, 4
      %v1393 = vrot.slane %v834, 5
      %v1394 = vsel %vm673, %v1392, %v1393
      %s1395 = scalar_lea.vmem %s165, 24
      %v1396 = vld [vmem:[%s1395] sm:$0xf]
      %v1397 = vld [vmem:[%s1395 + $0x4] sm:$0xf]
      %v1398 = vld [vmem:[%s1395 + $0xc] sm:$0xf]
      %v1399 = vld [vmem:[%s1395 + $0x10] sm:$0xf]
      %v1400 = vld [vmem:[%s1395 + $0x18] sm:$0xf]
      %v1401 = vld [vmem:[%s1395 + $0x1c] sm:$0xf]
      %v1402 = vld [vmem:[%s1395 + $0x24] sm:$0xf]
      %v1403 = vld [vmem:[%s1395 + $0x28] sm:$0xf]
      %v1404 = vld [vmem:[%s1395 + $0x30] sm:$0xf]
      %v1405 = vld [vmem:[%s1395 + $0x34] sm:$0xf]
      %v1406 = vld [vmem:[%s1395 + $0x3c] sm:$0xf]
      %v1407 = vld [vmem:[%s1395 + $0x40] sm:$0xf]
      %v1408 = vld [vmem:[%s1395 + $0x48] sm:$0xf]
      %v1409 = vld [vmem:[%s1395 + $0x4c] sm:$0xf]
      %v1410 = vld [vmem:[%s1395 + $0x54] sm:$0xf]
      %v1411 = vld [vmem:[%s1395 + $0x58] sm:$0xf]
      %v1412 = vld [vmem:[%s1395 + $0x60] sm:$0xf]
      %v1413 = vld [vmem:[%s1395 + $0x64] sm:$0xf]
      %v1414 = vld [vmem:[%s1395 + $0x6c] sm:$0xf]
      %v1415 = vld [vmem:[%s1395 + $0x70] sm:$0xf]
      %v1416 = vld [vmem:[%s1395 + $0x78] sm:$0xf]
      %v1417 = vld [vmem:[%s1395 + $0x7c] sm:$0xf]
      %v1418 = vld [vmem:[%s1395 + $0x84] sm:$0xf]
      %v1419 = vld [vmem:[%s1395 + $0x88] sm:$0xf]
      %v1420 = vld [vmem:[%s1395 + $0x90] sm:$0xf]
      %v1421 = vld [vmem:[%s1395 + $0x94] sm:$0xf]
      %v1422 = vld [vmem:[%s1395 + $0x9c] sm:$0xf]
      %v1423 = vld [vmem:[%s1395 + $0xa0] sm:$0xf]
      %v1424 = vld [vmem:[%s1395 + $0xa8] sm:$0xf]
      %v1425 = vld [vmem:[%s1395 + $0xac] sm:$0xf]
      %v1426 = vld [vmem:[%s1395 + $0xb4] sm:$0xf]
      %v1427 = vld [vmem:[%s1395 + $0xb8] sm:$0xf]
      %v1428 = vld [vmem:[%s1395 + $0x8] sm:$0x1]
      %v1429 = vld [vmem:[%s1395 + $0x14] sm:$0x1]
      %v1430 = vld [vmem:[%s1395 + $0x20] sm:$0x1]
      %v1431 = vld [vmem:[%s1395 + $0x2c] sm:$0x1]
      %v1432 = vld [vmem:[%s1395 + $0x38] sm:$0x1]
      %v1433 = vld [vmem:[%s1395 + $0x44] sm:$0x1]
      %v1434 = vld [vmem:[%s1395 + $0x50] sm:$0x1]
      %v1435 = vld [vmem:[%s1395 + $0x5c] sm:$0x1]
      %v1436 = vld [vmem:[%s1395 + $0x68] sm:$0x1]
      %v1437 = vld [vmem:[%s1395 + $0x74] sm:$0x1]
      %v1438 = vld [vmem:[%s1395 + $0x80] sm:$0x1]
      %v1439 = vld [vmem:[%s1395 + $0x8c] sm:$0x1]
      %v1440 = vld [vmem:[%s1395 + $0x98] sm:$0x1]
      %v1441 = vld [vmem:[%s1395 + $0xa4] sm:$0x1]
      %v1442 = vld [vmem:[%s1395 + $0xb0] sm:$0x1]
      %v1443 = vld [vmem:[%s1395 + $0xbc] sm:$0x1]
      %v1445 = vshrl.u32 %v1396, 16
      %v1447 = vrot.slane %v1445, 4
      %v1448 = vshll.u32 %v1396, 16
      %v1450 = vrot.slane %v1448, 5
      %v1451 = vor.u32 %v1447, %v1450
      %v1452 = vrot.slane %v1451, 4
      %v1454 = vshll.u32 %v1397, 16
      %v1456 = vrot.slane %v1454, 5
      %v1457 = vsel %vm222, %v1452, %v1456
      %v1458 = vshrl.u32 %v1397, 16
      %v1460 = vrot.slane %v1458, 4
      %v1461 = vor.u32 %v1460, %v1456
      %v1462 = vrot.slane %v1461, 4
      %v1464 = vshll.u32 %v1428, 16
      %v1466 = vrot.slane %v1464, 5
      %v1467 = vsel %vm222, %v1462, %v1466
      %v1469 = vshrl.u32 %v1398, 16
      %v1471 = vrot.slane %v1469, 4
      %v1472 = vshll.u32 %v1398, 16
      %v1474 = vrot.slane %v1472, 5
      %v1475 = vor.u32 %v1471, %v1474
      %v1476 = vrot.slane %v1475, 4
      %v1478 = vshll.u32 %v1399, 16
      %v1480 = vrot.slane %v1478, 5
      %v1481 = vsel %vm222, %v1476, %v1480
      %v1482 = vshrl.u32 %v1399, 16
      %v1484 = vrot.slane %v1482, 4
      %v1485 = vor.u32 %v1484, %v1480
      %v1486 = vrot.slane %v1485, 4
      %v1488 = vshll.u32 %v1429, 16
      %v1490 = vrot.slane %v1488, 5
      %v1491 = vsel %vm222, %v1486, %v1490
      %v1493 = vshrl.u32 %v1400, 16
      %v1495 = vrot.slane %v1493, 4
      %v1496 = vshll.u32 %v1400, 16
      %v1498 = vrot.slane %v1496, 5
      %v1499 = vor.u32 %v1495, %v1498
      %v1500 = vrot.slane %v1499, 4
      %v1502 = vshll.u32 %v1401, 16
      %v1504 = vrot.slane %v1502, 5
      %v1505 = vsel %vm222, %v1500, %v1504
      %v1506 = vshrl.u32 %v1401, 16
      %v1508 = vrot.slane %v1506, 4
      %v1509 = vor.u32 %v1508, %v1504
      %v1510 = vrot.slane %v1509, 4
      %v1512 = vshll.u32 %v1430, 16
      %v1514 = vrot.slane %v1512, 5
      %v1515 = vsel %vm222, %v1510, %v1514
      %v1517 = vshrl.u32 %v1402, 16
      %v1519 = vrot.slane %v1517, 4
      %v1520 = vshll.u32 %v1402, 16
      %v1522 = vrot.slane %v1520, 5
      %v1523 = vor.u32 %v1519, %v1522
      %v1524 = vrot.slane %v1523, 4
      %v1526 = vshll.u32 %v1403, 16
      %v1528 = vrot.slane %v1526, 5
      %v1529 = vsel %vm222, %v1524, %v1528
      %v1530 = vshrl.u32 %v1403, 16
      %v1532 = vrot.slane %v1530, 4
      %v1533 = vor.u32 %v1532, %v1528
      %v1534 = vrot.slane %v1533, 4
      %v1536 = vshll.u32 %v1431, 16
      %v1538 = vrot.slane %v1536, 5
      %v1539 = vsel %vm222, %v1534, %v1538
      %v1541 = vshrl.u32 %v1404, 16
      %v1543 = vrot.slane %v1541, 4
      %v1544 = vshll.u32 %v1404, 16
      %v1546 = vrot.slane %v1544, 5
      %v1547 = vor.u32 %v1543, %v1546
      %v1548 = vrot.slane %v1547, 4
      %v1550 = vshll.u32 %v1405, 16
      %v1552 = vrot.slane %v1550, 5
      %v1553 = vsel %vm222, %v1548, %v1552
      %v1554 = vshrl.u32 %v1405, 16
      %v1556 = vrot.slane %v1554, 4
      %v1557 = vor.u32 %v1556, %v1552
      %v1558 = vrot.slane %v1557, 4
      %v1560 = vshll.u32 %v1432, 16
      %v1562 = vrot.slane %v1560, 5
      %v1563 = vsel %vm222, %v1558, %v1562
      %v1565 = vshrl.u32 %v1406, 16
      %v1567 = vrot.slane %v1565, 4
      %v1568 = vshll.u32 %v1406, 16
      %v1570 = vrot.slane %v1568, 5
      %v1571 = vor.u32 %v1567, %v1570
      %v1572 = vrot.slane %v1571, 4
      %v1574 = vshll.u32 %v1407, 16
      %v1576 = vrot.slane %v1574, 5
      %v1577 = vsel %vm222, %v1572, %v1576
      %v1578 = vshrl.u32 %v1407, 16
      %v1580 = vrot.slane %v1578, 4
      %v1581 = vor.u32 %v1580, %v1576
      %v1582 = vrot.slane %v1581, 4
      %v1584 = vshll.u32 %v1433, 16
      %v1586 = vrot.slane %v1584, 5
      %v1587 = vsel %vm222, %v1582, %v1586
      %v1589 = vshrl.u32 %v1408, 16
      %v1591 = vrot.slane %v1589, 4
      %v1592 = vshll.u32 %v1408, 16
      %v1594 = vrot.slane %v1592, 5
      %v1595 = vor.u32 %v1591, %v1594
      %v1596 = vrot.slane %v1595, 4
      %v1598 = vshll.u32 %v1409, 16
      %v1600 = vrot.slane %v1598, 5
      %v1601 = vsel %vm222, %v1596, %v1600
      %v1602 = vshrl.u32 %v1409, 16
      %v1604 = vrot.slane %v1602, 4
      %v1605 = vor.u32 %v1604, %v1600
      %v1606 = vrot.slane %v1605, 4
      %v1608 = vshll.u32 %v1434, 16
      %v1610 = vrot.slane %v1608, 5
      %v1611 = vsel %vm222, %v1606, %v1610
      %v1613 = vshrl.u32 %v1410, 16
      %v1615 = vrot.slane %v1613, 4
      %v1616 = vshll.u32 %v1410, 16
      %v1618 = vrot.slane %v1616, 5
      %v1619 = vor.u32 %v1615, %v1618
      %v1620 = vrot.slane %v1619, 4
      %v1622 = vshll.u32 %v1411, 16
      %v1624 = vrot.slane %v1622, 5
      %v1625 = vsel %vm222, %v1620, %v1624
      %v1626 = vshrl.u32 %v1411, 16
      %v1628 = vrot.slane %v1626, 4
      %v1629 = vor.u32 %v1628, %v1624
      %v1630 = vrot.slane %v1629, 4
      %v1632 = vshll.u32 %v1435, 16
      %v1634 = vrot.slane %v1632, 5
      %v1635 = vsel %vm222, %v1630, %v1634
      %v1637 = vshrl.u32 %v1412, 16
      %v1639 = vrot.slane %v1637, 4
      %v1640 = vshll.u32 %v1412, 16
      %v1642 = vrot.slane %v1640, 5
      %v1643 = vor.u32 %v1639, %v1642
      %v1644 = vrot.slane %v1643, 4
      %v1646 = vshll.u32 %v1413, 16
      %v1648 = vrot.slane %v1646, 5
      %v1649 = vsel %vm222, %v1644, %v1648
      %v1650 = vshrl.u32 %v1413, 16
      %v1652 = vrot.slane %v1650, 4
      %v1653 = vor.u32 %v1652, %v1648
      %v1654 = vrot.slane %v1653, 4
      %v1656 = vshll.u32 %v1436, 16
      %v1658 = vrot.slane %v1656, 5
      %v1659 = vsel %vm222, %v1654, %v1658
      %v1661 = vshrl.u32 %v1414, 16
      %v1663 = vrot.slane %v1661, 4
      %v1664 = vshll.u32 %v1414, 16
      %v1666 = vrot.slane %v1664, 5
      %v1667 = vor.u32 %v1663, %v1666
      %v1668 = vrot.slane %v1667, 4
      %v1670 = vshll.u32 %v1415, 16
      %v1672 = vrot.slane %v1670, 5
      %v1673 = vsel %vm222, %v1668, %v1672
      %v1674 = vshrl.u32 %v1415, 16
      %v1676 = vrot.slane %v1674, 4
      %v1677 = vor.u32 %v1676, %v1672
      %v1678 = vrot.slane %v1677, 4
      %v1680 = vshll.u32 %v1437, 16
      %v1682 = vrot.slane %v1680, 5
      %v1683 = vsel %vm222, %v1678, %v1682
      %v1685 = vshrl.u32 %v1416, 16
      %v1687 = vrot.slane %v1685, 4
      %v1688 = vshll.u32 %v1416, 16
      %v1690 = vrot.slane %v1688, 5
      %v1691 = vor.u32 %v1687, %v1690
      %v1692 = vrot.slane %v1691, 4
      %v1694 = vshll.u32 %v1417, 16
      %v1696 = vrot.slane %v1694, 5
      %v1697 = vsel %vm222, %v1692, %v1696
      %v1698 = vshrl.u32 %v1417, 16
      %v1700 = vrot.slane %v1698, 4
      %v1701 = vor.u32 %v1700, %v1696
      %v1702 = vrot.slane %v1701, 4
      %v1704 = vshll.u32 %v1438, 16
      %v1706 = vrot.slane %v1704, 5
      %v1707 = vsel %vm222, %v1702, %v1706
      %v1709 = vshrl.u32 %v1418, 16
      %v1711 = vrot.slane %v1709, 4
      %v1712 = vshll.u32 %v1418, 16
      %v1714 = vrot.slane %v1712, 5
      %v1715 = vor.u32 %v1711, %v1714
      %v1716 = vrot.slane %v1715, 4
      %v1718 = vshll.u32 %v1419, 16
      %v1720 = vrot.slane %v1718, 5
      %v1721 = vsel %vm222, %v1716, %v1720
      %v1722 = vshrl.u32 %v1419, 16
      %v1724 = vrot.slane %v1722, 4
      %v1725 = vor.u32 %v1724, %v1720
      %v1726 = vrot.slane %v1725, 4
      %v1728 = vshll.u32 %v1439, 16
      %v1730 = vrot.slane %v1728, 5
      %v1731 = vsel %vm222, %v1726, %v1730
      %v1733 = vshrl.u32 %v1420, 16
      %v1735 = vrot.slane %v1733, 4
      %v1736 = vshll.u32 %v1420, 16
      %v1738 = vrot.slane %v1736, 5
      %v1739 = vor.u32 %v1735, %v1738
      %v1740 = vrot.slane %v1739, 4
      %v1742 = vshll.u32 %v1421, 16
      %v1744 = vrot.slane %v1742, 5
      %v1745 = vsel %vm222, %v1740, %v1744
      %v1746 = vshrl.u32 %v1421, 16
      %v1748 = vrot.slane %v1746, 4
      %v1749 = vor.u32 %v1748, %v1744
      %v1750 = vrot.slane %v1749, 4
      %v1752 = vshll.u32 %v1440, 16
      %v1754 = vrot.slane %v1752, 5
      %v1755 = vsel %vm222, %v1750, %v1754
      %v1757 = vshrl.u32 %v1422, 16
      %v1759 = vrot.slane %v1757, 4
      %v1760 = vshll.u32 %v1422, 16
      %v1762 = vrot.slane %v1760, 5
      %v1763 = vor.u32 %v1759, %v1762
      %v1764 = vrot.slane %v1763, 4
      %v1766 = vshll.u32 %v1423, 16
      %v1768 = vrot.slane %v1766, 5
      %v1769 = vsel %vm222, %v1764, %v1768
      %v1770 = vshrl.u32 %v1423, 16
      %v1772 = vrot.slane %v1770, 4
      %v1773 = vor.u32 %v1772, %v1768
      %v1774 = vrot.slane %v1773, 4
      %v1776 = vshll.u32 %v1441, 16
      %v1778 = vrot.slane %v1776, 5
      %v1779 = vsel %vm222, %v1774, %v1778
      %v1781 = vshrl.u32 %v1424, 16
      %v1783 = vrot.slane %v1781, 4
      %v1784 = vshll.u32 %v1424, 16
      %v1786 = vrot.slane %v1784, 5
      %v1787 = vor.u32 %v1783, %v1786
      %v1788 = vrot.slane %v1787, 4
      %v1790 = vshll.u32 %v1425, 16
      %v1792 = vrot.slane %v1790, 5
      %v1793 = vsel %vm222, %v1788, %v1792
      %v1794 = vshrl.u32 %v1425, 16
      %v1796 = vrot.slane %v1794, 4
      %v1797 = vor.u32 %v1796, %v1792
      %v1798 = vrot.slane %v1797, 4
      %v1800 = vshll.u32 %v1442, 16
      %v1802 = vrot.slane %v1800, 5
      %v1803 = vsel %vm222, %v1798, %v1802
      %v1805 = vshrl.u32 %v1426, 16
      %v1807 = vrot.slane %v1805, 4
      %v1808 = vshll.u32 %v1426, 16
      %v1810 = vrot.slane %v1808, 5
      %v1811 = vor.u32 %v1807, %v1810
      %v1812 = vrot.slane %v1811, 4
      %v1814 = vshll.u32 %v1427, 16
      %v1816 = vrot.slane %v1814, 5
      %v1817 = vsel %vm222, %v1812, %v1816
      %v1818 = vshrl.u32 %v1427, 16
      %v1820 = vrot.slane %v1818, 4
      %v1821 = vor.u32 %v1820, %v1816
      %v1822 = vrot.slane %v1821, 4
      %v1824 = vshll.u32 %v1443, 16
      %v1826 = vrot.slane %v1824, 5
      %v1827 = vsel %vm222, %v1822, %v1826
      %v1828 = vld [vmem:[%s1395] sm:$0xe]
      %v1829 = vld [vmem:[%s1395 + $0xc] sm:$0xe]
      %v1830 = vld [vmem:[%s1395 + $0x18] sm:$0xe]
      %v1831 = vld [vmem:[%s1395 + $0x24] sm:$0xe]
      %v1832 = vld [vmem:[%s1395 + $0x30] sm:$0xe]
      %v1833 = vld [vmem:[%s1395 + $0x3c] sm:$0xe]
      %v1834 = vld [vmem:[%s1395 + $0x48] sm:$0xe]
      %v1835 = vld [vmem:[%s1395 + $0x54] sm:$0xe]
      %v1836 = vld [vmem:[%s1395 + $0x60] sm:$0xe]
      %v1837 = vld [vmem:[%s1395 + $0x6c] sm:$0xe]
      %v1838 = vld [vmem:[%s1395 + $0x78] sm:$0xe]
      %v1839 = vld [vmem:[%s1395 + $0x84] sm:$0xe]
      %v1840 = vld [vmem:[%s1395 + $0x90] sm:$0xe]
      %v1841 = vld [vmem:[%s1395 + $0x9c] sm:$0xe]
      %v1842 = vld [vmem:[%s1395 + $0xa8] sm:$0xe]
      %v1843 = vld [vmem:[%s1395 + $0xb4] sm:$0xe]
      %v1892 = vrot.slane %v1828, 5
      %v1893 = vrot.slane %v1892, 4
      %v1894 = vrot.slane %v1397, 5
      %v1895 = vsel %vm673, %v1893, %v1894
      %v1896 = vrot.slane %v1894, 4
      %v1897 = vrot.slane %v1428, 5
      %v1898 = vsel %vm673, %v1896, %v1897
      %v1899 = vrot.slane %v1829, 5
      %v1900 = vrot.slane %v1899, 4
      %v1901 = vrot.slane %v1399, 5
      %v1902 = vsel %vm673, %v1900, %v1901
      %v1903 = vrot.slane %v1901, 4
      %v1904 = vrot.slane %v1429, 5
      %v1905 = vsel %vm673, %v1903, %v1904
      %v1906 = vrot.slane %v1830, 5
      %v1907 = vrot.slane %v1906, 4
      %v1908 = vrot.slane %v1401, 5
      %v1909 = vsel %vm673, %v1907, %v1908
      %v1910 = vrot.slane %v1908, 4
      %v1911 = vrot.slane %v1430, 5
      %v1912 = vsel %vm673, %v1910, %v1911
      %v1913 = vrot.slane %v1831, 5
      %v1914 = vrot.slane %v1913, 4
      %v1915 = vrot.slane %v1403, 5
      %v1916 = vsel %vm673, %v1914, %v1915
      %v1917 = vrot.slane %v1915, 4
      %v1918 = vrot.slane %v1431, 5
      %v1919 = vsel %vm673, %v1917, %v1918
      %v1920 = vrot.slane %v1832, 5
      %v1921 = vrot.slane %v1920, 4
      %v1922 = vrot.slane %v1405, 5
      %v1923 = vsel %vm673, %v1921, %v1922
      %v1924 = vrot.slane %v1922, 4
      %v1925 = vrot.slane %v1432, 5
      %v1926 = vsel %vm673, %v1924, %v1925
      %v1927 = vrot.slane %v1833, 5
      %v1928 = vrot.slane %v1927, 4
      %v1929 = vrot.slane %v1407, 5
      %v1930 = vsel %vm673, %v1928, %v1929
      %v1931 = vrot.slane %v1929, 4
      %v1932 = vrot.slane %v1433, 5
      %v1933 = vsel %vm673, %v1931, %v1932
      %v1934 = vrot.slane %v1834, 5
      %v1935 = vrot.slane %v1934, 4
      %v1936 = vrot.slane %v1409, 5
      %v1937 = vsel %vm673, %v1935, %v1936
      %v1938 = vrot.slane %v1936, 4
      %v1939 = vrot.slane %v1434, 5
      %v1940 = vsel %vm673, %v1938, %v1939
      %v1941 = vrot.slane %v1835, 5
      %v1942 = vrot.slane %v1941, 4
      %v1943 = vrot.slane %v1411, 5
      %v1944 = vsel %vm673, %v1942, %v1943
      %v1945 = vrot.slane %v1943, 4
      %v1946 = vrot.slane %v1435, 5
      %v1947 = vsel %vm673, %v1945, %v1946
      %v1948 = vrot.slane %v1836, 5
      %v1949 = vrot.slane %v1948, 4
      %v1950 = vrot.slane %v1413, 5
      %v1951 = vsel %vm673, %v1949, %v1950
      %v1952 = vrot.slane %v1950, 4
      %v1953 = vrot.slane %v1436, 5
      %v1954 = vsel %vm673, %v1952, %v1953
      %v1955 = vrot.slane %v1837, 5
      %v1956 = vrot.slane %v1955, 4
      %v1957 = vrot.slane %v1415, 5
      %v1958 = vsel %vm673, %v1956, %v1957
      %v1959 = vrot.slane %v1957, 4
      %v1960 = vrot.slane %v1437, 5
      %v1961 = vsel %vm673, %v1959, %v1960
      %v1962 = vrot.slane %v1838, 5
      %v1963 = vrot.slane %v1962, 4
      %v1964 = vrot.slane %v1417, 5
      %v1965 = vsel %vm673, %v1963, %v1964
      %v1966 = vrot.slane %v1964, 4
      %v1967 = vrot.slane %v1438, 5
      %v1968 = vsel %vm673, %v1966, %v1967
      %v1969 = vrot.slane %v1839, 5
      %v1970 = vrot.slane %v1969, 4
      %v1971 = vrot.slane %v1419, 5
      %v1972 = vsel %vm673, %v1970, %v1971
      %v1973 = vrot.slane %v1971, 4
      %v1974 = vrot.slane %v1439, 5
      %v1975 = vsel %vm673, %v1973, %v1974
      %v1976 = vrot.slane %v1840, 5
      %v1977 = vrot.slane %v1976, 4
      %v1978 = vrot.slane %v1421, 5
      %v1979 = vsel %vm673, %v1977, %v1978
      %v1980 = vrot.slane %v1978, 4
      %v1981 = vrot.slane %v1440, 5
      %v1982 = vsel %vm673, %v1980, %v1981
      %v1983 = vrot.slane %v1841, 5
      %v1984 = vrot.slane %v1983, 4
      %v1985 = vrot.slane %v1423, 5
      %v1986 = vsel %vm673, %v1984, %v1985
      %v1987 = vrot.slane %v1985, 4
      %v1988 = vrot.slane %v1441, 5
      %v1989 = vsel %vm673, %v1987, %v1988
      %v1990 = vrot.slane %v1842, 5
      %v1991 = vrot.slane %v1990, 4
      %v1992 = vrot.slane %v1425, 5
      %v1993 = vsel %vm673, %v1991, %v1992
      %v1994 = vrot.slane %v1992, 4
      %v1995 = vrot.slane %v1442, 5
      %v1996 = vsel %vm673, %v1994, %v1995
      %v1997 = vrot.slane %v1843, 5
      %v1998 = vrot.slane %v1997, 4
      %v1999 = vrot.slane %v1427, 5
      %v2000 = vsel %vm673, %v1998, %v1999
      %v2001 = vrot.slane %v1999, 4
      %v2002 = vrot.slane %v1443, 5
      %v2003 = vsel %vm673, %v2001, %v2002
      %v2004 = vld [vmem:[%s2] sm:$0x1]
      %v2005 = vld [vmem:[%s1] sm:$0xf]
      %v2006 = vld [vmem:[%s1 + $0x4] sm:$0xf]
      %v2007 = vld [vmem:[%s1 + $0x8] sm:$0xf]
      %v2008 = vld [vmem:[%s1 + $0xc] sm:$0xf]
      %s2009 = scalar_lea.vmem %s1, 16
      %v2010 = vld [vmem:[%s2009] sm:$0xf]
      %v2011 = vld [vmem:[%s2009 + $0x4] sm:$0xf]
      %v2012 = vld [vmem:[%s2009 + $0x8] sm:$0xf]
      %v2013 = vld [vmem:[%s2009 + $0xc] sm:$0xf]
      %v2014 = vunpack.c.l.b16 %v236
      %v2015 = vunpack.c.l.b16 %v246
      %v2016 = vunpack.c.l.b16 %v260
      %v2017 = vunpack.c.l.b16 %v270
      %v2018 = vunpack.c.l.b16 %v284
      %v2019 = vunpack.c.l.b16 %v294
      %v2020 = vunpack.c.l.b16 %v308
      %v2021 = vunpack.c.l.b16 %v318
      %v2022 = vunpack.c.l.b16 %v332
      %v2023 = vunpack.c.l.b16 %v342
      %v2024 = vunpack.c.l.b16 %v356
      %v2025 = vunpack.c.l.b16 %v366
      %v2026 = vunpack.c.l.b16 %v380
      %v2027 = vunpack.c.l.b16 %v390
      %v2028 = vunpack.c.l.b16 %v404
      %v2029 = vunpack.c.l.b16 %v414
      %v2030 = vunpack.c.l.b16 %v428
      %v2031 = vunpack.c.l.b16 %v438
      %v2032 = vunpack.c.l.b16 %v452
      %v2033 = vunpack.c.l.b16 %v462
      %v2034 = vunpack.c.l.b16 %v476
      %v2035 = vunpack.c.l.b16 %v486
      %v2036 = vunpack.c.l.b16 %v500
      %v2037 = vunpack.c.l.b16 %v510
      %v2038 = vunpack.c.l.b16 %v524
      %v2039 = vunpack.c.l.b16 %v534
      %v2040 = vunpack.c.l.b16 %v548
      %v2041 = vunpack.c.l.b16 %v558
      %v2042 = vunpack.c.l.b16 %v572
      %v2043 = vunpack.c.l.b16 %v582
      %v2044 = vunpack.c.l.b16 %v596
      %v2045 = vunpack.c.l.b16 %v606
      %v2046 = vpack.c.b16 %v2015, %v2014
      %v2047 = vpack.c.b16 %v2017, %v2016
      %v2048 = vpack.c.b16 %v2019, %v2018
      %v2049 = vpack.c.b16 %v2021, %v2020
      %v2050 = vpack.c.b16 %v2023, %v2022
      %v2051 = vpack.c.b16 %v2025, %v2024
      %v2052 = vpack.c.b16 %v2027, %v2026
      %v2053 = vpack.c.b16 %v2029, %v2028
      %v2054 = vpack.c.b16 %v2031, %v2030
      %v2055 = vpack.c.b16 %v2033, %v2032
      %v2056 = vpack.c.b16 %v2035, %v2034
      %v2057 = vpack.c.b16 %v2037, %v2036
      %v2058 = vpack.c.b16 %v2039, %v2038
      %v2059 = vpack.c.b16 %v2041, %v2040
      %v2060 = vpack.c.b16 %v2043, %v2042
      %v2061 = vpack.c.b16 %v2045, %v2044
      %v2066 = vunpack.c.l.b16 %v2010
      %v2067 = vunpack.c.l.b16 %v2011
      %v2068 = vunpack.c.l.b16 %v2012
      %v2069 = vunpack.c.l.b16 %v2013
      %v2070 = vpack.c.b16 %v2067, %v2066
      %v2071 = vpack.c.b16 %v2069, %v2068
      %vm2074 = vcmask 261120
      %v2076 = vsel %vm2074, %v2046, 0
      %v2079 = vsel %vm2074, %v2047, 0
      %v2082 = vsel %vm2074, %v2048, 0
      %v2085 = vsel %vm2074, %v2049, 0
      %v2088 = vsel %vm2074, %v2050, 0
      %v2091 = vsel %vm2074, %v2051, 0
      %v2094 = vsel %vm2074, %v2052, 0
      %v2097 = vsel %vm2074, %v2053, 0
      %v2100 = vsel %vm2074, %v2054, 0
      %v2103 = vsel %vm2074, %v2055, 0
      %v2106 = vsel %vm2074, %v2056, 0
      %v2109 = vsel %vm2074, %v2057, 0
      %v2112 = vsel %vm2074, %v2058, 0
      %v2115 = vsel %vm2074, %v2059, 0
      %v2118 = vsel %vm2074, %v2060, 0
      %v2121 = vsel %vm2074, %v2061, 0
      %2123 = vmatprep.subr.bf16.mxu0 0
      %2124 = vmatpush1.bf16.msra.mxu0 0
      %2125 = vmatprep.subr.bf16.mxu0 0
      %2126 = vmatpush1.bf16.msra.mxu0 0
      %2127 = vmatprep.subr.bf16.mxu0 0
      %2128 = vmatpush1.bf16.msra.mxu0 0
      %2129 = vmatprep.subr.bf16.mxu0 0
      %2130 = vmatpush1.bf16.msra.mxu0 0
      %2131 = vmatprep.subr.bf16.mxu0 0
      %2132 = vmatpush1.bf16.msra.mxu0 0
      %2133 = vmatprep.subr.bf16.mxu0 0
      %2134 = vmatpush1.bf16.msra.mxu0 0
      %2135 = vmatprep.subr.bf16.mxu0 0
      %2136 = vmatpush1.bf16.msra.mxu0 %v2071
      %2137 = vmatprep.subr.bf16.mxu0 0
      %2138 = vmatpush1.bf16.msra.mxu0 %v2070
      %2139 = vmatprep.subr.bf16.mxu0 0
      %2140 = vmatpush2.bf16.msra.mxu0 0
      %2141 = vmatprep.subr.bf16.mxu0 0
      %2142 = vmatpush2.bf16.msra.mxu0 0
      %2143 = vmatprep.subr.bf16.mxu0 0
      %2144 = vmatpush2.bf16.msra.mxu0 0
      %2145 = vmatprep.subr.bf16.mxu0 0
      %2146 = vmatpush2.bf16.msra.mxu0 0
      %2147 = vmatprep.subr.bf16.mxu0 0
      %2148 = vmatpush2.bf16.msra.mxu0 0
      %2149 = vmatprep.subr.bf16.mxu0 0
      %2150 = vmatpush2.bf16.msra.mxu0 0
      %2151 = vmatprep.subr.bf16.mxu0 0
      %2152 = vmatpush2.bf16.msra.mxu0 0
      %2153 = vmatprep.subr.bf16.mxu0 0
      %2154 = vmatpush2.bf16.msra.mxu0 0
      %2155 = vmatprep.mubr.bf16.mxu0 0
      %2156 = vmatmul.mubr.bf16.gmra.mxu0 %v2076
      %v2157 = vpop.f32.mrf.mxu0
      %v2158 = vadd.f32 0.0, %v2157
      %v2159 = vpop.f32.mrf.mxu0
      %v2160 = vpop.f32.mrf.mxu0
      %v2161 = vadd.f32 0.0, %v2160
      %v2162 = vpop.f32.mrf.mxu0
      %2163 = vmatprep.mubr.bf16.mxu0 0
      %2164 = vmatmul.mubr.bf16.gmra.mxu0 %v2079
      %v2165 = vpop.f32.mrf.mxu0
      %v2166 = vadd.f32 0.0, %v2165
      %v2167 = vpop.f32.mrf.mxu0
      %v2168 = vpop.f32.mrf.mxu0
      %v2169 = vadd.f32 0.0, %v2168
      %v2170 = vpop.f32.mrf.mxu0
      %2171 = vmatprep.mubr.bf16.mxu0 0
      %2172 = vmatmul.mubr.bf16.gmra.mxu0 %v2082
      %v2173 = vpop.f32.mrf.mxu0
      %v2174 = vadd.f32 0.0, %v2173
      %v2175 = vpop.f32.mrf.mxu0
      %v2176 = vpop.f32.mrf.mxu0
      %v2177 = vadd.f32 0.0, %v2176
      %v2178 = vpop.f32.mrf.mxu0
      %2179 = vmatprep.mubr.bf16.mxu0 0
      %2180 = vmatmul.mubr.bf16.gmra.mxu0 %v2085
      %v2181 = vpop.f32.mrf.mxu0
      %v2182 = vadd.f32 0.0, %v2181
      %v2183 = vpop.f32.mrf.mxu0
      %v2184 = vpop.f32.mrf.mxu0
      %v2185 = vadd.f32 0.0, %v2184
      %v2186 = vpop.f32.mrf.mxu0
      %2187 = vmatprep.mubr.bf16.mxu0 0
      %2188 = vmatmul.mubr.bf16.gmra.mxu0 %v2088
      %v2189 = vpop.f32.mrf.mxu0
      %v2190 = vadd.f32 0.0, %v2189
      %v2191 = vpop.f32.mrf.mxu0
      %v2192 = vpop.f32.mrf.mxu0
      %v2193 = vadd.f32 0.0, %v2192
      %v2194 = vpop.f32.mrf.mxu0
      %2195 = vmatprep.mubr.bf16.mxu0 0
      %2196 = vmatmul.mubr.bf16.gmra.mxu0 %v2091
      %v2197 = vpop.f32.mrf.mxu0
      %v2198 = vadd.f32 0.0, %v2197
      %v2199 = vpop.f32.mrf.mxu0
      %v2200 = vpop.f32.mrf.mxu0
      %v2201 = vadd.f32 0.0, %v2200
      %v2202 = vpop.f32.mrf.mxu0
      %2203 = vmatprep.mubr.bf16.mxu0 0
      %2204 = vmatmul.mubr.bf16.gmra.mxu0 %v2094
      %v2205 = vpop.f32.mrf.mxu0
      %v2206 = vadd.f32 0.0, %v2205
      %v2207 = vpop.f32.mrf.mxu0
      %v2208 = vpop.f32.mrf.mxu0
      %v2209 = vadd.f32 0.0, %v2208
      %v2210 = vpop.f32.mrf.mxu0
      %2211 = vmatprep.mubr.bf16.mxu0 0
      %2212 = vmatmul.mubr.bf16.gmra.mxu0 %v2097
      %v2213 = vpop.f32.mrf.mxu0
      %v2214 = vadd.f32 0.0, %v2213
      %v2215 = vpop.f32.mrf.mxu0
      %v2216 = vpop.f32.mrf.mxu0
      %v2217 = vadd.f32 0.0, %v2216
      %v2218 = vpop.f32.mrf.mxu0
      %2219 = vmatprep.mubr.bf16.mxu0 0
      %2220 = vmatmul.mubr.bf16.gmra.mxu0 %v2100
      %v2221 = vpop.f32.mrf.mxu0
      %v2222 = vadd.f32 0.0, %v2221
      %v2223 = vpop.f32.mrf.mxu0
      %v2224 = vpop.f32.mrf.mxu0
      %v2225 = vadd.f32 0.0, %v2224
      %v2226 = vpop.f32.mrf.mxu0
      %2227 = vmatprep.mubr.bf16.mxu0 0
      %2228 = vmatmul.mubr.bf16.gmra.mxu0 %v2103
      %v2229 = vpop.f32.mrf.mxu0
      %v2230 = vadd.f32 0.0, %v2229
      %v2231 = vpop.f32.mrf.mxu0
      %v2232 = vpop.f32.mrf.mxu0
      %v2233 = vadd.f32 0.0, %v2232
      %v2234 = vpop.f32.mrf.mxu0
      %2235 = vmatprep.mubr.bf16.mxu0 0
      %2236 = vmatmul.mubr.bf16.gmra.mxu0 %v2106
      %v2237 = vpop.f32.mrf.mxu0
      %v2238 = vadd.f32 0.0, %v2237
      %v2239 = vpop.f32.mrf.mxu0
      %v2240 = vpop.f32.mrf.mxu0
      %v2241 = vadd.f32 0.0, %v2240
      %v2242 = vpop.f32.mrf.mxu0
      %2243 = vmatprep.mubr.bf16.mxu0 0
      %2244 = vmatmul.mubr.bf16.gmra.mxu0 %v2109
      %v2245 = vpop.f32.mrf.mxu0
      %v2246 = vadd.f32 0.0, %v2245
      %v2247 = vpop.f32.mrf.mxu0
      %v2248 = vpop.f32.mrf.mxu0
      %v2249 = vadd.f32 0.0, %v2248
      %v2250 = vpop.f32.mrf.mxu0
      %2251 = vmatprep.mubr.bf16.mxu0 0
      %2252 = vmatmul.mubr.bf16.gmra.mxu0 %v2112
      %v2253 = vpop.f32.mrf.mxu0
      %v2254 = vadd.f32 0.0, %v2253
      %v2255 = vpop.f32.mrf.mxu0
      %v2256 = vpop.f32.mrf.mxu0
      %v2257 = vadd.f32 0.0, %v2256
      %v2258 = vpop.f32.mrf.mxu0
      %2259 = vmatprep.mubr.bf16.mxu0 0
      %2260 = vmatmul.mubr.bf16.gmra.mxu0 %v2115
      %v2261 = vpop.f32.mrf.mxu0
      %v2262 = vadd.f32 0.0, %v2261
      %v2263 = vpop.f32.mrf.mxu0
      %v2264 = vpop.f32.mrf.mxu0
      %v2265 = vadd.f32 0.0, %v2264
      %v2266 = vpop.f32.mrf.mxu0
      %2267 = vmatprep.mubr.bf16.mxu0 0
      %2268 = vmatmul.mubr.bf16.gmra.mxu0 %v2118
      %v2269 = vpop.f32.mrf.mxu0
      %v2270 = vadd.f32 0.0, %v2269
      %v2271 = vpop.f32.mrf.mxu0
      %v2272 = vpop.f32.mrf.mxu0
      %v2273 = vadd.f32 0.0, %v2272
      %v2274 = vpop.f32.mrf.mxu0
      %2275 = vmatprep.mubr.bf16.mxu0 0
      %2276 = vmatmul.mubr.bf16.gmra.mxu0 %v2121
      %v2277 = vpop.f32.mrf.mxu0
      %v2278 = vadd.f32 0.0, %v2277
      %v2279 = vpop.f32.mrf.mxu0
      %v2280 = vpop.f32.mrf.mxu0
      %v2281 = vadd.f32 0.0, %v2280
      %v2282 = vpop.f32.mrf.mxu0
      %2283 = vdwg.mxu0
      %v2300 = vunpack.c.l.b16 %v172
      %v2301 = vunpack.c.l.b16 %v173
      %v2302 = vunpack.c.l.b16 %v174
      %v2303 = vunpack.c.l.b16 %v175
      %v2304 = vunpack.c.l.b16 %v176
      %v2305 = vunpack.c.l.b16 %v177
      %v2306 = vunpack.c.l.b16 %v178
      %v2307 = vunpack.c.l.b16 %v179
      %v2308 = vunpack.c.l.b16 %v180
      %v2309 = vunpack.c.l.b16 %v181
      %v2310 = vunpack.c.l.b16 %v182
      %v2311 = vunpack.c.l.b16 %v183
      %v2312 = vunpack.c.l.b16 %v184
      %v2313 = vunpack.c.l.b16 %v185
      %v2314 = vunpack.c.l.b16 %v186
      %v2315 = vunpack.c.l.b16 %v187
      %v2316 = vunpack.c.l.b16 %v188
      %v2317 = vunpack.c.l.b16 %v189
      %v2318 = vunpack.c.l.b16 %v190
      %v2319 = vunpack.c.l.b16 %v191
      %v2320 = vunpack.c.l.b16 %v192
      %v2321 = vunpack.c.l.b16 %v193
      %v2322 = vunpack.c.l.b16 %v194
      %v2323 = vunpack.c.l.b16 %v195
      %v2324 = vunpack.c.l.b16 %v196
      %v2325 = vunpack.c.l.b16 %v197
      %v2326 = vunpack.c.l.b16 %v198
      %v2327 = vunpack.c.l.b16 %v199
      %v2328 = vunpack.c.l.b16 %v200
      %v2329 = vunpack.c.l.b16 %v201
      %v2330 = vunpack.c.l.b16 %v202
      %v2331 = vunpack.c.l.b16 %v203
      %v2332 = vpack.c.b16 %v2301, %v2300
      %v2333 = vpack.c.b16 %v2303, %v2302
      %v2334 = vpack.c.b16 %v2305, %v2304
      %v2335 = vpack.c.b16 %v2307, %v2306
      %v2336 = vpack.c.b16 %v2309, %v2308
      %v2337 = vpack.c.b16 %v2311, %v2310
      %v2338 = vpack.c.b16 %v2313, %v2312
      %v2339 = vpack.c.b16 %v2315, %v2314
      %v2340 = vpack.c.b16 %v2317, %v2316
      %v2341 = vpack.c.b16 %v2319, %v2318
      %v2342 = vpack.c.b16 %v2321, %v2320
      %v2343 = vpack.c.b16 %v2323, %v2322
      %v2344 = vpack.c.b16 %v2325, %v2324
      %v2345 = vpack.c.b16 %v2327, %v2326
      %v2346 = vpack.c.b16 %v2329, %v2328
      %v2347 = vpack.c.b16 %v2331, %v2330
      %v2352 = vunpack.c.l.b16 %v2005
      %v2353 = vunpack.c.l.b16 %v2006
      %v2354 = vunpack.c.l.b16 %v2007
      %v2355 = vunpack.c.l.b16 %v2008
      %v2356 = vpack.c.b16 %v2353, %v2352
      %v2357 = vpack.c.b16 %v2355, %v2354
      %v2361 = vsel %vm2074, %v2332, 0
      %v2364 = vsel %vm2074, %v2333, 0
      %v2367 = vsel %vm2074, %v2334, 0
      %v2370 = vsel %vm2074, %v2335, 0
      %v2373 = vsel %vm2074, %v2336, 0
      %v2376 = vsel %vm2074, %v2337, 0
      %v2379 = vsel %vm2074, %v2338, 0
      %v2382 = vsel %vm2074, %v2339, 0
      %v2385 = vsel %vm2074, %v2340, 0
      %v2388 = vsel %vm2074, %v2341, 0
      %v2391 = vsel %vm2074, %v2342, 0
      %v2394 = vsel %vm2074, %v2343, 0
      %v2397 = vsel %vm2074, %v2344, 0
      %v2400 = vsel %vm2074, %v2345, 0
      %v2403 = vsel %vm2074, %v2346, 0
      %v2406 = vsel %vm2074, %v2347, 0
      %2408 = vmatprep.subr.bf16.mxu0 0
      %2409 = vmatpush1.bf16.msra.mxu0 0
      %2410 = vmatprep.subr.bf16.mxu0 0
      %2411 = vmatpush1.bf16.msra.mxu0 0
      %2412 = vmatprep.subr.bf16.mxu0 0
      %2413 = vmatpush1.bf16.msra.mxu0 0
      %2414 = vmatprep.subr.bf16.mxu0 0
      %2415 = vmatpush1.bf16.msra.mxu0 0
      %2416 = vmatprep.subr.bf16.mxu0 0
      %2417 = vmatpush1.bf16.msra.mxu0 0
      %2418 = vmatprep.subr.bf16.mxu0 0
      %2419 = vmatpush1.bf16.msra.mxu0 0
      %2420 = vmatprep.subr.bf16.mxu0 0
      %2421 = vmatpush1.bf16.msra.mxu0 %v2357
      %2422 = vmatprep.subr.bf16.mxu0 0
      %2423 = vmatpush1.bf16.msra.mxu0 %v2356
      %2424 = vmatprep.subr.bf16.mxu0 0
      %2425 = vmatpush2.bf16.msra.mxu0 0
      %2426 = vmatprep.subr.bf16.mxu0 0
      %2427 = vmatpush2.bf16.msra.mxu0 0
      %2428 = vmatprep.subr.bf16.mxu0 0
      %2429 = vmatpush2.bf16.msra.mxu0 0
      %2430 = vmatprep.subr.bf16.mxu0 0
      %2431 = vmatpush2.bf16.msra.mxu0 0
      %2432 = vmatprep.subr.bf16.mxu0 0
      %2433 = vmatpush2.bf16.msra.mxu0 0
      %2434 = vmatprep.subr.bf16.mxu0 0
      %2435 = vmatpush2.bf16.msra.mxu0 0
      %2436 = vmatprep.subr.bf16.mxu0 0
      %2437 = vmatpush2.bf16.msra.mxu0 0
      %2438 = vmatprep.subr.bf16.mxu0 0
      %2439 = vmatpush2.bf16.msra.mxu0 0
      %2440 = vmatprep.mubr.bf16.mxu0 0
      %2441 = vmatmul.mubr.bf16.gmra.mxu0 %v2361
      %v2442 = vpop.f32.mrf.mxu0
      %v2443 = vadd.f32 %v2158, %v2442
      %v2444 = vpop.f32.mrf.mxu0
      %v2445 = vpop.f32.mrf.mxu0
      %v2446 = vadd.f32 %v2161, %v2445
      %v2447 = vpop.f32.mrf.mxu0
      %2448 = vmatprep.mubr.bf16.mxu0 0
      %2449 = vmatmul.mubr.bf16.gmra.mxu0 %v2364
      %v2450 = vpop.f32.mrf.mxu0
      %v2451 = vadd.f32 %v2166, %v2450
      %v2452 = vpop.f32.mrf.mxu0
      %v2453 = vpop.f32.mrf.mxu0
      %v2454 = vadd.f32 %v2169, %v2453
      %v2455 = vpop.f32.mrf.mxu0
      %2456 = vmatprep.mubr.bf16.mxu0 0
      %2457 = vmatmul.mubr.bf16.gmra.mxu0 %v2367
      %v2458 = vpop.f32.mrf.mxu0
      %v2459 = vadd.f32 %v2174, %v2458
      %v2460 = vpop.f32.mrf.mxu0
      %v2461 = vpop.f32.mrf.mxu0
      %v2462 = vadd.f32 %v2177, %v2461
      %v2463 = vpop.f32.mrf.mxu0
      %2464 = vmatprep.mubr.bf16.mxu0 0
      %2465 = vmatmul.mubr.bf16.gmra.mxu0 %v2370
      %v2466 = vpop.f32.mrf.mxu0
      %v2467 = vadd.f32 %v2182, %v2466
      %v2468 = vpop.f32.mrf.mxu0
      %v2469 = vpop.f32.mrf.mxu0
      %v2470 = vadd.f32 %v2185, %v2469
      %v2471 = vpop.f32.mrf.mxu0
      %2472 = vmatprep.mubr.bf16.mxu0 0
      %2473 = vmatmul.mubr.bf16.gmra.mxu0 %v2373
      %v2474 = vpop.f32.mrf.mxu0
      %v2475 = vadd.f32 %v2190, %v2474
      %v2476 = vpop.f32.mrf.mxu0
      %v2477 = vpop.f32.mrf.mxu0
      %v2478 = vadd.f32 %v2193, %v2477
      %v2479 = vpop.f32.mrf.mxu0
      %2480 = vmatprep.mubr.bf16.mxu0 0
      %2481 = vmatmul.mubr.bf16.gmra.mxu0 %v2376
      %v2482 = vpop.f32.mrf.mxu0
      %v2483 = vadd.f32 %v2198, %v2482
      %v2484 = vpop.f32.mrf.mxu0
      %v2485 = vpop.f32.mrf.mxu0
      %v2486 = vadd.f32 %v2201, %v2485
      %v2487 = vpop.f32.mrf.mxu0
      %2488 = vmatprep.mubr.bf16.mxu0 0
      %2489 = vmatmul.mubr.bf16.gmra.mxu0 %v2379
      %v2490 = vpop.f32.mrf.mxu0
      %v2491 = vadd.f32 %v2206, %v2490
      %v2492 = vpop.f32.mrf.mxu0
      %v2493 = vpop.f32.mrf.mxu0
      %v2494 = vadd.f32 %v2209, %v2493
      %v2495 = vpop.f32.mrf.mxu0
      %2496 = vmatprep.mubr.bf16.mxu0 0
      %2497 = vmatmul.mubr.bf16.gmra.mxu0 %v2382
      %v2498 = vpop.f32.mrf.mxu0
      %v2499 = vadd.f32 %v2214, %v2498
      %v2500 = vpop.f32.mrf.mxu0
      %v2501 = vpop.f32.mrf.mxu0
      %v2502 = vadd.f32 %v2217, %v2501
      %v2503 = vpop.f32.mrf.mxu0
      %2504 = vmatprep.mubr.bf16.mxu0 0
      %2505 = vmatmul.mubr.bf16.gmra.mxu0 %v2385
      %v2506 = vpop.f32.mrf.mxu0
      %v2507 = vadd.f32 %v2222, %v2506
      %v2508 = vpop.f32.mrf.mxu0
      %v2509 = vpop.f32.mrf.mxu0
      %v2510 = vadd.f32 %v2225, %v2509
      %v2511 = vpop.f32.mrf.mxu0
      %2512 = vmatprep.mubr.bf16.mxu0 0
      %2513 = vmatmul.mubr.bf16.gmra.mxu0 %v2388
      %v2514 = vpop.f32.mrf.mxu0
      %v2515 = vadd.f32 %v2230, %v2514
      %v2516 = vpop.f32.mrf.mxu0
      %v2517 = vpop.f32.mrf.mxu0
      %v2518 = vadd.f32 %v2233, %v2517
      %v2519 = vpop.f32.mrf.mxu0
      %2520 = vmatprep.mubr.bf16.mxu0 0
      %2521 = vmatmul.mubr.bf16.gmra.mxu0 %v2391
      %v2522 = vpop.f32.mrf.mxu0
      %v2523 = vadd.f32 %v2238, %v2522
      %v2524 = vpop.f32.mrf.mxu0
      %v2525 = vpop.f32.mrf.mxu0
      %v2526 = vadd.f32 %v2241, %v2525
      %v2527 = vpop.f32.mrf.mxu0
      %2528 = vmatprep.mubr.bf16.mxu0 0
      %2529 = vmatmul.mubr.bf16.gmra.mxu0 %v2394
      %v2530 = vpop.f32.mrf.mxu0
      %v2531 = vadd.f32 %v2246, %v2530
      %v2532 = vpop.f32.mrf.mxu0
      %v2533 = vpop.f32.mrf.mxu0
      %v2534 = vadd.f32 %v2249, %v2533
      %v2535 = vpop.f32.mrf.mxu0
      %2536 = vmatprep.mubr.bf16.mxu0 0
      %2537 = vmatmul.mubr.bf16.gmra.mxu0 %v2397
      %v2538 = vpop.f32.mrf.mxu0
      %v2539 = vadd.f32 %v2254, %v2538
      %v2540 = vpop.f32.mrf.mxu0
      %v2541 = vpop.f32.mrf.mxu0
      %v2542 = vadd.f32 %v2257, %v2541
      %v2543 = vpop.f32.mrf.mxu0
      %2544 = vmatprep.mubr.bf16.mxu0 0
      %2545 = vmatmul.mubr.bf16.gmra.mxu0 %v2400
      %v2546 = vpop.f32.mrf.mxu0
      %v2547 = vadd.f32 %v2262, %v2546
      %v2548 = vpop.f32.mrf.mxu0
      %v2549 = vpop.f32.mrf.mxu0
      %v2550 = vadd.f32 %v2265, %v2549
      %v2551 = vpop.f32.mrf.mxu0
      %2552 = vmatprep.mubr.bf16.mxu0 0
      %2553 = vmatmul.mubr.bf16.gmra.mxu0 %v2403
      %v2554 = vpop.f32.mrf.mxu0
      %v2555 = vadd.f32 %v2270, %v2554
      %v2556 = vpop.f32.mrf.mxu0
      %v2557 = vpop.f32.mrf.mxu0
      %v2558 = vadd.f32 %v2273, %v2557
      %v2559 = vpop.f32.mrf.mxu0
      %2560 = vmatprep.mubr.bf16.mxu0 0
      %2561 = vmatmul.mubr.bf16.gmra.mxu0 %v2406
      %v2562 = vpop.f32.mrf.mxu0
      %v2563 = vadd.f32 %v2278, %v2562
      %v2564 = vpop.f32.mrf.mxu0
      %v2565 = vpop.f32.mrf.mxu0
      %v2566 = vadd.f32 %v2281, %v2565
      %v2567 = vpop.f32.mrf.mxu0
      %2568 = vdwg.mxu0
      %s2569 = scalar_lea.vmem %s1, 32
      %v2570 = vld [vmem:[%s2569] sm:$0xf]
      %v2571 = vld [vmem:[%s2569 + $0x4] sm:$0xf]
      %v2572 = vld [vmem:[%s2569 + $0x8] sm:$0xf]
      %v2573 = vld [vmem:[%s2569 + $0xc] sm:$0xf]
      %v2590 = vunpack.c.l.b16 %v787
      %v2591 = vunpack.c.l.b16 %v788
      %v2592 = vunpack.c.l.b16 %v789
      %v2593 = vunpack.c.l.b16 %v790
      %v2594 = vunpack.c.l.b16 %v791
      %v2595 = vunpack.c.l.b16 %v792
      %v2596 = vunpack.c.l.b16 %v793
      %v2597 = vunpack.c.l.b16 %v794
      %v2598 = vunpack.c.l.b16 %v795
      %v2599 = vunpack.c.l.b16 %v796
      %v2600 = vunpack.c.l.b16 %v797
      %v2601 = vunpack.c.l.b16 %v798
      %v2602 = vunpack.c.l.b16 %v799
      %v2603 = vunpack.c.l.b16 %v800
      %v2604 = vunpack.c.l.b16 %v801
      %v2605 = vunpack.c.l.b16 %v802
      %v2606 = vunpack.c.l.b16 %v803
      %v2607 = vunpack.c.l.b16 %v804
      %v2608 = vunpack.c.l.b16 %v805
      %v2609 = vunpack.c.l.b16 %v806
      %v2610 = vunpack.c.l.b16 %v807
      %v2611 = vunpack.c.l.b16 %v808
      %v2612 = vunpack.c.l.b16 %v809
      %v2613 = vunpack.c.l.b16 %v810
      %v2614 = vunpack.c.l.b16 %v811
      %v2615 = vunpack.c.l.b16 %v812
      %v2616 = vunpack.c.l.b16 %v813
      %v2617 = vunpack.c.l.b16 %v814
      %v2618 = vunpack.c.l.b16 %v815
      %v2619 = vunpack.c.l.b16 %v816
      %v2620 = vunpack.c.l.b16 %v817
      %v2621 = vunpack.c.l.b16 %v818
      %v2622 = vpack.c.b16 %v2591, %v2590
      %v2623 = vpack.c.b16 %v2593, %v2592
      %v2624 = vpack.c.b16 %v2595, %v2594
      %v2625 = vpack.c.b16 %v2597, %v2596
      %v2626 = vpack.c.b16 %v2599, %v2598
      %v2627 = vpack.c.b16 %v2601, %v2600
      %v2628 = vpack.c.b16 %v2603, %v2602
      %v2629 = vpack.c.b16 %v2605, %v2604
      %v2630 = vpack.c.b16 %v2607, %v2606
      %v2631 = vpack.c.b16 %v2609, %v2608
      %v2632 = vpack.c.b16 %v2611, %v2610
      %v2633 = vpack.c.b16 %v2613, %v2612
      %v2634 = vpack.c.b16 %v2615, %v2614
      %v2635 = vpack.c.b16 %v2617, %v2616
      %v2636 = vpack.c.b16 %v2619, %v2618
      %v2637 = vpack.c.b16 %v2621, %v2620
      %v2642 = vunpack.c.l.b16 %v2570
      %v2643 = vunpack.c.l.b16 %v2571
      %v2644 = vunpack.c.l.b16 %v2572
      %v2645 = vunpack.c.l.b16 %v2573
      %v2646 = vpack.c.b16 %v2643, %v2642
      %v2647 = vpack.c.b16 %v2645, %v2644
      %v2651 = vsel %vm2074, %v2622, 0
      %v2654 = vsel %vm2074, %v2623, 0
      %v2657 = vsel %vm2074, %v2624, 0
      %v2660 = vsel %vm2074, %v2625, 0
      %v2663 = vsel %vm2074, %v2626, 0
      %v2666 = vsel %vm2074, %v2627, 0
      %v2669 = vsel %vm2074, %v2628, 0
      %v2672 = vsel %vm2074, %v2629, 0
      %v2675 = vsel %vm2074, %v2630, 0
      %v2678 = vsel %vm2074, %v2631, 0
      %v2681 = vsel %vm2074, %v2632, 0
      %v2684 = vsel %vm2074, %v2633, 0
      %v2687 = vsel %vm2074, %v2634, 0
      %v2690 = vsel %vm2074, %v2635, 0
      %v2693 = vsel %vm2074, %v2636, 0
      %v2696 = vsel %vm2074, %v2637, 0
      %2698 = vmatprep.subr.bf16.mxu0 0
      %2699 = vmatpush1.bf16.msra.mxu0 0
      %2700 = vmatprep.subr.bf16.mxu0 0
      %2701 = vmatpush1.bf16.msra.mxu0 0
      %2702 = vmatprep.subr.bf16.mxu0 0
      %2703 = vmatpush1.bf16.msra.mxu0 0
      %2704 = vmatprep.subr.bf16.mxu0 0
      %2705 = vmatpush1.bf16.msra.mxu0 0
      %2706 = vmatprep.subr.bf16.mxu0 0
      %2707 = vmatpush1.bf16.msra.mxu0 0
      %2708 = vmatprep.subr.bf16.mxu0 0
      %2709 = vmatpush1.bf16.msra.mxu0 0
      %2710 = vmatprep.subr.bf16.mxu0 0
      %2711 = vmatpush1.bf16.msra.mxu0 %v2647
      %2712 = vmatprep.subr.bf16.mxu0 0
      %2713 = vmatpush1.bf16.msra.mxu0 %v2646
      %2714 = vmatprep.subr.bf16.mxu0 0
      %2715 = vmatpush2.bf16.msra.mxu0 0
      %2716 = vmatprep.subr.bf16.mxu0 0
      %2717 = vmatpush2.bf16.msra.mxu0 0
      %2718 = vmatprep.subr.bf16.mxu0 0
      %2719 = vmatpush2.bf16.msra.mxu0 0
      %2720 = vmatprep.subr.bf16.mxu0 0
      %2721 = vmatpush2.bf16.msra.mxu0 0
      %2722 = vmatprep.subr.bf16.mxu0 0
      %2723 = vmatpush2.bf16.msra.mxu0 0
      %2724 = vmatprep.subr.bf16.mxu0 0
      %2725 = vmatpush2.bf16.msra.mxu0 0
      %2726 = vmatprep.subr.bf16.mxu0 0
      %2727 = vmatpush2.bf16.msra.mxu0 0
      %2728 = vmatprep.subr.bf16.mxu0 0
      %2729 = vmatpush2.bf16.msra.mxu0 0
      %2730 = vmatprep.mubr.bf16.mxu0 0
      %2731 = vmatmul.mubr.bf16.gmra.mxu0 %v2651
      %v2732 = vpop.f32.mrf.mxu0
      %v2733 = vadd.f32 0.0, %v2732
      %v2734 = vpop.f32.mrf.mxu0
      %v2735 = vpop.f32.mrf.mxu0
      %v2736 = vadd.f32 0.0, %v2735
      %v2737 = vpop.f32.mrf.mxu0
      %2738 = vmatprep.mubr.bf16.mxu0 0
      %2739 = vmatmul.mubr.bf16.gmra.mxu0 %v2654
      %v2740 = vpop.f32.mrf.mxu0
      %v2741 = vadd.f32 0.0, %v2740
      %v2742 = vpop.f32.mrf.mxu0
      %v2743 = vpop.f32.mrf.mxu0
      %v2744 = vadd.f32 0.0, %v2743
      %v2745 = vpop.f32.mrf.mxu0
      %2746 = vmatprep.mubr.bf16.mxu0 0
      %2747 = vmatmul.mubr.bf16.gmra.mxu0 %v2657
      %v2748 = vpop.f32.mrf.mxu0
      %v2749 = vadd.f32 0.0, %v2748
      %v2750 = vpop.f32.mrf.mxu0
      %v2751 = vpop.f32.mrf.mxu0
      %v2752 = vadd.f32 0.0, %v2751
      %v2753 = vpop.f32.mrf.mxu0
      %2754 = vmatprep.mubr.bf16.mxu0 0
      %2755 = vmatmul.mubr.bf16.gmra.mxu0 %v2660
      %v2756 = vpop.f32.mrf.mxu0
      %v2757 = vadd.f32 0.0, %v2756
      %v2758 = vpop.f32.mrf.mxu0
      %v2759 = vpop.f32.mrf.mxu0
      %v2760 = vadd.f32 0.0, %v2759
      %v2761 = vpop.f32.mrf.mxu0
      %2762 = vmatprep.mubr.bf16.mxu0 0
      %2763 = vmatmul.mubr.bf16.gmra.mxu0 %v2663
      %v2764 = vpop.f32.mrf.mxu0
      %v2765 = vadd.f32 0.0, %v2764
      %v2766 = vpop.f32.mrf.mxu0
      %v2767 = vpop.f32.mrf.mxu0
      %v2768 = vadd.f32 0.0, %v2767
      %v2769 = vpop.f32.mrf.mxu0
      %2770 = vmatprep.mubr.bf16.mxu0 0
      %2771 = vmatmul.mubr.bf16.gmra.mxu0 %v2666
      %v2772 = vpop.f32.mrf.mxu0
      %v2773 = vadd.f32 0.0, %v2772
      %v2774 = vpop.f32.mrf.mxu0
      %v2775 = vpop.f32.mrf.mxu0
      %v2776 = vadd.f32 0.0, %v2775
      %v2777 = vpop.f32.mrf.mxu0
      %2778 = vmatprep.mubr.bf16.mxu0 0
      %2779 = vmatmul.mubr.bf16.gmra.mxu0 %v2669
      %v2780 = vpop.f32.mrf.mxu0
      %v2781 = vadd.f32 0.0, %v2780
      %v2782 = vpop.f32.mrf.mxu0
      %v2783 = vpop.f32.mrf.mxu0
      %v2784 = vadd.f32 0.0, %v2783
      %v2785 = vpop.f32.mrf.mxu0
      %2786 = vmatprep.mubr.bf16.mxu0 0
      %2787 = vmatmul.mubr.bf16.gmra.mxu0 %v2672
      %v2788 = vpop.f32.mrf.mxu0
      %v2789 = vadd.f32 0.0, %v2788
      %v2790 = vpop.f32.mrf.mxu0
      %v2791 = vpop.f32.mrf.mxu0
      %v2792 = vadd.f32 0.0, %v2791
      %v2793 = vpop.f32.mrf.mxu0
      %2794 = vmatprep.mubr.bf16.mxu0 0
      %2795 = vmatmul.mubr.bf16.gmra.mxu0 %v2675
      %v2796 = vpop.f32.mrf.mxu0
      %v2797 = vadd.f32 0.0, %v2796
      %v2798 = vpop.f32.mrf.mxu0
      %v2799 = vpop.f32.mrf.mxu0
      %v2800 = vadd.f32 0.0, %v2799
      %v2801 = vpop.f32.mrf.mxu0
      %2802 = vmatprep.mubr.bf16.mxu0 0
      %2803 = vmatmul.mubr.bf16.gmra.mxu0 %v2678
      %v2804 = vpop.f32.mrf.mxu0
      %v2805 = vadd.f32 0.0, %v2804
      %v2806 = vpop.f32.mrf.mxu0
      %v2807 = vpop.f32.mrf.mxu0
      %v2808 = vadd.f32 0.0, %v2807
      %v2809 = vpop.f32.mrf.mxu0
      %2810 = vmatprep.mubr.bf16.mxu0 0
      %2811 = vmatmul.mubr.bf16.gmra.mxu0 %v2681
      %v2812 = vpop.f32.mrf.mxu0
      %v2813 = vadd.f32 0.0, %v2812
      %v2814 = vpop.f32.mrf.mxu0
      %v2815 = vpop.f32.mrf.mxu0
      %v2816 = vadd.f32 0.0, %v2815
      %v2817 = vpop.f32.mrf.mxu0
      %2818 = vmatprep.mubr.bf16.mxu0 0
      %2819 = vmatmul.mubr.bf16.gmra.mxu0 %v2684
      %v2820 = vpop.f32.mrf.mxu0
      %v2821 = vadd.f32 0.0, %v2820
      %v2822 = vpop.f32.mrf.mxu0
      %v2823 = vpop.f32.mrf.mxu0
      %v2824 = vadd.f32 0.0, %v2823
      %v2825 = vpop.f32.mrf.mxu0
      %2826 = vmatprep.mubr.bf16.mxu0 0
      %2827 = vmatmul.mubr.bf16.gmra.mxu0 %v2687
      %v2828 = vpop.f32.mrf.mxu0
      %v2829 = vadd.f32 0.0, %v2828
      %v2830 = vpop.f32.mrf.mxu0
      %v2831 = vpop.f32.mrf.mxu0
      %v2832 = vadd.f32 0.0, %v2831
      %v2833 = vpop.f32.mrf.mxu0
      %2834 = vmatprep.mubr.bf16.mxu0 0
      %2835 = vmatmul.mubr.bf16.gmra.mxu0 %v2690
      %v2836 = vpop.f32.mrf.mxu0
      %v2837 = vadd.f32 0.0, %v2836
      %v2838 = vpop.f32.mrf.mxu0
      %v2839 = vpop.f32.mrf.mxu0
      %v2840 = vadd.f32 0.0, %v2839
      %v2841 = vpop.f32.mrf.mxu0
      %2842 = vmatprep.mubr.bf16.mxu0 0
      %2843 = vmatmul.mubr.bf16.gmra.mxu0 %v2693
      %v2844 = vpop.f32.mrf.mxu0
      %v2845 = vadd.f32 0.0, %v2844
      %v2846 = vpop.f32.mrf.mxu0
      %v2847 = vpop.f32.mrf.mxu0
      %v2848 = vadd.f32 0.0, %v2847
      %v2849 = vpop.f32.mrf.mxu0
      %2850 = vmatprep.mubr.bf16.mxu0 0
      %2851 = vmatmul.mubr.bf16.gmra.mxu0 %v2696
      %v2852 = vpop.f32.mrf.mxu0
      %v2853 = vadd.f32 0.0, %v2852
      %v2854 = vpop.f32.mrf.mxu0
      %v2855 = vpop.f32.mrf.mxu0
      %v2856 = vadd.f32 0.0, %v2855
      %v2857 = vpop.f32.mrf.mxu0
      %2858 = vdwg.mxu0
      %v2859 = vadd.f32 %v2443, %v2733
      %v2860 = vadd.f32 %v2446, %v2736
      %v2861 = vadd.f32 %v2451, %v2741
      %v2862 = vadd.f32 %v2454, %v2744
      %v2863 = vadd.f32 %v2459, %v2749
      %v2864 = vadd.f32 %v2462, %v2752
      %v2865 = vadd.f32 %v2467, %v2757
      %v2866 = vadd.f32 %v2470, %v2760
      %v2867 = vadd.f32 %v2475, %v2765
      %v2868 = vadd.f32 %v2478, %v2768
      %v2869 = vadd.f32 %v2483, %v2773
      %v2870 = vadd.f32 %v2486, %v2776
      %v2871 = vadd.f32 %v2491, %v2781
      %v2872 = vadd.f32 %v2494, %v2784
      %v2873 = vadd.f32 %v2499, %v2789
      %v2874 = vadd.f32 %v2502, %v2792
      %v2875 = vadd.f32 %v2507, %v2797
      %v2876 = vadd.f32 %v2510, %v2800
      %v2877 = vadd.f32 %v2515, %v2805
      %v2878 = vadd.f32 %v2518, %v2808
      %v2879 = vadd.f32 %v2523, %v2813
      %v2880 = vadd.f32 %v2526, %v2816
      %v2881 = vadd.f32 %v2531, %v2821
      %v2882 = vadd.f32 %v2534, %v2824
      %v2883 = vadd.f32 %v2539, %v2829
      %v2884 = vadd.f32 %v2542, %v2832
      %v2885 = vadd.f32 %v2547, %v2837
      %v2886 = vadd.f32 %v2550, %v2840
      %v2887 = vadd.f32 %v2555, %v2845
      %v2888 = vadd.f32 %v2558, %v2848
      %v2889 = vadd.f32 %v2563, %v2853
      %v2890 = vadd.f32 %v2566, %v2856
      %s2891 = scalar_lea.vmem %s1, 48
      %v2892 = vld [vmem:[%s2891] sm:$0xf]
      %v2893 = vld [vmem:[%s2891 + $0x4] sm:$0xf]
      %v2894 = vld [vmem:[%s2891 + $0x8] sm:$0xf]
      %v2895 = vld [vmem:[%s2891 + $0xc] sm:$0xf]
      %v2896 = vunpack.c.l.b16 %v848
      %v2897 = vunpack.c.l.b16 %v858
      %v2898 = vunpack.c.l.b16 %v872
      %v2899 = vunpack.c.l.b16 %v882
      %v2900 = vunpack.c.l.b16 %v896
      %v2901 = vunpack.c.l.b16 %v906
      %v2902 = vunpack.c.l.b16 %v920
      %v2903 = vunpack.c.l.b16 %v930
      %v2904 = vunpack.c.l.b16 %v944
      %v2905 = vunpack.c.l.b16 %v954
      %v2906 = vunpack.c.l.b16 %v968
      %v2907 = vunpack.c.l.b16 %v978
      %v2908 = vunpack.c.l.b16 %v992
      %v2909 = vunpack.c.l.b16 %v1002
      %v2910 = vunpack.c.l.b16 %v1016
      %v2911 = vunpack.c.l.b16 %v1026
      %v2912 = vunpack.c.l.b16 %v1040
      %v2913 = vunpack.c.l.b16 %v1050
      %v2914 = vunpack.c.l.b16 %v1064
      %v2915 = vunpack.c.l.b16 %v1074
      %v2916 = vunpack.c.l.b16 %v1088
      %v2917 = vunpack.c.l.b16 %v1098
      %v2918 = vunpack.c.l.b16 %v1112
      %v2919 = vunpack.c.l.b16 %v1122
      %v2920 = vunpack.c.l.b16 %v1136
      %v2921 = vunpack.c.l.b16 %v1146
      %v2922 = vunpack.c.l.b16 %v1160
      %v2923 = vunpack.c.l.b16 %v1170
      %v2924 = vunpack.c.l.b16 %v1184
      %v2925 = vunpack.c.l.b16 %v1194
      %v2926 = vunpack.c.l.b16 %v1208
      %v2927 = vunpack.c.l.b16 %v1218
      %v2928 = vpack.c.b16 %v2897, %v2896
      %v2929 = vpack.c.b16 %v2899, %v2898
      %v2930 = vpack.c.b16 %v2901, %v2900
      %v2931 = vpack.c.b16 %v2903, %v2902
      %v2932 = vpack.c.b16 %v2905, %v2904
      %v2933 = vpack.c.b16 %v2907, %v2906
      %v2934 = vpack.c.b16 %v2909, %v2908
      %v2935 = vpack.c.b16 %v2911, %v2910
      %v2936 = vpack.c.b16 %v2913, %v2912
      %v2937 = vpack.c.b16 %v2915, %v2914
      %v2938 = vpack.c.b16 %v2917, %v2916
      %v2939 = vpack.c.b16 %v2919, %v2918
      %v2940 = vpack.c.b16 %v2921, %v2920
      %v2941 = vpack.c.b16 %v2923, %v2922
      %v2942 = vpack.c.b16 %v2925, %v2924
      %v2943 = vpack.c.b16 %v2927, %v2926
      %v2948 = vunpack.c.l.b16 %v2892
      %v2949 = vunpack.c.l.b16 %v2893
      %v2950 = vunpack.c.l.b16 %v2894
      %v2951 = vunpack.c.l.b16 %v2895
      %v2952 = vpack.c.b16 %v2949, %v2948
      %v2953 = vpack.c.b16 %v2951, %v2950
      %v2957 = vsel %vm2074, %v2928, 0
      %v2960 = vsel %vm2074, %v2929, 0
      %v2963 = vsel %vm2074, %v2930, 0
      %v2966 = vsel %vm2074, %v2931, 0
      %v2969 = vsel %vm2074, %v2932, 0
      %v2972 = vsel %vm2074, %v2933, 0
      %v2975 = vsel %vm2074, %v2934, 0
      %v2978 = vsel %vm2074, %v2935, 0
      %v2981 = vsel %vm2074, %v2936, 0
      %v2984 = vsel %vm2074, %v2937, 0
      %v2987 = vsel %vm2074, %v2938, 0
      %v2990 = vsel %vm2074, %v2939, 0
      %v2993 = vsel %vm2074, %v2940, 0
      %v2996 = vsel %vm2074, %v2941, 0
      %v2999 = vsel %vm2074, %v2942, 0
      %v3002 = vsel %vm2074, %v2943, 0
      %3004 = vmatprep.subr.bf16.mxu0 0
      %3005 = vmatpush1.bf16.msra.mxu0 0
      %3006 = vmatprep.subr.bf16.mxu0 0
      %3007 = vmatpush1.bf16.msra.mxu0 0
      %3008 = vmatprep.subr.bf16.mxu0 0
      %3009 = vmatpush1.bf16.msra.mxu0 0
      %3010 = vmatprep.subr.bf16.mxu0 0
      %3011 = vmatpush1.bf16.msra.mxu0 0
      %3012 = vmatprep.subr.bf16.mxu0 0
      %3013 = vmatpush1.bf16.msra.mxu0 0
      %3014 = vmatprep.subr.bf16.mxu0 0
      %3015 = vmatpush1.bf16.msra.mxu0 0
      %3016 = vmatprep.subr.bf16.mxu0 0
      %3017 = vmatpush1.bf16.msra.mxu0 %v2953
      %3018 = vmatprep.subr.bf16.mxu0 0
      %3019 = vmatpush1.bf16.msra.mxu0 %v2952
      %3020 = vmatprep.subr.bf16.mxu0 0
      %3021 = vmatpush2.bf16.msra.mxu0 0
      %3022 = vmatprep.subr.bf16.mxu0 0
      %3023 = vmatpush2.bf16.msra.mxu0 0
      %3024 = vmatprep.subr.bf16.mxu0 0
      %3025 = vmatpush2.bf16.msra.mxu0 0
      %3026 = vmatprep.subr.bf16.mxu0 0
      %3027 = vmatpush2.bf16.msra.mxu0 0
      %3028 = vmatprep.subr.bf16.mxu0 0
      %3029 = vmatpush2.bf16.msra.mxu0 0
      %3030 = vmatprep.subr.bf16.mxu0 0
      %3031 = vmatpush2.bf16.msra.mxu0 0
      %3032 = vmatprep.subr.bf16.mxu0 0
      %3033 = vmatpush2.bf16.msra.mxu0 0
      %3034 = vmatprep.subr.bf16.mxu0 0
      %3035 = vmatpush2.bf16.msra.mxu0 0
      %3036 = vmatprep.mubr.bf16.mxu0 0
      %3037 = vmatmul.mubr.bf16.gmra.mxu0 %v2957
      %v3038 = vpop.f32.mrf.mxu0
      %v3039 = vadd.f32 0.0, %v3038
      %v3040 = vpop.f32.mrf.mxu0
      %v3041 = vpop.f32.mrf.mxu0
      %v3042 = vadd.f32 0.0, %v3041
      %v3043 = vpop.f32.mrf.mxu0
      %3044 = vmatprep.mubr.bf16.mxu0 0
      %3045 = vmatmul.mubr.bf16.gmra.mxu0 %v2960
      %v3046 = vpop.f32.mrf.mxu0
      %v3047 = vadd.f32 0.0, %v3046
      %v3048 = vpop.f32.mrf.mxu0
      %v3049 = vpop.f32.mrf.mxu0
      %v3050 = vadd.f32 0.0, %v3049
      %v3051 = vpop.f32.mrf.mxu0
      %3052 = vmatprep.mubr.bf16.mxu0 0
      %3053 = vmatmul.mubr.bf16.gmra.mxu0 %v2963
      %v3054 = vpop.f32.mrf.mxu0
      %v3055 = vadd.f32 0.0, %v3054
      %v3056 = vpop.f32.mrf.mxu0
      %v3057 = vpop.f32.mrf.mxu0
      %v3058 = vadd.f32 0.0, %v3057
      %v3059 = vpop.f32.mrf.mxu0
      %3060 = vmatprep.mubr.bf16.mxu0 0
      %3061 = vmatmul.mubr.bf16.gmra.mxu0 %v2966
      %v3062 = vpop.f32.mrf.mxu0
      %v3063 = vadd.f32 0.0, %v3062
      %v3064 = vpop.f32.mrf.mxu0
      %v3065 = vpop.f32.mrf.mxu0
      %v3066 = vadd.f32 0.0, %v3065
      %v3067 = vpop.f32.mrf.mxu0
      %3068 = vmatprep.mubr.bf16.mxu0 0
      %3069 = vmatmul.mubr.bf16.gmra.mxu0 %v2969
      %v3070 = vpop.f32.mrf.mxu0
      %v3071 = vadd.f32 0.0, %v3070
      %v3072 = vpop.f32.mrf.mxu0
      %v3073 = vpop.f32.mrf.mxu0
      %v3074 = vadd.f32 0.0, %v3073
      %v3075 = vpop.f32.mrf.mxu0
      %3076 = vmatprep.mubr.bf16.mxu0 0
      %3077 = vmatmul.mubr.bf16.gmra.mxu0 %v2972
      %v3078 = vpop.f32.mrf.mxu0
      %v3079 = vadd.f32 0.0, %v3078
      %v3080 = vpop.f32.mrf.mxu0
      %v3081 = vpop.f32.mrf.mxu0
      %v3082 = vadd.f32 0.0, %v3081
      %v3083 = vpop.f32.mrf.mxu0
      %3084 = vmatprep.mubr.bf16.mxu0 0
      %3085 = vmatmul.mubr.bf16.gmra.mxu0 %v2975
      %v3086 = vpop.f32.mrf.mxu0
      %v3087 = vadd.f32 0.0, %v3086
      %v3088 = vpop.f32.mrf.mxu0
      %v3089 = vpop.f32.mrf.mxu0
      %v3090 = vadd.f32 0.0, %v3089
      %v3091 = vpop.f32.mrf.mxu0
      %3092 = vmatprep.mubr.bf16.mxu0 0
      %3093 = vmatmul.mubr.bf16.gmra.mxu0 %v2978
      %v3094 = vpop.f32.mrf.mxu0
      %v3095 = vadd.f32 0.0, %v3094
      %v3096 = vpop.f32.mrf.mxu0
      %v3097 = vpop.f32.mrf.mxu0
      %v3098 = vadd.f32 0.0, %v3097
      %v3099 = vpop.f32.mrf.mxu0
      %3100 = vmatprep.mubr.bf16.mxu0 0
      %3101 = vmatmul.mubr.bf16.gmra.mxu0 %v2981
      %v3102 = vpop.f32.mrf.mxu0
      %v3103 = vadd.f32 0.0, %v3102
      %v3104 = vpop.f32.mrf.mxu0
      %v3105 = vpop.f32.mrf.mxu0
      %v3106 = vadd.f32 0.0, %v3105
      %v3107 = vpop.f32.mrf.mxu0
      %3108 = vmatprep.mubr.bf16.mxu0 0
      %3109 = vmatmul.mubr.bf16.gmra.mxu0 %v2984
      %v3110 = vpop.f32.mrf.mxu0
      %v3111 = vadd.f32 0.0, %v3110
      %v3112 = vpop.f32.mrf.mxu0
      %v3113 = vpop.f32.mrf.mxu0
      %v3114 = vadd.f32 0.0, %v3113
      %v3115 = vpop.f32.mrf.mxu0
      %3116 = vmatprep.mubr.bf16.mxu0 0
      %3117 = vmatmul.mubr.bf16.gmra.mxu0 %v2987
      %v3118 = vpop.f32.mrf.mxu0
      %v3119 = vadd.f32 0.0, %v3118
      %v3120 = vpop.f32.mrf.mxu0
      %v3121 = vpop.f32.mrf.mxu0
      %v3122 = vadd.f32 0.0, %v3121
      %v3123 = vpop.f32.mrf.mxu0
      %3124 = vmatprep.mubr.bf16.mxu0 0
      %3125 = vmatmul.mubr.bf16.gmra.mxu0 %v2990
      %v3126 = vpop.f32.mrf.mxu0
      %v3127 = vadd.f32 0.0, %v3126
      %v3128 = vpop.f32.mrf.mxu0
      %v3129 = vpop.f32.mrf.mxu0
      %v3130 = vadd.f32 0.0, %v3129
      %v3131 = vpop.f32.mrf.mxu0
      %3132 = vmatprep.mubr.bf16.mxu0 0
      %3133 = vmatmul.mubr.bf16.gmra.mxu0 %v2993
      %v3134 = vpop.f32.mrf.mxu0
      %v3135 = vadd.f32 0.0, %v3134
      %v3136 = vpop.f32.mrf.mxu0
      %v3137 = vpop.f32.mrf.mxu0
      %v3138 = vadd.f32 0.0, %v3137
      %v3139 = vpop.f32.mrf.mxu0
      %3140 = vmatprep.mubr.bf16.mxu0 0
      %3141 = vmatmul.mubr.bf16.gmra.mxu0 %v2996
      %v3142 = vpop.f32.mrf.mxu0
      %v3143 = vadd.f32 0.0, %v3142
      %v3144 = vpop.f32.mrf.mxu0
      %v3145 = vpop.f32.mrf.mxu0
      %v3146 = vadd.f32 0.0, %v3145
      %v3147 = vpop.f32.mrf.mxu0
      %3148 = vmatprep.mubr.bf16.mxu0 0
      %3149 = vmatmul.mubr.bf16.gmra.mxu0 %v2999
      %v3150 = vpop.f32.mrf.mxu0
      %v3151 = vadd.f32 0.0, %v3150
      %v3152 = vpop.f32.mrf.mxu0
      %v3153 = vpop.f32.mrf.mxu0
      %v3154 = vadd.f32 0.0, %v3153
      %v3155 = vpop.f32.mrf.mxu0
      %3156 = vmatprep.mubr.bf16.mxu0 0
      %3157 = vmatmul.mubr.bf16.gmra.mxu0 %v3002
      %v3158 = vpop.f32.mrf.mxu0
      %v3159 = vadd.f32 0.0, %v3158
      %v3160 = vpop.f32.mrf.mxu0
      %v3161 = vpop.f32.mrf.mxu0
      %v3162 = vadd.f32 0.0, %v3161
      %v3163 = vpop.f32.mrf.mxu0
      %3164 = vdwg.mxu0
      %v3165 = vadd.f32 %v2859, %v3039
      %v3166 = vadd.f32 %v2860, %v3042
      %v3167 = vadd.f32 %v2861, %v3047
      %v3168 = vadd.f32 %v2862, %v3050
      %v3169 = vadd.f32 %v2863, %v3055
      %v3170 = vadd.f32 %v2864, %v3058
      %v3171 = vadd.f32 %v2865, %v3063
      %v3172 = vadd.f32 %v2866, %v3066
      %v3173 = vadd.f32 %v2867, %v3071
      %v3174 = vadd.f32 %v2868, %v3074
      %v3175 = vadd.f32 %v2869, %v3079
      %v3176 = vadd.f32 %v2870, %v3082
      %v3177 = vadd.f32 %v2871, %v3087
      %v3178 = vadd.f32 %v2872, %v3090
      %v3179 = vadd.f32 %v2873, %v3095
      %v3180 = vadd.f32 %v2874, %v3098
      %v3181 = vadd.f32 %v2875, %v3103
      %v3182 = vadd.f32 %v2876, %v3106
      %v3183 = vadd.f32 %v2877, %v3111
      %v3184 = vadd.f32 %v2878, %v3114
      %v3185 = vadd.f32 %v2879, %v3119
      %v3186 = vadd.f32 %v2880, %v3122
      %v3187 = vadd.f32 %v2881, %v3127
      %v3188 = vadd.f32 %v2882, %v3130
      %v3189 = vadd.f32 %v2883, %v3135
      %v3190 = vadd.f32 %v2884, %v3138
      %v3191 = vadd.f32 %v2885, %v3143
      %v3192 = vadd.f32 %v2886, %v3146
      %v3193 = vadd.f32 %v2887, %v3151
      %v3194 = vadd.f32 %v2888, %v3154
      %v3195 = vadd.f32 %v2889, %v3159
      %v3196 = vadd.f32 %v2890, %v3162
      %v3198 = vlaneseq
      %v3199 = vshrl.u32 %v3198, 7
      %v3200 = vsub.s32 0, %v3199
      %v3201 = vrot.slane %v2004, %v3200
      %v3203 = vadd.f32 %v3165, %v3201
      %v3204 = vadd.f32 %v3166, %v3201
      %v3205 = vadd.f32 %v3167, %v3201
      %v3206 = vadd.f32 %v3168, %v3201
      %v3207 = vadd.f32 %v3169, %v3201
      %v3208 = vadd.f32 %v3170, %v3201
      %v3209 = vadd.f32 %v3171, %v3201
      %v3210 = vadd.f32 %v3172, %v3201
      %v3211 = vadd.f32 %v3173, %v3201
      %v3212 = vadd.f32 %v3174, %v3201
      %v3213 = vadd.f32 %v3175, %v3201
      %v3214 = vadd.f32 %v3176, %v3201
      %v3215 = vadd.f32 %v3177, %v3201
      %v3216 = vadd.f32 %v3178, %v3201
      %v3217 = vadd.f32 %v3179, %v3201
      %v3218 = vadd.f32 %v3180, %v3201
      %v3219 = vadd.f32 %v3181, %v3201
      %v3220 = vadd.f32 %v3182, %v3201
      %v3221 = vadd.f32 %v3183, %v3201
      %v3222 = vadd.f32 %v3184, %v3201
      %v3223 = vadd.f32 %v3185, %v3201
      %v3224 = vadd.f32 %v3186, %v3201
      %v3225 = vadd.f32 %v3187, %v3201
      %v3226 = vadd.f32 %v3188, %v3201
      %v3227 = vadd.f32 %v3189, %v3201
      %v3228 = vadd.f32 %v3190, %v3201
      %v3229 = vadd.f32 %v3191, %v3201
      %v3230 = vadd.f32 %v3192, %v3201
      %v3231 = vadd.f32 %v3193, %v3201
      %v3232 = vadd.f32 %v3194, %v3201
      %v3233 = vadd.f32 %v3195, %v3201
      %v3234 = vadd.f32 %v3196, %v3201
      %v3235 = vmax.f32 %v3203, 0.0
      %v3236 = vmax.f32 %v3204, 0.0
      %v3237 = vmax.f32 %v3205, 0.0
      %v3238 = vmax.f32 %v3206, 0.0
      %v3239 = vmax.f32 %v3207, 0.0
      %v3240 = vmax.f32 %v3208, 0.0
      %v3241 = vmax.f32 %v3209, 0.0
      %v3242 = vmax.f32 %v3210, 0.0
      %v3243 = vmax.f32 %v3211, 0.0
      %v3244 = vmax.f32 %v3212, 0.0
      %v3245 = vmax.f32 %v3213, 0.0
      %v3246 = vmax.f32 %v3214, 0.0
      %v3247 = vmax.f32 %v3215, 0.0
      %v3248 = vmax.f32 %v3216, 0.0
      %v3249 = vmax.f32 %v3217, 0.0
      %v3250 = vmax.f32 %v3218, 0.0
      %v3251 = vmax.f32 %v3219, 0.0
      %v3252 = vmax.f32 %v3220, 0.0
      %v3253 = vmax.f32 %v3221, 0.0
      %v3254 = vmax.f32 %v3222, 0.0
      %v3255 = vmax.f32 %v3223, 0.0
      %v3256 = vmax.f32 %v3224, 0.0
      %v3257 = vmax.f32 %v3225, 0.0
      %v3258 = vmax.f32 %v3226, 0.0
      %v3259 = vmax.f32 %v3227, 0.0
      %v3260 = vmax.f32 %v3228, 0.0
      %v3261 = vmax.f32 %v3229, 0.0
      %v3262 = vmax.f32 %v3230, 0.0
      %v3263 = vmax.f32 %v3231, 0.0
      %v3264 = vmax.f32 %v3232, 0.0
      %v3265 = vmax.f32 %v3233, 0.0
      %v3266 = vmax.f32 %v3234, 0.0
      %v3267 = vpack.c.bf16 %v3236, %v3235
      %v3268 = vpack.c.bf16 %v3238, %v3237
      %v3269 = vpack.c.bf16 %v3240, %v3239
      %v3270 = vpack.c.bf16 %v3242, %v3241
      %v3271 = vpack.c.bf16 %v3244, %v3243
      %v3272 = vpack.c.bf16 %v3246, %v3245
      %v3273 = vpack.c.bf16 %v3248, %v3247
      %v3274 = vpack.c.bf16 %v3250, %v3249
      %v3275 = vpack.c.bf16 %v3252, %v3251
      %v3276 = vpack.c.bf16 %v3254, %v3253
      %v3277 = vpack.c.bf16 %v3256, %v3255
      %v3278 = vpack.c.bf16 %v3258, %v3257
      %v3279 = vpack.c.bf16 %v3260, %v3259
      %v3280 = vpack.c.bf16 %v3262, %v3261
      %v3281 = vpack.c.bf16 %v3264, %v3263
      %v3282 = vpack.c.bf16 %v3266, %v3265
      %v3299 = vunpack.c.l.b16 %v3267
      %v3300 = vunpack.c.h.b16 %v3267
      %v3301 = vunpack.c.l.b16 %v3268
      %v3302 = vunpack.c.h.b16 %v3268
      %v3303 = vunpack.c.l.b16 %v3269
      %v3304 = vunpack.c.h.b16 %v3269
      %v3305 = vunpack.c.l.b16 %v3270
      %v3306 = vunpack.c.h.b16 %v3270
      %v3307 = vunpack.c.l.b16 %v3271
      %v3308 = vunpack.c.h.b16 %v3271
      %v3309 = vunpack.c.l.b16 %v3272
      %v3310 = vunpack.c.h.b16 %v3272
      %v3311 = vunpack.c.l.b16 %v3273
      %v3312 = vunpack.c.h.b16 %v3273
      %v3313 = vunpack.c.l.b16 %v3274
      %v3314 = vunpack.c.h.b16 %v3274
      %v3315 = vunpack.c.l.b16 %v3275
      %v3316 = vunpack.c.h.b16 %v3275
      %v3317 = vunpack.c.l.b16 %v3276
      %v3318 = vunpack.c.h.b16 %v3276
      %v3319 = vunpack.c.l.b16 %v3277
      %v3320 = vunpack.c.h.b16 %v3277
      %v3321 = vunpack.c.l.b16 %v3278
      %v3322 = vunpack.c.h.b16 %v3278
      %v3323 = vunpack.c.l.b16 %v3279
      %v3324 = vunpack.c.h.b16 %v3279
      %v3325 = vunpack.c.l.b16 %v3280
      %v3326 = vunpack.c.h.b16 %v3280
      %v3327 = vunpack.c.l.b16 %v3281
      %v3328 = vunpack.c.h.b16 %v3281
      %v3329 = vunpack.c.l.b16 %v3282
      %v3330 = vunpack.c.h.b16 %v3282
      %v3331 = vpack.c.b16 %v3299, %v3299
      %v3332 = vpack.c.b16 %v3300, %v3300
      %v3333 = vpack.c.b16 %v3301, %v3301
      %v3334 = vpack.c.b16 %v3302, %v3302
      %v3335 = vpack.c.b16 %v3303, %v3303
      %v3336 = vpack.c.b16 %v3304, %v3304
      %v3337 = vpack.c.b16 %v3305, %v3305
      %v3338 = vpack.c.b16 %v3306, %v3306
      %v3339 = vpack.c.b16 %v3307, %v3307
      %v3340 = vpack.c.b16 %v3308, %v3308
      %v3341 = vpack.c.b16 %v3309, %v3309
      %v3342 = vpack.c.b16 %v3310, %v3310
      %v3343 = vpack.c.b16 %v3311, %v3311
      %v3344 = vpack.c.b16 %v3312, %v3312
      %v3345 = vpack.c.b16 %v3313, %v3313
      %v3346 = vpack.c.b16 %v3314, %v3314
      %v3347 = vpack.c.b16 %v3315, %v3315
      %v3348 = vpack.c.b16 %v3316, %v3316
      %v3349 = vpack.c.b16 %v3317, %v3317
      %v3350 = vpack.c.b16 %v3318, %v3318
      %v3351 = vpack.c.b16 %v3319, %v3319
      %v3352 = vpack.c.b16 %v3320, %v3320
      %v3353 = vpack.c.b16 %v3321, %v3321
      %v3354 = vpack.c.b16 %v3322, %v3322
      %v3355 = vpack.c.b16 %v3323, %v3323
      %v3356 = vpack.c.b16 %v3324, %v3324
      %v3357 = vpack.c.b16 %v3325, %v3325
      %v3358 = vpack.c.b16 %v3326, %v3326
      %v3359 = vpack.c.b16 %v3327, %v3327
      %v3360 = vpack.c.b16 %v3328, %v3328
      %v3361 = vpack.c.b16 %v3329, %v3329
      %v3362 = vpack.c.b16 %v3330, %v3330
      %vm3395 = vcmask 257024
      %3396 = vst.msk [vmem:[%s170] sm:$0xf] %vm3395, %v3331
      %3397 = vst.msk [vmem:[%s170 + $0x4] sm:$0xf] %vm3395, %v3332
      %3398 = vst.msk [vmem:[%s170 + $0x10] sm:$0xf] %vm3395, %v3333
      %3399 = vst.msk [vmem:[%s170 + $0x14] sm:$0xf] %vm3395, %v3334
      %3400 = vst.msk [vmem:[%s170 + $0x20] sm:$0xf] %vm3395, %v3335
      %3401 = vst.msk [vmem:[%s170 + $0x24] sm:$0xf] %vm3395, %v3336
      %3402 = vst.msk [vmem:[%s170 + $0x30] sm:$0xf] %vm3395, %v3337
      %3403 = vst.msk [vmem:[%s170 + $0x34] sm:$0xf] %vm3395, %v3338
      %3404 = vst.msk [vmem:[%s170 + $0x40] sm:$0xf] %vm3395, %v3339
      %3405 = vst.msk [vmem:[%s170 + $0x44] sm:$0xf] %vm3395, %v3340
      %3406 = vst.msk [vmem:[%s170 + $0x50] sm:$0xf] %vm3395, %v3341
      %3407 = vst.msk [vmem:[%s170 + $0x54] sm:$0xf] %vm3395, %v3342
      %3408 = vst.msk [vmem:[%s170 + $0x60] sm:$0xf] %vm3395, %v3343
      %3409 = vst.msk [vmem:[%s170 + $0x64] sm:$0xf] %vm3395, %v3344
      %3410 = vst.msk [vmem:[%s170 + $0x70] sm:$0xf] %vm3395, %v3345
      %3411 = vst.msk [vmem:[%s170 + $0x74] sm:$0xf] %vm3395, %v3346
      %3412 = vst.msk [vmem:[%s170 + $0x80] sm:$0xf] %vm3395, %v3347
      %3413 = vst.msk [vmem:[%s170 + $0x84] sm:$0xf] %vm3395, %v3348
      %3414 = vst.msk [vmem:[%s170 + $0x90] sm:$0xf] %vm3395, %v3349
      %3415 = vst.msk [vmem:[%s170 + $0x94] sm:$0xf] %vm3395, %v3350
      %3416 = vst.msk [vmem:[%s170 + $0xa0] sm:$0xf] %vm3395, %v3351
      %3417 = vst.msk [vmem:[%s170 + $0xa4] sm:$0xf] %vm3395, %v3352
      %3418 = vst.msk [vmem:[%s170 + $0xb0] sm:$0xf] %vm3395, %v3353
      %3419 = vst.msk [vmem:[%s170 + $0xb4] sm:$0xf] %vm3395, %v3354
      %3420 = vst.msk [vmem:[%s170 + $0xc0] sm:$0xf] %vm3395, %v3355
      %3421 = vst.msk [vmem:[%s170 + $0xc4] sm:$0xf] %vm3395, %v3356
      %3422 = vst.msk [vmem:[%s170 + $0xd0] sm:$0xf] %vm3395, %v3357
      %3423 = vst.msk [vmem:[%s170 + $0xd4] sm:$0xf] %vm3395, %v3358
      %3424 = vst.msk [vmem:[%s170 + $0xe0] sm:$0xf] %vm3395, %v3359
      %3425 = vst.msk [vmem:[%s170 + $0xe4] sm:$0xf] %vm3395, %v3360
      %3426 = vst.msk [vmem:[%s170 + $0xf0] sm:$0xf] %vm3395, %v3361
      %3427 = vst.msk [vmem:[%s170 + $0xf4] sm:$0xf] %vm3395, %v3362
      %s3428 = scalar_lea.vmem %s1, 64
      %v3429 = vld [vmem:[%s3428] sm:$0xf]
      %v3430 = vld [vmem:[%s3428 + $0x4] sm:$0xf]
      %v3431 = vld [vmem:[%s3428 + $0x8] sm:$0xf]
      %v3432 = vld [vmem:[%s3428 + $0xc] sm:$0xf]
      %s3433 = scalar_lea.vmem %s1, 80
      %v3434 = vld [vmem:[%s3433] sm:$0xf]
      %v3435 = vld [vmem:[%s3433 + $0x4] sm:$0xf]
      %v3436 = vld [vmem:[%s3433 + $0x8] sm:$0xf]
      %v3437 = vld [vmem:[%s3433 + $0xc] sm:$0xf]
      %v3438 = vunpack.c.l.b16 %v677
      %v3439 = vunpack.c.l.b16 %v680
      %v3440 = vunpack.c.l.b16 %v684
      %v3441 = vunpack.c.l.b16 %v687
      %v3442 = vunpack.c.l.b16 %v691
      %v3443 = vunpack.c.l.b16 %v694
      %v3444 = vunpack.c.l.b16 %v698
      %v3445 = vunpack.c.l.b16 %v701
      %v3446 = vunpack.c.l.b16 %v705
      %v3447 = vunpack.c.l.b16 %v708
      %v3448 = vunpack.c.l.b16 %v712
      %v3449 = vunpack.c.l.b16 %v715
      %v3450 = vunpack.c.l.b16 %v719
      %v3451 = vunpack.c.l.b16 %v722
      %v3452 = vunpack.c.l.b16 %v726
      %v3453 = vunpack.c.l.b16 %v729
      %v3454 = vunpack.c.l.b16 %v733
      %v3455 = vunpack.c.l.b16 %v736
      %v3456 = vunpack.c.l.b16 %v740
      %v3457 = vunpack.c.l.b16 %v743
      %v3458 = vunpack.c.l.b16 %v747
      %v3459 = vunpack.c.l.b16 %v750
      %v3460 = vunpack.c.l.b16 %v754
      %v3461 = vunpack.c.l.b16 %v757
      %v3462 = vunpack.c.l.b16 %v761
      %v3463 = vunpack.c.l.b16 %v764
      %v3464 = vunpack.c.l.b16 %v768
      %v3465 = vunpack.c.l.b16 %v771
      %v3466 = vunpack.c.l.b16 %v775
      %v3467 = vunpack.c.l.b16 %v778
      %v3468 = vunpack.c.l.b16 %v782
      %v3469 = vunpack.c.l.b16 %v785
      %v3470 = vpack.c.b16 %v3439, %v3438
      %v3471 = vpack.c.b16 %v3441, %v3440
      %v3472 = vpack.c.b16 %v3443, %v3442
      %v3473 = vpack.c.b16 %v3445, %v3444
      %v3474 = vpack.c.b16 %v3447, %v3446
      %v3475 = vpack.c.b16 %v3449, %v3448
      %v3476 = vpack.c.b16 %v3451, %v3450
      %v3477 = vpack.c.b16 %v3453, %v3452
      %v3478 = vpack.c.b16 %v3455, %v3454
      %v3479 = vpack.c.b16 %v3457, %v3456
      %v3480 = vpack.c.b16 %v3459, %v3458
      %v3481 = vpack.c.b16 %v3461, %v3460
      %v3482 = vpack.c.b16 %v3463, %v3462
      %v3483 = vpack.c.b16 %v3465, %v3464
      %v3484 = vpack.c.b16 %v3467, %v3466
      %v3485 = vpack.c.b16 %v3469, %v3468
      %v3490 = vunpack.c.l.b16 %v3434
      %v3491 = vunpack.c.l.b16 %v3435
      %v3492 = vunpack.c.l.b16 %v3436
      %v3493 = vunpack.c.l.b16 %v3437
      %v3494 = vpack.c.b16 %v3491, %v3490
      %v3495 = vpack.c.b16 %v3493, %v3492
      %v3499 = vsel %vm2074, %v3470, 0
      %v3502 = vsel %vm2074, %v3471, 0
      %v3505 = vsel %vm2074, %v3472, 0
      %v3508 = vsel %vm2074, %v3473, 0
      %v3511 = vsel %vm2074, %v3474, 0
      %v3514 = vsel %vm2074, %v3475, 0
      %v3517 = vsel %vm2074, %v3476, 0
      %v3520 = vsel %vm2074, %v3477, 0
      %v3523 = vsel %vm2074, %v3478, 0
      %v3526 = vsel %vm2074, %v3479, 0
      %v3529 = vsel %vm2074, %v3480, 0
      %v3532 = vsel %vm2074, %v3481, 0
      %v3535 = vsel %vm2074, %v3482, 0
      %v3538 = vsel %vm2074, %v3483, 0
      %v3541 = vsel %vm2074, %v3484, 0
      %v3544 = vsel %vm2074, %v3485, 0
      %3546 = vmatprep.subr.bf16.mxu0 0
      %3547 = vmatpush1.bf16.msra.mxu0 0
      %3548 = vmatprep.subr.bf16.mxu0 0
      %3549 = vmatpush1.bf16.msra.mxu0 0
      %3550 = vmatprep.subr.bf16.mxu0 0
      %3551 = vmatpush1.bf16.msra.mxu0 0
      %3552 = vmatprep.subr.bf16.mxu0 0
      %3553 = vmatpush1.bf16.msra.mxu0 0
      %3554 = vmatprep.subr.bf16.mxu0 0
      %3555 = vmatpush1.bf16.msra.mxu0 0
      %3556 = vmatprep.subr.bf16.mxu0 0
      %3557 = vmatpush1.bf16.msra.mxu0 0
      %3558 = vmatprep.subr.bf16.mxu0 0
      %3559 = vmatpush1.bf16.msra.mxu0 %v3495
      %3560 = vmatprep.subr.bf16.mxu0 0
      %3561 = vmatpush1.bf16.msra.mxu0 %v3494
      %3562 = vmatprep.subr.bf16.mxu0 0
      %3563 = vmatpush2.bf16.msra.mxu0 0
      %3564 = vmatprep.subr.bf16.mxu0 0
      %3565 = vmatpush2.bf16.msra.mxu0 0
      %3566 = vmatprep.subr.bf16.mxu0 0
      %3567 = vmatpush2.bf16.msra.mxu0 0
      %3568 = vmatprep.subr.bf16.mxu0 0
      %3569 = vmatpush2.bf16.msra.mxu0 0
      %3570 = vmatprep.subr.bf16.mxu0 0
      %3571 = vmatpush2.bf16.msra.mxu0 0
      %3572 = vmatprep.subr.bf16.mxu0 0
      %3573 = vmatpush2.bf16.msra.mxu0 0
      %3574 = vmatprep.subr.bf16.mxu0 0
      %3575 = vmatpush2.bf16.msra.mxu0 0
      %3576 = vmatprep.subr.bf16.mxu0 0
      %3577 = vmatpush2.bf16.msra.mxu0 0
      %3578 = vmatprep.mubr.bf16.mxu0 0
      %3579 = vmatmul.mubr.bf16.gmra.mxu0 %v3499
      %v3580 = vpop.f32.mrf.mxu0
      %v3581 = vadd.f32 0.0, %v3580
      %v3582 = vpop.f32.mrf.mxu0
      %v3583 = vpop.f32.mrf.mxu0
      %v3584 = vadd.f32 0.0, %v3583
      %v3585 = vpop.f32.mrf.mxu0
      %3586 = vmatprep.mubr.bf16.mxu0 0
      %3587 = vmatmul.mubr.bf16.gmra.mxu0 %v3502
      %v3588 = vpop.f32.mrf.mxu0
      %v3589 = vadd.f32 0.0, %v3588
      %v3590 = vpop.f32.mrf.mxu0
      %v3591 = vpop.f32.mrf.mxu0
      %v3592 = vadd.f32 0.0, %v3591
      %v3593 = vpop.f32.mrf.mxu0
      %3594 = vmatprep.mubr.bf16.mxu0 0
      %3595 = vmatmul.mubr.bf16.gmra.mxu0 %v3505
      %v3596 = vpop.f32.mrf.mxu0
      %v3597 = vadd.f32 0.0, %v3596
      %v3598 = vpop.f32.mrf.mxu0
      %v3599 = vpop.f32.mrf.mxu0
      %v3600 = vadd.f32 0.0, %v3599
      %v3601 = vpop.f32.mrf.mxu0
      %3602 = vmatprep.mubr.bf16.mxu0 0
      %3603 = vmatmul.mubr.bf16.gmra.mxu0 %v3508
      %v3604 = vpop.f32.mrf.mxu0
      %v3605 = vadd.f32 0.0, %v3604
      %v3606 = vpop.f32.mrf.mxu0
      %v3607 = vpop.f32.mrf.mxu0
      %v3608 = vadd.f32 0.0, %v3607
      %v3609 = vpop.f32.mrf.mxu0
      %3610 = vmatprep.mubr.bf16.mxu0 0
      %3611 = vmatmul.mubr.bf16.gmra.mxu0 %v3511
      %v3612 = vpop.f32.mrf.mxu0
      %v3613 = vadd.f32 0.0, %v3612
      %v3614 = vpop.f32.mrf.mxu0
      %v3615 = vpop.f32.mrf.mxu0
      %v3616 = vadd.f32 0.0, %v3615
      %v3617 = vpop.f32.mrf.mxu0
      %3618 = vmatprep.mubr.bf16.mxu0 0
      %3619 = vmatmul.mubr.bf16.gmra.mxu0 %v3514
      %v3620 = vpop.f32.mrf.mxu0
      %v3621 = vadd.f32 0.0, %v3620
      %v3622 = vpop.f32.mrf.mxu0
      %v3623 = vpop.f32.mrf.mxu0
      %v3624 = vadd.f32 0.0, %v3623
      %v3625 = vpop.f32.mrf.mxu0
      %3626 = vmatprep.mubr.bf16.mxu0 0
      %3627 = vmatmul.mubr.bf16.gmra.mxu0 %v3517
      %v3628 = vpop.f32.mrf.mxu0
      %v3629 = vadd.f32 0.0, %v3628
      %v3630 = vpop.f32.mrf.mxu0
      %v3631 = vpop.f32.mrf.mxu0
      %v3632 = vadd.f32 0.0, %v3631
      %v3633 = vpop.f32.mrf.mxu0
      %3634 = vmatprep.mubr.bf16.mxu0 0
      %3635 = vmatmul.mubr.bf16.gmra.mxu0 %v3520
      %v3636 = vpop.f32.mrf.mxu0
      %v3637 = vadd.f32 0.0, %v3636
      %v3638 = vpop.f32.mrf.mxu0
      %v3639 = vpop.f32.mrf.mxu0
      %v3640 = vadd.f32 0.0, %v3639
      %v3641 = vpop.f32.mrf.mxu0
      %3642 = vmatprep.mubr.bf16.mxu0 0
      %3643 = vmatmul.mubr.bf16.gmra.mxu0 %v3523
      %v3644 = vpop.f32.mrf.mxu0
      %v3645 = vadd.f32 0.0, %v3644
      %v3646 = vpop.f32.mrf.mxu0
      %v3647 = vpop.f32.mrf.mxu0
      %v3648 = vadd.f32 0.0, %v3647
      %v3649 = vpop.f32.mrf.mxu0
      %3650 = vmatprep.mubr.bf16.mxu0 0
      %3651 = vmatmul.mubr.bf16.gmra.mxu0 %v3526
      %v3652 = vpop.f32.mrf.mxu0
      %v3653 = vadd.f32 0.0, %v3652
      %v3654 = vpop.f32.mrf.mxu0
      %v3655 = vpop.f32.mrf.mxu0
      %v3656 = vadd.f32 0.0, %v3655
      %v3657 = vpop.f32.mrf.mxu0
      %3658 = vmatprep.mubr.bf16.mxu0 0
      %3659 = vmatmul.mubr.bf16.gmra.mxu0 %v3529
      %v3660 = vpop.f32.mrf.mxu0
      %v3661 = vadd.f32 0.0, %v3660
      %v3662 = vpop.f32.mrf.mxu0
      %v3663 = vpop.f32.mrf.mxu0
      %v3664 = vadd.f32 0.0, %v3663
      %v3665 = vpop.f32.mrf.mxu0
      %3666 = vmatprep.mubr.bf16.mxu0 0
      %3667 = vmatmul.mubr.bf16.gmra.mxu0 %v3532
      %v3668 = vpop.f32.mrf.mxu0
      %v3669 = vadd.f32 0.0, %v3668
      %v3670 = vpop.f32.mrf.mxu0
      %v3671 = vpop.f32.mrf.mxu0
      %v3672 = vadd.f32 0.0, %v3671
      %v3673 = vpop.f32.mrf.mxu0
      %3674 = vmatprep.mubr.bf16.mxu0 0
      %3675 = vmatmul.mubr.bf16.gmra.mxu0 %v3535
      %v3676 = vpop.f32.mrf.mxu0
      %v3677 = vadd.f32 0.0, %v3676
      %v3678 = vpop.f32.mrf.mxu0
      %v3679 = vpop.f32.mrf.mxu0
      %v3680 = vadd.f32 0.0, %v3679
      %v3681 = vpop.f32.mrf.mxu0
      %3682 = vmatprep.mubr.bf16.mxu0 0
      %3683 = vmatmul.mubr.bf16.gmra.mxu0 %v3538
      %v3684 = vpop.f32.mrf.mxu0
      %v3685 = vadd.f32 0.0, %v3684
      %v3686 = vpop.f32.mrf.mxu0
      %v3687 = vpop.f32.mrf.mxu0
      %v3688 = vadd.f32 0.0, %v3687
      %v3689 = vpop.f32.mrf.mxu0
      %3690 = vmatprep.mubr.bf16.mxu0 0
      %3691 = vmatmul.mubr.bf16.gmra.mxu0 %v3541
      %v3692 = vpop.f32.mrf.mxu0
      %v3693 = vadd.f32 0.0, %v3692
      %v3694 = vpop.f32.mrf.mxu0
      %v3695 = vpop.f32.mrf.mxu0
      %v3696 = vadd.f32 0.0, %v3695
      %v3697 = vpop.f32.mrf.mxu0
      %3698 = vmatprep.mubr.bf16.mxu0 0
      %3699 = vmatmul.mubr.bf16.gmra.mxu0 %v3544
      %v3700 = vpop.f32.mrf.mxu0
      %v3701 = vadd.f32 0.0, %v3700
      %v3702 = vpop.f32.mrf.mxu0
      %v3703 = vpop.f32.mrf.mxu0
      %v3704 = vadd.f32 0.0, %v3703
      %v3705 = vpop.f32.mrf.mxu0
      %3706 = vdwg.mxu0
      %v3711 = vunpack.c.l.b16 %v3429
      %v3712 = vunpack.c.l.b16 %v3430
      %v3713 = vunpack.c.l.b16 %v3431
      %v3714 = vunpack.c.l.b16 %v3432
      %v3715 = vpack.c.b16 %v3712, %v3711
      %v3716 = vpack.c.b16 %v3714, %v3713
      %3719 = vmatprep.subr.bf16.mxu0 0
      %3720 = vmatpush1.bf16.msra.mxu0 0
      %3721 = vmatprep.subr.bf16.mxu0 0
      %3722 = vmatpush1.bf16.msra.mxu0 0
      %3723 = vmatprep.subr.bf16.mxu0 0
      %3724 = vmatpush1.bf16.msra.mxu0 0
      %3725 = vmatprep.subr.bf16.mxu0 0
      %3726 = vmatpush1.bf16.msra.mxu0 0
      %3727 = vmatprep.subr.bf16.mxu0 0
      %3728 = vmatpush1.bf16.msra.mxu0 0
      %3729 = vmatprep.subr.bf16.mxu0 0
      %3730 = vmatpush1.bf16.msra.mxu0 0
      %3731 = vmatprep.subr.bf16.mxu0 0
      %3732 = vmatpush1.bf16.msra.mxu0 %v3716
      %3733 = vmatprep.subr.bf16.mxu0 0
      %3734 = vmatpush1.bf16.msra.mxu0 %v3715
      %3735 = vmatprep.subr.bf16.mxu0 0
      %3736 = vmatpush2.bf16.msra.mxu0 0
      %3737 = vmatprep.subr.bf16.mxu0 0
      %3738 = vmatpush2.bf16.msra.mxu0 0
      %3739 = vmatprep.subr.bf16.mxu0 0
      %3740 = vmatpush2.bf16.msra.mxu0 0
      %3741 = vmatprep.subr.bf16.mxu0 0
      %3742 = vmatpush2.bf16.msra.mxu0 0
      %3743 = vmatprep.subr.bf16.mxu0 0
      %3744 = vmatpush2.bf16.msra.mxu0 0
      %3745 = vmatprep.subr.bf16.mxu0 0
      %3746 = vmatpush2.bf16.msra.mxu0 0
      %3747 = vmatprep.subr.bf16.mxu0 0
      %3748 = vmatpush2.bf16.msra.mxu0 0
      %3749 = vmatprep.subr.bf16.mxu0 0
      %3750 = vmatpush2.bf16.msra.mxu0 0
      %3751 = vmatprep.mubr.bf16.mxu0 0
      %3752 = vmatmul.mubr.bf16.gmra.mxu0 %v2076
      %v3753 = vpop.f32.mrf.mxu0
      %v3754 = vadd.f32 %v3581, %v3753
      %v3755 = vpop.f32.mrf.mxu0
      %v3756 = vpop.f32.mrf.mxu0
      %v3757 = vadd.f32 %v3584, %v3756
      %v3758 = vpop.f32.mrf.mxu0
      %3759 = vmatprep.mubr.bf16.mxu0 0
      %3760 = vmatmul.mubr.bf16.gmra.mxu0 %v2079
      %v3761 = vpop.f32.mrf.mxu0
      %v3762 = vadd.f32 %v3589, %v3761
      %v3763 = vpop.f32.mrf.mxu0
      %v3764 = vpop.f32.mrf.mxu0
      %v3765 = vadd.f32 %v3592, %v3764
      %v3766 = vpop.f32.mrf.mxu0
      %3767 = vmatprep.mubr.bf16.mxu0 0
      %3768 = vmatmul.mubr.bf16.gmra.mxu0 %v2082
      %v3769 = vpop.f32.mrf.mxu0
      %v3770 = vadd.f32 %v3597, %v3769
      %v3771 = vpop.f32.mrf.mxu0
      %v3772 = vpop.f32.mrf.mxu0
      %v3773 = vadd.f32 %v3600, %v3772
      %v3774 = vpop.f32.mrf.mxu0
      %3775 = vmatprep.mubr.bf16.mxu0 0
      %3776 = vmatmul.mubr.bf16.gmra.mxu0 %v2085
      %v3777 = vpop.f32.mrf.mxu0
      %v3778 = vadd.f32 %v3605, %v3777
      %v3779 = vpop.f32.mrf.mxu0
      %v3780 = vpop.f32.mrf.mxu0
      %v3781 = vadd.f32 %v3608, %v3780
      %v3782 = vpop.f32.mrf.mxu0
      %3783 = vmatprep.mubr.bf16.mxu0 0
      %3784 = vmatmul.mubr.bf16.gmra.mxu0 %v2088
      %v3785 = vpop.f32.mrf.mxu0
      %v3786 = vadd.f32 %v3613, %v3785
      %v3787 = vpop.f32.mrf.mxu0
      %v3788 = vpop.f32.mrf.mxu0
      %v3789 = vadd.f32 %v3616, %v3788
      %v3790 = vpop.f32.mrf.mxu0
      %3791 = vmatprep.mubr.bf16.mxu0 0
      %3792 = vmatmul.mubr.bf16.gmra.mxu0 %v2091
      %v3793 = vpop.f32.mrf.mxu0
      %v3794 = vadd.f32 %v3621, %v3793
      %v3795 = vpop.f32.mrf.mxu0
      %v3796 = vpop.f32.mrf.mxu0
      %v3797 = vadd.f32 %v3624, %v3796
      %v3798 = vpop.f32.mrf.mxu0
      %3799 = vmatprep.mubr.bf16.mxu0 0
      %3800 = vmatmul.mubr.bf16.gmra.mxu0 %v2094
      %v3801 = vpop.f32.mrf.mxu0
      %v3802 = vadd.f32 %v3629, %v3801
      %v3803 = vpop.f32.mrf.mxu0
      %v3804 = vpop.f32.mrf.mxu0
      %v3805 = vadd.f32 %v3632, %v3804
      %v3806 = vpop.f32.mrf.mxu0
      %3807 = vmatprep.mubr.bf16.mxu0 0
      %3808 = vmatmul.mubr.bf16.gmra.mxu0 %v2097
      %v3809 = vpop.f32.mrf.mxu0
      %v3810 = vadd.f32 %v3637, %v3809
      %v3811 = vpop.f32.mrf.mxu0
      %v3812 = vpop.f32.mrf.mxu0
      %v3813 = vadd.f32 %v3640, %v3812
      %v3814 = vpop.f32.mrf.mxu0
      %3815 = vmatprep.mubr.bf16.mxu0 0
      %3816 = vmatmul.mubr.bf16.gmra.mxu0 %v2100
      %v3817 = vpop.f32.mrf.mxu0
      %v3818 = vadd.f32 %v3645, %v3817
      %v3819 = vpop.f32.mrf.mxu0
      %v3820 = vpop.f32.mrf.mxu0
      %v3821 = vadd.f32 %v3648, %v3820
      %v3822 = vpop.f32.mrf.mxu0
      %3823 = vmatprep.mubr.bf16.mxu0 0
      %3824 = vmatmul.mubr.bf16.gmra.mxu0 %v2103
      %v3825 = vpop.f32.mrf.mxu0
      %v3826 = vadd.f32 %v3653, %v3825
      %v3827 = vpop.f32.mrf.mxu0
      %v3828 = vpop.f32.mrf.mxu0
      %v3829 = vadd.f32 %v3656, %v3828
      %v3830 = vpop.f32.mrf.mxu0
      %3831 = vmatprep.mubr.bf16.mxu0 0
      %3832 = vmatmul.mubr.bf16.gmra.mxu0 %v2106
      %v3833 = vpop.f32.mrf.mxu0
      %v3834 = vadd.f32 %v3661, %v3833
      %v3835 = vpop.f32.mrf.mxu0
      %v3836 = vpop.f32.mrf.mxu0
      %v3837 = vadd.f32 %v3664, %v3836
      %v3838 = vpop.f32.mrf.mxu0
      %3839 = vmatprep.mubr.bf16.mxu0 0
      %3840 = vmatmul.mubr.bf16.gmra.mxu0 %v2109
      %v3841 = vpop.f32.mrf.mxu0
      %v3842 = vadd.f32 %v3669, %v3841
      %v3843 = vpop.f32.mrf.mxu0
      %v3844 = vpop.f32.mrf.mxu0
      %v3845 = vadd.f32 %v3672, %v3844
      %v3846 = vpop.f32.mrf.mxu0
      %3847 = vmatprep.mubr.bf16.mxu0 0
      %3848 = vmatmul.mubr.bf16.gmra.mxu0 %v2112
      %v3849 = vpop.f32.mrf.mxu0
      %v3850 = vadd.f32 %v3677, %v3849
      %v3851 = vpop.f32.mrf.mxu0
      %v3852 = vpop.f32.mrf.mxu0
      %v3853 = vadd.f32 %v3680, %v3852
      %v3854 = vpop.f32.mrf.mxu0
      %3855 = vmatprep.mubr.bf16.mxu0 0
      %3856 = vmatmul.mubr.bf16.gmra.mxu0 %v2115
      %v3857 = vpop.f32.mrf.mxu0
      %v3858 = vadd.f32 %v3685, %v3857
      %v3859 = vpop.f32.mrf.mxu0
      %v3860 = vpop.f32.mrf.mxu0
      %v3861 = vadd.f32 %v3688, %v3860
      %v3862 = vpop.f32.mrf.mxu0
      %3863 = vmatprep.mubr.bf16.mxu0 0
      %3864 = vmatmul.mubr.bf16.gmra.mxu0 %v2118
      %v3865 = vpop.f32.mrf.mxu0
      %v3866 = vadd.f32 %v3693, %v3865
      %v3867 = vpop.f32.mrf.mxu0
      %v3868 = vpop.f32.mrf.mxu0
      %v3869 = vadd.f32 %v3696, %v3868
      %v3870 = vpop.f32.mrf.mxu0
      %3871 = vmatprep.mubr.bf16.mxu0 0
      %3872 = vmatmul.mubr.bf16.gmra.mxu0 %v2121
      %v3873 = vpop.f32.mrf.mxu0
      %v3874 = vadd.f32 %v3701, %v3873
      %v3875 = vpop.f32.mrf.mxu0
      %v3876 = vpop.f32.mrf.mxu0
      %v3877 = vadd.f32 %v3704, %v3876
      %v3878 = vpop.f32.mrf.mxu0
      %3879 = vdwg.mxu0
      %s3880 = scalar_lea.vmem %s1, 96
      %v3881 = vld [vmem:[%s3880] sm:$0xf]
      %v3882 = vld [vmem:[%s3880 + $0x4] sm:$0xf]
      %v3883 = vld [vmem:[%s3880 + $0x8] sm:$0xf]
      %v3884 = vld [vmem:[%s3880 + $0xc] sm:$0xf]
      %v3889 = vunpack.c.l.b16 %v3881
      %v3890 = vunpack.c.l.b16 %v3882
      %v3891 = vunpack.c.l.b16 %v3883
      %v3892 = vunpack.c.l.b16 %v3884
      %v3893 = vpack.c.b16 %v3890, %v3889
      %v3894 = vpack.c.b16 %v3892, %v3891
      %3897 = vmatprep.subr.bf16.mxu0 0
      %3898 = vmatpush1.bf16.msra.mxu0 0
      %3899 = vmatprep.subr.bf16.mxu0 0
      %3900 = vmatpush1.bf16.msra.mxu0 0
      %3901 = vmatprep.subr.bf16.mxu0 0
      %3902 = vmatpush1.bf16.msra.mxu0 0
      %3903 = vmatprep.subr.bf16.mxu0 0
      %3904 = vmatpush1.bf16.msra.mxu0 0
      %3905 = vmatprep.subr.bf16.mxu0 0
      %3906 = vmatpush1.bf16.msra.mxu0 0
      %3907 = vmatprep.subr.bf16.mxu0 0
      %3908 = vmatpush1.bf16.msra.mxu0 0
      %3909 = vmatprep.subr.bf16.mxu0 0
      %3910 = vmatpush1.bf16.msra.mxu0 %v3894
      %3911 = vmatprep.subr.bf16.mxu0 0
      %3912 = vmatpush1.bf16.msra.mxu0 %v3893
      %3913 = vmatprep.subr.bf16.mxu0 0
      %3914 = vmatpush2.bf16.msra.mxu0 0
      %3915 = vmatprep.subr.bf16.mxu0 0
      %3916 = vmatpush2.bf16.msra.mxu0 0
      %3917 = vmatprep.subr.bf16.mxu0 0
      %3918 = vmatpush2.bf16.msra.mxu0 0
      %3919 = vmatprep.subr.bf16.mxu0 0
      %3920 = vmatpush2.bf16.msra.mxu0 0
      %3921 = vmatprep.subr.bf16.mxu0 0
      %3922 = vmatpush2.bf16.msra.mxu0 0
      %3923 = vmatprep.subr.bf16.mxu0 0
      %3924 = vmatpush2.bf16.msra.mxu0 0
      %3925 = vmatprep.subr.bf16.mxu0 0
      %3926 = vmatpush2.bf16.msra.mxu0 0
      %3927 = vmatprep.subr.bf16.mxu0 0
      %3928 = vmatpush2.bf16.msra.mxu0 0
      %3929 = vmatprep.mubr.bf16.mxu0 0
      %3930 = vmatmul.mubr.bf16.gmra.mxu0 %v2957
      %v3931 = vpop.f32.mrf.mxu0
      %v3932 = vadd.f32 0.0, %v3931
      %v3933 = vpop.f32.mrf.mxu0
      %v3934 = vpop.f32.mrf.mxu0
      %v3935 = vadd.f32 0.0, %v3934
      %v3936 = vpop.f32.mrf.mxu0
      %3937 = vmatprep.mubr.bf16.mxu0 0
      %3938 = vmatmul.mubr.bf16.gmra.mxu0 %v2960
      %v3939 = vpop.f32.mrf.mxu0
      %v3940 = vadd.f32 0.0, %v3939
      %v3941 = vpop.f32.mrf.mxu0
      %v3942 = vpop.f32.mrf.mxu0
      %v3943 = vadd.f32 0.0, %v3942
      %v3944 = vpop.f32.mrf.mxu0
      %3945 = vmatprep.mubr.bf16.mxu0 0
      %3946 = vmatmul.mubr.bf16.gmra.mxu0 %v2963
      %v3947 = vpop.f32.mrf.mxu0
      %v3948 = vadd.f32 0.0, %v3947
      %v3949 = vpop.f32.mrf.mxu0
      %v3950 = vpop.f32.mrf.mxu0
      %v3951 = vadd.f32 0.0, %v3950
      %v3952 = vpop.f32.mrf.mxu0
      %3953 = vmatprep.mubr.bf16.mxu0 0
      %3954 = vmatmul.mubr.bf16.gmra.mxu0 %v2966
      %v3955 = vpop.f32.mrf.mxu0
      %v3956 = vadd.f32 0.0, %v3955
      %v3957 = vpop.f32.mrf.mxu0
      %v3958 = vpop.f32.mrf.mxu0
      %v3959 = vadd.f32 0.0, %v3958
      %v3960 = vpop.f32.mrf.mxu0
      %3961 = vmatprep.mubr.bf16.mxu0 0
      %3962 = vmatmul.mubr.bf16.gmra.mxu0 %v2969
      %v3963 = vpop.f32.mrf.mxu0
      %v3964 = vadd.f32 0.0, %v3963
      %v3965 = vpop.f32.mrf.mxu0
      %v3966 = vpop.f32.mrf.mxu0
      %v3967 = vadd.f32 0.0, %v3966
      %v3968 = vpop.f32.mrf.mxu0
      %3969 = vmatprep.mubr.bf16.mxu0 0
      %3970 = vmatmul.mubr.bf16.gmra.mxu0 %v2972
      %v3971 = vpop.f32.mrf.mxu0
      %v3972 = vadd.f32 0.0, %v3971
      %v3973 = vpop.f32.mrf.mxu0
      %v3974 = vpop.f32.mrf.mxu0
      %v3975 = vadd.f32 0.0, %v3974
      %v3976 = vpop.f32.mrf.mxu0
      %3977 = vmatprep.mubr.bf16.mxu0 0
      %3978 = vmatmul.mubr.bf16.gmra.mxu0 %v2975
      %v3979 = vpop.f32.mrf.mxu0
      %v3980 = vadd.f32 0.0, %v3979
      %v3981 = vpop.f32.mrf.mxu0
      %v3982 = vpop.f32.mrf.mxu0
      %v3983 = vadd.f32 0.0, %v3982
      %v3984 = vpop.f32.mrf.mxu0
      %3985 = vmatprep.mubr.bf16.mxu0 0
      %3986 = vmatmul.mubr.bf16.gmra.mxu0 %v2978
      %v3987 = vpop.f32.mrf.mxu0
      %v3988 = vadd.f32 0.0, %v3987
      %v3989 = vpop.f32.mrf.mxu0
      %v3990 = vpop.f32.mrf.mxu0
      %v3991 = vadd.f32 0.0, %v3990
      %v3992 = vpop.f32.mrf.mxu0
      %3993 = vmatprep.mubr.bf16.mxu0 0
      %3994 = vmatmul.mubr.bf16.gmra.mxu0 %v2981
      %v3995 = vpop.f32.mrf.mxu0
      %v3996 = vadd.f32 0.0, %v3995
      %v3997 = vpop.f32.mrf.mxu0
      %v3998 = vpop.f32.mrf.mxu0
      %v3999 = vadd.f32 0.0, %v3998
      %v4000 = vpop.f32.mrf.mxu0
      %4001 = vmatprep.mubr.bf16.mxu0 0
      %4002 = vmatmul.mubr.bf16.gmra.mxu0 %v2984
      %v4003 = vpop.f32.mrf.mxu0
      %v4004 = vadd.f32 0.0, %v4003
      %v4005 = vpop.f32.mrf.mxu0
      %v4006 = vpop.f32.mrf.mxu0
      %v4007 = vadd.f32 0.0, %v4006
      %v4008 = vpop.f32.mrf.mxu0
      %4009 = vmatprep.mubr.bf16.mxu0 0
      %4010 = vmatmul.mubr.bf16.gmra.mxu0 %v2987
      %v4011 = vpop.f32.mrf.mxu0
      %v4012 = vadd.f32 0.0, %v4011
      %v4013 = vpop.f32.mrf.mxu0
      %v4014 = vpop.f32.mrf.mxu0
      %v4015 = vadd.f32 0.0, %v4014
      %v4016 = vpop.f32.mrf.mxu0
      %4017 = vmatprep.mubr.bf16.mxu0 0
      %4018 = vmatmul.mubr.bf16.gmra.mxu0 %v2990
      %v4019 = vpop.f32.mrf.mxu0
      %v4020 = vadd.f32 0.0, %v4019
      %v4021 = vpop.f32.mrf.mxu0
      %v4022 = vpop.f32.mrf.mxu0
      %v4023 = vadd.f32 0.0, %v4022
      %v4024 = vpop.f32.mrf.mxu0
      %4025 = vmatprep.mubr.bf16.mxu0 0
      %4026 = vmatmul.mubr.bf16.gmra.mxu0 %v2993
      %v4027 = vpop.f32.mrf.mxu0
      %v4028 = vadd.f32 0.0, %v4027
      %v4029 = vpop.f32.mrf.mxu0
      %v4030 = vpop.f32.mrf.mxu0
      %v4031 = vadd.f32 0.0, %v4030
      %v4032 = vpop.f32.mrf.mxu0
      %4033 = vmatprep.mubr.bf16.mxu0 0
      %4034 = vmatmul.mubr.bf16.gmra.mxu0 %v2996
      %v4035 = vpop.f32.mrf.mxu0
      %v4036 = vadd.f32 0.0, %v4035
      %v4037 = vpop.f32.mrf.mxu0
      %v4038 = vpop.f32.mrf.mxu0
      %v4039 = vadd.f32 0.0, %v4038
      %v4040 = vpop.f32.mrf.mxu0
      %4041 = vmatprep.mubr.bf16.mxu0 0
      %4042 = vmatmul.mubr.bf16.gmra.mxu0 %v2999
      %v4043 = vpop.f32.mrf.mxu0
      %v4044 = vadd.f32 0.0, %v4043
      %v4045 = vpop.f32.mrf.mxu0
      %v4046 = vpop.f32.mrf.mxu0
      %v4047 = vadd.f32 0.0, %v4046
      %v4048 = vpop.f32.mrf.mxu0
      %4049 = vmatprep.mubr.bf16.mxu0 0
      %4050 = vmatmul.mubr.bf16.gmra.mxu0 %v3002
      %v4051 = vpop.f32.mrf.mxu0
      %v4052 = vadd.f32 0.0, %v4051
      %v4053 = vpop.f32.mrf.mxu0
      %v4054 = vpop.f32.mrf.mxu0
      %v4055 = vadd.f32 0.0, %v4054
      %v4056 = vpop.f32.mrf.mxu0
      %4057 = vdwg.mxu0
      %v4058 = vadd.f32 %v3754, %v3932
      %v4059 = vadd.f32 %v3757, %v3935
      %v4060 = vadd.f32 %v3762, %v3940
      %v4061 = vadd.f32 %v3765, %v3943
      %v4062 = vadd.f32 %v3770, %v3948
      %v4063 = vadd.f32 %v3773, %v3951
      %v4064 = vadd.f32 %v3778, %v3956
      %v4065 = vadd.f32 %v3781, %v3959
      %v4066 = vadd.f32 %v3786, %v3964
      %v4067 = vadd.f32 %v3789, %v3967
      %v4068 = vadd.f32 %v3794, %v3972
      %v4069 = vadd.f32 %v3797, %v3975
      %v4070 = vadd.f32 %v3802, %v3980
      %v4071 = vadd.f32 %v3805, %v3983
      %v4072 = vadd.f32 %v3810, %v3988
      %v4073 = vadd.f32 %v3813, %v3991
      %v4074 = vadd.f32 %v3818, %v3996
      %v4075 = vadd.f32 %v3821, %v3999
      %v4076 = vadd.f32 %v3826, %v4004
      %v4077 = vadd.f32 %v3829, %v4007
      %v4078 = vadd.f32 %v3834, %v4012
      %v4079 = vadd.f32 %v3837, %v4015
      %v4080 = vadd.f32 %v3842, %v4020
      %v4081 = vadd.f32 %v3845, %v4023
      %v4082 = vadd.f32 %v3850, %v4028
      %v4083 = vadd.f32 %v3853, %v4031
      %v4084 = vadd.f32 %v3858, %v4036
      %v4085 = vadd.f32 %v3861, %v4039
      %v4086 = vadd.f32 %v3866, %v4044
      %v4087 = vadd.f32 %v3869, %v4047
      %v4088 = vadd.f32 %v3874, %v4052
      %v4089 = vadd.f32 %v3877, %v4055
      %s4090 = scalar_lea.vmem %s1, 112
      %v4091 = vld [vmem:[%s4090] sm:$0xf]
      %v4092 = vld [vmem:[%s4090 + $0x4] sm:$0xf]
      %v4093 = vld [vmem:[%s4090 + $0x8] sm:$0xf]
      %v4094 = vld [vmem:[%s4090 + $0xc] sm:$0xf]
      %v4095 = vunpack.c.l.b16 %v1286
      %v4096 = vunpack.c.l.b16 %v1289
      %v4097 = vunpack.c.l.b16 %v1293
      %v4098 = vunpack.c.l.b16 %v1296
      %v4099 = vunpack.c.l.b16 %v1300
      %v4100 = vunpack.c.l.b16 %v1303
      %v4101 = vunpack.c.l.b16 %v1307
      %v4102 = vunpack.c.l.b16 %v1310
      %v4103 = vunpack.c.l.b16 %v1314
      %v4104 = vunpack.c.l.b16 %v1317
      %v4105 = vunpack.c.l.b16 %v1321
      %v4106 = vunpack.c.l.b16 %v1324
      %v4107 = vunpack.c.l.b16 %v1328
      %v4108 = vunpack.c.l.b16 %v1331
      %v4109 = vunpack.c.l.b16 %v1335
      %v4110 = vunpack.c.l.b16 %v1338
      %v4111 = vunpack.c.l.b16 %v1342
      %v4112 = vunpack.c.l.b16 %v1345
      %v4113 = vunpack.c.l.b16 %v1349
      %v4114 = vunpack.c.l.b16 %v1352
      %v4115 = vunpack.c.l.b16 %v1356
      %v4116 = vunpack.c.l.b16 %v1359
      %v4117 = vunpack.c.l.b16 %v1363
      %v4118 = vunpack.c.l.b16 %v1366
      %v4119 = vunpack.c.l.b16 %v1370
      %v4120 = vunpack.c.l.b16 %v1373
      %v4121 = vunpack.c.l.b16 %v1377
      %v4122 = vunpack.c.l.b16 %v1380
      %v4123 = vunpack.c.l.b16 %v1384
      %v4124 = vunpack.c.l.b16 %v1387
      %v4125 = vunpack.c.l.b16 %v1391
      %v4126 = vunpack.c.l.b16 %v1394
      %v4127 = vpack.c.b16 %v4096, %v4095
      %v4128 = vpack.c.b16 %v4098, %v4097
      %v4129 = vpack.c.b16 %v4100, %v4099
      %v4130 = vpack.c.b16 %v4102, %v4101
      %v4131 = vpack.c.b16 %v4104, %v4103
      %v4132 = vpack.c.b16 %v4106, %v4105
      %v4133 = vpack.c.b16 %v4108, %v4107
      %v4134 = vpack.c.b16 %v4110, %v4109
      %v4135 = vpack.c.b16 %v4112, %v4111
      %v4136 = vpack.c.b16 %v4114, %v4113
      %v4137 = vpack.c.b16 %v4116, %v4115
      %v4138 = vpack.c.b16 %v4118, %v4117
      %v4139 = vpack.c.b16 %v4120, %v4119
      %v4140 = vpack.c.b16 %v4122, %v4121
      %v4141 = vpack.c.b16 %v4124, %v4123
      %v4142 = vpack.c.b16 %v4126, %v4125
      %v4147 = vunpack.c.l.b16 %v4091
      %v4148 = vunpack.c.l.b16 %v4092
      %v4149 = vunpack.c.l.b16 %v4093
      %v4150 = vunpack.c.l.b16 %v4094
      %v4151 = vpack.c.b16 %v4148, %v4147
      %v4152 = vpack.c.b16 %v4150, %v4149
      %v4156 = vsel %vm2074, %v4127, 0
      %v4159 = vsel %vm2074, %v4128, 0
      %v4162 = vsel %vm2074, %v4129, 0
      %v4165 = vsel %vm2074, %v4130, 0
      %v4168 = vsel %vm2074, %v4131, 0
      %v4171 = vsel %vm2074, %v4132, 0
      %v4174 = vsel %vm2074, %v4133, 0
      %v4177 = vsel %vm2074, %v4134, 0
      %v4180 = vsel %vm2074, %v4135, 0
      %v4183 = vsel %vm2074, %v4136, 0
      %v4186 = vsel %vm2074, %v4137, 0
      %v4189 = vsel %vm2074, %v4138, 0
      %v4192 = vsel %vm2074, %v4139, 0
      %v4195 = vsel %vm2074, %v4140, 0
      %v4198 = vsel %vm2074, %v4141, 0
      %v4201 = vsel %vm2074, %v4142, 0
      %4203 = vmatprep.subr.bf16.mxu0 0
      %4204 = vmatpush1.bf16.msra.mxu0 0
      %4205 = vmatprep.subr.bf16.mxu0 0
      %4206 = vmatpush1.bf16.msra.mxu0 0
      %4207 = vmatprep.subr.bf16.mxu0 0
      %4208 = vmatpush1.bf16.msra.mxu0 0
      %4209 = vmatprep.subr.bf16.mxu0 0
      %4210 = vmatpush1.bf16.msra.mxu0 0
      %4211 = vmatprep.subr.bf16.mxu0 0
      %4212 = vmatpush1.bf16.msra.mxu0 0
      %4213 = vmatprep.subr.bf16.mxu0 0
      %4214 = vmatpush1.bf16.msra.mxu0 0
      %4215 = vmatprep.subr.bf16.mxu0 0
      %4216 = vmatpush1.bf16.msra.mxu0 %v4152
      %4217 = vmatprep.subr.bf16.mxu0 0
      %4218 = vmatpush1.bf16.msra.mxu0 %v4151
      %4219 = vmatprep.subr.bf16.mxu0 0
      %4220 = vmatpush2.bf16.msra.mxu0 0
      %4221 = vmatprep.subr.bf16.mxu0 0
      %4222 = vmatpush2.bf16.msra.mxu0 0
      %4223 = vmatprep.subr.bf16.mxu0 0
      %4224 = vmatpush2.bf16.msra.mxu0 0
      %4225 = vmatprep.subr.bf16.mxu0 0
      %4226 = vmatpush2.bf16.msra.mxu0 0
      %4227 = vmatprep.subr.bf16.mxu0 0
      %4228 = vmatpush2.bf16.msra.mxu0 0
      %4229 = vmatprep.subr.bf16.mxu0 0
      %4230 = vmatpush2.bf16.msra.mxu0 0
      %4231 = vmatprep.subr.bf16.mxu0 0
      %4232 = vmatpush2.bf16.msra.mxu0 0
      %4233 = vmatprep.subr.bf16.mxu0 0
      %4234 = vmatpush2.bf16.msra.mxu0 0
      %4235 = vmatprep.mubr.bf16.mxu0 0
      %4236 = vmatmul.mubr.bf16.gmra.mxu0 %v4156
      %v4237 = vpop.f32.mrf.mxu0
      %v4238 = vadd.f32 0.0, %v4237
      %v4239 = vpop.f32.mrf.mxu0
      %v4240 = vpop.f32.mrf.mxu0
      %v4241 = vadd.f32 0.0, %v4240
      %v4242 = vpop.f32.mrf.mxu0
      %4243 = vmatprep.mubr.bf16.mxu0 0
      %4244 = vmatmul.mubr.bf16.gmra.mxu0 %v4159
      %v4245 = vpop.f32.mrf.mxu0
      %v4246 = vadd.f32 0.0, %v4245
      %v4247 = vpop.f32.mrf.mxu0
      %v4248 = vpop.f32.mrf.mxu0
      %v4249 = vadd.f32 0.0, %v4248
      %v4250 = vpop.f32.mrf.mxu0
      %4251 = vmatprep.mubr.bf16.mxu0 0
      %4252 = vmatmul.mubr.bf16.gmra.mxu0 %v4162
      %v4253 = vpop.f32.mrf.mxu0
      %v4254 = vadd.f32 0.0, %v4253
      %v4255 = vpop.f32.mrf.mxu0
      %v4256 = vpop.f32.mrf.mxu0
      %v4257 = vadd.f32 0.0, %v4256
      %v4258 = vpop.f32.mrf.mxu0
      %4259 = vmatprep.mubr.bf16.mxu0 0
      %4260 = vmatmul.mubr.bf16.gmra.mxu0 %v4165
      %v4261 = vpop.f32.mrf.mxu0
      %v4262 = vadd.f32 0.0, %v4261
      %v4263 = vpop.f32.mrf.mxu0
      %v4264 = vpop.f32.mrf.mxu0
      %v4265 = vadd.f32 0.0, %v4264
      %v4266 = vpop.f32.mrf.mxu0
      %4267 = vmatprep.mubr.bf16.mxu0 0
      %4268 = vmatmul.mubr.bf16.gmra.mxu0 %v4168
      %v4269 = vpop.f32.mrf.mxu0
      %v4270 = vadd.f32 0.0, %v4269
      %v4271 = vpop.f32.mrf.mxu0
      %v4272 = vpop.f32.mrf.mxu0
      %v4273 = vadd.f32 0.0, %v4272
      %v4274 = vpop.f32.mrf.mxu0
      %4275 = vmatprep.mubr.bf16.mxu0 0
      %4276 = vmatmul.mubr.bf16.gmra.mxu0 %v4171
      %v4277 = vpop.f32.mrf.mxu0
      %v4278 = vadd.f32 0.0, %v4277
      %v4279 = vpop.f32.mrf.mxu0
      %v4280 = vpop.f32.mrf.mxu0
      %v4281 = vadd.f32 0.0, %v4280
      %v4282 = vpop.f32.mrf.mxu0
      %4283 = vmatprep.mubr.bf16.mxu0 0
      %4284 = vmatmul.mubr.bf16.gmra.mxu0 %v4174
      %v4285 = vpop.f32.mrf.mxu0
      %v4286 = vadd.f32 0.0, %v4285
      %v4287 = vpop.f32.mrf.mxu0
      %v4288 = vpop.f32.mrf.mxu0
      %v4289 = vadd.f32 0.0, %v4288
      %v4290 = vpop.f32.mrf.mxu0
      %4291 = vmatprep.mubr.bf16.mxu0 0
      %4292 = vmatmul.mubr.bf16.gmra.mxu0 %v4177
      %v4293 = vpop.f32.mrf.mxu0
      %v4294 = vadd.f32 0.0, %v4293
      %v4295 = vpop.f32.mrf.mxu0
      %v4296 = vpop.f32.mrf.mxu0
      %v4297 = vadd.f32 0.0, %v4296
      %v4298 = vpop.f32.mrf.mxu0
      %4299 = vmatprep.mubr.bf16.mxu0 0
      %4300 = vmatmul.mubr.bf16.gmra.mxu0 %v4180
      %v4301 = vpop.f32.mrf.mxu0
      %v4302 = vadd.f32 0.0, %v4301
      %v4303 = vpop.f32.mrf.mxu0
      %v4304 = vpop.f32.mrf.mxu0
      %v4305 = vadd.f32 0.0, %v4304
      %v4306 = vpop.f32.mrf.mxu0
      %4307 = vmatprep.mubr.bf16.mxu0 0
      %4308 = vmatmul.mubr.bf16.gmra.mxu0 %v4183
      %v4309 = vpop.f32.mrf.mxu0
      %v4310 = vadd.f32 0.0, %v4309
      %v4311 = vpop.f32.mrf.mxu0
      %v4312 = vpop.f32.mrf.mxu0
      %v4313 = vadd.f32 0.0, %v4312
      %v4314 = vpop.f32.mrf.mxu0
      %4315 = vmatprep.mubr.bf16.mxu0 0
      %4316 = vmatmul.mubr.bf16.gmra.mxu0 %v4186
      %v4317 = vpop.f32.mrf.mxu0
      %v4318 = vadd.f32 0.0, %v4317
      %v4319 = vpop.f32.mrf.mxu0
      %v4320 = vpop.f32.mrf.mxu0
      %v4321 = vadd.f32 0.0, %v4320
      %v4322 = vpop.f32.mrf.mxu0
      %4323 = vmatprep.mubr.bf16.mxu0 0
      %4324 = vmatmul.mubr.bf16.gmra.mxu0 %v4189
      %v4325 = vpop.f32.mrf.mxu0
      %v4326 = vadd.f32 0.0, %v4325
      %v4327 = vpop.f32.mrf.mxu0
      %v4328 = vpop.f32.mrf.mxu0
      %v4329 = vadd.f32 0.0, %v4328
      %v4330 = vpop.f32.mrf.mxu0
      %4331 = vmatprep.mubr.bf16.mxu0 0
      %4332 = vmatmul.mubr.bf16.gmra.mxu0 %v4192
      %v4333 = vpop.f32.mrf.mxu0
      %v4334 = vadd.f32 0.0, %v4333
      %v4335 = vpop.f32.mrf.mxu0
      %v4336 = vpop.f32.mrf.mxu0
      %v4337 = vadd.f32 0.0, %v4336
      %v4338 = vpop.f32.mrf.mxu0
      %4339 = vmatprep.mubr.bf16.mxu0 0
      %4340 = vmatmul.mubr.bf16.gmra.mxu0 %v4195
      %v4341 = vpop.f32.mrf.mxu0
      %v4342 = vadd.f32 0.0, %v4341
      %v4343 = vpop.f32.mrf.mxu0
      %v4344 = vpop.f32.mrf.mxu0
      %v4345 = vadd.f32 0.0, %v4344
      %v4346 = vpop.f32.mrf.mxu0
      %4347 = vmatprep.mubr.bf16.mxu0 0
      %4348 = vmatmul.mubr.bf16.gmra.mxu0 %v4198
      %v4349 = vpop.f32.mrf.mxu0
      %v4350 = vadd.f32 0.0, %v4349
      %v4351 = vpop.f32.mrf.mxu0
      %v4352 = vpop.f32.mrf.mxu0
      %v4353 = vadd.f32 0.0, %v4352
      %v4354 = vpop.f32.mrf.mxu0
      %4355 = vmatprep.mubr.bf16.mxu0 0
      %4356 = vmatmul.mubr.bf16.gmra.mxu0 %v4201
      %v4357 = vpop.f32.mrf.mxu0
      %v4358 = vadd.f32 0.0, %v4357
      %v4359 = vpop.f32.mrf.mxu0
      %v4360 = vpop.f32.mrf.mxu0
      %v4361 = vadd.f32 0.0, %v4360
      %v4362 = vpop.f32.mrf.mxu0
      %4363 = vdwg.mxu0
      %v4364 = vadd.f32 %v4058, %v4238
      %v4365 = vadd.f32 %v4059, %v4241
      %v4366 = vadd.f32 %v4060, %v4246
      %v4367 = vadd.f32 %v4061, %v4249
      %v4368 = vadd.f32 %v4062, %v4254
      %v4369 = vadd.f32 %v4063, %v4257
      %v4370 = vadd.f32 %v4064, %v4262
      %v4371 = vadd.f32 %v4065, %v4265
      %v4372 = vadd.f32 %v4066, %v4270
      %v4373 = vadd.f32 %v4067, %v4273
      %v4374 = vadd.f32 %v4068, %v4278
      %v4375 = vadd.f32 %v4069, %v4281
      %v4376 = vadd.f32 %v4070, %v4286
      %v4377 = vadd.f32 %v4071, %v4289
      %v4378 = vadd.f32 %v4072, %v4294
      %v4379 = vadd.f32 %v4073, %v4297
      %v4380 = vadd.f32 %v4074, %v4302
      %v4381 = vadd.f32 %v4075, %v4305
      %v4382 = vadd.f32 %v4076, %v4310
      %v4383 = vadd.f32 %v4077, %v4313
      %v4384 = vadd.f32 %v4078, %v4318
      %v4385 = vadd.f32 %v4079, %v4321
      %v4386 = vadd.f32 %v4080, %v4326
      %v4387 = vadd.f32 %v4081, %v4329
      %v4388 = vadd.f32 %v4082, %v4334
      %v4389 = vadd.f32 %v4083, %v4337
      %v4390 = vadd.f32 %v4084, %v4342
      %v4391 = vadd.f32 %v4085, %v4345
      %v4392 = vadd.f32 %v4086, %v4350
      %v4393 = vadd.f32 %v4087, %v4353
      %v4394 = vadd.f32 %v4088, %v4358
      %v4395 = vadd.f32 %v4089, %v4361
      %v4396 = vadd.f32 %v4364, %v3201
      %v4397 = vadd.f32 %v4365, %v3201
      %v4398 = vadd.f32 %v4366, %v3201
      %v4399 = vadd.f32 %v4367, %v3201
      %v4400 = vadd.f32 %v4368, %v3201
      %v4401 = vadd.f32 %v4369, %v3201
      %v4402 = vadd.f32 %v4370, %v3201
      %v4403 = vadd.f32 %v4371, %v3201
      %v4404 = vadd.f32 %v4372, %v3201
      %v4405 = vadd.f32 %v4373, %v3201
      %v4406 = vadd.f32 %v4374, %v3201
      %v4407 = vadd.f32 %v4375, %v3201
      %v4408 = vadd.f32 %v4376, %v3201
      %v4409 = vadd.f32 %v4377, %v3201
      %v4410 = vadd.f32 %v4378, %v3201
      %v4411 = vadd.f32 %v4379, %v3201
      %v4412 = vadd.f32 %v4380, %v3201
      %v4413 = vadd.f32 %v4381, %v3201
      %v4414 = vadd.f32 %v4382, %v3201
      %v4415 = vadd.f32 %v4383, %v3201
      %v4416 = vadd.f32 %v4384, %v3201
      %v4417 = vadd.f32 %v4385, %v3201
      %v4418 = vadd.f32 %v4386, %v3201
      %v4419 = vadd.f32 %v4387, %v3201
      %v4420 = vadd.f32 %v4388, %v3201
      %v4421 = vadd.f32 %v4389, %v3201
      %v4422 = vadd.f32 %v4390, %v3201
      %v4423 = vadd.f32 %v4391, %v3201
      %v4424 = vadd.f32 %v4392, %v3201
      %v4425 = vadd.f32 %v4393, %v3201
      %v4426 = vadd.f32 %v4394, %v3201
      %v4427 = vadd.f32 %v4395, %v3201
      %v4428 = vmax.f32 %v4396, 0.0
      %v4429 = vmax.f32 %v4397, 0.0
      %v4430 = vmax.f32 %v4398, 0.0
      %v4431 = vmax.f32 %v4399, 0.0
      %v4432 = vmax.f32 %v4400, 0.0
      %v4433 = vmax.f32 %v4401, 0.0
      %v4434 = vmax.f32 %v4402, 0.0
      %v4435 = vmax.f32 %v4403, 0.0
      %v4436 = vmax.f32 %v4404, 0.0
      %v4437 = vmax.f32 %v4405, 0.0
      %v4438 = vmax.f32 %v4406, 0.0
      %v4439 = vmax.f32 %v4407, 0.0
      %v4440 = vmax.f32 %v4408, 0.0
      %v4441 = vmax.f32 %v4409, 0.0
      %v4442 = vmax.f32 %v4410, 0.0
      %v4443 = vmax.f32 %v4411, 0.0
      %v4444 = vmax.f32 %v4412, 0.0
      %v4445 = vmax.f32 %v4413, 0.0
      %v4446 = vmax.f32 %v4414, 0.0
      %v4447 = vmax.f32 %v4415, 0.0
      %v4448 = vmax.f32 %v4416, 0.0
      %v4449 = vmax.f32 %v4417, 0.0
      %v4450 = vmax.f32 %v4418, 0.0
      %v4451 = vmax.f32 %v4419, 0.0
      %v4452 = vmax.f32 %v4420, 0.0
      %v4453 = vmax.f32 %v4421, 0.0
      %v4454 = vmax.f32 %v4422, 0.0
      %v4455 = vmax.f32 %v4423, 0.0
      %v4456 = vmax.f32 %v4424, 0.0
      %v4457 = vmax.f32 %v4425, 0.0
      %v4458 = vmax.f32 %v4426, 0.0
      %v4459 = vmax.f32 %v4427, 0.0
      %v4460 = vpack.c.bf16 %v4429, %v4428
      %v4461 = vpack.c.bf16 %v4431, %v4430
      %v4462 = vpack.c.bf16 %v4433, %v4432
      %v4463 = vpack.c.bf16 %v4435, %v4434
      %v4464 = vpack.c.bf16 %v4437, %v4436
      %v4465 = vpack.c.bf16 %v4439, %v4438
      %v4466 = vpack.c.bf16 %v4441, %v4440
      %v4467 = vpack.c.bf16 %v4443, %v4442
      %v4468 = vpack.c.bf16 %v4445, %v4444
      %v4469 = vpack.c.bf16 %v4447, %v4446
      %v4470 = vpack.c.bf16 %v4449, %v4448
      %v4471 = vpack.c.bf16 %v4451, %v4450
      %v4472 = vpack.c.bf16 %v4453, %v4452
      %v4473 = vpack.c.bf16 %v4455, %v4454
      %v4474 = vpack.c.bf16 %v4457, %v4456
      %v4475 = vpack.c.bf16 %v4459, %v4458
      %v4492 = vunpack.c.l.b16 %v4460
      %v4493 = vunpack.c.h.b16 %v4460
      %v4494 = vunpack.c.l.b16 %v4461
      %v4495 = vunpack.c.h.b16 %v4461
      %v4496 = vunpack.c.l.b16 %v4462
      %v4497 = vunpack.c.h.b16 %v4462
      %v4498 = vunpack.c.l.b16 %v4463
      %v4499 = vunpack.c.h.b16 %v4463
      %v4500 = vunpack.c.l.b16 %v4464
      %v4501 = vunpack.c.h.b16 %v4464
      %v4502 = vunpack.c.l.b16 %v4465
      %v4503 = vunpack.c.h.b16 %v4465
      %v4504 = vunpack.c.l.b16 %v4466
      %v4505 = vunpack.c.h.b16 %v4466
      %v4506 = vunpack.c.l.b16 %v4467
      %v4507 = vunpack.c.h.b16 %v4467
      %v4508 = vunpack.c.l.b16 %v4468
      %v4509 = vunpack.c.h.b16 %v4468
      %v4510 = vunpack.c.l.b16 %v4469
      %v4511 = vunpack.c.h.b16 %v4469
      %v4512 = vunpack.c.l.b16 %v4470
      %v4513 = vunpack.c.h.b16 %v4470
      %v4514 = vunpack.c.l.b16 %v4471
      %v4515 = vunpack.c.h.b16 %v4471
      %v4516 = vunpack.c.l.b16 %v4472
      %v4517 = vunpack.c.h.b16 %v4472
      %v4518 = vunpack.c.l.b16 %v4473
      %v4519 = vunpack.c.h.b16 %v4473
      %v4520 = vunpack.c.l.b16 %v4474
      %v4521 = vunpack.c.h.b16 %v4474
      %v4522 = vunpack.c.l.b16 %v4475
      %v4523 = vunpack.c.h.b16 %v4475
      %v4524 = vpack.c.b16 %v4492, %v4492
      %v4525 = vpack.c.b16 %v4493, %v4493
      %v4526 = vpack.c.b16 %v4494, %v4494
      %v4527 = vpack.c.b16 %v4495, %v4495
      %v4528 = vpack.c.b16 %v4496, %v4496
      %v4529 = vpack.c.b16 %v4497, %v4497
      %v4530 = vpack.c.b16 %v4498, %v4498
      %v4531 = vpack.c.b16 %v4499, %v4499
      %v4532 = vpack.c.b16 %v4500, %v4500
      %v4533 = vpack.c.b16 %v4501, %v4501
      %v4534 = vpack.c.b16 %v4502, %v4502
      %v4535 = vpack.c.b16 %v4503, %v4503
      %v4536 = vpack.c.b16 %v4504, %v4504
      %v4537 = vpack.c.b16 %v4505, %v4505
      %v4538 = vpack.c.b16 %v4506, %v4506
      %v4539 = vpack.c.b16 %v4507, %v4507
      %v4540 = vpack.c.b16 %v4508, %v4508
      %v4541 = vpack.c.b16 %v4509, %v4509
      %v4542 = vpack.c.b16 %v4510, %v4510
      %v4543 = vpack.c.b16 %v4511, %v4511
      %v4544 = vpack.c.b16 %v4512, %v4512
      %v4545 = vpack.c.b16 %v4513, %v4513
      %v4546 = vpack.c.b16 %v4514, %v4514
      %v4547 = vpack.c.b16 %v4515, %v4515
      %v4548 = vpack.c.b16 %v4516, %v4516
      %v4549 = vpack.c.b16 %v4517, %v4517
      %v4550 = vpack.c.b16 %v4518, %v4518
      %v4551 = vpack.c.b16 %v4519, %v4519
      %v4552 = vpack.c.b16 %v4520, %v4520
      %v4553 = vpack.c.b16 %v4521, %v4521
      %v4554 = vpack.c.b16 %v4522, %v4522
      %v4555 = vpack.c.b16 %v4523, %v4523
      %4556 = vrot.lane.b32.xlu0 %v4524, 32
      %v4557 = vpop.permute.xlu0 %4556
      %4558 = vrot.lane.b32.xlu0 %v4525, 32
      %v4559 = vpop.permute.xlu0 %4558
      %4560 = vrot.lane.b32.xlu0 %v4526, 32
      %v4561 = vpop.permute.xlu0 %4560
      %4562 = vrot.lane.b32.xlu0 %v4527, 32
      %v4563 = vpop.permute.xlu0 %4562
      %4564 = vrot.lane.b32.xlu0 %v4528, 32
      %v4565 = vpop.permute.xlu0 %4564
      %4566 = vrot.lane.b32.xlu0 %v4529, 32
      %v4567 = vpop.permute.xlu0 %4566
      %4568 = vrot.lane.b32.xlu0 %v4530, 32
      %v4569 = vpop.permute.xlu0 %4568
      %4570 = vrot.lane.b32.xlu0 %v4531, 32
      %v4571 = vpop.permute.xlu0 %4570
      %4572 = vrot.lane.b32.xlu0 %v4532, 32
      %v4573 = vpop.permute.xlu0 %4572
      %4574 = vrot.lane.b32.xlu0 %v4533, 32
      %v4575 = vpop.permute.xlu0 %4574
      %4576 = vrot.lane.b32.xlu0 %v4534, 32
      %v4577 = vpop.permute.xlu0 %4576
      %4578 = vrot.lane.b32.xlu0 %v4535, 32
      %v4579 = vpop.permute.xlu0 %4578
      %4580 = vrot.lane.b32.xlu0 %v4536, 32
      %v4581 = vpop.permute.xlu0 %4580
      %4582 = vrot.lane.b32.xlu0 %v4537, 32
      %v4583 = vpop.permute.xlu0 %4582
      %4584 = vrot.lane.b32.xlu0 %v4538, 32
      %v4585 = vpop.permute.xlu0 %4584
      %4586 = vrot.lane.b32.xlu0 %v4539, 32
      %v4587 = vpop.permute.xlu0 %4586
      %4588 = vrot.lane.b32.xlu0 %v4540, 32
      %v4589 = vpop.permute.xlu0 %4588
      %4590 = vrot.lane.b32.xlu0 %v4541, 32
      %v4591 = vpop.permute.xlu0 %4590
      %4592 = vrot.lane.b32.xlu0 %v4542, 32
      %v4593 = vpop.permute.xlu0 %4592
      %4594 = vrot.lane.b32.xlu0 %v4543, 32
      %v4595 = vpop.permute.xlu0 %4594
      %4596 = vrot.lane.b32.xlu0 %v4544, 32
      %v4597 = vpop.permute.xlu0 %4596
      %4598 = vrot.lane.b32.xlu0 %v4545, 32
      %v4599 = vpop.permute.xlu0 %4598
      %4600 = vrot.lane.b32.xlu0 %v4546, 32
      %v4601 = vpop.permute.xlu0 %4600
      %4602 = vrot.lane.b32.xlu0 %v4547, 32
      %v4603 = vpop.permute.xlu0 %4602
      %4604 = vrot.lane.b32.xlu0 %v4548, 32
      %v4605 = vpop.permute.xlu0 %4604
      %4606 = vrot.lane.b32.xlu0 %v4549, 32
      %v4607 = vpop.permute.xlu0 %4606
      %4608 = vrot.lane.b32.xlu0 %v4550, 32
      %v4609 = vpop.permute.xlu0 %4608
      %4610 = vrot.lane.b32.xlu0 %v4551, 32
      %v4611 = vpop.permute.xlu0 %4610
      %4612 = vrot.lane.b32.xlu0 %v4552, 32
      %v4613 = vpop.permute.xlu0 %4612
      %4614 = vrot.lane.b32.xlu0 %v4553, 32
      %v4615 = vpop.permute.xlu0 %4614
      %4616 = vrot.lane.b32.xlu0 %v4554, 32
      %v4617 = vpop.permute.xlu0 %4616
      %4618 = vrot.lane.b32.xlu0 %v4555, 32
      %v4619 = vpop.permute.xlu0 %4618
      %vm4652 = vcmask 519424
      %4653 = vst.msk [vmem:[%s170] sm:$0xf] %vm4652, %v4557
      %4654 = vst.msk [vmem:[%s170 + $0x4] sm:$0xf] %vm4652, %v4559
      %4655 = vst.msk [vmem:[%s170 + $0x10] sm:$0xf] %vm4652, %v4561
      %4656 = vst.msk [vmem:[%s170 + $0x14] sm:$0xf] %vm4652, %v4563
      %4657 = vst.msk [vmem:[%s170 + $0x20] sm:$0xf] %vm4652, %v4565
      %4658 = vst.msk [vmem:[%s170 + $0x24] sm:$0xf] %vm4652, %v4567
      %4659 = vst.msk [vmem:[%s170 + $0x30] sm:$0xf] %vm4652, %v4569
      %4660 = vst.msk [vmem:[%s170 + $0x34] sm:$0xf] %vm4652, %v4571
      %4661 = vst.msk [vmem:[%s170 + $0x40] sm:$0xf] %vm4652, %v4573
      %4662 = vst.msk [vmem:[%s170 + $0x44] sm:$0xf] %vm4652, %v4575
      %4663 = vst.msk [vmem:[%s170 + $0x50] sm:$0xf] %vm4652, %v4577
      %4664 = vst.msk [vmem:[%s170 + $0x54] sm:$0xf] %vm4652, %v4579
      %4665 = vst.msk [vmem:[%s170 + $0x60] sm:$0xf] %vm4652, %v4581
      %4666 = vst.msk [vmem:[%s170 + $0x64] sm:$0xf] %vm4652, %v4583
      %4667 = vst.msk [vmem:[%s170 + $0x70] sm:$0xf] %vm4652, %v4585
      %4668 = vst.msk [vmem:[%s170 + $0x74] sm:$0xf] %vm4652, %v4587
      %4669 = vst.msk [vmem:[%s170 + $0x80] sm:$0xf] %vm4652, %v4589
      %4670 = vst.msk [vmem:[%s170 + $0x84] sm:$0xf] %vm4652, %v4591
      %4671 = vst.msk [vmem:[%s170 + $0x90] sm:$0xf] %vm4652, %v4593
      %4672 = vst.msk [vmem:[%s170 + $0x94] sm:$0xf] %vm4652, %v4595
      %4673 = vst.msk [vmem:[%s170 + $0xa0] sm:$0xf] %vm4652, %v4597
      %4674 = vst.msk [vmem:[%s170 + $0xa4] sm:$0xf] %vm4652, %v4599
      %4675 = vst.msk [vmem:[%s170 + $0xb0] sm:$0xf] %vm4652, %v4601
      %4676 = vst.msk [vmem:[%s170 + $0xb4] sm:$0xf] %vm4652, %v4603
      %4677 = vst.msk [vmem:[%s170 + $0xc0] sm:$0xf] %vm4652, %v4605
      %4678 = vst.msk [vmem:[%s170 + $0xc4] sm:$0xf] %vm4652, %v4607
      %4679 = vst.msk [vmem:[%s170 + $0xd0] sm:$0xf] %vm4652, %v4609
      %4680 = vst.msk [vmem:[%s170 + $0xd4] sm:$0xf] %vm4652, %v4611
      %4681 = vst.msk [vmem:[%s170 + $0xe0] sm:$0xf] %vm4652, %v4613
      %4682 = vst.msk [vmem:[%s170 + $0xe4] sm:$0xf] %vm4652, %v4615
      %4683 = vst.msk [vmem:[%s170 + $0xf0] sm:$0xf] %vm4652, %v4617
      %4684 = vst.msk [vmem:[%s170 + $0xf4] sm:$0xf] %vm4652, %v4619
      %s4685 = scalar_lea.vmem %s1, 128
      %v4686 = vld [vmem:[%s4685] sm:$0xf]
      %v4687 = vld [vmem:[%s4685 + $0x4] sm:$0xf]
      %v4688 = vld [vmem:[%s4685 + $0x8] sm:$0xf]
      %v4689 = vld [vmem:[%s4685 + $0xc] sm:$0xf]
      %s4690 = scalar_lea.vmem %s1, 144
      %v4691 = vld [vmem:[%s4690] sm:$0xf]
      %v4692 = vld [vmem:[%s4690 + $0x4] sm:$0xf]
      %v4693 = vld [vmem:[%s4690 + $0x8] sm:$0xf]
      %v4694 = vld [vmem:[%s4690 + $0xc] sm:$0xf]
      %v4699 = vunpack.c.l.b16 %v4691
      %v4700 = vunpack.c.l.b16 %v4692
      %v4701 = vunpack.c.l.b16 %v4693
      %v4702 = vunpack.c.l.b16 %v4694
      %v4703 = vpack.c.b16 %v4700, %v4699
      %v4704 = vpack.c.b16 %v4702, %v4701
      %4707 = vmatprep.subr.bf16.mxu0 0
      %4708 = vmatpush1.bf16.msra.mxu0 0
      %4709 = vmatprep.subr.bf16.mxu0 0
      %4710 = vmatpush1.bf16.msra.mxu0 0
      %4711 = vmatprep.subr.bf16.mxu0 0
      %4712 = vmatpush1.bf16.msra.mxu0 0
      %4713 = vmatprep.subr.bf16.mxu0 0
      %4714 = vmatpush1.bf16.msra.mxu0 0
      %4715 = vmatprep.subr.bf16.mxu0 0
      %4716 = vmatpush1.bf16.msra.mxu0 0
      %4717 = vmatprep.subr.bf16.mxu0 0
      %4718 = vmatpush1.bf16.msra.mxu0 0
      %4719 = vmatprep.subr.bf16.mxu0 0
      %4720 = vmatpush1.bf16.msra.mxu0 %v4704
      %4721 = vmatprep.subr.bf16.mxu0 0
      %4722 = vmatpush1.bf16.msra.mxu0 %v4703
      %4723 = vmatprep.subr.bf16.mxu0 0
      %4724 = vmatpush2.bf16.msra.mxu0 0
      %4725 = vmatprep.subr.bf16.mxu0 0
      %4726 = vmatpush2.bf16.msra.mxu0 0
      %4727 = vmatprep.subr.bf16.mxu0 0
      %4728 = vmatpush2.bf16.msra.mxu0 0
      %4729 = vmatprep.subr.bf16.mxu0 0
      %4730 = vmatpush2.bf16.msra.mxu0 0
      %4731 = vmatprep.subr.bf16.mxu0 0
      %4732 = vmatpush2.bf16.msra.mxu0 0
      %4733 = vmatprep.subr.bf16.mxu0 0
      %4734 = vmatpush2.bf16.msra.mxu0 0
      %4735 = vmatprep.subr.bf16.mxu0 0
      %4736 = vmatpush2.bf16.msra.mxu0 0
      %4737 = vmatprep.subr.bf16.mxu0 0
      %4738 = vmatpush2.bf16.msra.mxu0 0
      %4739 = vmatprep.mubr.bf16.mxu0 0
      %4740 = vmatmul.mubr.bf16.gmra.mxu0 %v2957
      %v4741 = vpop.f32.mrf.mxu0
      %v4742 = vadd.f32 0.0, %v4741
      %v4743 = vpop.f32.mrf.mxu0
      %v4744 = vpop.f32.mrf.mxu0
      %v4745 = vadd.f32 0.0, %v4744
      %v4746 = vpop.f32.mrf.mxu0
      %4747 = vmatprep.mubr.bf16.mxu0 0
      %4748 = vmatmul.mubr.bf16.gmra.mxu0 %v2960
      %v4749 = vpop.f32.mrf.mxu0
      %v4750 = vadd.f32 0.0, %v4749
      %v4751 = vpop.f32.mrf.mxu0
      %v4752 = vpop.f32.mrf.mxu0
      %v4753 = vadd.f32 0.0, %v4752
      %v4754 = vpop.f32.mrf.mxu0
      %4755 = vmatprep.mubr.bf16.mxu0 0
      %4756 = vmatmul.mubr.bf16.gmra.mxu0 %v2963
      %v4757 = vpop.f32.mrf.mxu0
      %v4758 = vadd.f32 0.0, %v4757
      %v4759 = vpop.f32.mrf.mxu0
      %v4760 = vpop.f32.mrf.mxu0
      %v4761 = vadd.f32 0.0, %v4760
      %v4762 = vpop.f32.mrf.mxu0
      %4763 = vmatprep.mubr.bf16.mxu0 0
      %4764 = vmatmul.mubr.bf16.gmra.mxu0 %v2966
      %v4765 = vpop.f32.mrf.mxu0
      %v4766 = vadd.f32 0.0, %v4765
      %v4767 = vpop.f32.mrf.mxu0
      %v4768 = vpop.f32.mrf.mxu0
      %v4769 = vadd.f32 0.0, %v4768
      %v4770 = vpop.f32.mrf.mxu0
      %4771 = vmatprep.mubr.bf16.mxu0 0
      %4772 = vmatmul.mubr.bf16.gmra.mxu0 %v2969
      %v4773 = vpop.f32.mrf.mxu0
      %v4774 = vadd.f32 0.0, %v4773
      %v4775 = vpop.f32.mrf.mxu0
      %v4776 = vpop.f32.mrf.mxu0
      %v4777 = vadd.f32 0.0, %v4776
      %v4778 = vpop.f32.mrf.mxu0
      %4779 = vmatprep.mubr.bf16.mxu0 0
      %4780 = vmatmul.mubr.bf16.gmra.mxu0 %v2972
      %v4781 = vpop.f32.mrf.mxu0
      %v4782 = vadd.f32 0.0, %v4781
      %v4783 = vpop.f32.mrf.mxu0
      %v4784 = vpop.f32.mrf.mxu0
      %v4785 = vadd.f32 0.0, %v4784
      %v4786 = vpop.f32.mrf.mxu0
      %4787 = vmatprep.mubr.bf16.mxu0 0
      %4788 = vmatmul.mubr.bf16.gmra.mxu0 %v2975
      %v4789 = vpop.f32.mrf.mxu0
      %v4790 = vadd.f32 0.0, %v4789
      %v4791 = vpop.f32.mrf.mxu0
      %v4792 = vpop.f32.mrf.mxu0
      %v4793 = vadd.f32 0.0, %v4792
      %v4794 = vpop.f32.mrf.mxu0
      %4795 = vmatprep.mubr.bf16.mxu0 0
      %4796 = vmatmul.mubr.bf16.gmra.mxu0 %v2978
      %v4797 = vpop.f32.mrf.mxu0
      %v4798 = vadd.f32 0.0, %v4797
      %v4799 = vpop.f32.mrf.mxu0
      %v4800 = vpop.f32.mrf.mxu0
      %v4801 = vadd.f32 0.0, %v4800
      %v4802 = vpop.f32.mrf.mxu0
      %4803 = vmatprep.mubr.bf16.mxu0 0
      %4804 = vmatmul.mubr.bf16.gmra.mxu0 %v2981
      %v4805 = vpop.f32.mrf.mxu0
      %v4806 = vadd.f32 0.0, %v4805
      %v4807 = vpop.f32.mrf.mxu0
      %v4808 = vpop.f32.mrf.mxu0
      %v4809 = vadd.f32 0.0, %v4808
      %v4810 = vpop.f32.mrf.mxu0
      %4811 = vmatprep.mubr.bf16.mxu0 0
      %4812 = vmatmul.mubr.bf16.gmra.mxu0 %v2984
      %v4813 = vpop.f32.mrf.mxu0
      %v4814 = vadd.f32 0.0, %v4813
      %v4815 = vpop.f32.mrf.mxu0
      %v4816 = vpop.f32.mrf.mxu0
      %v4817 = vadd.f32 0.0, %v4816
      %v4818 = vpop.f32.mrf.mxu0
      %4819 = vmatprep.mubr.bf16.mxu0 0
      %4820 = vmatmul.mubr.bf16.gmra.mxu0 %v2987
      %v4821 = vpop.f32.mrf.mxu0
      %v4822 = vadd.f32 0.0, %v4821
      %v4823 = vpop.f32.mrf.mxu0
      %v4824 = vpop.f32.mrf.mxu0
      %v4825 = vadd.f32 0.0, %v4824
      %v4826 = vpop.f32.mrf.mxu0
      %4827 = vmatprep.mubr.bf16.mxu0 0
      %4828 = vmatmul.mubr.bf16.gmra.mxu0 %v2990
      %v4829 = vpop.f32.mrf.mxu0
      %v4830 = vadd.f32 0.0, %v4829
      %v4831 = vpop.f32.mrf.mxu0
      %v4832 = vpop.f32.mrf.mxu0
      %v4833 = vadd.f32 0.0, %v4832
      %v4834 = vpop.f32.mrf.mxu0
      %4835 = vmatprep.mubr.bf16.mxu0 0
      %4836 = vmatmul.mubr.bf16.gmra.mxu0 %v2993
      %v4837 = vpop.f32.mrf.mxu0
      %v4838 = vadd.f32 0.0, %v4837
      %v4839 = vpop.f32.mrf.mxu0
      %v4840 = vpop.f32.mrf.mxu0
      %v4841 = vadd.f32 0.0, %v4840
      %v4842 = vpop.f32.mrf.mxu0
      %4843 = vmatprep.mubr.bf16.mxu0 0
      %4844 = vmatmul.mubr.bf16.gmra.mxu0 %v2996
      %v4845 = vpop.f32.mrf.mxu0
      %v4846 = vadd.f32 0.0, %v4845
      %v4847 = vpop.f32.mrf.mxu0
      %v4848 = vpop.f32.mrf.mxu0
      %v4849 = vadd.f32 0.0, %v4848
      %v4850 = vpop.f32.mrf.mxu0
      %4851 = vmatprep.mubr.bf16.mxu0 0
      %4852 = vmatmul.mubr.bf16.gmra.mxu0 %v2999
      %v4853 = vpop.f32.mrf.mxu0
      %v4854 = vadd.f32 0.0, %v4853
      %v4855 = vpop.f32.mrf.mxu0
      %v4856 = vpop.f32.mrf.mxu0
      %v4857 = vadd.f32 0.0, %v4856
      %v4858 = vpop.f32.mrf.mxu0
      %4859 = vmatprep.mubr.bf16.mxu0 0
      %4860 = vmatmul.mubr.bf16.gmra.mxu0 %v3002
      %v4861 = vpop.f32.mrf.mxu0
      %v4862 = vadd.f32 0.0, %v4861
      %v4863 = vpop.f32.mrf.mxu0
      %v4864 = vpop.f32.mrf.mxu0
      %v4865 = vadd.f32 0.0, %v4864
      %v4866 = vpop.f32.mrf.mxu0
      %4867 = vdwg.mxu0
      %v4872 = vunpack.c.l.b16 %v4686
      %v4873 = vunpack.c.l.b16 %v4687
      %v4874 = vunpack.c.l.b16 %v4688
      %v4875 = vunpack.c.l.b16 %v4689
      %v4876 = vpack.c.b16 %v4873, %v4872
      %v4877 = vpack.c.b16 %v4875, %v4874
      %4880 = vmatprep.subr.bf16.mxu0 0
      %4881 = vmatpush1.bf16.msra.mxu0 0
      %4882 = vmatprep.subr.bf16.mxu0 0
      %4883 = vmatpush1.bf16.msra.mxu0 0
      %4884 = vmatprep.subr.bf16.mxu0 0
      %4885 = vmatpush1.bf16.msra.mxu0 0
      %4886 = vmatprep.subr.bf16.mxu0 0
      %4887 = vmatpush1.bf16.msra.mxu0 0
      %4888 = vmatprep.subr.bf16.mxu0 0
      %4889 = vmatpush1.bf16.msra.mxu0 0
      %4890 = vmatprep.subr.bf16.mxu0 0
      %4891 = vmatpush1.bf16.msra.mxu0 0
      %4892 = vmatprep.subr.bf16.mxu0 0
      %4893 = vmatpush1.bf16.msra.mxu0 %v4877
      %4894 = vmatprep.subr.bf16.mxu0 0
      %4895 = vmatpush1.bf16.msra.mxu0 %v4876
      %4896 = vmatprep.subr.bf16.mxu0 0
      %4897 = vmatpush2.bf16.msra.mxu0 0
      %4898 = vmatprep.subr.bf16.mxu0 0
      %4899 = vmatpush2.bf16.msra.mxu0 0
      %4900 = vmatprep.subr.bf16.mxu0 0
      %4901 = vmatpush2.bf16.msra.mxu0 0
      %4902 = vmatprep.subr.bf16.mxu0 0
      %4903 = vmatpush2.bf16.msra.mxu0 0
      %4904 = vmatprep.subr.bf16.mxu0 0
      %4905 = vmatpush2.bf16.msra.mxu0 0
      %4906 = vmatprep.subr.bf16.mxu0 0
      %4907 = vmatpush2.bf16.msra.mxu0 0
      %4908 = vmatprep.subr.bf16.mxu0 0
      %4909 = vmatpush2.bf16.msra.mxu0 0
      %4910 = vmatprep.subr.bf16.mxu0 0
      %4911 = vmatpush2.bf16.msra.mxu0 0
      %4912 = vmatprep.mubr.bf16.mxu0 0
      %4913 = vmatmul.mubr.bf16.gmra.mxu0 %v2651
      %v4914 = vpop.f32.mrf.mxu0
      %v4915 = vadd.f32 %v4742, %v4914
      %v4916 = vpop.f32.mrf.mxu0
      %v4917 = vpop.f32.mrf.mxu0
      %v4918 = vadd.f32 %v4745, %v4917
      %v4919 = vpop.f32.mrf.mxu0
      %4920 = vmatprep.mubr.bf16.mxu0 0
      %4921 = vmatmul.mubr.bf16.gmra.mxu0 %v2654
      %v4922 = vpop.f32.mrf.mxu0
      %v4923 = vadd.f32 %v4750, %v4922
      %v4924 = vpop.f32.mrf.mxu0
      %v4925 = vpop.f32.mrf.mxu0
      %v4926 = vadd.f32 %v4753, %v4925
      %v4927 = vpop.f32.mrf.mxu0
      %4928 = vmatprep.mubr.bf16.mxu0 0
      %4929 = vmatmul.mubr.bf16.gmra.mxu0 %v2657
      %v4930 = vpop.f32.mrf.mxu0
      %v4931 = vadd.f32 %v4758, %v4930
      %v4932 = vpop.f32.mrf.mxu0
      %v4933 = vpop.f32.mrf.mxu0
      %v4934 = vadd.f32 %v4761, %v4933
      %v4935 = vpop.f32.mrf.mxu0
      %4936 = vmatprep.mubr.bf16.mxu0 0
      %4937 = vmatmul.mubr.bf16.gmra.mxu0 %v2660
      %v4938 = vpop.f32.mrf.mxu0
      %v4939 = vadd.f32 %v4766, %v4938
      %v4940 = vpop.f32.mrf.mxu0
      %v4941 = vpop.f32.mrf.mxu0
      %v4942 = vadd.f32 %v4769, %v4941
      %v4943 = vpop.f32.mrf.mxu0
      %4944 = vmatprep.mubr.bf16.mxu0 0
      %4945 = vmatmul.mubr.bf16.gmra.mxu0 %v2663
      %v4946 = vpop.f32.mrf.mxu0
      %v4947 = vadd.f32 %v4774, %v4946
      %v4948 = vpop.f32.mrf.mxu0
      %v4949 = vpop.f32.mrf.mxu0
      %v4950 = vadd.f32 %v4777, %v4949
      %v4951 = vpop.f32.mrf.mxu0
      %4952 = vmatprep.mubr.bf16.mxu0 0
      %4953 = vmatmul.mubr.bf16.gmra.mxu0 %v2666
      %v4954 = vpop.f32.mrf.mxu0
      %v4955 = vadd.f32 %v4782, %v4954
      %v4956 = vpop.f32.mrf.mxu0
      %v4957 = vpop.f32.mrf.mxu0
      %v4958 = vadd.f32 %v4785, %v4957
      %v4959 = vpop.f32.mrf.mxu0
      %4960 = vmatprep.mubr.bf16.mxu0 0
      %4961 = vmatmul.mubr.bf16.gmra.mxu0 %v2669
      %v4962 = vpop.f32.mrf.mxu0
      %v4963 = vadd.f32 %v4790, %v4962
      %v4964 = vpop.f32.mrf.mxu0
      %v4965 = vpop.f32.mrf.mxu0
      %v4966 = vadd.f32 %v4793, %v4965
      %v4967 = vpop.f32.mrf.mxu0
      %4968 = vmatprep.mubr.bf16.mxu0 0
      %4969 = vmatmul.mubr.bf16.gmra.mxu0 %v2672
      %v4970 = vpop.f32.mrf.mxu0
      %v4971 = vadd.f32 %v4798, %v4970
      %v4972 = vpop.f32.mrf.mxu0
      %v4973 = vpop.f32.mrf.mxu0
      %v4974 = vadd.f32 %v4801, %v4973
      %v4975 = vpop.f32.mrf.mxu0
      %4976 = vmatprep.mubr.bf16.mxu0 0
      %4977 = vmatmul.mubr.bf16.gmra.mxu0 %v2675
      %v4978 = vpop.f32.mrf.mxu0
      %v4979 = vadd.f32 %v4806, %v4978
      %v4980 = vpop.f32.mrf.mxu0
      %v4981 = vpop.f32.mrf.mxu0
      %v4982 = vadd.f32 %v4809, %v4981
      %v4983 = vpop.f32.mrf.mxu0
      %4984 = vmatprep.mubr.bf16.mxu0 0
      %4985 = vmatmul.mubr.bf16.gmra.mxu0 %v2678
      %v4986 = vpop.f32.mrf.mxu0
      %v4987 = vadd.f32 %v4814, %v4986
      %v4988 = vpop.f32.mrf.mxu0
      %v4989 = vpop.f32.mrf.mxu0
      %v4990 = vadd.f32 %v4817, %v4989
      %v4991 = vpop.f32.mrf.mxu0
      %4992 = vmatprep.mubr.bf16.mxu0 0
      %4993 = vmatmul.mubr.bf16.gmra.mxu0 %v2681
      %v4994 = vpop.f32.mrf.mxu0
      %v4995 = vadd.f32 %v4822, %v4994
      %v4996 = vpop.f32.mrf.mxu0
      %v4997 = vpop.f32.mrf.mxu0
      %v4998 = vadd.f32 %v4825, %v4997
      %v4999 = vpop.f32.mrf.mxu0
      %5000 = vmatprep.mubr.bf16.mxu0 0
      %5001 = vmatmul.mubr.bf16.gmra.mxu0 %v2684
      %v5002 = vpop.f32.mrf.mxu0
      %v5003 = vadd.f32 %v4830, %v5002
      %v5004 = vpop.f32.mrf.mxu0
      %v5005 = vpop.f32.mrf.mxu0
      %v5006 = vadd.f32 %v4833, %v5005
      %v5007 = vpop.f32.mrf.mxu0
      %5008 = vmatprep.mubr.bf16.mxu0 0
      %5009 = vmatmul.mubr.bf16.gmra.mxu0 %v2687
      %v5010 = vpop.f32.mrf.mxu0
      %v5011 = vadd.f32 %v4838, %v5010
      %v5012 = vpop.f32.mrf.mxu0
      %v5013 = vpop.f32.mrf.mxu0
      %v5014 = vadd.f32 %v4841, %v5013
      %v5015 = vpop.f32.mrf.mxu0
      %5016 = vmatprep.mubr.bf16.mxu0 0
      %5017 = vmatmul.mubr.bf16.gmra.mxu0 %v2690
      %v5018 = vpop.f32.mrf.mxu0
      %v5019 = vadd.f32 %v4846, %v5018
      %v5020 = vpop.f32.mrf.mxu0
      %v5021 = vpop.f32.mrf.mxu0
      %v5022 = vadd.f32 %v4849, %v5021
      %v5023 = vpop.f32.mrf.mxu0
      %5024 = vmatprep.mubr.bf16.mxu0 0
      %5025 = vmatmul.mubr.bf16.gmra.mxu0 %v2693
      %v5026 = vpop.f32.mrf.mxu0
      %v5027 = vadd.f32 %v4854, %v5026
      %v5028 = vpop.f32.mrf.mxu0
      %v5029 = vpop.f32.mrf.mxu0
      %v5030 = vadd.f32 %v4857, %v5029
      %v5031 = vpop.f32.mrf.mxu0
      %5032 = vmatprep.mubr.bf16.mxu0 0
      %5033 = vmatmul.mubr.bf16.gmra.mxu0 %v2696
      %v5034 = vpop.f32.mrf.mxu0
      %v5035 = vadd.f32 %v4862, %v5034
      %v5036 = vpop.f32.mrf.mxu0
      %v5037 = vpop.f32.mrf.mxu0
      %v5038 = vadd.f32 %v4865, %v5037
      %v5039 = vpop.f32.mrf.mxu0
      %5040 = vdwg.mxu0
      %s5041 = scalar_lea.vmem %s1, 160
      %v5042 = vld [vmem:[%s5041] sm:$0xf]
      %v5043 = vld [vmem:[%s5041 + $0x4] sm:$0xf]
      %v5044 = vld [vmem:[%s5041 + $0x8] sm:$0xf]
      %v5045 = vld [vmem:[%s5041 + $0xc] sm:$0xf]
      %v5062 = vunpack.c.l.b16 %v1396
      %v5063 = vunpack.c.l.b16 %v1397
      %v5064 = vunpack.c.l.b16 %v1398
      %v5065 = vunpack.c.l.b16 %v1399
      %v5066 = vunpack.c.l.b16 %v1400
      %v5067 = vunpack.c.l.b16 %v1401
      %v5068 = vunpack.c.l.b16 %v1402
      %v5069 = vunpack.c.l.b16 %v1403
      %v5070 = vunpack.c.l.b16 %v1404
      %v5071 = vunpack.c.l.b16 %v1405
      %v5072 = vunpack.c.l.b16 %v1406
      %v5073 = vunpack.c.l.b16 %v1407
      %v5074 = vunpack.c.l.b16 %v1408
      %v5075 = vunpack.c.l.b16 %v1409
      %v5076 = vunpack.c.l.b16 %v1410
      %v5077 = vunpack.c.l.b16 %v1411
      %v5078 = vunpack.c.l.b16 %v1412
      %v5079 = vunpack.c.l.b16 %v1413
      %v5080 = vunpack.c.l.b16 %v1414
      %v5081 = vunpack.c.l.b16 %v1415
      %v5082 = vunpack.c.l.b16 %v1416
      %v5083 = vunpack.c.l.b16 %v1417
      %v5084 = vunpack.c.l.b16 %v1418
      %v5085 = vunpack.c.l.b16 %v1419
      %v5086 = vunpack.c.l.b16 %v1420
      %v5087 = vunpack.c.l.b16 %v1421
      %v5088 = vunpack.c.l.b16 %v1422
      %v5089 = vunpack.c.l.b16 %v1423
      %v5090 = vunpack.c.l.b16 %v1424
      %v5091 = vunpack.c.l.b16 %v1425
      %v5092 = vunpack.c.l.b16 %v1426
      %v5093 = vunpack.c.l.b16 %v1427
      %v5094 = vpack.c.b16 %v5063, %v5062
      %v5095 = vpack.c.b16 %v5065, %v5064
      %v5096 = vpack.c.b16 %v5067, %v5066
      %v5097 = vpack.c.b16 %v5069, %v5068
      %v5098 = vpack.c.b16 %v5071, %v5070
      %v5099 = vpack.c.b16 %v5073, %v5072
      %v5100 = vpack.c.b16 %v5075, %v5074
      %v5101 = vpack.c.b16 %v5077, %v5076
      %v5102 = vpack.c.b16 %v5079, %v5078
      %v5103 = vpack.c.b16 %v5081, %v5080
      %v5104 = vpack.c.b16 %v5083, %v5082
      %v5105 = vpack.c.b16 %v5085, %v5084
      %v5106 = vpack.c.b16 %v5087, %v5086
      %v5107 = vpack.c.b16 %v5089, %v5088
      %v5108 = vpack.c.b16 %v5091, %v5090
      %v5109 = vpack.c.b16 %v5093, %v5092
      %v5114 = vunpack.c.l.b16 %v5042
      %v5115 = vunpack.c.l.b16 %v5043
      %v5116 = vunpack.c.l.b16 %v5044
      %v5117 = vunpack.c.l.b16 %v5045
      %v5118 = vpack.c.b16 %v5115, %v5114
      %v5119 = vpack.c.b16 %v5117, %v5116
      %v5123 = vsel %vm2074, %v5094, 0
      %v5126 = vsel %vm2074, %v5095, 0
      %v5129 = vsel %vm2074, %v5096, 0
      %v5132 = vsel %vm2074, %v5097, 0
      %v5135 = vsel %vm2074, %v5098, 0
      %v5138 = vsel %vm2074, %v5099, 0
      %v5141 = vsel %vm2074, %v5100, 0
      %v5144 = vsel %vm2074, %v5101, 0
      %v5147 = vsel %vm2074, %v5102, 0
      %v5150 = vsel %vm2074, %v5103, 0
      %v5153 = vsel %vm2074, %v5104, 0
      %v5156 = vsel %vm2074, %v5105, 0
      %v5159 = vsel %vm2074, %v5106, 0
      %v5162 = vsel %vm2074, %v5107, 0
      %v5165 = vsel %vm2074, %v5108, 0
      %v5168 = vsel %vm2074, %v5109, 0
      %5170 = vmatprep.subr.bf16.mxu0 0
      %5171 = vmatpush1.bf16.msra.mxu0 0
      %5172 = vmatprep.subr.bf16.mxu0 0
      %5173 = vmatpush1.bf16.msra.mxu0 0
      %5174 = vmatprep.subr.bf16.mxu0 0
      %5175 = vmatpush1.bf16.msra.mxu0 0
      %5176 = vmatprep.subr.bf16.mxu0 0
      %5177 = vmatpush1.bf16.msra.mxu0 0
      %5178 = vmatprep.subr.bf16.mxu0 0
      %5179 = vmatpush1.bf16.msra.mxu0 0
      %5180 = vmatprep.subr.bf16.mxu0 0
      %5181 = vmatpush1.bf16.msra.mxu0 0
      %5182 = vmatprep.subr.bf16.mxu0 0
      %5183 = vmatpush1.bf16.msra.mxu0 %v5119
      %5184 = vmatprep.subr.bf16.mxu0 0
      %5185 = vmatpush1.bf16.msra.mxu0 %v5118
      %5186 = vmatprep.subr.bf16.mxu0 0
      %5187 = vmatpush2.bf16.msra.mxu0 0
      %5188 = vmatprep.subr.bf16.mxu0 0
      %5189 = vmatpush2.bf16.msra.mxu0 0
      %5190 = vmatprep.subr.bf16.mxu0 0
      %5191 = vmatpush2.bf16.msra.mxu0 0
      %5192 = vmatprep.subr.bf16.mxu0 0
      %5193 = vmatpush2.bf16.msra.mxu0 0
      %5194 = vmatprep.subr.bf16.mxu0 0
      %5195 = vmatpush2.bf16.msra.mxu0 0
      %5196 = vmatprep.subr.bf16.mxu0 0
      %5197 = vmatpush2.bf16.msra.mxu0 0
      %5198 = vmatprep.subr.bf16.mxu0 0
      %5199 = vmatpush2.bf16.msra.mxu0 0
      %5200 = vmatprep.subr.bf16.mxu0 0
      %5201 = vmatpush2.bf16.msra.mxu0 0
      %5202 = vmatprep.mubr.bf16.mxu0 0
      %5203 = vmatmul.mubr.bf16.gmra.mxu0 %v5123
      %v5204 = vpop.f32.mrf.mxu0
      %v5205 = vadd.f32 0.0, %v5204
      %v5206 = vpop.f32.mrf.mxu0
      %v5207 = vpop.f32.mrf.mxu0
      %v5208 = vadd.f32 0.0, %v5207
      %v5209 = vpop.f32.mrf.mxu0
      %5210 = vmatprep.mubr.bf16.mxu0 0
      %5211 = vmatmul.mubr.bf16.gmra.mxu0 %v5126
      %v5212 = vpop.f32.mrf.mxu0
      %v5213 = vadd.f32 0.0, %v5212
      %v5214 = vpop.f32.mrf.mxu0
      %v5215 = vpop.f32.mrf.mxu0
      %v5216 = vadd.f32 0.0, %v5215
      %v5217 = vpop.f32.mrf.mxu0
      %5218 = vmatprep.mubr.bf16.mxu0 0
      %5219 = vmatmul.mubr.bf16.gmra.mxu0 %v5129
      %v5220 = vpop.f32.mrf.mxu0
      %v5221 = vadd.f32 0.0, %v5220
      %v5222 = vpop.f32.mrf.mxu0
      %v5223 = vpop.f32.mrf.mxu0
      %v5224 = vadd.f32 0.0, %v5223
      %v5225 = vpop.f32.mrf.mxu0
      %5226 = vmatprep.mubr.bf16.mxu0 0
      %5227 = vmatmul.mubr.bf16.gmra.mxu0 %v5132
      %v5228 = vpop.f32.mrf.mxu0
      %v5229 = vadd.f32 0.0, %v5228
      %v5230 = vpop.f32.mrf.mxu0
      %v5231 = vpop.f32.mrf.mxu0
      %v5232 = vadd.f32 0.0, %v5231
      %v5233 = vpop.f32.mrf.mxu0
      %5234 = vmatprep.mubr.bf16.mxu0 0
      %5235 = vmatmul.mubr.bf16.gmra.mxu0 %v5135
      %v5236 = vpop.f32.mrf.mxu0
      %v5237 = vadd.f32 0.0, %v5236
      %v5238 = vpop.f32.mrf.mxu0
      %v5239 = vpop.f32.mrf.mxu0
      %v5240 = vadd.f32 0.0, %v5239
      %v5241 = vpop.f32.mrf.mxu0
      %5242 = vmatprep.mubr.bf16.mxu0 0
      %5243 = vmatmul.mubr.bf16.gmra.mxu0 %v5138
      %v5244 = vpop.f32.mrf.mxu0
      %v5245 = vadd.f32 0.0, %v5244
      %v5246 = vpop.f32.mrf.mxu0
      %v5247 = vpop.f32.mrf.mxu0
      %v5248 = vadd.f32 0.0, %v5247
      %v5249 = vpop.f32.mrf.mxu0
      %5250 = vmatprep.mubr.bf16.mxu0 0
      %5251 = vmatmul.mubr.bf16.gmra.mxu0 %v5141
      %v5252 = vpop.f32.mrf.mxu0
      %v5253 = vadd.f32 0.0, %v5252
      %v5254 = vpop.f32.mrf.mxu0
      %v5255 = vpop.f32.mrf.mxu0
      %v5256 = vadd.f32 0.0, %v5255
      %v5257 = vpop.f32.mrf.mxu0
      %5258 = vmatprep.mubr.bf16.mxu0 0
      %5259 = vmatmul.mubr.bf16.gmra.mxu0 %v5144
      %v5260 = vpop.f32.mrf.mxu0
      %v5261 = vadd.f32 0.0, %v5260
      %v5262 = vpop.f32.mrf.mxu0
      %v5263 = vpop.f32.mrf.mxu0
      %v5264 = vadd.f32 0.0, %v5263
      %v5265 = vpop.f32.mrf.mxu0
      %5266 = vmatprep.mubr.bf16.mxu0 0
      %5267 = vmatmul.mubr.bf16.gmra.mxu0 %v5147
      %v5268 = vpop.f32.mrf.mxu0
      %v5269 = vadd.f32 0.0, %v5268
      %v5270 = vpop.f32.mrf.mxu0
      %v5271 = vpop.f32.mrf.mxu0
      %v5272 = vadd.f32 0.0, %v5271
      %v5273 = vpop.f32.mrf.mxu0
      %5274 = vmatprep.mubr.bf16.mxu0 0
      %5275 = vmatmul.mubr.bf16.gmra.mxu0 %v5150
      %v5276 = vpop.f32.mrf.mxu0
      %v5277 = vadd.f32 0.0, %v5276
      %v5278 = vpop.f32.mrf.mxu0
      %v5279 = vpop.f32.mrf.mxu0
      %v5280 = vadd.f32 0.0, %v5279
      %v5281 = vpop.f32.mrf.mxu0
      %5282 = vmatprep.mubr.bf16.mxu0 0
      %5283 = vmatmul.mubr.bf16.gmra.mxu0 %v5153
      %v5284 = vpop.f32.mrf.mxu0
      %v5285 = vadd.f32 0.0, %v5284
      %v5286 = vpop.f32.mrf.mxu0
      %v5287 = vpop.f32.mrf.mxu0
      %v5288 = vadd.f32 0.0, %v5287
      %v5289 = vpop.f32.mrf.mxu0
      %5290 = vmatprep.mubr.bf16.mxu0 0
      %5291 = vmatmul.mubr.bf16.gmra.mxu0 %v5156
      %v5292 = vpop.f32.mrf.mxu0
      %v5293 = vadd.f32 0.0, %v5292
      %v5294 = vpop.f32.mrf.mxu0
      %v5295 = vpop.f32.mrf.mxu0
      %v5296 = vadd.f32 0.0, %v5295
      %v5297 = vpop.f32.mrf.mxu0
      %5298 = vmatprep.mubr.bf16.mxu0 0
      %5299 = vmatmul.mubr.bf16.gmra.mxu0 %v5159
      %v5300 = vpop.f32.mrf.mxu0
      %v5301 = vadd.f32 0.0, %v5300
      %v5302 = vpop.f32.mrf.mxu0
      %v5303 = vpop.f32.mrf.mxu0
      %v5304 = vadd.f32 0.0, %v5303
      %v5305 = vpop.f32.mrf.mxu0
      %5306 = vmatprep.mubr.bf16.mxu0 0
      %5307 = vmatmul.mubr.bf16.gmra.mxu0 %v5162
      %v5308 = vpop.f32.mrf.mxu0
      %v5309 = vadd.f32 0.0, %v5308
      %v5310 = vpop.f32.mrf.mxu0
      %v5311 = vpop.f32.mrf.mxu0
      %v5312 = vadd.f32 0.0, %v5311
      %v5313 = vpop.f32.mrf.mxu0
      %5314 = vmatprep.mubr.bf16.mxu0 0
      %5315 = vmatmul.mubr.bf16.gmra.mxu0 %v5165
      %v5316 = vpop.f32.mrf.mxu0
      %v5317 = vadd.f32 0.0, %v5316
      %v5318 = vpop.f32.mrf.mxu0
      %v5319 = vpop.f32.mrf.mxu0
      %v5320 = vadd.f32 0.0, %v5319
      %v5321 = vpop.f32.mrf.mxu0
      %5322 = vmatprep.mubr.bf16.mxu0 0
      %5323 = vmatmul.mubr.bf16.gmra.mxu0 %v5168
      %v5324 = vpop.f32.mrf.mxu0
      %v5325 = vadd.f32 0.0, %v5324
      %v5326 = vpop.f32.mrf.mxu0
      %v5327 = vpop.f32.mrf.mxu0
      %v5328 = vadd.f32 0.0, %v5327
      %v5329 = vpop.f32.mrf.mxu0
      %5330 = vdwg.mxu0
      %v5331 = vadd.f32 %v4915, %v5205
      %v5332 = vadd.f32 %v4918, %v5208
      %v5333 = vadd.f32 %v4923, %v5213
      %v5334 = vadd.f32 %v4926, %v5216
      %v5335 = vadd.f32 %v4931, %v5221
      %v5336 = vadd.f32 %v4934, %v5224
      %v5337 = vadd.f32 %v4939, %v5229
      %v5338 = vadd.f32 %v4942, %v5232
      %v5339 = vadd.f32 %v4947, %v5237
      %v5340 = vadd.f32 %v4950, %v5240
      %v5341 = vadd.f32 %v4955, %v5245
      %v5342 = vadd.f32 %v4958, %v5248
      %v5343 = vadd.f32 %v4963, %v5253
      %v5344 = vadd.f32 %v4966, %v5256
      %v5345 = vadd.f32 %v4971, %v5261
      %v5346 = vadd.f32 %v4974, %v5264
      %v5347 = vadd.f32 %v4979, %v5269
      %v5348 = vadd.f32 %v4982, %v5272
      %v5349 = vadd.f32 %v4987, %v5277
      %v5350 = vadd.f32 %v4990, %v5280
      %v5351 = vadd.f32 %v4995, %v5285
      %v5352 = vadd.f32 %v4998, %v5288
      %v5353 = vadd.f32 %v5003, %v5293
      %v5354 = vadd.f32 %v5006, %v5296
      %v5355 = vadd.f32 %v5011, %v5301
      %v5356 = vadd.f32 %v5014, %v5304
      %v5357 = vadd.f32 %v5019, %v5309
      %v5358 = vadd.f32 %v5022, %v5312
      %v5359 = vadd.f32 %v5027, %v5317
      %v5360 = vadd.f32 %v5030, %v5320
      %v5361 = vadd.f32 %v5035, %v5325
      %v5362 = vadd.f32 %v5038, %v5328
      %s5363 = scalar_lea.vmem %s1, 176
      %v5364 = vld [vmem:[%s5363] sm:$0xf]
      %v5365 = vld [vmem:[%s5363 + $0x4] sm:$0xf]
      %v5366 = vld [vmem:[%s5363 + $0x8] sm:$0xf]
      %v5367 = vld [vmem:[%s5363 + $0xc] sm:$0xf]
      %v5368 = vunpack.c.l.b16 %v1457
      %v5369 = vunpack.c.l.b16 %v1467
      %v5370 = vunpack.c.l.b16 %v1481
      %v5371 = vunpack.c.l.b16 %v1491
      %v5372 = vunpack.c.l.b16 %v1505
      %v5373 = vunpack.c.l.b16 %v1515
      %v5374 = vunpack.c.l.b16 %v1529
      %v5375 = vunpack.c.l.b16 %v1539
      %v5376 = vunpack.c.l.b16 %v1553
      %v5377 = vunpack.c.l.b16 %v1563
      %v5378 = vunpack.c.l.b16 %v1577
      %v5379 = vunpack.c.l.b16 %v1587
      %v5380 = vunpack.c.l.b16 %v1601
      %v5381 = vunpack.c.l.b16 %v1611
      %v5382 = vunpack.c.l.b16 %v1625
      %v5383 = vunpack.c.l.b16 %v1635
      %v5384 = vunpack.c.l.b16 %v1649
      %v5385 = vunpack.c.l.b16 %v1659
      %v5386 = vunpack.c.l.b16 %v1673
      %v5387 = vunpack.c.l.b16 %v1683
      %v5388 = vunpack.c.l.b16 %v1697
      %v5389 = vunpack.c.l.b16 %v1707
      %v5390 = vunpack.c.l.b16 %v1721
      %v5391 = vunpack.c.l.b16 %v1731
      %v5392 = vunpack.c.l.b16 %v1745
      %v5393 = vunpack.c.l.b16 %v1755
      %v5394 = vunpack.c.l.b16 %v1769
      %v5395 = vunpack.c.l.b16 %v1779
      %v5396 = vunpack.c.l.b16 %v1793
      %v5397 = vunpack.c.l.b16 %v1803
      %v5398 = vunpack.c.l.b16 %v1817
      %v5399 = vunpack.c.l.b16 %v1827
      %v5400 = vpack.c.b16 %v5369, %v5368
      %v5401 = vpack.c.b16 %v5371, %v5370
      %v5402 = vpack.c.b16 %v5373, %v5372
      %v5403 = vpack.c.b16 %v5375, %v5374
      %v5404 = vpack.c.b16 %v5377, %v5376
      %v5405 = vpack.c.b16 %v5379, %v5378
      %v5406 = vpack.c.b16 %v5381, %v5380
      %v5407 = vpack.c.b16 %v5383, %v5382
      %v5408 = vpack.c.b16 %v5385, %v5384
      %v5409 = vpack.c.b16 %v5387, %v5386
      %v5410 = vpack.c.b16 %v5389, %v5388
      %v5411 = vpack.c.b16 %v5391, %v5390
      %v5412 = vpack.c.b16 %v5393, %v5392
      %v5413 = vpack.c.b16 %v5395, %v5394
      %v5414 = vpack.c.b16 %v5397, %v5396
      %v5415 = vpack.c.b16 %v5399, %v5398
      %v5420 = vunpack.c.l.b16 %v5364
      %v5421 = vunpack.c.l.b16 %v5365
      %v5422 = vunpack.c.l.b16 %v5366
      %v5423 = vunpack.c.l.b16 %v5367
      %v5424 = vpack.c.b16 %v5421, %v5420
      %v5425 = vpack.c.b16 %v5423, %v5422
      %v5429 = vsel %vm2074, %v5400, 0
      %v5432 = vsel %vm2074, %v5401, 0
      %v5435 = vsel %vm2074, %v5402, 0
      %v5438 = vsel %vm2074, %v5403, 0
      %v5441 = vsel %vm2074, %v5404, 0
      %v5444 = vsel %vm2074, %v5405, 0
      %v5447 = vsel %vm2074, %v5406, 0
      %v5450 = vsel %vm2074, %v5407, 0
      %v5453 = vsel %vm2074, %v5408, 0
      %v5456 = vsel %vm2074, %v5409, 0
      %v5459 = vsel %vm2074, %v5410, 0
      %v5462 = vsel %vm2074, %v5411, 0
      %v5465 = vsel %vm2074, %v5412, 0
      %v5468 = vsel %vm2074, %v5413, 0
      %v5471 = vsel %vm2074, %v5414, 0
      %v5474 = vsel %vm2074, %v5415, 0
      %5476 = vmatprep.subr.bf16.mxu0 0
      %5477 = vmatpush1.bf16.msra.mxu0 0
      %5478 = vmatprep.subr.bf16.mxu0 0
      %5479 = vmatpush1.bf16.msra.mxu0 0
      %5480 = vmatprep.subr.bf16.mxu0 0
      %5481 = vmatpush1.bf16.msra.mxu0 0
      %5482 = vmatprep.subr.bf16.mxu0 0
      %5483 = vmatpush1.bf16.msra.mxu0 0
      %5484 = vmatprep.subr.bf16.mxu0 0
      %5485 = vmatpush1.bf16.msra.mxu0 0
      %5486 = vmatprep.subr.bf16.mxu0 0
      %5487 = vmatpush1.bf16.msra.mxu0 0
      %5488 = vmatprep.subr.bf16.mxu0 0
      %5489 = vmatpush1.bf16.msra.mxu0 %v5425
      %5490 = vmatprep.subr.bf16.mxu0 0
      %5491 = vmatpush1.bf16.msra.mxu0 %v5424
      %5492 = vmatprep.subr.bf16.mxu0 0
      %5493 = vmatpush2.bf16.msra.mxu0 0
      %5494 = vmatprep.subr.bf16.mxu0 0
      %5495 = vmatpush2.bf16.msra.mxu0 0
      %5496 = vmatprep.subr.bf16.mxu0 0
      %5497 = vmatpush2.bf16.msra.mxu0 0
      %5498 = vmatprep.subr.bf16.mxu0 0
      %5499 = vmatpush2.bf16.msra.mxu0 0
      %5500 = vmatprep.subr.bf16.mxu0 0
      %5501 = vmatpush2.bf16.msra.mxu0 0
      %5502 = vmatprep.subr.bf16.mxu0 0
      %5503 = vmatpush2.bf16.msra.mxu0 0
      %5504 = vmatprep.subr.bf16.mxu0 0
      %5505 = vmatpush2.bf16.msra.mxu0 0
      %5506 = vmatprep.subr.bf16.mxu0 0
      %5507 = vmatpush2.bf16.msra.mxu0 0
      %5508 = vmatprep.mubr.bf16.mxu0 0
      %5509 = vmatmul.mubr.bf16.gmra.mxu0 %v5429
      %v5510 = vpop.f32.mrf.mxu0
      %v5511 = vadd.f32 0.0, %v5510
      %v5512 = vpop.f32.mrf.mxu0
      %v5513 = vpop.f32.mrf.mxu0
      %v5514 = vadd.f32 0.0, %v5513
      %v5515 = vpop.f32.mrf.mxu0
      %5516 = vmatprep.mubr.bf16.mxu0 0
      %5517 = vmatmul.mubr.bf16.gmra.mxu0 %v5432
      %v5518 = vpop.f32.mrf.mxu0
      %v5519 = vadd.f32 0.0, %v5518
      %v5520 = vpop.f32.mrf.mxu0
      %v5521 = vpop.f32.mrf.mxu0
      %v5522 = vadd.f32 0.0, %v5521
      %v5523 = vpop.f32.mrf.mxu0
      %5524 = vmatprep.mubr.bf16.mxu0 0
      %5525 = vmatmul.mubr.bf16.gmra.mxu0 %v5435
      %v5526 = vpop.f32.mrf.mxu0
      %v5527 = vadd.f32 0.0, %v5526
      %v5528 = vpop.f32.mrf.mxu0
      %v5529 = vpop.f32.mrf.mxu0
      %v5530 = vadd.f32 0.0, %v5529
      %v5531 = vpop.f32.mrf.mxu0
      %5532 = vmatprep.mubr.bf16.mxu0 0
      %5533 = vmatmul.mubr.bf16.gmra.mxu0 %v5438
      %v5534 = vpop.f32.mrf.mxu0
      %v5535 = vadd.f32 0.0, %v5534
      %v5536 = vpop.f32.mrf.mxu0
      %v5537 = vpop.f32.mrf.mxu0
      %v5538 = vadd.f32 0.0, %v5537
      %v5539 = vpop.f32.mrf.mxu0
      %5540 = vmatprep.mubr.bf16.mxu0 0
      %5541 = vmatmul.mubr.bf16.gmra.mxu0 %v5441
      %v5542 = vpop.f32.mrf.mxu0
      %v5543 = vadd.f32 0.0, %v5542
      %v5544 = vpop.f32.mrf.mxu0
      %v5545 = vpop.f32.mrf.mxu0
      %v5546 = vadd.f32 0.0, %v5545
      %v5547 = vpop.f32.mrf.mxu0
      %5548 = vmatprep.mubr.bf16.mxu0 0
      %5549 = vmatmul.mubr.bf16.gmra.mxu0 %v5444
      %v5550 = vpop.f32.mrf.mxu0
      %v5551 = vadd.f32 0.0, %v5550
      %v5552 = vpop.f32.mrf.mxu0
      %v5553 = vpop.f32.mrf.mxu0
      %v5554 = vadd.f32 0.0, %v5553
      %v5555 = vpop.f32.mrf.mxu0
      %5556 = vmatprep.mubr.bf16.mxu0 0
      %5557 = vmatmul.mubr.bf16.gmra.mxu0 %v5447
      %v5558 = vpop.f32.mrf.mxu0
      %v5559 = vadd.f32 0.0, %v5558
      %v5560 = vpop.f32.mrf.mxu0
      %v5561 = vpop.f32.mrf.mxu0
      %v5562 = vadd.f32 0.0, %v5561
      %v5563 = vpop.f32.mrf.mxu0
      %5564 = vmatprep.mubr.bf16.mxu0 0
      %5565 = vmatmul.mubr.bf16.gmra.mxu0 %v5450
      %v5566 = vpop.f32.mrf.mxu0
      %v5567 = vadd.f32 0.0, %v5566
      %v5568 = vpop.f32.mrf.mxu0
      %v5569 = vpop.f32.mrf.mxu0
      %v5570 = vadd.f32 0.0, %v5569
      %v5571 = vpop.f32.mrf.mxu0
      %5572 = vmatprep.mubr.bf16.mxu0 0
      %5573 = vmatmul.mubr.bf16.gmra.mxu0 %v5453
      %v5574 = vpop.f32.mrf.mxu0
      %v5575 = vadd.f32 0.0, %v5574
      %v5576 = vpop.f32.mrf.mxu0
      %v5577 = vpop.f32.mrf.mxu0
      %v5578 = vadd.f32 0.0, %v5577
      %v5579 = vpop.f32.mrf.mxu0
      %5580 = vmatprep.mubr.bf16.mxu0 0
      %5581 = vmatmul.mubr.bf16.gmra.mxu0 %v5456
      %v5582 = vpop.f32.mrf.mxu0
      %v5583 = vadd.f32 0.0, %v5582
      %v5584 = vpop.f32.mrf.mxu0
      %v5585 = vpop.f32.mrf.mxu0
      %v5586 = vadd.f32 0.0, %v5585
      %v5587 = vpop.f32.mrf.mxu0
      %5588 = vmatprep.mubr.bf16.mxu0 0
      %5589 = vmatmul.mubr.bf16.gmra.mxu0 %v5459
      %v5590 = vpop.f32.mrf.mxu0
      %v5591 = vadd.f32 0.0, %v5590
      %v5592 = vpop.f32.mrf.mxu0
      %v5593 = vpop.f32.mrf.mxu0
      %v5594 = vadd.f32 0.0, %v5593
      %v5595 = vpop.f32.mrf.mxu0
      %5596 = vmatprep.mubr.bf16.mxu0 0
      %5597 = vmatmul.mubr.bf16.gmra.mxu0 %v5462
      %v5598 = vpop.f32.mrf.mxu0
      %v5599 = vadd.f32 0.0, %v5598
      %v5600 = vpop.f32.mrf.mxu0
      %v5601 = vpop.f32.mrf.mxu0
      %v5602 = vadd.f32 0.0, %v5601
      %v5603 = vpop.f32.mrf.mxu0
      %5604 = vmatprep.mubr.bf16.mxu0 0
      %5605 = vmatmul.mubr.bf16.gmra.mxu0 %v5465
      %v5606 = vpop.f32.mrf.mxu0
      %v5607 = vadd.f32 0.0, %v5606
      %v5608 = vpop.f32.mrf.mxu0
      %v5609 = vpop.f32.mrf.mxu0
      %v5610 = vadd.f32 0.0, %v5609
      %v5611 = vpop.f32.mrf.mxu0
      %5612 = vmatprep.mubr.bf16.mxu0 0
      %5613 = vmatmul.mubr.bf16.gmra.mxu0 %v5468
      %v5614 = vpop.f32.mrf.mxu0
      %v5615 = vadd.f32 0.0, %v5614
      %v5616 = vpop.f32.mrf.mxu0
      %v5617 = vpop.f32.mrf.mxu0
      %v5618 = vadd.f32 0.0, %v5617
      %v5619 = vpop.f32.mrf.mxu0
      %5620 = vmatprep.mubr.bf16.mxu0 0
      %5621 = vmatmul.mubr.bf16.gmra.mxu0 %v5471
      %v5622 = vpop.f32.mrf.mxu0
      %v5623 = vadd.f32 0.0, %v5622
      %v5624 = vpop.f32.mrf.mxu0
      %v5625 = vpop.f32.mrf.mxu0
      %v5626 = vadd.f32 0.0, %v5625
      %v5627 = vpop.f32.mrf.mxu0
      %5628 = vmatprep.mubr.bf16.mxu0 0
      %5629 = vmatmul.mubr.bf16.gmra.mxu0 %v5474
      %v5630 = vpop.f32.mrf.mxu0
      %v5631 = vadd.f32 0.0, %v5630
      %v5632 = vpop.f32.mrf.mxu0
      %v5633 = vpop.f32.mrf.mxu0
      %v5634 = vadd.f32 0.0, %v5633
      %v5635 = vpop.f32.mrf.mxu0
      %5636 = vdwg.mxu0
      %v5637 = vadd.f32 %v5331, %v5511
      %v5638 = vadd.f32 %v5332, %v5514
      %v5639 = vadd.f32 %v5333, %v5519
      %v5640 = vadd.f32 %v5334, %v5522
      %v5641 = vadd.f32 %v5335, %v5527
      %v5642 = vadd.f32 %v5336, %v5530
      %v5643 = vadd.f32 %v5337, %v5535
      %v5644 = vadd.f32 %v5338, %v5538
      %v5645 = vadd.f32 %v5339, %v5543
      %v5646 = vadd.f32 %v5340, %v5546
      %v5647 = vadd.f32 %v5341, %v5551
      %v5648 = vadd.f32 %v5342, %v5554
      %v5649 = vadd.f32 %v5343, %v5559
      %v5650 = vadd.f32 %v5344, %v5562
      %v5651 = vadd.f32 %v5345, %v5567
      %v5652 = vadd.f32 %v5346, %v5570
      %v5653 = vadd.f32 %v5347, %v5575
      %v5654 = vadd.f32 %v5348, %v5578
      %v5655 = vadd.f32 %v5349, %v5583
      %v5656 = vadd.f32 %v5350, %v5586
      %v5657 = vadd.f32 %v5351, %v5591
      %v5658 = vadd.f32 %v5352, %v5594
      %v5659 = vadd.f32 %v5353, %v5599
      %v5660 = vadd.f32 %v5354, %v5602
      %v5661 = vadd.f32 %v5355, %v5607
      %v5662 = vadd.f32 %v5356, %v5610
      %v5663 = vadd.f32 %v5357, %v5615
      %v5664 = vadd.f32 %v5358, %v5618
      %v5665 = vadd.f32 %v5359, %v5623
      %v5666 = vadd.f32 %v5360, %v5626
      %v5667 = vadd.f32 %v5361, %v5631
      %v5668 = vadd.f32 %v5362, %v5634
      %v5669 = vadd.f32 %v5637, %v3201
      %v5670 = vadd.f32 %v5638, %v3201
      %v5671 = vadd.f32 %v5639, %v3201
      %v5672 = vadd.f32 %v5640, %v3201
      %v5673 = vadd.f32 %v5641, %v3201
      %v5674 = vadd.f32 %v5642, %v3201
      %v5675 = vadd.f32 %v5643, %v3201
      %v5676 = vadd.f32 %v5644, %v3201
      %v5677 = vadd.f32 %v5645, %v3201
      %v5678 = vadd.f32 %v5646, %v3201
      %v5679 = vadd.f32 %v5647, %v3201
      %v5680 = vadd.f32 %v5648, %v3201
      %v5681 = vadd.f32 %v5649, %v3201
      %v5682 = vadd.f32 %v5650, %v3201
      %v5683 = vadd.f32 %v5651, %v3201
      %v5684 = vadd.f32 %v5652, %v3201
      %v5685 = vadd.f32 %v5653, %v3201
      %v5686 = vadd.f32 %v5654, %v3201
      %v5687 = vadd.f32 %v5655, %v3201
      %v5688 = vadd.f32 %v5656, %v3201
      %v5689 = vadd.f32 %v5657, %v3201
      %v5690 = vadd.f32 %v5658, %v3201
      %v5691 = vadd.f32 %v5659, %v3201
      %v5692 = vadd.f32 %v5660, %v3201
      %v5693 = vadd.f32 %v5661, %v3201
      %v5694 = vadd.f32 %v5662, %v3201
      %v5695 = vadd.f32 %v5663, %v3201
      %v5696 = vadd.f32 %v5664, %v3201
      %v5697 = vadd.f32 %v5665, %v3201
      %v5698 = vadd.f32 %v5666, %v3201
      %v5699 = vadd.f32 %v5667, %v3201
      %v5700 = vadd.f32 %v5668, %v3201
      %v5701 = vmax.f32 %v5669, 0.0
      %v5702 = vmax.f32 %v5670, 0.0
      %v5703 = vmax.f32 %v5671, 0.0
      %v5704 = vmax.f32 %v5672, 0.0
      %v5705 = vmax.f32 %v5673, 0.0
      %v5706 = vmax.f32 %v5674, 0.0
      %v5707 = vmax.f32 %v5675, 0.0
      %v5708 = vmax.f32 %v5676, 0.0
      %v5709 = vmax.f32 %v5677, 0.0
      %v5710 = vmax.f32 %v5678, 0.0
      %v5711 = vmax.f32 %v5679, 0.0
      %v5712 = vmax.f32 %v5680, 0.0
      %v5713 = vmax.f32 %v5681, 0.0
      %v5714 = vmax.f32 %v5682, 0.0
      %v5715 = vmax.f32 %v5683, 0.0
      %v5716 = vmax.f32 %v5684, 0.0
      %v5717 = vmax.f32 %v5685, 0.0
      %v5718 = vmax.f32 %v5686, 0.0
      %v5719 = vmax.f32 %v5687, 0.0
      %v5720 = vmax.f32 %v5688, 0.0
      %v5721 = vmax.f32 %v5689, 0.0
      %v5722 = vmax.f32 %v5690, 0.0
      %v5723 = vmax.f32 %v5691, 0.0
      %v5724 = vmax.f32 %v5692, 0.0
      %v5725 = vmax.f32 %v5693, 0.0
      %v5726 = vmax.f32 %v5694, 0.0
      %v5727 = vmax.f32 %v5695, 0.0
      %v5728 = vmax.f32 %v5696, 0.0
      %v5729 = vmax.f32 %v5697, 0.0
      %v5730 = vmax.f32 %v5698, 0.0
      %v5731 = vmax.f32 %v5699, 0.0
      %v5732 = vmax.f32 %v5700, 0.0
      %v5733 = vpack.c.bf16 %v5702, %v5701
      %v5734 = vpack.c.bf16 %v5704, %v5703
      %v5735 = vpack.c.bf16 %v5706, %v5705
      %v5736 = vpack.c.bf16 %v5708, %v5707
      %v5737 = vpack.c.bf16 %v5710, %v5709
      %v5738 = vpack.c.bf16 %v5712, %v5711
      %v5739 = vpack.c.bf16 %v5714, %v5713
      %v5740 = vpack.c.bf16 %v5716, %v5715
      %v5741 = vpack.c.bf16 %v5718, %v5717
      %v5742 = vpack.c.bf16 %v5720, %v5719
      %v5743 = vpack.c.bf16 %v5722, %v5721
      %v5744 = vpack.c.bf16 %v5724, %v5723
      %v5745 = vpack.c.bf16 %v5726, %v5725
      %v5746 = vpack.c.bf16 %v5728, %v5727
      %v5747 = vpack.c.bf16 %v5730, %v5729
      %v5748 = vpack.c.bf16 %v5732, %v5731
      %v5765 = vunpack.c.l.b16 %v5733
      %v5766 = vunpack.c.h.b16 %v5733
      %v5767 = vunpack.c.l.b16 %v5734
      %v5768 = vunpack.c.h.b16 %v5734
      %v5769 = vunpack.c.l.b16 %v5735
      %v5770 = vunpack.c.h.b16 %v5735
      %v5771 = vunpack.c.l.b16 %v5736
      %v5772 = vunpack.c.h.b16 %v5736
      %v5773 = vunpack.c.l.b16 %v5737
      %v5774 = vunpack.c.h.b16 %v5737
      %v5775 = vunpack.c.l.b16 %v5738
      %v5776 = vunpack.c.h.b16 %v5738
      %v5777 = vunpack.c.l.b16 %v5739
      %v5778 = vunpack.c.h.b16 %v5739
      %v5779 = vunpack.c.l.b16 %v5740
      %v5780 = vunpack.c.h.b16 %v5740
      %v5781 = vunpack.c.l.b16 %v5741
      %v5782 = vunpack.c.h.b16 %v5741
      %v5783 = vunpack.c.l.b16 %v5742
      %v5784 = vunpack.c.h.b16 %v5742
      %v5785 = vunpack.c.l.b16 %v5743
      %v5786 = vunpack.c.h.b16 %v5743
      %v5787 = vunpack.c.l.b16 %v5744
      %v5788 = vunpack.c.h.b16 %v5744
      %v5789 = vunpack.c.l.b16 %v5745
      %v5790 = vunpack.c.h.b16 %v5745
      %v5791 = vunpack.c.l.b16 %v5746
      %v5792 = vunpack.c.h.b16 %v5746
      %v5793 = vunpack.c.l.b16 %v5747
      %v5794 = vunpack.c.h.b16 %v5747
      %v5795 = vunpack.c.l.b16 %v5748
      %v5796 = vunpack.c.h.b16 %v5748
      %v5797 = vpack.c.b16 %v5765, %v5765
      %v5798 = vpack.c.b16 %v5766, %v5766
      %v5799 = vpack.c.b16 %v5767, %v5767
      %v5800 = vpack.c.b16 %v5768, %v5768
      %v5801 = vpack.c.b16 %v5769, %v5769
      %v5802 = vpack.c.b16 %v5770, %v5770
      %v5803 = vpack.c.b16 %v5771, %v5771
      %v5804 = vpack.c.b16 %v5772, %v5772
      %v5805 = vpack.c.b16 %v5773, %v5773
      %v5806 = vpack.c.b16 %v5774, %v5774
      %v5807 = vpack.c.b16 %v5775, %v5775
      %v5808 = vpack.c.b16 %v5776, %v5776
      %v5809 = vpack.c.b16 %v5777, %v5777
      %v5810 = vpack.c.b16 %v5778, %v5778
      %v5811 = vpack.c.b16 %v5779, %v5779
      %v5812 = vpack.c.b16 %v5780, %v5780
      %v5813 = vpack.c.b16 %v5781, %v5781
      %v5814 = vpack.c.b16 %v5782, %v5782
      %v5815 = vpack.c.b16 %v5783, %v5783
      %v5816 = vpack.c.b16 %v5784, %v5784
      %v5817 = vpack.c.b16 %v5785, %v5785
      %v5818 = vpack.c.b16 %v5786, %v5786
      %v5819 = vpack.c.b16 %v5787, %v5787
      %v5820 = vpack.c.b16 %v5788, %v5788
      %v5821 = vpack.c.b16 %v5789, %v5789
      %v5822 = vpack.c.b16 %v5790, %v5790
      %v5823 = vpack.c.b16 %v5791, %v5791
      %v5824 = vpack.c.b16 %v5792, %v5792
      %v5825 = vpack.c.b16 %v5793, %v5793
      %v5826 = vpack.c.b16 %v5794, %v5794
      %v5827 = vpack.c.b16 %v5795, %v5795
      %v5828 = vpack.c.b16 %v5796, %v5796
      %s5861 = scalar_lea.vmem %s170, 8
      %5862 = vst.msk [vmem:[%s5861] sm:$0xf] %vm3395, %v5797
      %5863 = vst.msk [vmem:[%s5861 + $0x4] sm:$0xf] %vm3395, %v5798
      %5864 = vst.msk [vmem:[%s5861 + $0x10] sm:$0xf] %vm3395, %v5799
      %5865 = vst.msk [vmem:[%s5861 + $0x14] sm:$0xf] %vm3395, %v5800
      %5866 = vst.msk [vmem:[%s5861 + $0x20] sm:$0xf] %vm3395, %v5801
      %5867 = vst.msk [vmem:[%s5861 + $0x24] sm:$0xf] %vm3395, %v5802
      %5868 = vst.msk [vmem:[%s5861 + $0x30] sm:$0xf] %vm3395, %v5803
      %5869 = vst.msk [vmem:[%s5861 + $0x34] sm:$0xf] %vm3395, %v5804
      %5870 = vst.msk [vmem:[%s5861 + $0x40] sm:$0xf] %vm3395, %v5805
      %5871 = vst.msk [vmem:[%s5861 + $0x44] sm:$0xf] %vm3395, %v5806
      %5872 = vst.msk [vmem:[%s5861 + $0x50] sm:$0xf] %vm3395, %v5807
      %5873 = vst.msk [vmem:[%s5861 + $0x54] sm:$0xf] %vm3395, %v5808
      %5874 = vst.msk [vmem:[%s5861 + $0x60] sm:$0xf] %vm3395, %v5809
      %5875 = vst.msk [vmem:[%s5861 + $0x64] sm:$0xf] %vm3395, %v5810
      %5876 = vst.msk [vmem:[%s5861 + $0x70] sm:$0xf] %vm3395, %v5811
      %5877 = vst.msk [vmem:[%s5861 + $0x74] sm:$0xf] %vm3395, %v5812
      %5878 = vst.msk [vmem:[%s5861 + $0x80] sm:$0xf] %vm3395, %v5813
      %5879 = vst.msk [vmem:[%s5861 + $0x84] sm:$0xf] %vm3395, %v5814
      %5880 = vst.msk [vmem:[%s5861 + $0x90] sm:$0xf] %vm3395, %v5815
      %5881 = vst.msk [vmem:[%s5861 + $0x94] sm:$0xf] %vm3395, %v5816
      %5882 = vst.msk [vmem:[%s5861 + $0xa0] sm:$0xf] %vm3395, %v5817
      %5883 = vst.msk [vmem:[%s5861 + $0xa4] sm:$0xf] %vm3395, %v5818
      %5884 = vst.msk [vmem:[%s5861 + $0xb0] sm:$0xf] %vm3395, %v5819
      %5885 = vst.msk [vmem:[%s5861 + $0xb4] sm:$0xf] %vm3395, %v5820
      %5886 = vst.msk [vmem:[%s5861 + $0xc0] sm:$0xf] %vm3395, %v5821
      %5887 = vst.msk [vmem:[%s5861 + $0xc4] sm:$0xf] %vm3395, %v5822
      %5888 = vst.msk [vmem:[%s5861 + $0xd0] sm:$0xf] %vm3395, %v5823
      %5889 = vst.msk [vmem:[%s5861 + $0xd4] sm:$0xf] %vm3395, %v5824
      %5890 = vst.msk [vmem:[%s5861 + $0xe0] sm:$0xf] %vm3395, %v5825
      %5891 = vst.msk [vmem:[%s5861 + $0xe4] sm:$0xf] %vm3395, %v5826
      %5892 = vst.msk [vmem:[%s5861 + $0xf0] sm:$0xf] %vm3395, %v5827
      %5893 = vst.msk [vmem:[%s5861 + $0xf4] sm:$0xf] %vm3395, %v5828
      %s5894 = scalar_lea.vmem %s1, 192
      %v5895 = vld [vmem:[%s5894] sm:$0xf]
      %v5896 = vld [vmem:[%s5894 + $0x4] sm:$0xf]
      %v5897 = vld [vmem:[%s5894 + $0x8] sm:$0xf]
      %v5898 = vld [vmem:[%s5894 + $0xc] sm:$0xf]
      %s5899 = scalar_lea.vmem %s1, 208
      %v5900 = vld [vmem:[%s5899] sm:$0xf]
      %v5901 = vld [vmem:[%s5899 + $0x4] sm:$0xf]
      %v5902 = vld [vmem:[%s5899 + $0x8] sm:$0xf]
      %v5903 = vld [vmem:[%s5899 + $0xc] sm:$0xf]
      %v5908 = vunpack.c.l.b16 %v5900
      %v5909 = vunpack.c.l.b16 %v5901
      %v5910 = vunpack.c.l.b16 %v5902
      %v5911 = vunpack.c.l.b16 %v5903
      %v5912 = vpack.c.b16 %v5909, %v5908
      %v5913 = vpack.c.b16 %v5911, %v5910
      %5916 = vmatprep.subr.bf16.mxu0 0
      %5917 = vmatpush1.bf16.msra.mxu0 0
      %5918 = vmatprep.subr.bf16.mxu0 0
      %5919 = vmatpush1.bf16.msra.mxu0 0
      %5920 = vmatprep.subr.bf16.mxu0 0
      %5921 = vmatpush1.bf16.msra.mxu0 0
      %5922 = vmatprep.subr.bf16.mxu0 0
      %5923 = vmatpush1.bf16.msra.mxu0 0
      %5924 = vmatprep.subr.bf16.mxu0 0
      %5925 = vmatpush1.bf16.msra.mxu0 0
      %5926 = vmatprep.subr.bf16.mxu0 0
      %5927 = vmatpush1.bf16.msra.mxu0 0
      %5928 = vmatprep.subr.bf16.mxu0 0
      %5929 = vmatpush1.bf16.msra.mxu0 %v5913
      %5930 = vmatprep.subr.bf16.mxu0 0
      %5931 = vmatpush1.bf16.msra.mxu0 %v5912
      %5932 = vmatprep.subr.bf16.mxu0 0
      %5933 = vmatpush2.bf16.msra.mxu0 0
      %5934 = vmatprep.subr.bf16.mxu0 0
      %5935 = vmatpush2.bf16.msra.mxu0 0
      %5936 = vmatprep.subr.bf16.mxu0 0
      %5937 = vmatpush2.bf16.msra.mxu0 0
      %5938 = vmatprep.subr.bf16.mxu0 0
      %5939 = vmatpush2.bf16.msra.mxu0 0
      %5940 = vmatprep.subr.bf16.mxu0 0
      %5941 = vmatpush2.bf16.msra.mxu0 0
      %5942 = vmatprep.subr.bf16.mxu0 0
      %5943 = vmatpush2.bf16.msra.mxu0 0
      %5944 = vmatprep.subr.bf16.mxu0 0
      %5945 = vmatpush2.bf16.msra.mxu0 0
      %5946 = vmatprep.subr.bf16.mxu0 0
      %5947 = vmatpush2.bf16.msra.mxu0 0
      %5948 = vmatprep.mubr.bf16.mxu0 0
      %5949 = vmatmul.mubr.bf16.gmra.mxu0 %v4156
      %v5950 = vpop.f32.mrf.mxu0
      %v5951 = vadd.f32 0.0, %v5950
      %v5952 = vpop.f32.mrf.mxu0
      %v5953 = vpop.f32.mrf.mxu0
      %v5954 = vadd.f32 0.0, %v5953
      %v5955 = vpop.f32.mrf.mxu0
      %5956 = vmatprep.mubr.bf16.mxu0 0
      %5957 = vmatmul.mubr.bf16.gmra.mxu0 %v4159
      %v5958 = vpop.f32.mrf.mxu0
      %v5959 = vadd.f32 0.0, %v5958
      %v5960 = vpop.f32.mrf.mxu0
      %v5961 = vpop.f32.mrf.mxu0
      %v5962 = vadd.f32 0.0, %v5961
      %v5963 = vpop.f32.mrf.mxu0
      %5964 = vmatprep.mubr.bf16.mxu0 0
      %5965 = vmatmul.mubr.bf16.gmra.mxu0 %v4162
      %v5966 = vpop.f32.mrf.mxu0
      %v5967 = vadd.f32 0.0, %v5966
      %v5968 = vpop.f32.mrf.mxu0
      %v5969 = vpop.f32.mrf.mxu0
      %v5970 = vadd.f32 0.0, %v5969
      %v5971 = vpop.f32.mrf.mxu0
      %5972 = vmatprep.mubr.bf16.mxu0 0
      %5973 = vmatmul.mubr.bf16.gmra.mxu0 %v4165
      %v5974 = vpop.f32.mrf.mxu0
      %v5975 = vadd.f32 0.0, %v5974
      %v5976 = vpop.f32.mrf.mxu0
      %v5977 = vpop.f32.mrf.mxu0
      %v5978 = vadd.f32 0.0, %v5977
      %v5979 = vpop.f32.mrf.mxu0
      %5980 = vmatprep.mubr.bf16.mxu0 0
      %5981 = vmatmul.mubr.bf16.gmra.mxu0 %v4168
      %v5982 = vpop.f32.mrf.mxu0
      %v5983 = vadd.f32 0.0, %v5982
      %v5984 = vpop.f32.mrf.mxu0
      %v5985 = vpop.f32.mrf.mxu0
      %v5986 = vadd.f32 0.0, %v5985
      %v5987 = vpop.f32.mrf.mxu0
      %5988 = vmatprep.mubr.bf16.mxu0 0
      %5989 = vmatmul.mubr.bf16.gmra.mxu0 %v4171
      %v5990 = vpop.f32.mrf.mxu0
      %v5991 = vadd.f32 0.0, %v5990
      %v5992 = vpop.f32.mrf.mxu0
      %v5993 = vpop.f32.mrf.mxu0
      %v5994 = vadd.f32 0.0, %v5993
      %v5995 = vpop.f32.mrf.mxu0
      %5996 = vmatprep.mubr.bf16.mxu0 0
      %5997 = vmatmul.mubr.bf16.gmra.mxu0 %v4174
      %v5998 = vpop.f32.mrf.mxu0
      %v5999 = vadd.f32 0.0, %v5998
      %v6000 = vpop.f32.mrf.mxu0
      %v6001 = vpop.f32.mrf.mxu0
      %v6002 = vadd.f32 0.0, %v6001
      %v6003 = vpop.f32.mrf.mxu0
      %6004 = vmatprep.mubr.bf16.mxu0 0
      %6005 = vmatmul.mubr.bf16.gmra.mxu0 %v4177
      %v6006 = vpop.f32.mrf.mxu0
      %v6007 = vadd.f32 0.0, %v6006
      %v6008 = vpop.f32.mrf.mxu0
      %v6009 = vpop.f32.mrf.mxu0
      %v6010 = vadd.f32 0.0, %v6009
      %v6011 = vpop.f32.mrf.mxu0
      %6012 = vmatprep.mubr.bf16.mxu0 0
      %6013 = vmatmul.mubr.bf16.gmra.mxu0 %v4180
      %v6014 = vpop.f32.mrf.mxu0
      %v6015 = vadd.f32 0.0, %v6014
      %v6016 = vpop.f32.mrf.mxu0
      %v6017 = vpop.f32.mrf.mxu0
      %v6018 = vadd.f32 0.0, %v6017
      %v6019 = vpop.f32.mrf.mxu0
      %6020 = vmatprep.mubr.bf16.mxu0 0
      %6021 = vmatmul.mubr.bf16.gmra.mxu0 %v4183
      %v6022 = vpop.f32.mrf.mxu0
      %v6023 = vadd.f32 0.0, %v6022
      %v6024 = vpop.f32.mrf.mxu0
      %v6025 = vpop.f32.mrf.mxu0
      %v6026 = vadd.f32 0.0, %v6025
      %v6027 = vpop.f32.mrf.mxu0
      %6028 = vmatprep.mubr.bf16.mxu0 0
      %6029 = vmatmul.mubr.bf16.gmra.mxu0 %v4186
      %v6030 = vpop.f32.mrf.mxu0
      %v6031 = vadd.f32 0.0, %v6030
      %v6032 = vpop.f32.mrf.mxu0
      %v6033 = vpop.f32.mrf.mxu0
      %v6034 = vadd.f32 0.0, %v6033
      %v6035 = vpop.f32.mrf.mxu0
      %6036 = vmatprep.mubr.bf16.mxu0 0
      %6037 = vmatmul.mubr.bf16.gmra.mxu0 %v4189
      %v6038 = vpop.f32.mrf.mxu0
      %v6039 = vadd.f32 0.0, %v6038
      %v6040 = vpop.f32.mrf.mxu0
      %v6041 = vpop.f32.mrf.mxu0
      %v6042 = vadd.f32 0.0, %v6041
      %v6043 = vpop.f32.mrf.mxu0
      %6044 = vmatprep.mubr.bf16.mxu0 0
      %6045 = vmatmul.mubr.bf16.gmra.mxu0 %v4192
      %v6046 = vpop.f32.mrf.mxu0
      %v6047 = vadd.f32 0.0, %v6046
      %v6048 = vpop.f32.mrf.mxu0
      %v6049 = vpop.f32.mrf.mxu0
      %v6050 = vadd.f32 0.0, %v6049
      %v6051 = vpop.f32.mrf.mxu0
      %6052 = vmatprep.mubr.bf16.mxu0 0
      %6053 = vmatmul.mubr.bf16.gmra.mxu0 %v4195
      %v6054 = vpop.f32.mrf.mxu0
      %v6055 = vadd.f32 0.0, %v6054
      %v6056 = vpop.f32.mrf.mxu0
      %v6057 = vpop.f32.mrf.mxu0
      %v6058 = vadd.f32 0.0, %v6057
      %v6059 = vpop.f32.mrf.mxu0
      %6060 = vmatprep.mubr.bf16.mxu0 0
      %6061 = vmatmul.mubr.bf16.gmra.mxu0 %v4198
      %v6062 = vpop.f32.mrf.mxu0
      %v6063 = vadd.f32 0.0, %v6062
      %v6064 = vpop.f32.mrf.mxu0
      %v6065 = vpop.f32.mrf.mxu0
      %v6066 = vadd.f32 0.0, %v6065
      %v6067 = vpop.f32.mrf.mxu0
      %6068 = vmatprep.mubr.bf16.mxu0 0
      %6069 = vmatmul.mubr.bf16.gmra.mxu0 %v4201
      %v6070 = vpop.f32.mrf.mxu0
      %v6071 = vadd.f32 0.0, %v6070
      %v6072 = vpop.f32.mrf.mxu0
      %v6073 = vpop.f32.mrf.mxu0
      %v6074 = vadd.f32 0.0, %v6073
      %v6075 = vpop.f32.mrf.mxu0
      %6076 = vdwg.mxu0
      %v6081 = vunpack.c.l.b16 %v5895
      %v6082 = vunpack.c.l.b16 %v5896
      %v6083 = vunpack.c.l.b16 %v5897
      %v6084 = vunpack.c.l.b16 %v5898
      %v6085 = vpack.c.b16 %v6082, %v6081
      %v6086 = vpack.c.b16 %v6084, %v6083
      %6089 = vmatprep.subr.bf16.mxu0 0
      %6090 = vmatpush1.bf16.msra.mxu0 0
      %6091 = vmatprep.subr.bf16.mxu0 0
      %6092 = vmatpush1.bf16.msra.mxu0 0
      %6093 = vmatprep.subr.bf16.mxu0 0
      %6094 = vmatpush1.bf16.msra.mxu0 0
      %6095 = vmatprep.subr.bf16.mxu0 0
      %6096 = vmatpush1.bf16.msra.mxu0 0
      %6097 = vmatprep.subr.bf16.mxu0 0
      %6098 = vmatpush1.bf16.msra.mxu0 0
      %6099 = vmatprep.subr.bf16.mxu0 0
      %6100 = vmatpush1.bf16.msra.mxu0 0
      %6101 = vmatprep.subr.bf16.mxu0 0
      %6102 = vmatpush1.bf16.msra.mxu0 %v6086
      %6103 = vmatprep.subr.bf16.mxu0 0
      %6104 = vmatpush1.bf16.msra.mxu0 %v6085
      %6105 = vmatprep.subr.bf16.mxu0 0
      %6106 = vmatpush2.bf16.msra.mxu0 0
      %6107 = vmatprep.subr.bf16.mxu0 0
      %6108 = vmatpush2.bf16.msra.mxu0 0
      %6109 = vmatprep.subr.bf16.mxu0 0
      %6110 = vmatpush2.bf16.msra.mxu0 0
      %6111 = vmatprep.subr.bf16.mxu0 0
      %6112 = vmatpush2.bf16.msra.mxu0 0
      %6113 = vmatprep.subr.bf16.mxu0 0
      %6114 = vmatpush2.bf16.msra.mxu0 0
      %6115 = vmatprep.subr.bf16.mxu0 0
      %6116 = vmatpush2.bf16.msra.mxu0 0
      %6117 = vmatprep.subr.bf16.mxu0 0
      %6118 = vmatpush2.bf16.msra.mxu0 0
      %6119 = vmatprep.subr.bf16.mxu0 0
      %6120 = vmatpush2.bf16.msra.mxu0 0
      %6121 = vmatprep.mubr.bf16.mxu0 0
      %6122 = vmatmul.mubr.bf16.gmra.mxu0 %v2957
      %v6123 = vpop.f32.mrf.mxu0
      %v6124 = vadd.f32 %v5951, %v6123
      %v6125 = vpop.f32.mrf.mxu0
      %v6126 = vpop.f32.mrf.mxu0
      %v6127 = vadd.f32 %v5954, %v6126
      %v6128 = vpop.f32.mrf.mxu0
      %6129 = vmatprep.mubr.bf16.mxu0 0
      %6130 = vmatmul.mubr.bf16.gmra.mxu0 %v2960
      %v6131 = vpop.f32.mrf.mxu0
      %v6132 = vadd.f32 %v5959, %v6131
      %v6133 = vpop.f32.mrf.mxu0
      %v6134 = vpop.f32.mrf.mxu0
      %v6135 = vadd.f32 %v5962, %v6134
      %v6136 = vpop.f32.mrf.mxu0
      %6137 = vmatprep.mubr.bf16.mxu0 0
      %6138 = vmatmul.mubr.bf16.gmra.mxu0 %v2963
      %v6139 = vpop.f32.mrf.mxu0
      %v6140 = vadd.f32 %v5967, %v6139
      %v6141 = vpop.f32.mrf.mxu0
      %v6142 = vpop.f32.mrf.mxu0
      %v6143 = vadd.f32 %v5970, %v6142
      %v6144 = vpop.f32.mrf.mxu0
      %6145 = vmatprep.mubr.bf16.mxu0 0
      %6146 = vmatmul.mubr.bf16.gmra.mxu0 %v2966
      %v6147 = vpop.f32.mrf.mxu0
      %v6148 = vadd.f32 %v5975, %v6147
      %v6149 = vpop.f32.mrf.mxu0
      %v6150 = vpop.f32.mrf.mxu0
      %v6151 = vadd.f32 %v5978, %v6150
      %v6152 = vpop.f32.mrf.mxu0
      %6153 = vmatprep.mubr.bf16.mxu0 0
      %6154 = vmatmul.mubr.bf16.gmra.mxu0 %v2969
      %v6155 = vpop.f32.mrf.mxu0
      %v6156 = vadd.f32 %v5983, %v6155
      %v6157 = vpop.f32.mrf.mxu0
      %v6158 = vpop.f32.mrf.mxu0
      %v6159 = vadd.f32 %v5986, %v6158
      %v6160 = vpop.f32.mrf.mxu0
      %6161 = vmatprep.mubr.bf16.mxu0 0
      %6162 = vmatmul.mubr.bf16.gmra.mxu0 %v2972
      %v6163 = vpop.f32.mrf.mxu0
      %v6164 = vadd.f32 %v5991, %v6163
      %v6165 = vpop.f32.mrf.mxu0
      %v6166 = vpop.f32.mrf.mxu0
      %v6167 = vadd.f32 %v5994, %v6166
      %v6168 = vpop.f32.mrf.mxu0
      %6169 = vmatprep.mubr.bf16.mxu0 0
      %6170 = vmatmul.mubr.bf16.gmra.mxu0 %v2975
      %v6171 = vpop.f32.mrf.mxu0
      %v6172 = vadd.f32 %v5999, %v6171
      %v6173 = vpop.f32.mrf.mxu0
      %v6174 = vpop.f32.mrf.mxu0
      %v6175 = vadd.f32 %v6002, %v6174
      %v6176 = vpop.f32.mrf.mxu0
      %6177 = vmatprep.mubr.bf16.mxu0 0
      %6178 = vmatmul.mubr.bf16.gmra.mxu0 %v2978
      %v6179 = vpop.f32.mrf.mxu0
      %v6180 = vadd.f32 %v6007, %v6179
      %v6181 = vpop.f32.mrf.mxu0
      %v6182 = vpop.f32.mrf.mxu0
      %v6183 = vadd.f32 %v6010, %v6182
      %v6184 = vpop.f32.mrf.mxu0
      %6185 = vmatprep.mubr.bf16.mxu0 0
      %6186 = vmatmul.mubr.bf16.gmra.mxu0 %v2981
      %v6187 = vpop.f32.mrf.mxu0
      %v6188 = vadd.f32 %v6015, %v6187
      %v6189 = vpop.f32.mrf.mxu0
      %v6190 = vpop.f32.mrf.mxu0
      %v6191 = vadd.f32 %v6018, %v6190
      %v6192 = vpop.f32.mrf.mxu0
      %6193 = vmatprep.mubr.bf16.mxu0 0
      %6194 = vmatmul.mubr.bf16.gmra.mxu0 %v2984
      %v6195 = vpop.f32.mrf.mxu0
      %v6196 = vadd.f32 %v6023, %v6195
      %v6197 = vpop.f32.mrf.mxu0
      %v6198 = vpop.f32.mrf.mxu0
      %v6199 = vadd.f32 %v6026, %v6198
      %v6200 = vpop.f32.mrf.mxu0
      %6201 = vmatprep.mubr.bf16.mxu0 0
      %6202 = vmatmul.mubr.bf16.gmra.mxu0 %v2987
      %v6203 = vpop.f32.mrf.mxu0
      %v6204 = vadd.f32 %v6031, %v6203
      %v6205 = vpop.f32.mrf.mxu0
      %v6206 = vpop.f32.mrf.mxu0
      %v6207 = vadd.f32 %v6034, %v6206
      %v6208 = vpop.f32.mrf.mxu0
      %6209 = vmatprep.mubr.bf16.mxu0 0
      %6210 = vmatmul.mubr.bf16.gmra.mxu0 %v2990
      %v6211 = vpop.f32.mrf.mxu0
      %v6212 = vadd.f32 %v6039, %v6211
      %v6213 = vpop.f32.mrf.mxu0
      %v6214 = vpop.f32.mrf.mxu0
      %v6215 = vadd.f32 %v6042, %v6214
      %v6216 = vpop.f32.mrf.mxu0
      %6217 = vmatprep.mubr.bf16.mxu0 0
      %6218 = vmatmul.mubr.bf16.gmra.mxu0 %v2993
      %v6219 = vpop.f32.mrf.mxu0
      %v6220 = vadd.f32 %v6047, %v6219
      %v6221 = vpop.f32.mrf.mxu0
      %v6222 = vpop.f32.mrf.mxu0
      %v6223 = vadd.f32 %v6050, %v6222
      %v6224 = vpop.f32.mrf.mxu0
      %6225 = vmatprep.mubr.bf16.mxu0 0
      %6226 = vmatmul.mubr.bf16.gmra.mxu0 %v2996
      %v6227 = vpop.f32.mrf.mxu0
      %v6228 = vadd.f32 %v6055, %v6227
      %v6229 = vpop.f32.mrf.mxu0
      %v6230 = vpop.f32.mrf.mxu0
      %v6231 = vadd.f32 %v6058, %v6230
      %v6232 = vpop.f32.mrf.mxu0
      %6233 = vmatprep.mubr.bf16.mxu0 0
      %6234 = vmatmul.mubr.bf16.gmra.mxu0 %v2999
      %v6235 = vpop.f32.mrf.mxu0
      %v6236 = vadd.f32 %v6063, %v6235
      %v6237 = vpop.f32.mrf.mxu0
      %v6238 = vpop.f32.mrf.mxu0
      %v6239 = vadd.f32 %v6066, %v6238
      %v6240 = vpop.f32.mrf.mxu0
      %6241 = vmatprep.mubr.bf16.mxu0 0
      %6242 = vmatmul.mubr.bf16.gmra.mxu0 %v3002
      %v6243 = vpop.f32.mrf.mxu0
      %v6244 = vadd.f32 %v6071, %v6243
      %v6245 = vpop.f32.mrf.mxu0
      %v6246 = vpop.f32.mrf.mxu0
      %v6247 = vadd.f32 %v6074, %v6246
      %v6248 = vpop.f32.mrf.mxu0
      %6249 = vdwg.mxu0
      %s6250 = scalar_lea.vmem %s1, 224
      %v6251 = vld [vmem:[%s6250] sm:$0xf]
      %v6252 = vld [vmem:[%s6250 + $0x4] sm:$0xf]
      %v6253 = vld [vmem:[%s6250 + $0x8] sm:$0xf]
      %v6254 = vld [vmem:[%s6250 + $0xc] sm:$0xf]
      %v6259 = vunpack.c.l.b16 %v6251
      %v6260 = vunpack.c.l.b16 %v6252
      %v6261 = vunpack.c.l.b16 %v6253
      %v6262 = vunpack.c.l.b16 %v6254
      %v6263 = vpack.c.b16 %v6260, %v6259
      %v6264 = vpack.c.b16 %v6262, %v6261
      %6267 = vmatprep.subr.bf16.mxu0 0
      %6268 = vmatpush1.bf16.msra.mxu0 0
      %6269 = vmatprep.subr.bf16.mxu0 0
      %6270 = vmatpush1.bf16.msra.mxu0 0
      %6271 = vmatprep.subr.bf16.mxu0 0
      %6272 = vmatpush1.bf16.msra.mxu0 0
      %6273 = vmatprep.subr.bf16.mxu0 0
      %6274 = vmatpush1.bf16.msra.mxu0 0
      %6275 = vmatprep.subr.bf16.mxu0 0
      %6276 = vmatpush1.bf16.msra.mxu0 0
      %6277 = vmatprep.subr.bf16.mxu0 0
      %6278 = vmatpush1.bf16.msra.mxu0 0
      %6279 = vmatprep.subr.bf16.mxu0 0
      %6280 = vmatpush1.bf16.msra.mxu0 %v6264
      %6281 = vmatprep.subr.bf16.mxu0 0
      %6282 = vmatpush1.bf16.msra.mxu0 %v6263
      %6283 = vmatprep.subr.bf16.mxu0 0
      %6284 = vmatpush2.bf16.msra.mxu0 0
      %6285 = vmatprep.subr.bf16.mxu0 0
      %6286 = vmatpush2.bf16.msra.mxu0 0
      %6287 = vmatprep.subr.bf16.mxu0 0
      %6288 = vmatpush2.bf16.msra.mxu0 0
      %6289 = vmatprep.subr.bf16.mxu0 0
      %6290 = vmatpush2.bf16.msra.mxu0 0
      %6291 = vmatprep.subr.bf16.mxu0 0
      %6292 = vmatpush2.bf16.msra.mxu0 0
      %6293 = vmatprep.subr.bf16.mxu0 0
      %6294 = vmatpush2.bf16.msra.mxu0 0
      %6295 = vmatprep.subr.bf16.mxu0 0
      %6296 = vmatpush2.bf16.msra.mxu0 0
      %6297 = vmatprep.subr.bf16.mxu0 0
      %6298 = vmatpush2.bf16.msra.mxu0 0
      %6299 = vmatprep.mubr.bf16.mxu0 0
      %6300 = vmatmul.mubr.bf16.gmra.mxu0 %v5429
      %v6301 = vpop.f32.mrf.mxu0
      %v6302 = vadd.f32 0.0, %v6301
      %v6303 = vpop.f32.mrf.mxu0
      %v6304 = vpop.f32.mrf.mxu0
      %v6305 = vadd.f32 0.0, %v6304
      %v6306 = vpop.f32.mrf.mxu0
      %6307 = vmatprep.mubr.bf16.mxu0 0
      %6308 = vmatmul.mubr.bf16.gmra.mxu0 %v5432
      %v6309 = vpop.f32.mrf.mxu0
      %v6310 = vadd.f32 0.0, %v6309
      %v6311 = vpop.f32.mrf.mxu0
      %v6312 = vpop.f32.mrf.mxu0
      %v6313 = vadd.f32 0.0, %v6312
      %v6314 = vpop.f32.mrf.mxu0
      %6315 = vmatprep.mubr.bf16.mxu0 0
      %6316 = vmatmul.mubr.bf16.gmra.mxu0 %v5435
      %v6317 = vpop.f32.mrf.mxu0
      %v6318 = vadd.f32 0.0, %v6317
      %v6319 = vpop.f32.mrf.mxu0
      %v6320 = vpop.f32.mrf.mxu0
      %v6321 = vadd.f32 0.0, %v6320
      %v6322 = vpop.f32.mrf.mxu0
      %6323 = vmatprep.mubr.bf16.mxu0 0
      %6324 = vmatmul.mubr.bf16.gmra.mxu0 %v5438
      %v6325 = vpop.f32.mrf.mxu0
      %v6326 = vadd.f32 0.0, %v6325
      %v6327 = vpop.f32.mrf.mxu0
      %v6328 = vpop.f32.mrf.mxu0
      %v6329 = vadd.f32 0.0, %v6328
      %v6330 = vpop.f32.mrf.mxu0
      %6331 = vmatprep.mubr.bf16.mxu0 0
      %6332 = vmatmul.mubr.bf16.gmra.mxu0 %v5441
      %v6333 = vpop.f32.mrf.mxu0
      %v6334 = vadd.f32 0.0, %v6333
      %v6335 = vpop.f32.mrf.mxu0
      %v6336 = vpop.f32.mrf.mxu0
      %v6337 = vadd.f32 0.0, %v6336
      %v6338 = vpop.f32.mrf.mxu0
      %6339 = vmatprep.mubr.bf16.mxu0 0
      %6340 = vmatmul.mubr.bf16.gmra.mxu0 %v5444
      %v6341 = vpop.f32.mrf.mxu0
      %v6342 = vadd.f32 0.0, %v6341
      %v6343 = vpop.f32.mrf.mxu0
      %v6344 = vpop.f32.mrf.mxu0
      %v6345 = vadd.f32 0.0, %v6344
      %v6346 = vpop.f32.mrf.mxu0
      %6347 = vmatprep.mubr.bf16.mxu0 0
      %6348 = vmatmul.mubr.bf16.gmra.mxu0 %v5447
      %v6349 = vpop.f32.mrf.mxu0
      %v6350 = vadd.f32 0.0, %v6349
      %v6351 = vpop.f32.mrf.mxu0
      %v6352 = vpop.f32.mrf.mxu0
      %v6353 = vadd.f32 0.0, %v6352
      %v6354 = vpop.f32.mrf.mxu0
      %6355 = vmatprep.mubr.bf16.mxu0 0
      %6356 = vmatmul.mubr.bf16.gmra.mxu0 %v5450
      %v6357 = vpop.f32.mrf.mxu0
      %v6358 = vadd.f32 0.0, %v6357
      %v6359 = vpop.f32.mrf.mxu0
      %v6360 = vpop.f32.mrf.mxu0
      %v6361 = vadd.f32 0.0, %v6360
      %v6362 = vpop.f32.mrf.mxu0
      %6363 = vmatprep.mubr.bf16.mxu0 0
      %6364 = vmatmul.mubr.bf16.gmra.mxu0 %v5453
      %v6365 = vpop.f32.mrf.mxu0
      %v6366 = vadd.f32 0.0, %v6365
      %v6367 = vpop.f32.mrf.mxu0
      %v6368 = vpop.f32.mrf.mxu0
      %v6369 = vadd.f32 0.0, %v6368
      %v6370 = vpop.f32.mrf.mxu0
      %6371 = vmatprep.mubr.bf16.mxu0 0
      %6372 = vmatmul.mubr.bf16.gmra.mxu0 %v5456
      %v6373 = vpop.f32.mrf.mxu0
      %v6374 = vadd.f32 0.0, %v6373
      %v6375 = vpop.f32.mrf.mxu0
      %v6376 = vpop.f32.mrf.mxu0
      %v6377 = vadd.f32 0.0, %v6376
      %v6378 = vpop.f32.mrf.mxu0
      %6379 = vmatprep.mubr.bf16.mxu0 0
      %6380 = vmatmul.mubr.bf16.gmra.mxu0 %v5459
      %v6381 = vpop.f32.mrf.mxu0
      %v6382 = vadd.f32 0.0, %v6381
      %v6383 = vpop.f32.mrf.mxu0
      %v6384 = vpop.f32.mrf.mxu0
      %v6385 = vadd.f32 0.0, %v6384
      %v6386 = vpop.f32.mrf.mxu0
      %6387 = vmatprep.mubr.bf16.mxu0 0
      %6388 = vmatmul.mubr.bf16.gmra.mxu0 %v5462
      %v6389 = vpop.f32.mrf.mxu0
      %v6390 = vadd.f32 0.0, %v6389
      %v6391 = vpop.f32.mrf.mxu0
      %v6392 = vpop.f32.mrf.mxu0
      %v6393 = vadd.f32 0.0, %v6392
      %v6394 = vpop.f32.mrf.mxu0
      %6395 = vmatprep.mubr.bf16.mxu0 0
      %6396 = vmatmul.mubr.bf16.gmra.mxu0 %v5465
      %v6397 = vpop.f32.mrf.mxu0
      %v6398 = vadd.f32 0.0, %v6397
      %v6399 = vpop.f32.mrf.mxu0
      %v6400 = vpop.f32.mrf.mxu0
      %v6401 = vadd.f32 0.0, %v6400
      %v6402 = vpop.f32.mrf.mxu0
      %6403 = vmatprep.mubr.bf16.mxu0 0
      %6404 = vmatmul.mubr.bf16.gmra.mxu0 %v5468
      %v6405 = vpop.f32.mrf.mxu0
      %v6406 = vadd.f32 0.0, %v6405
      %v6407 = vpop.f32.mrf.mxu0
      %v6408 = vpop.f32.mrf.mxu0
      %v6409 = vadd.f32 0.0, %v6408
      %v6410 = vpop.f32.mrf.mxu0
      %6411 = vmatprep.mubr.bf16.mxu0 0
      %6412 = vmatmul.mubr.bf16.gmra.mxu0 %v5471
      %v6413 = vpop.f32.mrf.mxu0
      %v6414 = vadd.f32 0.0, %v6413
      %v6415 = vpop.f32.mrf.mxu0
      %v6416 = vpop.f32.mrf.mxu0
      %v6417 = vadd.f32 0.0, %v6416
      %v6418 = vpop.f32.mrf.mxu0
      %6419 = vmatprep.mubr.bf16.mxu0 0
      %6420 = vmatmul.mubr.bf16.gmra.mxu0 %v5474
      %v6421 = vpop.f32.mrf.mxu0
      %v6422 = vadd.f32 0.0, %v6421
      %v6423 = vpop.f32.mrf.mxu0
      %v6424 = vpop.f32.mrf.mxu0
      %v6425 = vadd.f32 0.0, %v6424
      %v6426 = vpop.f32.mrf.mxu0
      %6427 = vdwg.mxu0
      %v6428 = vadd.f32 %v6124, %v6302
      %v6429 = vadd.f32 %v6127, %v6305
      %v6430 = vadd.f32 %v6132, %v6310
      %v6431 = vadd.f32 %v6135, %v6313
      %v6432 = vadd.f32 %v6140, %v6318
      %v6433 = vadd.f32 %v6143, %v6321
      %v6434 = vadd.f32 %v6148, %v6326
      %v6435 = vadd.f32 %v6151, %v6329
      %v6436 = vadd.f32 %v6156, %v6334
      %v6437 = vadd.f32 %v6159, %v6337
      %v6438 = vadd.f32 %v6164, %v6342
      %v6439 = vadd.f32 %v6167, %v6345
      %v6440 = vadd.f32 %v6172, %v6350
      %v6441 = vadd.f32 %v6175, %v6353
      %v6442 = vadd.f32 %v6180, %v6358
      %v6443 = vadd.f32 %v6183, %v6361
      %v6444 = vadd.f32 %v6188, %v6366
      %v6445 = vadd.f32 %v6191, %v6369
      %v6446 = vadd.f32 %v6196, %v6374
      %v6447 = vadd.f32 %v6199, %v6377
      %v6448 = vadd.f32 %v6204, %v6382
      %v6449 = vadd.f32 %v6207, %v6385
      %v6450 = vadd.f32 %v6212, %v6390
      %v6451 = vadd.f32 %v6215, %v6393
      %v6452 = vadd.f32 %v6220, %v6398
      %v6453 = vadd.f32 %v6223, %v6401
      %v6454 = vadd.f32 %v6228, %v6406
      %v6455 = vadd.f32 %v6231, %v6409
      %v6456 = vadd.f32 %v6236, %v6414
      %v6457 = vadd.f32 %v6239, %v6417
      %v6458 = vadd.f32 %v6244, %v6422
      %v6459 = vadd.f32 %v6247, %v6425
      %s6460 = scalar_lea.vmem %s1, 240
      %v6461 = vld [vmem:[%s6460] sm:$0xf]
      %v6462 = vld [vmem:[%s6460 + $0x4] sm:$0xf]
      %v6463 = vld [vmem:[%s6460 + $0x8] sm:$0xf]
      %v6464 = vld [vmem:[%s6460 + $0xc] sm:$0xf]
      %v6465 = vunpack.c.l.b16 %v1895
      %v6466 = vunpack.c.l.b16 %v1898
      %v6467 = vunpack.c.l.b16 %v1902
      %v6468 = vunpack.c.l.b16 %v1905
      %v6469 = vunpack.c.l.b16 %v1909
      %v6470 = vunpack.c.l.b16 %v1912
      %v6471 = vunpack.c.l.b16 %v1916
      %v6472 = vunpack.c.l.b16 %v1919
      %v6473 = vunpack.c.l.b16 %v1923
      %v6474 = vunpack.c.l.b16 %v1926
      %v6475 = vunpack.c.l.b16 %v1930
      %v6476 = vunpack.c.l.b16 %v1933
      %v6477 = vunpack.c.l.b16 %v1937
      %v6478 = vunpack.c.l.b16 %v1940
      %v6479 = vunpack.c.l.b16 %v1944
      %v6480 = vunpack.c.l.b16 %v1947
      %v6481 = vunpack.c.l.b16 %v1951
      %v6482 = vunpack.c.l.b16 %v1954
      %v6483 = vunpack.c.l.b16 %v1958
      %v6484 = vunpack.c.l.b16 %v1961
      %v6485 = vunpack.c.l.b16 %v1965
      %v6486 = vunpack.c.l.b16 %v1968
      %v6487 = vunpack.c.l.b16 %v1972
      %v6488 = vunpack.c.l.b16 %v1975
      %v6489 = vunpack.c.l.b16 %v1979
      %v6490 = vunpack.c.l.b16 %v1982
      %v6491 = vunpack.c.l.b16 %v1986
      %v6492 = vunpack.c.l.b16 %v1989
      %v6493 = vunpack.c.l.b16 %v1993
      %v6494 = vunpack.c.l.b16 %v1996
      %v6495 = vunpack.c.l.b16 %v2000
      %v6496 = vunpack.c.l.b16 %v2003
      %v6497 = vpack.c.b16 %v6466, %v6465
      %v6498 = vpack.c.b16 %v6468, %v6467
      %v6499 = vpack.c.b16 %v6470, %v6469
      %v6500 = vpack.c.b16 %v6472, %v6471
      %v6501 = vpack.c.b16 %v6474, %v6473
      %v6502 = vpack.c.b16 %v6476, %v6475
      %v6503 = vpack.c.b16 %v6478, %v6477
      %v6504 = vpack.c.b16 %v6480, %v6479
      %v6505 = vpack.c.b16 %v6482, %v6481
      %v6506 = vpack.c.b16 %v6484, %v6483
      %v6507 = vpack.c.b16 %v6486, %v6485
      %v6508 = vpack.c.b16 %v6488, %v6487
      %v6509 = vpack.c.b16 %v6490, %v6489
      %v6510 = vpack.c.b16 %v6492, %v6491
      %v6511 = vpack.c.b16 %v6494, %v6493
      %v6512 = vpack.c.b16 %v6496, %v6495
      %v6517 = vunpack.c.l.b16 %v6461
      %v6518 = vunpack.c.l.b16 %v6462
      %v6519 = vunpack.c.l.b16 %v6463
      %v6520 = vunpack.c.l.b16 %v6464
      %v6521 = vpack.c.b16 %v6518, %v6517
      %v6522 = vpack.c.b16 %v6520, %v6519
      %v6526 = vsel %vm2074, %v6497, 0
      %v6529 = vsel %vm2074, %v6498, 0
      %v6532 = vsel %vm2074, %v6499, 0
      %v6535 = vsel %vm2074, %v6500, 0
      %v6538 = vsel %vm2074, %v6501, 0
      %v6541 = vsel %vm2074, %v6502, 0
      %v6544 = vsel %vm2074, %v6503, 0
      %v6547 = vsel %vm2074, %v6504, 0
      %v6550 = vsel %vm2074, %v6505, 0
      %v6553 = vsel %vm2074, %v6506, 0
      %v6556 = vsel %vm2074, %v6507, 0
      %v6559 = vsel %vm2074, %v6508, 0
      %v6562 = vsel %vm2074, %v6509, 0
      %v6565 = vsel %vm2074, %v6510, 0
      %v6568 = vsel %vm2074, %v6511, 0
      %v6571 = vsel %vm2074, %v6512, 0
      %6573 = vmatprep.subr.bf16.mxu0 0
      %6574 = vmatpush1.bf16.msra.mxu0 0
      %6575 = vmatprep.subr.bf16.mxu0 0
      %6576 = vmatpush1.bf16.msra.mxu0 0
      %6577 = vmatprep.subr.bf16.mxu0 0
      %6578 = vmatpush1.bf16.msra.mxu0 0
      %6579 = vmatprep.subr.bf16.mxu0 0
      %6580 = vmatpush1.bf16.msra.mxu0 0
      %6581 = vmatprep.subr.bf16.mxu0 0
      %6582 = vmatpush1.bf16.msra.mxu0 0
      %6583 = vmatprep.subr.bf16.mxu0 0
      %6584 = vmatpush1.bf16.msra.mxu0 0
      %6585 = vmatprep.subr.bf16.mxu0 0
      %6586 = vmatpush1.bf16.msra.mxu0 %v6522
      %6587 = vmatprep.subr.bf16.mxu0 0
      %6588 = vmatpush1.bf16.msra.mxu0 %v6521
      %6589 = vmatprep.subr.bf16.mxu0 0
      %6590 = vmatpush2.bf16.msra.mxu0 0
      %6591 = vmatprep.subr.bf16.mxu0 0
      %6592 = vmatpush2.bf16.msra.mxu0 0
      %6593 = vmatprep.subr.bf16.mxu0 0
      %6594 = vmatpush2.bf16.msra.mxu0 0
      %6595 = vmatprep.subr.bf16.mxu0 0
      %6596 = vmatpush2.bf16.msra.mxu0 0
      %6597 = vmatprep.subr.bf16.mxu0 0
      %6598 = vmatpush2.bf16.msra.mxu0 0
      %6599 = vmatprep.subr.bf16.mxu0 0
      %6600 = vmatpush2.bf16.msra.mxu0 0
      %6601 = vmatprep.subr.bf16.mxu0 0
      %6602 = vmatpush2.bf16.msra.mxu0 0
      %6603 = vmatprep.subr.bf16.mxu0 0
      %6604 = vmatpush2.bf16.msra.mxu0 0
      %6605 = vmatprep.mubr.bf16.mxu0 0
      %6606 = vmatmul.mubr.bf16.gmra.mxu0 %v6526
      %v6607 = vpop.f32.mrf.mxu0
      %v6608 = vadd.f32 0.0, %v6607
      %v6609 = vpop.f32.mrf.mxu0
      %v6610 = vpop.f32.mrf.mxu0
      %v6611 = vadd.f32 0.0, %v6610
      %v6612 = vpop.f32.mrf.mxu0
      %6613 = vmatprep.mubr.bf16.mxu0 0
      %6614 = vmatmul.mubr.bf16.gmra.mxu0 %v6529
      %v6615 = vpop.f32.mrf.mxu0
      %v6616 = vadd.f32 0.0, %v6615
      %v6617 = vpop.f32.mrf.mxu0
      %v6618 = vpop.f32.mrf.mxu0
      %v6619 = vadd.f32 0.0, %v6618
      %v6620 = vpop.f32.mrf.mxu0
      %6621 = vmatprep.mubr.bf16.mxu0 0
      %6622 = vmatmul.mubr.bf16.gmra.mxu0 %v6532
      %v6623 = vpop.f32.mrf.mxu0
      %v6624 = vadd.f32 0.0, %v6623
      %v6625 = vpop.f32.mrf.mxu0
      %v6626 = vpop.f32.mrf.mxu0
      %v6627 = vadd.f32 0.0, %v6626
      %v6628 = vpop.f32.mrf.mxu0
      %6629 = vmatprep.mubr.bf16.mxu0 0
      %6630 = vmatmul.mubr.bf16.gmra.mxu0 %v6535
      %v6631 = vpop.f32.mrf.mxu0
      %v6632 = vadd.f32 0.0, %v6631
      %v6633 = vpop.f32.mrf.mxu0
      %v6634 = vpop.f32.mrf.mxu0
      %v6635 = vadd.f32 0.0, %v6634
      %v6636 = vpop.f32.mrf.mxu0
      %6637 = vmatprep.mubr.bf16.mxu0 0
      %6638 = vmatmul.mubr.bf16.gmra.mxu0 %v6538
      %v6639 = vpop.f32.mrf.mxu0
      %v6640 = vadd.f32 0.0, %v6639
      %v6641 = vpop.f32.mrf.mxu0
      %v6642 = vpop.f32.mrf.mxu0
      %v6643 = vadd.f32 0.0, %v6642
      %v6644 = vpop.f32.mrf.mxu0
      %6645 = vmatprep.mubr.bf16.mxu0 0
      %6646 = vmatmul.mubr.bf16.gmra.mxu0 %v6541
      %v6647 = vpop.f32.mrf.mxu0
      %v6648 = vadd.f32 0.0, %v6647
      %v6649 = vpop.f32.mrf.mxu0
      %v6650 = vpop.f32.mrf.mxu0
      %v6651 = vadd.f32 0.0, %v6650
      %v6652 = vpop.f32.mrf.mxu0
      %6653 = vmatprep.mubr.bf16.mxu0 0
      %6654 = vmatmul.mubr.bf16.gmra.mxu0 %v6544
      %v6655 = vpop.f32.mrf.mxu0
      %v6656 = vadd.f32 0.0, %v6655
      %v6657 = vpop.f32.mrf.mxu0
      %v6658 = vpop.f32.mrf.mxu0
      %v6659 = vadd.f32 0.0, %v6658
      %v6660 = vpop.f32.mrf.mxu0
      %6661 = vmatprep.mubr.bf16.mxu0 0
      %6662 = vmatmul.mubr.bf16.gmra.mxu0 %v6547
      %v6663 = vpop.f32.mrf.mxu0
      %v6664 = vadd.f32 0.0, %v6663
      %v6665 = vpop.f32.mrf.mxu0
      %v6666 = vpop.f32.mrf.mxu0
      %v6667 = vadd.f32 0.0, %v6666
      %v6668 = vpop.f32.mrf.mxu0
      %6669 = vmatprep.mubr.bf16.mxu0 0
      %6670 = vmatmul.mubr.bf16.gmra.mxu0 %v6550
      %v6671 = vpop.f32.mrf.mxu0
      %v6672 = vadd.f32 0.0, %v6671
      %v6673 = vpop.f32.mrf.mxu0
      %v6674 = vpop.f32.mrf.mxu0
      %v6675 = vadd.f32 0.0, %v6674
      %v6676 = vpop.f32.mrf.mxu0
      %6677 = vmatprep.mubr.bf16.mxu0 0
      %6678 = vmatmul.mubr.bf16.gmra.mxu0 %v6553
      %v6679 = vpop.f32.mrf.mxu0
      %v6680 = vadd.f32 0.0, %v6679
      %v6681 = vpop.f32.mrf.mxu0
      %v6682 = vpop.f32.mrf.mxu0
      %v6683 = vadd.f32 0.0, %v6682
      %v6684 = vpop.f32.mrf.mxu0
      %6685 = vmatprep.mubr.bf16.mxu0 0
      %6686 = vmatmul.mubr.bf16.gmra.mxu0 %v6556
      %v6687 = vpop.f32.mrf.mxu0
      %v6688 = vadd.f32 0.0, %v6687
      %v6689 = vpop.f32.mrf.mxu0
      %v6690 = vpop.f32.mrf.mxu0
      %v6691 = vadd.f32 0.0, %v6690
      %v6692 = vpop.f32.mrf.mxu0
      %6693 = vmatprep.mubr.bf16.mxu0 0
      %6694 = vmatmul.mubr.bf16.gmra.mxu0 %v6559
      %v6695 = vpop.f32.mrf.mxu0
      %v6696 = vadd.f32 0.0, %v6695
      %v6697 = vpop.f32.mrf.mxu0
      %v6698 = vpop.f32.mrf.mxu0
      %v6699 = vadd.f32 0.0, %v6698
      %v6700 = vpop.f32.mrf.mxu0
      %6701 = vmatprep.mubr.bf16.mxu0 0
      %6702 = vmatmul.mubr.bf16.gmra.mxu0 %v6562
      %v6703 = vpop.f32.mrf.mxu0
      %v6704 = vadd.f32 0.0, %v6703
      %v6705 = vpop.f32.mrf.mxu0
      %v6706 = vpop.f32.mrf.mxu0
      %v6707 = vadd.f32 0.0, %v6706
      %v6708 = vpop.f32.mrf.mxu0
      %6709 = vmatprep.mubr.bf16.mxu0 0
      %6710 = vmatmul.mubr.bf16.gmra.mxu0 %v6565
      %v6711 = vpop.f32.mrf.mxu0
      %v6712 = vadd.f32 0.0, %v6711
      %v6713 = vpop.f32.mrf.mxu0
      %v6714 = vpop.f32.mrf.mxu0
      %v6715 = vadd.f32 0.0, %v6714
      %v6716 = vpop.f32.mrf.mxu0
      %6717 = vmatprep.mubr.bf16.mxu0 0
      %6718 = vmatmul.mubr.bf16.gmra.mxu0 %v6568
      %v6719 = vpop.f32.mrf.mxu0
      %v6720 = vadd.f32 0.0, %v6719
      %v6721 = vpop.f32.mrf.mxu0
      %v6722 = vpop.f32.mrf.mxu0
      %v6723 = vadd.f32 0.0, %v6722
      %v6724 = vpop.f32.mrf.mxu0
      %6725 = vmatprep.mubr.bf16.mxu0 0
      %6726 = vmatmul.mubr.bf16.gmra.mxu0 %v6571
      %v6727 = vpop.f32.mrf.mxu0
      %v6728 = vadd.f32 0.0, %v6727
      %v6729 = vpop.f32.mrf.mxu0
      %v6730 = vpop.f32.mrf.mxu0
      %v6731 = vadd.f32 0.0, %v6730
      %v6732 = vpop.f32.mrf.mxu0
      %6733 = vdwg.mxu0
      %v6734 = vadd.f32 %v6428, %v6608
      %v6735 = vadd.f32 %v6429, %v6611
      %v6736 = vadd.f32 %v6430, %v6616
      %v6737 = vadd.f32 %v6431, %v6619
      %v6738 = vadd.f32 %v6432, %v6624
      %v6739 = vadd.f32 %v6433, %v6627
      %v6740 = vadd.f32 %v6434, %v6632
      %v6741 = vadd.f32 %v6435, %v6635
      %v6742 = vadd.f32 %v6436, %v6640
      %v6743 = vadd.f32 %v6437, %v6643
      %v6744 = vadd.f32 %v6438, %v6648
      %v6745 = vadd.f32 %v6439, %v6651
      %v6746 = vadd.f32 %v6440, %v6656
      %v6747 = vadd.f32 %v6441, %v6659
      %v6748 = vadd.f32 %v6442, %v6664
      %v6749 = vadd.f32 %v6443, %v6667
      %v6750 = vadd.f32 %v6444, %v6672
      %v6751 = vadd.f32 %v6445, %v6675
      %v6752 = vadd.f32 %v6446, %v6680
      %v6753 = vadd.f32 %v6447, %v6683
      %v6754 = vadd.f32 %v6448, %v6688
      %v6755 = vadd.f32 %v6449, %v6691
      %v6756 = vadd.f32 %v6450, %v6696
      %v6757 = vadd.f32 %v6451, %v6699
      %v6758 = vadd.f32 %v6452, %v6704
      %v6759 = vadd.f32 %v6453, %v6707
      %v6760 = vadd.f32 %v6454, %v6712
      %v6761 = vadd.f32 %v6455, %v6715
      %v6762 = vadd.f32 %v6456, %v6720
      %v6763 = vadd.f32 %v6457, %v6723
      %v6764 = vadd.f32 %v6458, %v6728
      %v6765 = vadd.f32 %v6459, %v6731
      %v6766 = vadd.f32 %v6734, %v3201
      %v6767 = vadd.f32 %v6735, %v3201
      %v6768 = vadd.f32 %v6736, %v3201
      %v6769 = vadd.f32 %v6737, %v3201
      %v6770 = vadd.f32 %v6738, %v3201
      %v6771 = vadd.f32 %v6739, %v3201
      %v6772 = vadd.f32 %v6740, %v3201
      %v6773 = vadd.f32 %v6741, %v3201
      %v6774 = vadd.f32 %v6742, %v3201
      %v6775 = vadd.f32 %v6743, %v3201
      %v6776 = vadd.f32 %v6744, %v3201
      %v6777 = vadd.f32 %v6745, %v3201
      %v6778 = vadd.f32 %v6746, %v3201
      %v6779 = vadd.f32 %v6747, %v3201
      %v6780 = vadd.f32 %v6748, %v3201
      %v6781 = vadd.f32 %v6749, %v3201
      %v6782 = vadd.f32 %v6750, %v3201
      %v6783 = vadd.f32 %v6751, %v3201
      %v6784 = vadd.f32 %v6752, %v3201
      %v6785 = vadd.f32 %v6753, %v3201
      %v6786 = vadd.f32 %v6754, %v3201
      %v6787 = vadd.f32 %v6755, %v3201
      %v6788 = vadd.f32 %v6756, %v3201
      %v6789 = vadd.f32 %v6757, %v3201
      %v6790 = vadd.f32 %v6758, %v3201
      %v6791 = vadd.f32 %v6759, %v3201
      %v6792 = vadd.f32 %v6760, %v3201
      %v6793 = vadd.f32 %v6761, %v3201
      %v6794 = vadd.f32 %v6762, %v3201
      %v6795 = vadd.f32 %v6763, %v3201
      %v6796 = vadd.f32 %v6764, %v3201
      %v6797 = vadd.f32 %v6765, %v3201
      %v6798 = vmax.f32 %v6766, 0.0
      %v6799 = vmax.f32 %v6767, 0.0
      %v6800 = vmax.f32 %v6768, 0.0
      %v6801 = vmax.f32 %v6769, 0.0
      %v6802 = vmax.f32 %v6770, 0.0
      %v6803 = vmax.f32 %v6771, 0.0
      %v6804 = vmax.f32 %v6772, 0.0
      %v6805 = vmax.f32 %v6773, 0.0
      %v6806 = vmax.f32 %v6774, 0.0
      %v6807 = vmax.f32 %v6775, 0.0
      %v6808 = vmax.f32 %v6776, 0.0
      %v6809 = vmax.f32 %v6777, 0.0
      %v6810 = vmax.f32 %v6778, 0.0
      %v6811 = vmax.f32 %v6779, 0.0
      %v6812 = vmax.f32 %v6780, 0.0
      %v6813 = vmax.f32 %v6781, 0.0
      %v6814 = vmax.f32 %v6782, 0.0
      %v6815 = vmax.f32 %v6783, 0.0
      %v6816 = vmax.f32 %v6784, 0.0
      %v6817 = vmax.f32 %v6785, 0.0
      %v6818 = vmax.f32 %v6786, 0.0
      %v6819 = vmax.f32 %v6787, 0.0
      %v6820 = vmax.f32 %v6788, 0.0
      %v6821 = vmax.f32 %v6789, 0.0
      %v6822 = vmax.f32 %v6790, 0.0
      %v6823 = vmax.f32 %v6791, 0.0
      %v6824 = vmax.f32 %v6792, 0.0
      %v6825 = vmax.f32 %v6793, 0.0
      %v6826 = vmax.f32 %v6794, 0.0
      %v6827 = vmax.f32 %v6795, 0.0
      %v6828 = vmax.f32 %v6796, 0.0
      %v6829 = vmax.f32 %v6797, 0.0
      %v6830 = vpack.c.bf16 %v6799, %v6798
      %v6831 = vpack.c.bf16 %v6801, %v6800
      %v6832 = vpack.c.bf16 %v6803, %v6802
      %v6833 = vpack.c.bf16 %v6805, %v6804
      %v6834 = vpack.c.bf16 %v6807, %v6806
      %v6835 = vpack.c.bf16 %v6809, %v6808
      %v6836 = vpack.c.bf16 %v6811, %v6810
      %v6837 = vpack.c.bf16 %v6813, %v6812
      %v6838 = vpack.c.bf16 %v6815, %v6814
      %v6839 = vpack.c.bf16 %v6817, %v6816
      %v6840 = vpack.c.bf16 %v6819, %v6818
      %v6841 = vpack.c.bf16 %v6821, %v6820
      %v6842 = vpack.c.bf16 %v6823, %v6822
      %v6843 = vpack.c.bf16 %v6825, %v6824
      %v6844 = vpack.c.bf16 %v6827, %v6826
      %v6845 = vpack.c.bf16 %v6829, %v6828
      %v6862 = vunpack.c.l.b16 %v6830
      %v6863 = vunpack.c.h.b16 %v6830
      %v6864 = vunpack.c.l.b16 %v6831
      %v6865 = vunpack.c.h.b16 %v6831
      %v6866 = vunpack.c.l.b16 %v6832
      %v6867 = vunpack.c.h.b16 %v6832
      %v6868 = vunpack.c.l.b16 %v6833
      %v6869 = vunpack.c.h.b16 %v6833
      %v6870 = vunpack.c.l.b16 %v6834
      %v6871 = vunpack.c.h.b16 %v6834
      %v6872 = vunpack.c.l.b16 %v6835
      %v6873 = vunpack.c.h.b16 %v6835
      %v6874 = vunpack.c.l.b16 %v6836
      %v6875 = vunpack.c.h.b16 %v6836
      %v6876 = vunpack.c.l.b16 %v6837
      %v6877 = vunpack.c.h.b16 %v6837
      %v6878 = vunpack.c.l.b16 %v6838
      %v6879 = vunpack.c.h.b16 %v6838
      %v6880 = vunpack.c.l.b16 %v6839
      %v6881 = vunpack.c.h.b16 %v6839
      %v6882 = vunpack.c.l.b16 %v6840
      %v6883 = vunpack.c.h.b16 %v6840
      %v6884 = vunpack.c.l.b16 %v6841
      %v6885 = vunpack.c.h.b16 %v6841
      %v6886 = vunpack.c.l.b16 %v6842
      %v6887 = vunpack.c.h.b16 %v6842
      %v6888 = vunpack.c.l.b16 %v6843
      %v6889 = vunpack.c.h.b16 %v6843
      %v6890 = vunpack.c.l.b16 %v6844
      %v6891 = vunpack.c.h.b16 %v6844
      %v6892 = vunpack.c.l.b16 %v6845
      %v6893 = vunpack.c.h.b16 %v6845
      %v6894 = vpack.c.b16 %v6862, %v6862
      %v6895 = vpack.c.b16 %v6863, %v6863
      %v6896 = vpack.c.b16 %v6864, %v6864
      %v6897 = vpack.c.b16 %v6865, %v6865
      %v6898 = vpack.c.b16 %v6866, %v6866
      %v6899 = vpack.c.b16 %v6867, %v6867
      %v6900 = vpack.c.b16 %v6868, %v6868
      %v6901 = vpack.c.b16 %v6869, %v6869
      %v6902 = vpack.c.b16 %v6870, %v6870
      %v6903 = vpack.c.b16 %v6871, %v6871
      %v6904 = vpack.c.b16 %v6872, %v6872
      %v6905 = vpack.c.b16 %v6873, %v6873
      %v6906 = vpack.c.b16 %v6874, %v6874
      %v6907 = vpack.c.b16 %v6875, %v6875
      %v6908 = vpack.c.b16 %v6876, %v6876
      %v6909 = vpack.c.b16 %v6877, %v6877
      %v6910 = vpack.c.b16 %v6878, %v6878
      %v6911 = vpack.c.b16 %v6879, %v6879
      %v6912 = vpack.c.b16 %v6880, %v6880
      %v6913 = vpack.c.b16 %v6881, %v6881
      %v6914 = vpack.c.b16 %v6882, %v6882
      %v6915 = vpack.c.b16 %v6883, %v6883
      %v6916 = vpack.c.b16 %v6884, %v6884
      %v6917 = vpack.c.b16 %v6885, %v6885
      %v6918 = vpack.c.b16 %v6886, %v6886
      %v6919 = vpack.c.b16 %v6887, %v6887
      %v6920 = vpack.c.b16 %v6888, %v6888
      %v6921 = vpack.c.b16 %v6889, %v6889
      %v6922 = vpack.c.b16 %v6890, %v6890
      %v6923 = vpack.c.b16 %v6891, %v6891
      %v6924 = vpack.c.b16 %v6892, %v6892
      %v6925 = vpack.c.b16 %v6893, %v6893
      %6926 = vrot.lane.b32.xlu0 %v6894, 32
      %v6927 = vpop.permute.xlu0 %6926
      %6928 = vrot.lane.b32.xlu0 %v6895, 32
      %v6929 = vpop.permute.xlu0 %6928
      %6930 = vrot.lane.b32.xlu0 %v6896, 32
      %v6931 = vpop.permute.xlu0 %6930
      %6932 = vrot.lane.b32.xlu0 %v6897, 32
      %v6933 = vpop.permute.xlu0 %6932
      %6934 = vrot.lane.b32.xlu0 %v6898, 32
      %v6935 = vpop.permute.xlu0 %6934
      %6936 = vrot.lane.b32.xlu0 %v6899, 32
      %v6937 = vpop.permute.xlu0 %6936
      %6938 = vrot.lane.b32.xlu0 %v6900, 32
      %v6939 = vpop.permute.xlu0 %6938
      %6940 = vrot.lane.b32.xlu0 %v6901, 32
      %v6941 = vpop.permute.xlu0 %6940
      %6942 = vrot.lane.b32.xlu0 %v6902, 32
      %v6943 = vpop.permute.xlu0 %6942
      %6944 = vrot.lane.b32.xlu0 %v6903, 32
      %v6945 = vpop.permute.xlu0 %6944
      %6946 = vrot.lane.b32.xlu0 %v6904, 32
      %v6947 = vpop.permute.xlu0 %6946
      %6948 = vrot.lane.b32.xlu0 %v6905, 32
      %v6949 = vpop.permute.xlu0 %6948
      %6950 = vrot.lane.b32.xlu0 %v6906, 32
      %v6951 = vpop.permute.xlu0 %6950
      %6952 = vrot.lane.b32.xlu0 %v6907, 32
      %v6953 = vpop.permute.xlu0 %6952
      %6954 = vrot.lane.b32.xlu0 %v6908, 32
      %v6955 = vpop.permute.xlu0 %6954
      %6956 = vrot.lane.b32.xlu0 %v6909, 32
      %v6957 = vpop.permute.xlu0 %6956
      %6958 = vrot.lane.b32.xlu0 %v6910, 32
      %v6959 = vpop.permute.xlu0 %6958
      %6960 = vrot.lane.b32.xlu0 %v6911, 32
      %v6961 = vpop.permute.xlu0 %6960
      %6962 = vrot.lane.b32.xlu0 %v6912, 32
      %v6963 = vpop.permute.xlu0 %6962
      %6964 = vrot.lane.b32.xlu0 %v6913, 32
      %v6965 = vpop.permute.xlu0 %6964
      %6966 = vrot.lane.b32.xlu0 %v6914, 32
      %v6967 = vpop.permute.xlu0 %6966
      %6968 = vrot.lane.b32.xlu0 %v6915, 32
      %v6969 = vpop.permute.xlu0 %6968
      %6970 = vrot.lane.b32.xlu0 %v6916, 32
      %v6971 = vpop.permute.xlu0 %6970
      %6972 = vrot.lane.b32.xlu0 %v6917, 32
      %v6973 = vpop.permute.xlu0 %6972
      %6974 = vrot.lane.b32.xlu0 %v6918, 32
      %v6975 = vpop.permute.xlu0 %6974
      %6976 = vrot.lane.b32.xlu0 %v6919, 32
      %v6977 = vpop.permute.xlu0 %6976
      %6978 = vrot.lane.b32.xlu0 %v6920, 32
      %v6979 = vpop.permute.xlu0 %6978
      %6980 = vrot.lane.b32.xlu0 %v6921, 32
      %v6981 = vpop.permute.xlu0 %6980
      %6982 = vrot.lane.b32.xlu0 %v6922, 32
      %v6983 = vpop.permute.xlu0 %6982
      %6984 = vrot.lane.b32.xlu0 %v6923, 32
      %v6985 = vpop.permute.xlu0 %6984
      %6986 = vrot.lane.b32.xlu0 %v6924, 32
      %v6987 = vpop.permute.xlu0 %6986
      %6988 = vrot.lane.b32.xlu0 %v6925, 32
      %v6989 = vpop.permute.xlu0 %6988
      %7022 = vst.msk [vmem:[%s5861] sm:$0xf] %vm4652, %v6927
      %7023 = vst.msk [vmem:[%s5861 + $0x4] sm:$0xf] %vm4652, %v6929
      %7024 = vst.msk [vmem:[%s5861 + $0x10] sm:$0xf] %vm4652, %v6931
      %7025 = vst.msk [vmem:[%s5861 + $0x14] sm:$0xf] %vm4652, %v6933
      %7026 = vst.msk [vmem:[%s5861 + $0x20] sm:$0xf] %vm4652, %v6935
      %7027 = vst.msk [vmem:[%s5861 + $0x24] sm:$0xf] %vm4652, %v6937
      %7028 = vst.msk [vmem:[%s5861 + $0x30] sm:$0xf] %vm4652, %v6939
      %7029 = vst.msk [vmem:[%s5861 + $0x34] sm:$0xf] %vm4652, %v6941
      %7030 = vst.msk [vmem:[%s5861 + $0x40] sm:$0xf] %vm4652, %v6943
      %7031 = vst.msk [vmem:[%s5861 + $0x44] sm:$0xf] %vm4652, %v6945
      %7032 = vst.msk [vmem:[%s5861 + $0x50] sm:$0xf] %vm4652, %v6947
      %7033 = vst.msk [vmem:[%s5861 + $0x54] sm:$0xf] %vm4652, %v6949
      %7034 = vst.msk [vmem:[%s5861 + $0x60] sm:$0xf] %vm4652, %v6951
      %7035 = vst.msk [vmem:[%s5861 + $0x64] sm:$0xf] %vm4652, %v6953
      %7036 = vst.msk [vmem:[%s5861 + $0x70] sm:$0xf] %vm4652, %v6955
      %7037 = vst.msk [vmem:[%s5861 + $0x74] sm:$0xf] %vm4652, %v6957
      %7038 = vst.msk [vmem:[%s5861 + $0x80] sm:$0xf] %vm4652, %v6959
      %7039 = vst.msk [vmem:[%s5861 + $0x84] sm:$0xf] %vm4652, %v6961
      %7040 = vst.msk [vmem:[%s5861 + $0x90] sm:$0xf] %vm4652, %v6963
      %7041 = vst.msk [vmem:[%s5861 + $0x94] sm:$0xf] %vm4652, %v6965
      %7042 = vst.msk [vmem:[%s5861 + $0xa0] sm:$0xf] %vm4652, %v6967
      %7043 = vst.msk [vmem:[%s5861 + $0xa4] sm:$0xf] %vm4652, %v6969
      %7044 = vst.msk [vmem:[%s5861 + $0xb0] sm:$0xf] %vm4652, %v6971
      %7045 = vst.msk [vmem:[%s5861 + $0xb4] sm:$0xf] %vm4652, %v6973
      %7046 = vst.msk [vmem:[%s5861 + $0xc0] sm:$0xf] %vm4652, %v6975
      %7047 = vst.msk [vmem:[%s5861 + $0xc4] sm:$0xf] %vm4652, %v6977
      %7048 = vst.msk [vmem:[%s5861 + $0xd0] sm:$0xf] %vm4652, %v6979
      %7049 = vst.msk [vmem:[%s5861 + $0xd4] sm:$0xf] %vm4652, %v6981
      %7050 = vst.msk [vmem:[%s5861 + $0xe0] sm:$0xf] %vm4652, %v6983
      %7051 = vst.msk [vmem:[%s5861 + $0xe4] sm:$0xf] %vm4652, %v6985
      %7052 = vst.msk [vmem:[%s5861 + $0xf0] sm:$0xf] %vm4652, %v6987
      %7053 = vst.msk [vmem:[%s5861 + $0xf4] sm:$0xf] %vm4652, %v6989
      %p7054 = scmp.lt.s32.totalorder %s14, 1
      %s7055 = scalar_select %p7054, %s14, 1
      %s7056 = smul.addr %s7055, 64
      %s7057 = smul.addr %s7056, 4
      %s7058 = scalar_lea.vmem %s3, %s7057
      // Predicated region
      $region33: #{topdown_head_forward.4} parent=31 // pred_check
        %p7059 = pneg %p100
      $region34: #{topdown_head_forward.4} parent=31 // pred_check_branch
        %7061 = sbr.rel (%p7059) target = $region36
      $region35: #{topdown_head_forward.4} parent=31 // pred_region
        _
      $region36: #{topdown_head_forward.4} parent=31 // pred_fallthru
        _
    $region32: #{topdown_head_forward.4} parent=5 // pred_fallthru
      _
    %p7062 = scmp.le.s32.totalorder 2, %s9
    // Predicated region
    $region37: #{topdown_head_forward.4} parent=5 // pred_check
      %p7063 = pneg %p7062
    $region38: #{topdown_head_forward.4} parent=5 // pred_check_branch
      %7065 = sbr.rel (%p7063) target = $region40
    $region39: #{topdown_head_forward.4} parent=5 // pred_region
      %s7066 = ssub.s32 %s9, 2
      // Predicated region
      $region41: #{topdown_head_forward.4} parent=39 // pred_check
        %p7067 = pneg %p106
      $region42: #{topdown_head_forward.4} parent=39 // pred_check_branch
        %7069 = sbr.rel (%p7067) target = $region44
      $region43: #{topdown_head_forward.4} parent=39 // pred_region
        %p7070 = scmp.lt.s32.totalorder %s15, 1
        %s7071 = scalar_select %p7070, %s15, 1
        %s7072 = smul.addr %s7071, 64
        %s7073 = smul.addr %s7072, 4
        %s7074 = scalar_lea.vmem %s3, %s7073
      $region44: #{topdown_head_forward.4} parent=39 // pred_fallthru
        _
    $region40: #{topdown_head_forward.4} parent=5 // pred_fallthru
      _
  $region6: #{topdown_head_forward.4} parent=0 // loop_footer
    %s13 = sadd.s32 1, %s9
  $region7: #{topdown_head_forward.4} parent=0 // loop_footer_branch
    %8 = sbr.rel target = $region3
  $region8: #{topdown_head_forward.4} parent=0 // loop_exit
    _

</llo_original>
